<compile_context>
chip_gen: v7x
topology: tpu7x:2x2x1
jax: 0.10.0
libtpu: 0.0.40
codegen_flags: <defaults>
</compile_context>

<pallas_src>
import jax
import jax.numpy as jnp
from jax import lax
from jax.experimental import pallas as pl
from jax.experimental.pallas import tpu as pltpu

CHANNEL = 20  # fixed by the PyTorch module (`channel = 20`)


# ---------------------------------------------------------------------------
# Host-side constant builders (tiny 0/1 matrices / masks)
# ---------------------------------------------------------------------------
def _tap_offsets():
    return tuple((dy, dx) for dy in (-1, 0, 1) for dx in (-1, 0, 1))


def _tap_masks(H, W):
    """(9, 1, H*W) f32: 1 where tap (dy,dx) stays inside the image (kills wrap)."""
    p = jnp.arange(H * W)
    h, w = p // W, p % W
    rows = []
    for dy, dx in _tap_offsets():
        ok = (h + dy >= 0) & (h + dy < H) & (w + dx >= 0) & (w + dx < W)
        rows.append(ok.astype(jnp.float32))
    return jnp.stack(rows).reshape(9, 1, H * W)


def _tap_shift_mats(H, W):
    """(9, HW, HW) bf16 0/1: column p holds a single 1 at the tap's source pixel."""
    HW = H * W
    p = jnp.arange(HW)
    h, w = p // W, p % W
    q = jnp.arange(HW)
    mats = []
    for dy, dx in _tap_offsets():
        ok = (h + dy >= 0) & (h + dy < H) & (w + dx >= 0) & (w + dx < W)
        src = (h + dy) * W + (w + dx)
        mats.append(((q[:, None] == src[None, :]) & ok[None, :]).astype(jnp.bfloat16))
    return jnp.stack(mats)


def _pool_selectors(H, W):
    """(4, HW, HW/4) bf16 0/1: the four corners of each 2x2 max-pool window."""
    H2, W2 = H // 2, W // 2
    p = jnp.arange(H2 * W2)
    base = (2 * (p // W2)) * W + 2 * (p % W2)
    q = jnp.arange(H * W)
    sels = [(q[:, None] == (base + off)[None, :]).astype(jnp.bfloat16)
            for off in (0, 1, W, W + 1)]
    return jnp.stack(sels)


def _upsample_matrix(Hs, Ws):
    """(Hs*Ws, 4*Hs*Ws) bf16 0/1: nearest-neighbour 2x upsample as a matmul."""
    Hb, Wb = 2 * Hs, 2 * Ws
    p = jnp.arange(Hb * Wb)
    src = (p // Wb // 2) * Ws + (p % Wb) // 2
    q = jnp.arange(Hs * Ws)
    return (q[:, None] == src[None, :]).astype(jnp.bfloat16)


# ---------------------------------------------------------------------------
# Kernel factory (H, W and the per-level roll/matrix choice are static)
# ---------------------------------------------------------------------------
def _make_kernel(H, W, use_roll):
    dims = ((H, W), (H // 2, W // 2), (H // 4, W // 4))
    offs = _tap_offsets()
    bf16 = jnp.bfloat16
    f32 = jnp.float32

    def lrelu(v):
        return jnp.maximum(v, 0.2 * v)

    def conv3x3(x, idx, level, wconv_ref, bconv_ref, tap_ref):
        """3x3 'same' conv + bias + LeakyReLU(0.2) on (C, hw) spatial-in-lanes data."""
        h, w = dims[level]
        hw = h * w
        xb = x.astype(bf16)
        acc = None
        for tap, (dy, dx) in enumerate(offs):
            wt = wconv_ref[idx, tap]                       # (Cout, Cin) bf16
            if use_roll[level]:
                s = dy * w + dx                            # flattened tap offset
                if s == 0:
                    xt = xb
                else:
                    # rolled[p] = x[p + s]; out-of-image (and wrapped) lanes -> 0.
                    xt = (pltpu.roll(x, (-s) % hw, 1) * tap_ref[tap]).astype(bf16)
            else:
                # shift+mask as a 0/1 selection matmul (exact, MXU is idle anyway).
                xt = jnp.dot(xb, tap_ref[tap],
                             preferred_element_type=f32).astype(bf16)
            t = jnp.dot(wt, xt, preferred_element_type=f32)
            acc = t if acc is None else acc + t
        return lrelu(acc + bconv_ref[idx])

    def maxpool(x, sel_ref):
        xb = x.astype(bf16)
        g0 = jnp.dot(xb, sel_ref[0], preferred_element_type=f32)
        g1 = jnp.dot(xb, sel_ref[1], preferred_element_type=f32)
        g2 = jnp.dot(xb, sel_ref[2], preferred_element_type=f32)
        g3 = jnp.dot(xb, sel_ref[3], preferred_element_type=f32)
        return jnp.maximum(jnp.maximum(g0, g1), jnp.maximum(g2, g3))

    def kernel(x_ref, wconv_ref, bconv_ref, wfus_ref, bfus_ref,
               tap1_ref, tap2_ref, tap3_ref, sel1_ref, sel2_ref,
               up32_ref, up21_ref, out_ref):
        x = x_ref[0]                                               # (C, HW1) f32

        # ---------------- encoder ----------------
        e1 = conv3x3(x, 0, 0, wconv_ref, bconv_ref, tap1_ref)      # (C, HW1)
        p1 = maxpool(e1, sel1_ref)                                 # (C, HW2)
        e2 = conv3x3(p1, 1, 1, wconv_ref, bconv_ref, tap2_ref)     # (C, HW2)
        p2 = maxpool(e2, sel2_ref)                                 # (C, HW4)
        e3 = conv3x3(p2, 2, 2, wconv_ref, bconv_ref, tap3_ref)     # (C, HW4)

        # ---------------- decoder ----------------
        d1 = conv3x3(e3, 3, 2, wconv_ref, bconv_ref, tap3_ref)     # (C, HW4)

        # fusion2_2(cat([encoder2, up(decoder1)])): concat folded into two matmuls,
        # the upsampled branch's 1x1 matmul runs at low resolution.
        f2 = jnp.dot(wfus_ref[0], e2.astype(bf16), preferred_element_type=f32)
        d1p = jnp.dot(wfus_ref[1], d1.astype(bf16), preferred_element_type=f32)
        f2 = f2 + jnp.dot(d1p.astype(bf16), up32_ref[...], preferred_element_type=f32)
        f2 = lrelu(f2 + bfus_ref[0])                               # (C, HW2)

        d2 = conv3x3(f2, 4, 1, wconv_ref, bconv_ref, tap2_ref)     # (C, HW2)

        # fusion2_3(cat([encoder1, up(decoder2)]))
        f3 = jnp.dot(wfus_ref[2], e1.astype(bf16), preferred_element_type=f32)
        d2p = jnp.dot(wfus_ref[3], d2.astype(bf16), preferred_element_type=f32)
        f3 = f3 + jnp.dot(d2p.astype(bf16), up21_ref[...], preferred_element_type=f32)
        f3 = lrelu(f3 + bfus_ref[1])                               # (C, HW1)

        d3 = conv3x3(f3, 5, 0, wconv_ref, bconv_ref, tap1_ref)     # (C, HW1)

        # residual with the block input; re-read x_ref so its live range is short
        out_ref[0] = d3 + x_ref[0]

    return kernel


# ---------------------------------------------------------------------------
# Parameters + wrapper
# ---------------------------------------------------------------------------
def init_params(key, channels=CHANNEL):
    C = channels
    ks = jax.random.split(key, 16)

    def w3(k):
        return jax.random.normal(k, (3, 3, C, C), jnp.float32) / jnp.sqrt(9.0 * C)

    def w1(k):
        return jax.random.normal(k, (2 * C, C), jnp.float32) / jnp.sqrt(2.0 * C)

    def b(k):
        return 0.05 * jax.random.normal(k, (1, C), jnp.float32)

    return dict(
        w_e1=w3(ks[0]), b_e1=b(ks[1]),
        w_e2=w3(ks[2]), b_e2=b(ks[3]),
        w_e3=w3(ks[4]), b_e3=b(ks[5]),
        w_d1=w3(ks[6]), b_d1=b(ks[7]),
        w_d2=w3(ks[8]), b_d2=b(ks[9]),
        w_d3=w3(ks[10]), b_d3=b(ks[11]),
        wf2=w1(ks[12]), b_f2=b(ks[13]),   # fusion2_2: 1x1 conv, 2C -> C
        wf3=w1(ks[14]), b_f3=b(ks[15]),   # fusion2_3: 1x1 conv, 2C -> C
    )


def encoder_decoder_forward(params, x_nchw):
    """Pallas forward of Encoder_decoder_block. x_nchw: (B, 20, H, W); H, W % 4 == 0."""
    B, C, H, W = x_nchw.shape
    assert C == CHANNEL
    assert H % 4 == 0 and W % 4 == 0, "two 2x2 max-pools need H, W divisible by 4"
    H2, W2, H4, W4 = H // 2, W // 2, H // 4, W // 4
    HW1, HW2, HW4 = H * W, H2 * W2, H4 * W4
    Cp = ((C + 7) // 8) * 8          # pad channels to a sublane multiple (20 -> 24)
    bf16 = jnp.bfloat16

    # activations: NCHW -> (B, Cp, H*W) with spatial flattened into lanes
    x = x_nchw.reshape(B, C, HW1).astype(jnp.float32)
    x = jnp.pad(x, ((0, 0), (0, Cp - C), (0, 0)))

    # parameters, repacked for the (Cout, Cin) @ (Cin, HW) kernel layout
    def conv_w(w_hwio):              # (3,3,Cin,Cout) -> (9, Cout, Cin), channel-padded
        w = jnp.transpose(w_hwio.reshape(9, C, C), (0, 2, 1))
        return jnp.pad(w, ((0, 0), (0, Cp - C), (0, Cp - C)))

    def col_bias(b):                 # (1, C) -> (Cp, 1)
        return jnp.pad(b.reshape(C, 1), ((0, Cp - C), (0, 0)))

    wconv = jnp.stack([conv_w(params[k]) for k in
                       ("w_e1", "w_e2", "w_e3", "w_d1", "w_d2", "w_d3")]).astype(bf16)
    bconv = jnp.stack([col_bias(params[k]) for k in
                       ("b_e1", "b_e2", "b_e3", "b_d1", "b_d2", "b_d3")]).astype(jnp.float32)

    def fus_w(w2c, rows):            # rows of the (2C, C) 1x1 weight -> (Cp, Cp) (Cout, Cin)
        return jnp.pad(w2c[rows].T, ((0, Cp - C), (0, Cp - C)))

    wfus = jnp.stack([fus_w(params["wf2"], slice(0, C)),      # skip branch (encoder2)
                      fus_w(params["wf2"], slice(C, 2 * C)),  # up(decoder1) branch
                      fus_w(params["wf3"], slice(0, C)),      # skip branch (encoder1)
                      fus_w(params["wf3"], slice(C, 2 * C))]  # up(decoder2) branch
                     ).astype(bf16)
    bfus = jnp.stack([col_bias(params["b_f2"]),
                      col_bias(params["b_f3"])]).astype(jnp.float32)

    # per-level tap operands: roll masks when the lane dim is 128-aligned,
    # otherwise 0/1 shift matrices for the MXU
    def tap_operand(h, w):
        if (h * w) % 128 == 0:
            return _tap_masks(h, w), True
        return _tap_shift_mats(h, w), False

    tap1, roll1 = tap_operand(H, W)
    tap2, roll2 = tap_operand(H2, W2)
    tap3, roll3 = tap_operand(H4, W4)

    sel1 = _pool_selectors(H, W)         # (4, HW1, HW2)
    sel2 = _pool_selectors(H2, W2)       # (4, HW2, HW4)
    up32 = _upsample_matrix(H4, W4)      # (HW4, HW2)
    up21 = _upsample_matrix(H2, W2)      # (HW2, HW1)

    kernel = _make_kernel(H, W, (roll1, roll2, roll3))

    def full_spec(a):
        n = a.ndim
        return pl.BlockSpec(a.shape, lambda b, _n=n: (0,) * _n)

    consts = (wconv, bconv, wfus, bfus, tap1, tap2, tap3, sel1, sel2, up32, up21)
    io_spec = pl.BlockSpec((1, Cp, HW1), lambda b: (b, 0, 0))

    out = pl.pallas_call(
        kernel,
        out_shape=jax.ShapeDtypeStruct((B, Cp, HW1), jnp.float32),
        grid=(B,),
        in_specs=[io_spec] + [full_spec(a) for a in consts],
        out_specs=io_spec,
        compiler_params=pltpu.CompilerParams(
            dimension_semantics=("parallel",)),
    )(x, *consts)

    return out[:, :C, :].reshape(B, C, H, W)


# ---------------------------------------------------------------------------
# Pure-JAX f32 reference (for correctness checking only)
# ---------------------------------------------------------------------------
def encoder_decoder_ref(params, x_nchw):
    x = jnp.transpose(x_nchw, (0, 2, 3, 1)).astype(jnp.float32)
    lr = lambda v: jnp.where(v > 0, v, 0.2 * v)

    def conv(a, w_hwio, b, pad):
        y = lax.conv_general_dilated(
            a, w_hwio, window_strides=(1, 1), padding=[(pad, pad), (pad, pad)],
            dimension_numbers=("NHWC", "HWIO", "NHWC"),
            precision=lax.Precision.HIGHEST)
        return lr(y + b.reshape(1, 1, 1, -1))

    pool = lambda a: lax.reduce_window(a, -jnp.inf, lax.max,
                                       (1, 2, 2, 1), (1, 2, 2, 1), "VALID")
    up = lambda a: jnp.repeat(jnp.repeat(a, 2, axis=1), 2, axis=2)   # nearest 2x

    e1 = conv(x, params["w_e1"], params["b_e1"], 1)
    p1 = pool(e1)
    e2 = conv(p1, params["w_e2"], params["b_e2"], 1)
    p2 = pool(e2)
    e3 = conv(p2, params["w_e3"], params["b_e3"], 1)
    d1 = conv(e3, params["w_d1"], params["b_d1"], 1)
    f2 = conv(jnp.concatenate([e2, up(d1)], axis=-1),
              params["wf2"].reshape(1, 1, *params["wf2"].shape), params["b_f2"], 0)
    d2 = conv(f2, params["w_d2"], params["b_d2"], 1)
    f3 = conv(jnp.concatenate([e1, up(d2)], axis=-1),
              params["wf3"].reshape(1, 1, *params["wf3"].shape), params["b_f3"], 0)
    d3 = conv(f3, params["w_d3"], params["b_d3"], 1)
    return jnp.transpose(d3 + x, (0, 3, 1, 2))


# ---------------------------------------------------------------------------
if __name__ == "__main__":
    B, C, H, W = 2, CHANNEL, 16, 16

    key = jax.random.PRNGKey(0)
    kx, kp = jax.random.split(key)
    x = jax.random.normal(kx, (B, C, H, W), jnp.float32)          # PyTorch-style NCHW
    params = init_params(kp, C)

    out = jax.block_until_ready(encoder_decoder_forward(params, x))
    ref = encoder_decoder_ref(params, x)

    assert out.shape == (B, C, H, W)
    # Kernel matmuls use bf16 operands on the MXU with f32 accumulation; the
    # reference is pure f32 HIGHEST, so allow bf16-level tolerance over the
    # 8-matmul-deep chain.
    max_err = float(jnp.max(jnp.abs(out - ref)))
    assert max_err < 1e-1, f"mismatch vs f32 reference, max abs err={max_err}"

    print("KERNEL_OK")
</pallas_src>

<mosaic_0001>
module attributes {stable_mosaic.version = 11 : i64} {
  func.func @kernel(%arg0: i32, %arg1: memref<1x24x256xf32, #tpu.memory_space<vmem>>, %arg2: memref<6x9x24x24xbf16, #tpu.memory_space<vmem>>, %arg3: memref<6x24x1xf32, #tpu.memory_space<vmem>>, %arg4: memref<4x24x24xbf16, #tpu.memory_space<vmem>>, %arg5: memref<2x24x1xf32, #tpu.memory_space<vmem>>, %arg6: memref<9x1x256xf32, #tpu.memory_space<vmem>>, %arg7: memref<9x64x64xbf16, #tpu.memory_space<vmem>>, %arg8: memref<9x16x16xbf16, #tpu.memory_space<vmem>>, %arg9: memref<4x256x64xbf16, #tpu.memory_space<vmem>>, %arg10: memref<4x64x16xbf16, #tpu.memory_space<vmem>>, %arg11: memref<16x64xbf16, #tpu.memory_space<vmem>>, %arg12: memref<64x256xbf16, #tpu.memory_space<vmem>>, %arg13: memref<1x24x256xf32, #tpu.memory_space<vmem>>) attributes {dimension_semantics = [#tpu.dimension_semantics<parallel>], iteration_bounds = array<i64: 2>, scalar_prefetch = 0 : i64, scratch_operands = 0 : i64, tpu.core_type = #tpu.core_type<tc>, window_params = [{transform_indices = @transform_0, window_bounds = array<i64: 1, 24, 256>}, {pipeline_mode = #tpu.pipeline_mode<synchronous>, transform_indices = @transform_1, window_bounds = array<i64: 6, 9, 24, 24>}, {pipeline_mode = #tpu.pipeline_mode<synchronous>, transform_indices = @transform_2, window_bounds = array<i64: 6, 24, 1>}, {pipeline_mode = #tpu.pipeline_mode<synchronous>, transform_indices = @transform_3, window_bounds = array<i64: 4, 24, 24>}, {pipeline_mode = #tpu.pipeline_mode<synchronous>, transform_indices = @transform_4, window_bounds = array<i64: 2, 24, 1>}, {pipeline_mode = #tpu.pipeline_mode<synchronous>, transform_indices = @transform_5, window_bounds = array<i64: 9, 1, 256>}, {pipeline_mode = #tpu.pipeline_mode<synchronous>, transform_indices = @transform_6, window_bounds = array<i64: 9, 64, 64>}, {pipeline_mode = #tpu.pipeline_mode<synchronous>, transform_indices = @transform_7, window_bounds = array<i64: 9, 16, 16>}, {pipeline_mode = #tpu.pipeline_mode<synchronous>, transform_indices = @transform_8, window_bounds = array<i64: 4, 256, 64>}, {pipeline_mode = #tpu.pipeline_mode<synchronous>, transform_indices = @transform_9, window_bounds = array<i64: 4, 64, 16>}, {pipeline_mode = #tpu.pipeline_mode<synchronous>, transform_indices = @transform_10, window_bounds = array<i64: 16, 64>}, {pipeline_mode = #tpu.pipeline_mode<synchronous>, transform_indices = @transform_11, window_bounds = array<i64: 64, 256>}, {transform_indices = @transform_12, window_bounds = array<i64: 1, 24, 256>}]} {
    %c0 = arith.constant 0 : index
    %c0_0 = arith.constant 0 : index
    %c0_1 = arith.constant 0 : index
    %0 = vector.load %arg1[%c0, %c0_0, %c0_1] : memref<1x24x256xf32, #tpu.memory_space<vmem>>, vector<1x24x256xf32>
    %1 = vector.shape_cast %0 : vector<1x24x256xf32> to vector<24x256xf32>
    %2 = arith.truncf %1 : vector<24x256xf32> to vector<24x256xbf16>
    %c0_2 = arith.constant 0 : index
    %c0_3 = arith.constant 0 : index
    %c0_4 = arith.constant 0 : index
    %c0_5 = arith.constant 0 : index
    %3 = vector.load %arg2[%c0_2, %c0_3, %c0_4, %c0_5] : memref<6x9x24x24xbf16, #tpu.memory_space<vmem>>, vector<1x1x24x24xbf16>
    %4 = vector.shape_cast %3 : vector<1x1x24x24xbf16> to vector<24x24xbf16>
    %c17_i32 = arith.constant 17 : i32
    %5 = tpu.dynamic_rotate %1 by %c17_i32 dim 1 : vector<24x256xf32>, i32 -> vector<24x256xf32>
    %c0_6 = arith.constant 0 : index
    %c0_7 = arith.constant 0 : index
    %c0_8 = arith.constant 0 : index
    %6 = vector.load %arg6[%c0_6, %c0_7, %c0_8] : memref<9x1x256xf32, #tpu.memory_space<vmem>>, vector<1x1x256xf32>
    %7 = vector.shape_cast %6 : vector<1x1x256xf32> to vector<1x256xf32>
    %8 = vector.broadcast %7 : vector<1x256xf32> to vector<24x256xf32>
    %9 = arith.mulf %5, %8 : vector<24x256xf32>
    %10 = arith.truncf %9 : vector<24x256xf32> to vector<24x256xbf16>
    %cst = arith.constant dense<0.000000e+00> : vector<24x256xf32>
    %11 = tpu.matmul %4, %10, %cst {dimension_numbers = #tpu.dot_dimension_numbers<[1], [0], [0], [1], [0, 0, 1, 1], [], []>} : vector<24x24xbf16>, vector<24x256xbf16>, vector<24x256xf32> -> vector<24x256xf32>
    %c0_9 = arith.constant 0 : index
    %c1 = arith.constant 1 : index
    %c0_10 = arith.constant 0 : index
    %c0_11 = arith.constant 0 : index
    %12 = vector.load %arg2[%c0_9, %c1, %c0_10, %c0_11] : memref<6x9x24x24xbf16, #tpu.memory_space<vmem>>, vector<1x1x24x24xbf16>
    %13 = vector.shape_cast %12 : vector<1x1x24x24xbf16> to vector<24x24xbf16>
    %c16_i32 = arith.constant 16 : i32
    %14 = tpu.dynamic_rotate %1 by %c16_i32 dim 1 : vector<24x256xf32>, i32 -> vector<24x256xf32>
    %c1_12 = arith.constant 1 : index
    %c0_13 = arith.constant 0 : index
    %c0_14 = arith.constant 0 : index
    %15 = vector.load %arg6[%c1_12, %c0_13, %c0_14] : memref<9x1x256xf32, #tpu.memory_space<vmem>>, vector<1x1x256xf32>
    %16 = vector.shape_cast %15 : vector<1x1x256xf32> to vector<1x256xf32>
    %17 = vector.broadcast %16 : vector<1x256xf32> to vector<24x256xf32>
    %18 = arith.mulf %14, %17 : vector<24x256xf32>
    %19 = arith.truncf %18 : vector<24x256xf32> to vector<24x256xbf16>
    %cst_15 = arith.constant dense<0.000000e+00> : vector<24x256xf32>
    %20 = tpu.matmul %13, %19, %cst_15 {dimension_numbers = #tpu.dot_dimension_numbers<[1], [0], [0], [1], [0, 0, 1, 1], [], []>} : vector<24x24xbf16>, vector<24x256xbf16>, vector<24x256xf32> -> vector<24x256xf32>
    %21 = arith.addf %11, %20 : vector<24x256xf32>
    %c0_16 = arith.constant 0 : index
    %c2 = arith.constant 2 : index
    %c0_17 = arith.constant 0 : index
    %c0_18 = arith.constant 0 : index
    %22 = vector.load %arg2[%c0_16, %c2, %c0_17, %c0_18] : memref<6x9x24x24xbf16, #tpu.memory_space<vmem>>, vector<1x1x24x24xbf16>
    %23 = vector.shape_cast %22 : vector<1x1x24x24xbf16> to vector<24x24xbf16>
    %c15_i32 = arith.constant 15 : i32
    %24 = tpu.dynamic_rotate %1 by %c15_i32 dim 1 : vector<24x256xf32>, i32 -> vector<24x256xf32>
    %c2_19 = arith.constant 2 : index
    %c0_20 = arith.constant 0 : index
    %c0_21 = arith.constant 0 : index
    %25 = vector.load %arg6[%c2_19, %c0_20, %c0_21] : memref<9x1x256xf32, #tpu.memory_space<vmem>>, vector<1x1x256xf32>
    %26 = vector.shape_cast %25 : vector<1x1x256xf32> to vector<1x256xf32>
    %27 = vector.broadcast %26 : vector<1x256xf32> to vector<24x256xf32>
    %28 = arith.mulf %24, %27 : vector<24x256xf32>
    %29 = arith.truncf %28 : vector<24x256xf32> to vector<24x256xbf16>
    %cst_22 = arith.constant dense<0.000000e+00> : vector<24x256xf32>
    %30 = tpu.matmul %23, %29, %cst_22 {dimension_numbers = #tpu.dot_dimension_numbers<[1], [0], [0], [1], [0, 0, 1, 1], [], []>} : vector<24x24xbf16>, vector<24x256xbf16>, vector<24x256xf32> -> vector<24x256xf32>
    %31 = arith.addf %21, %30 : vector<24x256xf32>
    %c0_23 = arith.constant 0 : index
    %c3 = arith.constant 3 : index
    %c0_24 = arith.constant 0 : index
    %c0_25 = arith.constant 0 : index
    %32 = vector.load %arg2[%c0_23, %c3, %c0_24, %c0_25] : memref<6x9x24x24xbf16, #tpu.memory_space<vmem>>, vector<1x1x24x24xbf16>
    %33 = vector.shape_cast %32 : vector<1x1x24x24xbf16> to vector<24x24xbf16>
    %c1_i32 = arith.constant 1 : i32
    %34 = tpu.dynamic_rotate %1 by %c1_i32 dim 1 : vector<24x256xf32>, i32 -> vector<24x256xf32>
    %c3_26 = arith.constant 3 : index
    %c0_27 = arith.constant 0 : index
    %c0_28 = arith.constant 0 : index
    %35 = vector.load %arg6[%c3_26, %c0_27, %c0_28] : memref<9x1x256xf32, #tpu.memory_space<vmem>>, vector<1x1x256xf32>
    %36 = vector.shape_cast %35 : vector<1x1x256xf32> to vector<1x256xf32>
    %37 = vector.broadcast %36 : vector<1x256xf32> to vector<24x256xf32>
    %38 = arith.mulf %34, %37 : vector<24x256xf32>
    %39 = arith.truncf %38 : vector<24x256xf32> to vector<24x256xbf16>
    %cst_29 = arith.constant dense<0.000000e+00> : vector<24x256xf32>
    %40 = tpu.matmul %33, %39, %cst_29 {dimension_numbers = #tpu.dot_dimension_numbers<[1], [0], [0], [1], [0, 0, 1, 1], [], []>} : vector<24x24xbf16>, vector<24x256xbf16>, vector<24x256xf32> -> vector<24x256xf32>
    %41 = arith.addf %31, %40 : vector<24x256xf32>
    %c0_30 = arith.constant 0 : index
    %c4 = arith.constant 4 : index
    %c0_31 = arith.constant 0 : index
    %c0_32 = arith.constant 0 : index
    %42 = vector.load %arg2[%c0_30, %c4, %c0_31, %c0_32] : memref<6x9x24x24xbf16, #tpu.memory_space<vmem>>, vector<1x1x24x24xbf16>
    %43 = vector.shape_cast %42 : vector<1x1x24x24xbf16> to vector<24x24xbf16>
    %cst_33 = arith.constant dense<0.000000e+00> : vector<24x256xf32>
    %44 = tpu.matmul %43, %2, %cst_33 {dimension_numbers = #tpu.dot_dimension_numbers<[1], [0], [0], [1], [0, 0, 1, 1], [], []>} : vector<24x24xbf16>, vector<24x256xbf16>, vector<24x256xf32> -> vector<24x256xf32>
    %45 = arith.addf %41, %44 : vector<24x256xf32>
    %c0_34 = arith.constant 0 : index
    %c5 = arith.constant 5 : index
    %c0_35 = arith.constant 0 : index
    %c0_36 = arith.constant 0 : index
    %46 = vector.load %arg2[%c0_34, %c5, %c0_35, %c0_36] : memref<6x9x24x24xbf16, #tpu.memory_space<vmem>>, vector<1x1x24x24xbf16>
    %47 = vector.shape_cast %46 : vector<1x1x24x24xbf16> to vector<24x24xbf16>
    %c255_i32 = arith.constant 255 : i32
    %48 = tpu.dynamic_rotate %1 by %c255_i32 dim 1 : vector<24x256xf32>, i32 -> vector<24x256xf32>
    %c5_37 = arith.constant 5 : index
    %c0_38 = arith.constant 0 : index
    %c0_39 = arith.constant 0 : index
    %49 = vector.load %arg6[%c5_37, %c0_38, %c0_39] : memref<9x1x256xf32, #tpu.memory_space<vmem>>, vector<1x1x256xf32>
    %50 = vector.shape_cast %49 : vector<1x1x256xf32> to vector<1x256xf32>
    %51 = vector.broadcast %50 : vector<1x256xf32> to vector<24x256xf32>
    %52 = arith.mulf %48, %51 : vector<24x256xf32>
    %53 = arith.truncf %52 : vector<24x256xf32> to vector<24x256xbf16>
    %cst_40 = arith.constant dense<0.000000e+00> : vector<24x256xf32>
    %54 = tpu.matmul %47, %53, %cst_40 {dimension_numbers = #tpu.dot_dimension_numbers<[1], [0], [0], [1], [0, 0, 1, 1], [], []>} : vector<24x24xbf16>, vector<24x256xbf16>, vector<24x256xf32> -> vector<24x256xf32>
    %55 = arith.addf %45, %54 : vector<24x256xf32>
    %c0_41 = arith.constant 0 : index
    %c6 = arith.constant 6 : index
    %c0_42 = arith.constant 0 : index
    %c0_43 = arith.constant 0 : index
    %56 = vector.load %arg2[%c0_41, %c6, %c0_42, %c0_43] : memref<6x9x24x24xbf16, #tpu.memory_space<vmem>>, vector<1x1x24x24xbf16>
    %57 = vector.shape_cast %56 : vector<1x1x24x24xbf16> to vector<24x24xbf16>
    %c241_i32 = arith.constant 241 : i32
    %58 = tpu.dynamic_rotate %1 by %c241_i32 dim 1 : vector<24x256xf32>, i32 -> vector<24x256xf32>
    %c6_44 = arith.constant 6 : index
    %c0_45 = arith.constant 0 : index
    %c0_46 = arith.constant 0 : index
    %59 = vector.load %arg6[%c6_44, %c0_45, %c0_46] : memref<9x1x256xf32, #tpu.memory_space<vmem>>, vector<1x1x256xf32>
    %60 = vector.shape_cast %59 : vector<1x1x256xf32> to vector<1x256xf32>
    %61 = vector.broadcast %60 : vector<1x256xf32> to vector<24x256xf32>
    %62 = arith.mulf %58, %61 : vector<24x256xf32>
    %63 = arith.truncf %62 : vector<24x256xf32> to vector<24x256xbf16>
    %cst_47 = arith.constant dense<0.000000e+00> : vector<24x256xf32>
    %64 = tpu.matmul %57, %63, %cst_47 {dimension_numbers = #tpu.dot_dimension_numbers<[1], [0], [0], [1], [0, 0, 1, 1], [], []>} : vector<24x24xbf16>, vector<24x256xbf16>, vector<24x256xf32> -> vector<24x256xf32>
    %65 = arith.addf %55, %64 : vector<24x256xf32>
    %c0_48 = arith.constant 0 : index
    %c7 = arith.constant 7 : index
    %c0_49 = arith.constant 0 : index
    %c0_50 = arith.constant 0 : index
    %66 = vector.load %arg2[%c0_48, %c7, %c0_49, %c0_50] : memref<6x9x24x24xbf16, #tpu.memory_space<vmem>>, vector<1x1x24x24xbf16>
    %67 = vector.shape_cast %66 : vector<1x1x24x24xbf16> to vector<24x24xbf16>
    %c240_i32 = arith.constant 240 : i32
    %68 = tpu.dynamic_rotate %1 by %c240_i32 dim 1 : vector<24x256xf32>, i32 -> vector<24x256xf32>
    %c7_51 = arith.constant 7 : index
    %c0_52 = arith.constant 0 : index
    %c0_53 = arith.constant 0 : index
    %69 = vector.load %arg6[%c7_51, %c0_52, %c0_53] : memref<9x1x256xf32, #tpu.memory_space<vmem>>, vector<1x1x256xf32>
    %70 = vector.shape_cast %69 : vector<1x1x256xf32> to vector<1x256xf32>
    %71 = vector.broadcast %70 : vector<1x256xf32> to vector<24x256xf32>
    %72 = arith.mulf %68, %71 : vector<24x256xf32>
    %73 = arith.truncf %72 : vector<24x256xf32> to vector<24x256xbf16>
    %cst_54 = arith.constant dense<0.000000e+00> : vector<24x256xf32>
    %74 = tpu.matmul %67, %73, %cst_54 {dimension_numbers = #tpu.dot_dimension_numbers<[1], [0], [0], [1], [0, 0, 1, 1], [], []>} : vector<24x24xbf16>, vector<24x256xbf16>, vector<24x256xf32> -> vector<24x256xf32>
    %75 = arith.addf %65, %74 : vector<24x256xf32>
    %c0_55 = arith.constant 0 : index
    %c8 = arith.constant 8 : index
    %c0_56 = arith.constant 0 : index
    %c0_57 = arith.constant 0 : index
    %76 = vector.load %arg2[%c0_55, %c8, %c0_56, %c0_57] : memref<6x9x24x24xbf16, #tpu.memory_space<vmem>>, vector<1x1x24x24xbf16>
    %77 = vector.shape_cast %76 : vector<1x1x24x24xbf16> to vector<24x24xbf16>
    %c239_i32 = arith.constant 239 : i32
    %78 = tpu.dynamic_rotate %1 by %c239_i32 dim 1 : vector<24x256xf32>, i32 -> vector<24x256xf32>
    %c8_58 = arith.constant 8 : index
    %c0_59 = arith.constant 0 : index
    %c0_60 = arith.constant 0 : index
    %79 = vector.load %arg6[%c8_58, %c0_59, %c0_60] : memref<9x1x256xf32, #tpu.memory_space<vmem>>, vector<1x1x256xf32>
    %80 = vector.shape_cast %79 : vector<1x1x256xf32> to vector<1x256xf32>
    %81 = vector.broadcast %80 : vector<1x256xf32> to vector<24x256xf32>
    %82 = arith.mulf %78, %81 : vector<24x256xf32>
    %83 = arith.truncf %82 : vector<24x256xf32> to vector<24x256xbf16>
    %cst_61 = arith.constant dense<0.000000e+00> : vector<24x256xf32>
    %84 = tpu.matmul %77, %83, %cst_61 {dimension_numbers = #tpu.dot_dimension_numbers<[1], [0], [0], [1], [0, 0, 1, 1], [], []>} : vector<24x24xbf16>, vector<24x256xbf16>, vector<24x256xf32> -> vector<24x256xf32>
    %85 = arith.addf %75, %84 : vector<24x256xf32>
    %c0_62 = arith.constant 0 : index
    %c0_63 = arith.constant 0 : index
    %c0_64 = arith.constant 0 : index
    %86 = vector.load %arg3[%c0_62, %c0_63, %c0_64] : memref<6x24x1xf32, #tpu.memory_space<vmem>>, vector<1x24x1xf32>
    %87 = vector.shape_cast %86 : vector<1x24x1xf32> to vector<24x1xf32>
    %88 = vector.broadcast %87 : vector<24x1xf32> to vector<24x256xf32>
    %89 = arith.addf %85, %88 : vector<24x256xf32>
    %cst_65 = arith.constant 2.000000e-01 : f32
    %90 = vector.broadcast %cst_65 : f32 to vector<24x256xf32>
    %91 = arith.mulf %90, %89 : vector<24x256xf32>
    %92 = arith.maximumf %89, %91 : vector<24x256xf32>
    %93 = arith.truncf %92 : vector<24x256xf32> to vector<24x256xbf16>
    %c0_66 = arith.constant 0 : index
    %c0_67 = arith.constant 0 : index
    %c0_68 = arith.constant 0 : index
    %94 = vector.load %arg9[%c0_66, %c0_67, %c0_68] : memref<4x256x64xbf16, #tpu.memory_space<vmem>>, vector<1x256x64xbf16>
    %95 = vector.shape_cast %94 : vector<1x256x64xbf16> to vector<256x64xbf16>
    %cst_69 = arith.constant dense<0.000000e+00> : vector<24x64xf32>
    %96 = tpu.matmul %93, %95, %cst_69 {dimension_numbers = #tpu.dot_dimension_numbers<[1], [0], [0], [1], [0, 0, 1, 1], [], []>} : vector<24x256xbf16>, vector<256x64xbf16>, vector<24x64xf32> -> vector<24x64xf32>
    %c1_70 = arith.constant 1 : index
    %c0_71 = arith.constant 0 : index
    %c0_72 = arith.constant 0 : index
    %97 = vector.load %arg9[%c1_70, %c0_71, %c0_72] : memref<4x256x64xbf16, #tpu.memory_space<vmem>>, vector<1x256x64xbf16>
    %98 = vector.shape_cast %97 : vector<1x256x64xbf16> to vector<256x64xbf16>
    %cst_73 = arith.constant dense<0.000000e+00> : vector<24x64xf32>
    %99 = tpu.matmul %93, %98, %cst_73 {dimension_numbers = #tpu.dot_dimension_numbers<[1], [0], [0], [1], [0, 0, 1, 1], [], []>} : vector<24x256xbf16>, vector<256x64xbf16>, vector<24x64xf32> -> vector<24x64xf32>
    %c2_74 = arith.constant 2 : index
    %c0_75 = arith.constant 0 : index
    %c0_76 = arith.constant 0 : index
    %100 = vector.load %arg9[%c2_74, %c0_75, %c0_76] : memref<4x256x64xbf16, #tpu.memory_space<vmem>>, vector<1x256x64xbf16>
    %101 = vector.shape_cast %100 : vector<1x256x64xbf16> to vector<256x64xbf16>
    %cst_77 = arith.constant dense<0.000000e+00> : vector<24x64xf32>
    %102 = tpu.matmul %93, %101, %cst_77 {dimension_numbers = #tpu.dot_dimension_numbers<[1], [0], [0], [1], [0, 0, 1, 1], [], []>} : vector<24x256xbf16>, vector<256x64xbf16>, vector<24x64xf32> -> vector<24x64xf32>
    %c3_78 = arith.constant 3 : index
    %c0_79 = arith.constant 0 : index
    %c0_80 = arith.constant 0 : index
    %103 = vector.load %arg9[%c3_78, %c0_79, %c0_80] : memref<4x256x64xbf16, #tpu.memory_space<vmem>>, vector<1x256x64xbf16>
    %104 = vector.shape_cast %103 : vector<1x256x64xbf16> to vector<256x64xbf16>
    %cst_81 = arith.constant dense<0.000000e+00> : vector<24x64xf32>
    %105 = tpu.matmul %93, %104, %cst_81 {dimension_numbers = #tpu.dot_dimension_numbers<[1], [0], [0], [1], [0, 0, 1, 1], [], []>} : vector<24x256xbf16>, vector<256x64xbf16>, vector<24x64xf32> -> vector<24x64xf32>
    %106 = arith.maximumf %96, %99 : vector<24x64xf32>
    %107 = arith.maximumf %102, %105 : vector<24x64xf32>
    %108 = arith.maximumf %106, %107 : vector<24x64xf32>
    %109 = arith.truncf %108 : vector<24x64xf32> to vector<24x64xbf16>
    %c1_82 = arith.constant 1 : index
    %c0_83 = arith.constant 0 : index
    %c0_84 = arith.constant 0 : index
    %c0_85 = arith.constant 0 : index
    %110 = vector.load %arg2[%c1_82, %c0_83, %c0_84, %c0_85] : memref<6x9x24x24xbf16, #tpu.memory_space<vmem>>, vector<1x1x24x24xbf16>
    %111 = vector.shape_cast %110 : vector<1x1x24x24xbf16> to vector<24x24xbf16>
    %c0_86 = arith.constant 0 : index
    %c0_87 = arith.constant 0 : index
    %c0_88 = arith.constant 0 : index
    %112 = vector.load %arg7[%c0_86, %c0_87, %c0_88] : memref<9x64x64xbf16, #tpu.memory_space<vmem>>, vector<1x64x64xbf16>
    %113 = vector.shape_cast %112 : vector<1x64x64xbf16> to vector<64x64xbf16>
    %cst_89 = arith.constant dense<0.000000e+00> : vector<24x64xf32>
    %114 = tpu.matmul %109, %113, %cst_89 {dimension_numbers = #tpu.dot_dimension_numbers<[1], [0], [0], [1], [0, 0, 1, 1], [], []>} : vector<24x64xbf16>, vector<64x64xbf16>, vector<24x64xf32> -> vector<24x64xf32>
    %115 = arith.truncf %114 : vector<24x64xf32> to vector<24x64xbf16>
    %cst_90 = arith.constant dense<0.000000e+00> : vector<24x64xf32>
    %116 = tpu.matmul %111, %115, %cst_90 {dimension_numbers = #tpu.dot_dimension_numbers<[1], [0], [0], [1], [0, 0, 1, 1], [], []>} : vector<24x24xbf16>, vector<24x64xbf16>, vector<24x64xf32> -> vector<24x64xf32>
    %c1_91 = arith.constant 1 : index
    %c1_92 = arith.constant 1 : index
    %c0_93 = arith.constant 0 : index
    %c0_94 = arith.constant 0 : index
    %117 = vector.load %arg2[%c1_91, %c1_92, %c0_93, %c0_94] : memref<6x9x24x24xbf16, #tpu.memory_space<vmem>>, vector<1x1x24x24xbf16>
    %118 = vector.shape_cast %117 : vector<1x1x24x24xbf16> to vector<24x24xbf16>
    %c1_95 = arith.constant 1 : index
    %c0_96 = arith.constant 0 : index
    %c0_97 = arith.constant 0 : index
    %119 = vector.load %arg7[%c1_95, %c0_96, %c0_97] : memref<9x64x64xbf16, #tpu.memory_space<vmem>>, vector<1x64x64xbf16>
    %120 = vector.shape_cast %119 : vector<1x64x64xbf16> to vector<64x64xbf16>
    %cst_98 = arith.constant dense<0.000000e+00> : vector<24x64xf32>
    %121 = tpu.matmul %109, %120, %cst_98 {dimension_numbers = #tpu.dot_dimension_numbers<[1], [0], [0], [1], [0, 0, 1, 1], [], []>} : vector<24x64xbf16>, vector<64x64xbf16>, vector<24x64xf32> -> vector<24x64xf32>
    %122 = arith.truncf %121 : vector<24x64xf32> to vector<24x64xbf16>
    %cst_99 = arith.constant dense<0.000000e+00> : vector<24x64xf32>
    %123 = tpu.matmul %118, %122, %cst_99 {dimension_numbers = #tpu.dot_dimension_numbers<[1], [0], [0], [1], [0, 0, 1, 1], [], []>} : vector<24x24xbf16>, vector<24x64xbf16>, vector<24x64xf32> -> vector<24x64xf32>
    %124 = arith.addf %116, %123 : vector<24x64xf32>
    %c1_100 = arith.constant 1 : index
    %c2_101 = arith.constant 2 : index
    %c0_102 = arith.constant 0 : index
    %c0_103 = arith.constant 0 : index
    %125 = vector.load %arg2[%c1_100, %c2_101, %c0_102, %c0_103] : memref<6x9x24x24xbf16, #tpu.memory_space<vmem>>, vector<1x1x24x24xbf16>
    %126 = vector.shape_cast %125 : vector<1x1x24x24xbf16> to vector<24x24xbf16>
    %c2_104 = arith.constant 2 : index
    %c0_105 = arith.constant 0 : index
    %c0_106 = arith.constant 0 : index
    %127 = vector.load %arg7[%c2_104, %c0_105, %c0_106] : memref<9x64x64xbf16, #tpu.memory_space<vmem>>, vector<1x64x64xbf16>
    %128 = vector.shape_cast %127 : vector<1x64x64xbf16> to vector<64x64xbf16>
    %cst_107 = arith.constant dense<0.000000e+00> : vector<24x64xf32>
    %129 = tpu.matmul %109, %128, %cst_107 {dimension_numbers = #tpu.dot_dimension_numbers<[1], [0], [0], [1], [0, 0, 1, 1], [], []>} : vector<24x64xbf16>, vector<64x64xbf16>, vector<24x64xf32> -> vector<24x64xf32>
    %130 = arith.truncf %129 : vector<24x64xf32> to vector<24x64xbf16>
    %cst_108 = arith.constant dense<0.000000e+00> : vector<24x64xf32>
    %131 = tpu.matmul %126, %130, %cst_108 {dimension_numbers = #tpu.dot_dimension_numbers<[1], [0], [0], [1], [0, 0, 1, 1], [], []>} : vector<24x24xbf16>, vector<24x64xbf16>, vector<24x64xf32> -> vector<24x64xf32>
    %132 = arith.addf %124, %131 : vector<24x64xf32>
    %c1_109 = arith.constant 1 : index
    %c3_110 = arith.constant 3 : index
    %c0_111 = arith.constant 0 : index
    %c0_112 = arith.constant 0 : index
    %133 = vector.load %arg2[%c1_109, %c3_110, %c0_111, %c0_112] : memref<6x9x24x24xbf16, #tpu.memory_space<vmem>>, vector<1x1x24x24xbf16>
    %134 = vector.shape_cast %133 : vector<1x1x24x24xbf16> to vector<24x24xbf16>
    %c3_113 = arith.constant 3 : index
    %c0_114 = arith.constant 0 : index
    %c0_115 = arith.constant 0 : index
    %135 = vector.load %arg7[%c3_113, %c0_114, %c0_115] : memref<9x64x64xbf16, #tpu.memory_space<vmem>>, vector<1x64x64xbf16>
    %136 = vector.shape_cast %135 : vector<1x64x64xbf16> to vector<64x64xbf16>
    %cst_116 = arith.constant dense<0.000000e+00> : vector<24x64xf32>
    %137 = tpu.matmul %109, %136, %cst_116 {dimension_numbers = #tpu.dot_dimension_numbers<[1], [0], [0], [1], [0, 0, 1, 1], [], []>} : vector<24x64xbf16>, vector<64x64xbf16>, vector<24x64xf32> -> vector<24x64xf32>
    %138 = arith.truncf %137 : vector<24x64xf32> to vector<24x64xbf16>
    %cst_117 = arith.constant dense<0.000000e+00> : vector<24x64xf32>
    %139 = tpu.matmul %134, %138, %cst_117 {dimension_numbers = #tpu.dot_dimension_numbers<[1], [0], [0], [1], [0, 0, 1, 1], [], []>} : vector<24x24xbf16>, vector<24x64xbf16>, vector<24x64xf32> -> vector<24x64xf32>
    %140 = arith.addf %132, %139 : vector<24x64xf32>
    %c1_118 = arith.constant 1 : index
    %c4_119 = arith.constant 4 : index
    %c0_120 = arith.constant 0 : index
    %c0_121 = arith.constant 0 : index
    %141 = vector.load %arg2[%c1_118, %c4_119, %c0_120, %c0_121] : memref<6x9x24x24xbf16, #tpu.memory_space<vmem>>, vector<1x1x24x24xbf16>
    %142 = vector.shape_cast %141 : vector<1x1x24x24xbf16> to vector<24x24xbf16>
    %c4_122 = arith.constant 4 : index
    %c0_123 = arith.constant 0 : index
    %c0_124 = arith.constant 0 : index
    %143 = vector.load %arg7[%c4_122, %c0_123, %c0_124] : memref<9x64x64xbf16, #tpu.memory_space<vmem>>, vector<1x64x64xbf16>
    %144 = vector.shape_cast %143 : vector<1x64x64xbf16> to vector<64x64xbf16>
    %cst_125 = arith.constant dense<0.000000e+00> : vector<24x64xf32>
    %145 = tpu.matmul %109, %144, %cst_125 {dimension_numbers = #tpu.dot_dimension_numbers<[1], [0], [0], [1], [0, 0, 1, 1], [], []>} : vector<24x64xbf16>, vector<64x64xbf16>, vector<24x64xf32> -> vector<24x64xf32>
    %146 = arith.truncf %145 : vector<24x64xf32> to vector<24x64xbf16>
    %cst_126 = arith.constant dense<0.000000e+00> : vector<24x64xf32>
    %147 = tpu.matmul %142, %146, %cst_126 {dimension_numbers = #tpu.dot_dimension_numbers<[1], [0], [0], [1], [0, 0, 1, 1], [], []>} : vector<24x24xbf16>, vector<24x64xbf16>, vector<24x64xf32> -> vector<24x64xf32>
    %148 = arith.addf %140, %147 : vector<24x64xf32>
    %c1_127 = arith.constant 1 : index
    %c5_128 = arith.constant 5 : index
    %c0_129 = arith.constant 0 : index
    %c0_130 = arith.constant 0 : index
    %149 = vector.load %arg2[%c1_127, %c5_128, %c0_129, %c0_130] : memref<6x9x24x24xbf16, #tpu.memory_space<vmem>>, vector<1x1x24x24xbf16>
    %150 = vector.shape_cast %149 : vector<1x1x24x24xbf16> to vector<24x24xbf16>
    %c5_131 = arith.constant 5 : index
    %c0_132 = arith.constant 0 : index
    %c0_133 = arith.constant 0 : index
    %151 = vector.load %arg7[%c5_131, %c0_132, %c0_133] : memref<9x64x64xbf16, #tpu.memory_space<vmem>>, vector<1x64x64xbf16>
    %152 = vector.shape_cast %151 : vector<1x64x64xbf16> to vector<64x64xbf16>
    %cst_134 = arith.constant dense<0.000000e+00> : vector<24x64xf32>
    %153 = tpu.matmul %109, %152, %cst_134 {dimension_numbers = #tpu.dot_dimension_numbers<[1], [0], [0], [1], [0, 0, 1, 1], [], []>} : vector<24x64xbf16>, vector<64x64xbf16>, vector<24x64xf32> -> vector<24x64xf32>
    %154 = arith.truncf %153 : vector<24x64xf32> to vector<24x64xbf16>
    %cst_135 = arith.constant dense<0.000000e+00> : vector<24x64xf32>
    %155 = tpu.matmul %150, %154, %cst_135 {dimension_numbers = #tpu.dot_dimension_numbers<[1], [0], [0], [1], [0, 0, 1, 1], [], []>} : vector<24x24xbf16>, vector<24x64xbf16>, vector<24x64xf32> -> vector<24x64xf32>
    %156 = arith.addf %148, %155 : vector<24x64xf32>
    %c1_136 = arith.constant 1 : index
    %c6_137 = arith.constant 6 : index
    %c0_138 = arith.constant 0 : index
    %c0_139 = arith.constant 0 : index
    %157 = vector.load %arg2[%c1_136, %c6_137, %c0_138, %c0_139] : memref<6x9x24x24xbf16, #tpu.memory_space<vmem>>, vector<1x1x24x24xbf16>
    %158 = vector.shape_cast %157 : vector<1x1x24x24xbf16> to vector<24x24xbf16>
    %c6_140 = arith.constant 6 : index
    %c0_141 = arith.constant 0 : index
    %c0_142 = arith.constant 0 : index
    %159 = vector.load %arg7[%c6_140, %c0_141, %c0_142] : memref<9x64x64xbf16, #tpu.memory_space<vmem>>, vector<1x64x64xbf16>
    %160 = vector.shape_cast %159 : vector<1x64x64xbf16> to vector<64x64xbf16>
    %cst_143 = arith.constant dense<0.000000e+00> : vector<24x64xf32>
    %161 = tpu.matmul %109, %160, %cst_143 {dimension_numbers = #tpu.dot_dimension_numbers<[1], [0], [0], [1], [0, 0, 1, 1], [], []>} : vector<24x64xbf16>, vector<64x64xbf16>, vector<24x64xf32> -> vector<24x64xf32>
    %162 = arith.truncf %161 : vector<24x64xf32> to vector<24x64xbf16>
    %cst_144 = arith.constant dense<0.000000e+00> : vector<24x64xf32>
    %163 = tpu.matmul %158, %162, %cst_144 {dimension_numbers = #tpu.dot_dimension_numbers<[1], [0], [0], [1], [0, 0, 1, 1], [], []>} : vector<24x24xbf16>, vector<24x64xbf16>, vector<24x64xf32> -> vector<24x64xf32>
    %164 = arith.addf %156, %163 : vector<24x64xf32>
    %c1_145 = arith.constant 1 : index
    %c7_146 = arith.constant 7 : index
    %c0_147 = arith.constant 0 : index
    %c0_148 = arith.constant 0 : index
    %165 = vector.load %arg2[%c1_145, %c7_146, %c0_147, %c0_148] : memref<6x9x24x24xbf16, #tpu.memory_space<vmem>>, vector<1x1x24x24xbf16>
    %166 = vector.shape_cast %165 : vector<1x1x24x24xbf16> to vector<24x24xbf16>
    %c7_149 = arith.constant 7 : index
    %c0_150 = arith.constant 0 : index
    %c0_151 = arith.constant 0 : index
    %167 = vector.load %arg7[%c7_149, %c0_150, %c0_151] : memref<9x64x64xbf16, #tpu.memory_space<vmem>>, vector<1x64x64xbf16>
    %168 = vector.shape_cast %167 : vector<1x64x64xbf16> to vector<64x64xbf16>
    %cst_152 = arith.constant dense<0.000000e+00> : vector<24x64xf32>
    %169 = tpu.matmul %109, %168, %cst_152 {dimension_numbers = #tpu.dot_dimension_numbers<[1], [0], [0], [1], [0, 0, 1, 1], [], []>} : vector<24x64xbf16>, vector<64x64xbf16>, vector<24x64xf32> -> vector<24x64xf32>
    %170 = arith.truncf %169 : vector<24x64xf32> to vector<24x64xbf16>
    %cst_153 = arith.constant dense<0.000000e+00> : vector<24x64xf32>
    %171 = tpu.matmul %166, %170, %cst_153 {dimension_numbers = #tpu.dot_dimension_numbers<[1], [0], [0], [1], [0, 0, 1, 1], [], []>} : vector<24x24xbf16>, vector<24x64xbf16>, vector<24x64xf32> -> vector<24x64xf32>
    %172 = arith.addf %164, %171 : vector<24x64xf32>
    %c1_154 = arith.constant 1 : index
    %c8_155 = arith.constant 8 : index
    %c0_156 = arith.constant 0 : index
    %c0_157 = arith.constant 0 : index
    %173 = vector.load %arg2[%c1_154, %c8_155, %c0_156, %c0_157] : memref<6x9x24x24xbf16, #tpu.memory_space<vmem>>, vector<1x1x24x24xbf16>
    %174 = vector.shape_cast %173 : vector<1x1x24x24xbf16> to vector<24x24xbf16>
    %c8_158 = arith.constant 8 : index
    %c0_159 = arith.constant 0 : index
    %c0_160 = arith.constant 0 : index
    %175 = vector.load %arg7[%c8_158, %c0_159, %c0_160] : memref<9x64x64xbf16, #tpu.memory_space<vmem>>, vector<1x64x64xbf16>
    %176 = vector.shape_cast %175 : vector<1x64x64xbf16> to vector<64x64xbf16>
    %cst_161 = arith.constant dense<0.000000e+00> : vector<24x64xf32>
    %177 = tpu.matmul %109, %176, %cst_161 {dimension_numbers = #tpu.dot_dimension_numbers<[1], [0], [0], [1], [0, 0, 1, 1], [], []>} : vector<24x64xbf16>, vector<64x64xbf16>, vector<24x64xf32> -> vector<24x64xf32>
    %178 = arith.truncf %177 : vector<24x64xf32> to vector<24x64xbf16>
    %cst_162 = arith.constant dense<0.000000e+00> : vector<24x64xf32>
    %179 = tpu.matmul %174, %178, %cst_162 {dimension_numbers = #tpu.dot_dimension_numbers<[1], [0], [0], [1], [0, 0, 1, 1], [], []>} : vector<24x24xbf16>, vector<24x64xbf16>, vector<24x64xf32> -> vector<24x64xf32>
    %180 = arith.addf %172, %179 : vector<24x64xf32>
    %c1_163 = arith.constant 1 : index
    %c0_164 = arith.constant 0 : index
    %c0_165 = arith.constant 0 : index
    %181 = vector.load %arg3[%c1_163, %c0_164, %c0_165] : memref<6x24x1xf32, #tpu.memory_space<vmem>>, vector<1x24x1xf32>
    %182 = vector.shape_cast %181 : vector<1x24x1xf32> to vector<24x1xf32>
    %183 = vector.broadcast %182 : vector<24x1xf32> to vector<24x64xf32>
    %184 = arith.addf %180, %183 : vector<24x64xf32>
    %cst_166 = arith.constant 2.000000e-01 : f32
    %185 = vector.broadcast %cst_166 : f32 to vector<24x64xf32>
    %186 = arith.mulf %185, %184 : vector<24x64xf32>
    %187 = arith.maximumf %184, %186 : vector<24x64xf32>
    %188 = arith.truncf %187 : vector<24x64xf32> to vector<24x64xbf16>
    %c0_167 = arith.constant 0 : index
    %c0_168 = arith.constant 0 : index
    %c0_169 = arith.constant 0 : index
    %189 = vector.load %arg10[%c0_167, %c0_168, %c0_169] : memref<4x64x16xbf16, #tpu.memory_space<vmem>>, vector<1x64x16xbf16>
    %190 = vector.shape_cast %189 : vector<1x64x16xbf16> to vector<64x16xbf16>
    %cst_170 = arith.constant dense<0.000000e+00> : vector<24x16xf32>
    %191 = tpu.matmul %188, %190, %cst_170 {dimension_numbers = #tpu.dot_dimension_numbers<[1], [0], [0], [1], [0, 0, 1, 1], [], []>} : vector<24x64xbf16>, vector<64x16xbf16>, vector<24x16xf32> -> vector<24x16xf32>
    %c1_171 = arith.constant 1 : index
    %c0_172 = arith.constant 0 : index
    %c0_173 = arith.constant 0 : index
    %192 = vector.load %arg10[%c1_171, %c0_172, %c0_173] : memref<4x64x16xbf16, #tpu.memory_space<vmem>>, vector<1x64x16xbf16>
    %193 = vector.shape_cast %192 : vector<1x64x16xbf16> to vector<64x16xbf16>
    %cst_174 = arith.constant dense<0.000000e+00> : vector<24x16xf32>
    %194 = tpu.matmul %188, %193, %cst_174 {dimension_numbers = #tpu.dot_dimension_numbers<[1], [0], [0], [1], [0, 0, 1, 1], [], []>} : vector<24x64xbf16>, vector<64x16xbf16>, vector<24x16xf32> -> vector<24x16xf32>
    %c2_175 = arith.constant 2 : index
    %c0_176 = arith.constant 0 : index
    %c0_177 = arith.constant 0 : index
    %195 = vector.load %arg10[%c2_175, %c0_176, %c0_177] : memref<4x64x16xbf16, #tpu.memory_space<vmem>>, vector<1x64x16xbf16>
    %196 = vector.shape_cast %195 : vector<1x64x16xbf16> to vector<64x16xbf16>
    %cst_178 = arith.constant dense<0.000000e+00> : vector<24x16xf32>
    %197 = tpu.matmul %188, %196, %cst_178 {dimension_numbers = #tpu.dot_dimension_numbers<[1], [0], [0], [1], [0, 0, 1, 1], [], []>} : vector<24x64xbf16>, vector<64x16xbf16>, vector<24x16xf32> -> vector<24x16xf32>
    %c3_179 = arith.constant 3 : index
    %c0_180 = arith.constant 0 : index
    %c0_181 = arith.constant 0 : index
    %198 = vector.load %arg10[%c3_179, %c0_180, %c0_181] : memref<4x64x16xbf16, #tpu.memory_space<vmem>>, vector<1x64x16xbf16>
    %199 = vector.shape_cast %198 : vector<1x64x16xbf16> to vector<64x16xbf16>
    %cst_182 = arith.constant dense<0.000000e+00> : vector<24x16xf32>
    %200 = tpu.matmul %188, %199, %cst_182 {dimension_numbers = #tpu.dot_dimension_numbers<[1], [0], [0], [1], [0, 0, 1, 1], [], []>} : vector<24x64xbf16>, vector<64x16xbf16>, vector<24x16xf32> -> vector<24x16xf32>
    %201 = arith.maximumf %191, %194 : vector<24x16xf32>
    %202 = arith.maximumf %197, %200 : vector<24x16xf32>
    %203 = arith.maximumf %201, %202 : vector<24x16xf32>
    %204 = arith.truncf %203 : vector<24x16xf32> to vector<24x16xbf16>
    %c2_183 = arith.constant 2 : index
    %c0_184 = arith.constant 0 : index
    %c0_185 = arith.constant 0 : index
    %c0_186 = arith.constant 0 : index
    %205 = vector.load %arg2[%c2_183, %c0_184, %c0_185, %c0_186] : memref<6x9x24x24xbf16, #tpu.memory_space<vmem>>, vector<1x1x24x24xbf16>
    %206 = vector.shape_cast %205 : vector<1x1x24x24xbf16> to vector<24x24xbf16>
    %c0_187 = arith.constant 0 : index
    %c0_188 = arith.constant 0 : index
    %c0_189 = arith.constant 0 : index
    %207 = vector.load %arg8[%c0_187, %c0_188, %c0_189] : memref<9x16x16xbf16, #tpu.memory_space<vmem>>, vector<1x16x16xbf16>
    %208 = vector.shape_cast %207 : vector<1x16x16xbf16> to vector<16x16xbf16>
    %cst_190 = arith.constant dense<0.000000e+00> : vector<24x16xf32>
    %209 = tpu.matmul %204, %208, %cst_190 {dimension_numbers = #tpu.dot_dimension_numbers<[1], [0], [0], [1], [0, 0, 1, 1], [], []>} : vector<24x16xbf16>, vector<16x16xbf16>, vector<24x16xf32> -> vector<24x16xf32>
    %210 = arith.truncf %209 : vector<24x16xf32> to vector<24x16xbf16>
    %cst_191 = arith.constant dense<0.000000e+00> : vector<24x16xf32>
    %211 = tpu.matmul %206, %210, %cst_191 {dimension_numbers = #tpu.dot_dimension_numbers<[1], [0], [0], [1], [0, 0, 1, 1], [], []>} : vector<24x24xbf16>, vector<24x16xbf16>, vector<24x16xf32> -> vector<24x16xf32>
    %c2_192 = arith.constant 2 : index
    %c1_193 = arith.constant 1 : index
    %c0_194 = arith.constant 0 : index
    %c0_195 = arith.constant 0 : index
    %212 = vector.load %arg2[%c2_192, %c1_193, %c0_194, %c0_195] : memref<6x9x24x24xbf16, #tpu.memory_space<vmem>>, vector<1x1x24x24xbf16>
    %213 = vector.shape_cast %212 : vector<1x1x24x24xbf16> to vector<24x24xbf16>
    %c1_196 = arith.constant 1 : index
    %c0_197 = arith.constant 0 : index
    %c0_198 = arith.constant 0 : index
    %214 = vector.load %arg8[%c1_196, %c0_197, %c0_198] : memref<9x16x16xbf16, #tpu.memory_space<vmem>>, vector<1x16x16xbf16>
    %215 = vector.shape_cast %214 : vector<1x16x16xbf16> to vector<16x16xbf16>
    %cst_199 = arith.constant dense<0.000000e+00> : vector<24x16xf32>
    %216 = tpu.matmul %204, %215, %cst_199 {dimension_numbers = #tpu.dot_dimension_numbers<[1], [0], [0], [1], [0, 0, 1, 1], [], []>} : vector<24x16xbf16>, vector<16x16xbf16>, vector<24x16xf32> -> vector<24x16xf32>
    %217 = arith.truncf %216 : vector<24x16xf32> to vector<24x16xbf16>
    %cst_200 = arith.constant dense<0.000000e+00> : vector<24x16xf32>
    %218 = tpu.matmul %213, %217, %cst_200 {dimension_numbers = #tpu.dot_dimension_numbers<[1], [0], [0], [1], [0, 0, 1, 1], [], []>} : vector<24x24xbf16>, vector<24x16xbf16>, vector<24x16xf32> -> vector<24x16xf32>
    %219 = arith.addf %211, %218 : vector<24x16xf32>
    %c2_201 = arith.constant 2 : index
    %c2_202 = arith.constant 2 : index
    %c0_203 = arith.constant 0 : index
    %c0_204 = arith.constant 0 : index
    %220 = vector.load %arg2[%c2_201, %c2_202, %c0_203, %c0_204] : memref<6x9x24x24xbf16, #tpu.memory_space<vmem>>, vector<1x1x24x24xbf16>
    %221 = vector.shape_cast %220 : vector<1x1x24x24xbf16> to vector<24x24xbf16>
    %c2_205 = arith.constant 2 : index
    %c0_206 = arith.constant 0 : index
    %c0_207 = arith.constant 0 : index
    %222 = vector.load %arg8[%c2_205, %c0_206, %c0_207] : memref<9x16x16xbf16, #tpu.memory_space<vmem>>, vector<1x16x16xbf16>
    %223 = vector.shape_cast %222 : vector<1x16x16xbf16> to vector<16x16xbf16>
    %cst_208 = arith.constant dense<0.000000e+00> : vector<24x16xf32>
    %224 = tpu.matmul %204, %223, %cst_208 {dimension_numbers = #tpu.dot_dimension_numbers<[1], [0], [0], [1], [0, 0, 1, 1], [], []>} : vector<24x16xbf16>, vector<16x16xbf16>, vector<24x16xf32> -> vector<24x16xf32>
    %225 = arith.truncf %224 : vector<24x16xf32> to vector<24x16xbf16>
    %cst_209 = arith.constant dense<0.000000e+00> : vector<24x16xf32>
    %226 = tpu.matmul %221, %225, %cst_209 {dimension_numbers = #tpu.dot_dimension_numbers<[1], [0], [0], [1], [0, 0, 1, 1], [], []>} : vector<24x24xbf16>, vector<24x16xbf16>, vector<24x16xf32> -> vector<24x16xf32>
    %227 = arith.addf %219, %226 : vector<24x16xf32>
    %c2_210 = arith.constant 2 : index
    %c3_211 = arith.constant 3 : index
    %c0_212 = arith.constant 0 : index
    %c0_213 = arith.constant 0 : index
    %228 = vector.load %arg2[%c2_210, %c3_211, %c0_212, %c0_213] : memref<6x9x24x24xbf16, #tpu.memory_space<vmem>>, vector<1x1x24x24xbf16>
    %229 = vector.shape_cast %228 : vector<1x1x24x24xbf16> to vector<24x24xbf16>
    %c3_214 = arith.constant 3 : index
    %c0_215 = arith.constant 0 : index
    %c0_216 = arith.constant 0 : index
    %230 = vector.load %arg8[%c3_214, %c0_215, %c0_216] : memref<9x16x16xbf16, #tpu.memory_space<vmem>>, vector<1x16x16xbf16>
    %231 = vector.shape_cast %230 : vector<1x16x16xbf16> to vector<16x16xbf16>
    %cst_217 = arith.constant dense<0.000000e+00> : vector<24x16xf32>
    %232 = tpu.matmul %204, %231, %cst_217 {dimension_numbers = #tpu.dot_dimension_numbers<[1], [0], [0], [1], [0, 0, 1, 1], [], []>} : vector<24x16xbf16>, vector<16x16xbf16>, vector<24x16xf32> -> vector<24x16xf32>
    %233 = arith.truncf %232 : vector<24x16xf32> to vector<24x16xbf16>
    %cst_218 = arith.constant dense<0.000000e+00> : vector<24x16xf32>
    %234 = tpu.matmul %229, %233, %cst_218 {dimension_numbers = #tpu.dot_dimension_numbers<[1], [0], [0], [1], [0, 0, 1, 1], [], []>} : vector<24x24xbf16>, vector<24x16xbf16>, vector<24x16xf32> -> vector<24x16xf32>
    %235 = arith.addf %227, %234 : vector<24x16xf32>
    %c2_219 = arith.constant 2 : index
    %c4_220 = arith.constant 4 : index
    %c0_221 = arith.constant 0 : index
    %c0_222 = arith.constant 0 : index
    %236 = vector.load %arg2[%c2_219, %c4_220, %c0_221, %c0_222] : memref<6x9x24x24xbf16, #tpu.memory_space<vmem>>, vector<1x1x24x24xbf16>
    %237 = vector.shape_cast %236 : vector<1x1x24x24xbf16> to vector<24x24xbf16>
    %c4_223 = arith.constant 4 : index
    %c0_224 = arith.constant 0 : index
    %c0_225 = arith.constant 0 : index
    %238 = vector.load %arg8[%c4_223, %c0_224, %c0_225] : memref<9x16x16xbf16, #tpu.memory_space<vmem>>, vector<1x16x16xbf16>
    %239 = vector.shape_cast %238 : vector<1x16x16xbf16> to vector<16x16xbf16>
    %cst_226 = arith.constant dense<0.000000e+00> : vector<24x16xf32>
    %240 = tpu.matmul %204, %239, %cst_226 {dimension_numbers = #tpu.dot_dimension_numbers<[1], [0], [0], [1], [0, 0, 1, 1], [], []>} : vector<24x16xbf16>, vector<16x16xbf16>, vector<24x16xf32> -> vector<24x16xf32>
    %241 = arith.truncf %240 : vector<24x16xf32> to vector<24x16xbf16>
    %cst_227 = arith.constant dense<0.000000e+00> : vector<24x16xf32>
    %242 = tpu.matmul %237, %241, %cst_227 {dimension_numbers = #tpu.dot_dimension_numbers<[1], [0], [0], [1], [0, 0, 1, 1], [], []>} : vector<24x24xbf16>, vector<24x16xbf16>, vector<24x16xf32> -> vector<24x16xf32>
    %243 = arith.addf %235, %242 : vector<24x16xf32>
    %c2_228 = arith.constant 2 : index
    %c5_229 = arith.constant 5 : index
    %c0_230 = arith.constant 0 : index
    %c0_231 = arith.constant 0 : index
    %244 = vector.load %arg2[%c2_228, %c5_229, %c0_230, %c0_231] : memref<6x9x24x24xbf16, #tpu.memory_space<vmem>>, vector<1x1x24x24xbf16>
    %245 = vector.shape_cast %244 : vector<1x1x24x24xbf16> to vector<24x24xbf16>
    %c5_232 = arith.constant 5 : index
    %c0_233 = arith.constant 0 : index
    %c0_234 = arith.constant 0 : index
    %246 = vector.load %arg8[%c5_232, %c0_233, %c0_234] : memref<9x16x16xbf16, #tpu.memory_space<vmem>>, vector<1x16x16xbf16>
    %247 = vector.shape_cast %246 : vector<1x16x16xbf16> to vector<16x16xbf16>
    %cst_235 = arith.constant dense<0.000000e+00> : vector<24x16xf32>
    %248 = tpu.matmul %204, %247, %cst_235 {dimension_numbers = #tpu.dot_dimension_numbers<[1], [0], [0], [1], [0, 0, 1, 1], [], []>} : vector<24x16xbf16>, vector<16x16xbf16>, vector<24x16xf32> -> vector<24x16xf32>
    %249 = arith.truncf %248 : vector<24x16xf32> to vector<24x16xbf16>
    %cst_236 = arith.constant dense<0.000000e+00> : vector<24x16xf32>
    %250 = tpu.matmul %245, %249, %cst_236 {dimension_numbers = #tpu.dot_dimension_numbers<[1], [0], [0], [1], [0, 0, 1, 1], [], []>} : vector<24x24xbf16>, vector<24x16xbf16>, vector<24x16xf32> -> vector<24x16xf32>
    %251 = arith.addf %243, %250 : vector<24x16xf32>
    %c2_237 = arith.constant 2 : index
    %c6_238 = arith.constant 6 : index
    %c0_239 = arith.constant 0 : index
    %c0_240 = arith.constant 0 : index
    %252 = vector.load %arg2[%c2_237, %c6_238, %c0_239, %c0_240] : memref<6x9x24x24xbf16, #tpu.memory_space<vmem>>, vector<1x1x24x24xbf16>
    %253 = vector.shape_cast %252 : vector<1x1x24x24xbf16> to vector<24x24xbf16>
    %c6_241 = arith.constant 6 : index
    %c0_242 = arith.constant 0 : index
    %c0_243 = arith.constant 0 : index
    %254 = vector.load %arg8[%c6_241, %c0_242, %c0_243] : memref<9x16x16xbf16, #tpu.memory_space<vmem>>, vector<1x16x16xbf16>
    %255 = vector.shape_cast %254 : vector<1x16x16xbf16> to vector<16x16xbf16>
    %cst_244 = arith.constant dense<0.000000e+00> : vector<24x16xf32>
    %256 = tpu.matmul %204, %255, %cst_244 {dimension_numbers = #tpu.dot_dimension_numbers<[1], [0], [0], [1], [0, 0, 1, 1], [], []>} : vector<24x16xbf16>, vector<16x16xbf16>, vector<24x16xf32> -> vector<24x16xf32>
    %257 = arith.truncf %256 : vector<24x16xf32> to vector<24x16xbf16>
    %cst_245 = arith.constant dense<0.000000e+00> : vector<24x16xf32>
    %258 = tpu.matmul %253, %257, %cst_245 {dimension_numbers = #tpu.dot_dimension_numbers<[1], [0], [0], [1], [0, 0, 1, 1], [], []>} : vector<24x24xbf16>, vector<24x16xbf16>, vector<24x16xf32> -> vector<24x16xf32>
    %259 = arith.addf %251, %258 : vector<24x16xf32>
    %c2_246 = arith.constant 2 : index
    %c7_247 = arith.constant 7 : index
    %c0_248 = arith.constant 0 : index
    %c0_249 = arith.constant 0 : index
    %260 = vector.load %arg2[%c2_246, %c7_247, %c0_248, %c0_249] : memref<6x9x24x24xbf16, #tpu.memory_space<vmem>>, vector<1x1x24x24xbf16>
    %261 = vector.shape_cast %260 : vector<1x1x24x24xbf16> to vector<24x24xbf16>
    %c7_250 = arith.constant 7 : index
    %c0_251 = arith.constant 0 : index
    %c0_252 = arith.constant 0 : index
    %262 = vector.load %arg8[%c7_250, %c0_251, %c0_252] : memref<9x16x16xbf16, #tpu.memory_space<vmem>>, vector<1x16x16xbf16>
    %263 = vector.shape_cast %262 : vector<1x16x16xbf16> to vector<16x16xbf16>
    %cst_253 = arith.constant dense<0.000000e+00> : vector<24x16xf32>
    %264 = tpu.matmul %204, %263, %cst_253 {dimension_numbers = #tpu.dot_dimension_numbers<[1], [0], [0], [1], [0, 0, 1, 1], [], []>} : vector<24x16xbf16>, vector<16x16xbf16>, vector<24x16xf32> -> vector<24x16xf32>
    %265 = arith.truncf %264 : vector<24x16xf32> to vector<24x16xbf16>
    %cst_254 = arith.constant dense<0.000000e+00> : vector<24x16xf32>
    %266 = tpu.matmul %261, %265, %cst_254 {dimension_numbers = #tpu.dot_dimension_numbers<[1], [0], [0], [1], [0, 0, 1, 1], [], []>} : vector<24x24xbf16>, vector<24x16xbf16>, vector<24x16xf32> -> vector<24x16xf32>
    %267 = arith.addf %259, %266 : vector<24x16xf32>
    %c2_255 = arith.constant 2 : index
    %c8_256 = arith.constant 8 : index
    %c0_257 = arith.constant 0 : index
    %c0_258 = arith.constant 0 : index
    %268 = vector.load %arg2[%c2_255, %c8_256, %c0_257, %c0_258] : memref<6x9x24x24xbf16, #tpu.memory_space<vmem>>, vector<1x1x24x24xbf16>
    %269 = vector.shape_cast %268 : vector<1x1x24x24xbf16> to vector<24x24xbf16>
    %c8_259 = arith.constant 8 : index
    %c0_260 = arith.constant 0 : index
    %c0_261 = arith.constant 0 : index
    %270 = vector.load %arg8[%c8_259, %c0_260, %c0_261] : memref<9x16x16xbf16, #tpu.memory_space<vmem>>, vector<1x16x16xbf16>
    %271 = vector.shape_cast %270 : vector<1x16x16xbf16> to vector<16x16xbf16>
    %cst_262 = arith.constant dense<0.000000e+00> : vector<24x16xf32>
    %272 = tpu.matmul %204, %271, %cst_262 {dimension_numbers = #tpu.dot_dimension_numbers<[1], [0], [0], [1], [0, 0, 1, 1], [], []>} : vector<24x16xbf16>, vector<16x16xbf16>, vector<24x16xf32> -> vector<24x16xf32>
    %273 = arith.truncf %272 : vector<24x16xf32> to vector<24x16xbf16>
    %cst_263 = arith.constant dense<0.000000e+00> : vector<24x16xf32>
    %274 = tpu.matmul %269, %273, %cst_263 {dimension_numbers = #tpu.dot_dimension_numbers<[1], [0], [0], [1], [0, 0, 1, 1], [], []>} : vector<24x24xbf16>, vector<24x16xbf16>, vector<24x16xf32> -> vector<24x16xf32>
    %275 = arith.addf %267, %274 : vector<24x16xf32>
    %c2_264 = arith.constant 2 : index
    %c0_265 = arith.constant 0 : index
    %c0_266 = arith.constant 0 : index
    %276 = vector.load %arg3[%c2_264, %c0_265, %c0_266] : memref<6x24x1xf32, #tpu.memory_space<vmem>>, vector<1x24x1xf32>
    %277 = vector.shape_cast %276 : vector<1x24x1xf32> to vector<24x1xf32>
    %278 = vector.broadcast %277 : vector<24x1xf32> to vector<24x16xf32>
    %279 = arith.addf %275, %278 : vector<24x16xf32>
    %cst_267 = arith.constant 2.000000e-01 : f32
    %280 = vector.broadcast %cst_267 : f32 to vector<24x16xf32>
    %281 = arith.mulf %280, %279 : vector<24x16xf32>
    %282 = arith.maximumf %279, %281 : vector<24x16xf32>
    %283 = arith.truncf %282 : vector<24x16xf32> to vector<24x16xbf16>
    %c3_268 = arith.constant 3 : index
    %c0_269 = arith.constant 0 : index
    %c0_270 = arith.constant 0 : index
    %c0_271 = arith.constant 0 : index
    %284 = vector.load %arg2[%c3_268, %c0_269, %c0_270, %c0_271] : memref<6x9x24x24xbf16, #tpu.memory_space<vmem>>, vector<1x1x24x24xbf16>
    %285 = vector.shape_cast %284 : vector<1x1x24x24xbf16> to vector<24x24xbf16>
    %c0_272 = arith.constant 0 : index
    %c0_273 = arith.constant 0 : index
    %c0_274 = arith.constant 0 : index
    %286 = vector.load %arg8[%c0_272, %c0_273, %c0_274] : memref<9x16x16xbf16, #tpu.memory_space<vmem>>, vector<1x16x16xbf16>
    %287 = vector.shape_cast %286 : vector<1x16x16xbf16> to vector<16x16xbf16>
    %cst_275 = arith.constant dense<0.000000e+00> : vector<24x16xf32>
    %288 = tpu.matmul %283, %287, %cst_275 {dimension_numbers = #tpu.dot_dimension_numbers<[1], [0], [0], [1], [0, 0, 1, 1], [], []>} : vector<24x16xbf16>, vector<16x16xbf16>, vector<24x16xf32> -> vector<24x16xf32>
    %289 = arith.truncf %288 : vector<24x16xf32> to vector<24x16xbf16>
    %cst_276 = arith.constant dense<0.000000e+00> : vector<24x16xf32>
    %290 = tpu.matmul %285, %289, %cst_276 {dimension_numbers = #tpu.dot_dimension_numbers<[1], [0], [0], [1], [0, 0, 1, 1], [], []>} : vector<24x24xbf16>, vector<24x16xbf16>, vector<24x16xf32> -> vector<24x16xf32>
    %c3_277 = arith.constant 3 : index
    %c1_278 = arith.constant 1 : index
    %c0_279 = arith.constant 0 : index
    %c0_280 = arith.constant 0 : index
    %291 = vector.load %arg2[%c3_277, %c1_278, %c0_279, %c0_280] : memref<6x9x24x24xbf16, #tpu.memory_space<vmem>>, vector<1x1x24x24xbf16>
    %292 = vector.shape_cast %291 : vector<1x1x24x24xbf16> to vector<24x24xbf16>
    %c1_281 = arith.constant 1 : index
    %c0_282 = arith.constant 0 : index
    %c0_283 = arith.constant 0 : index
    %293 = vector.load %arg8[%c1_281, %c0_282, %c0_283] : memref<9x16x16xbf16, #tpu.memory_space<vmem>>, vector<1x16x16xbf16>
    %294 = vector.shape_cast %293 : vector<1x16x16xbf16> to vector<16x16xbf16>
    %cst_284 = arith.constant dense<0.000000e+00> : vector<24x16xf32>
    %295 = tpu.matmul %283, %294, %cst_284 {dimension_numbers = #tpu.dot_dimension_numbers<[1], [0], [0], [1], [0, 0, 1, 1], [], []>} : vector<24x16xbf16>, vector<16x16xbf16>, vector<24x16xf32> -> vector<24x16xf32>
    %296 = arith.truncf %295 : vector<24x16xf32> to vector<24x16xbf16>
    %cst_285 = arith.constant dense<0.000000e+00> : vector<24x16xf32>
    %297 = tpu.matmul %292, %296, %cst_285 {dimension_numbers = #tpu.dot_dimension_numbers<[1], [0], [0], [1], [0, 0, 1, 1], [], []>} : vector<24x24xbf16>, vector<24x16xbf16>, vector<24x16xf32> -> vector<24x16xf32>
    %298 = arith.addf %290, %297 : vector<24x16xf32>
    %c3_286 = arith.constant 3 : index
    %c2_287 = arith.constant 2 : index
    %c0_288 = arith.constant 0 : index
    %c0_289 = arith.constant 0 : index
    %299 = vector.load %arg2[%c3_286, %c2_287, %c0_288, %c0_289] : memref<6x9x24x24xbf16, #tpu.memory_space<vmem>>, vector<1x1x24x24xbf16>
    %300 = vector.shape_cast %299 : vector<1x1x24x24xbf16> to vector<24x24xbf16>
    %c2_290 = arith.constant 2 : index
    %c0_291 = arith.constant 0 : index
    %c0_292 = arith.constant 0 : index
    %301 = vector.load %arg8[%c2_290, %c0_291, %c0_292] : memref<9x16x16xbf16, #tpu.memory_space<vmem>>, vector<1x16x16xbf16>
    %302 = vector.shape_cast %301 : vector<1x16x16xbf16> to vector<16x16xbf16>
    %cst_293 = arith.constant dense<0.000000e+00> : vector<24x16xf32>
    %303 = tpu.matmul %283, %302, %cst_293 {dimension_numbers = #tpu.dot_dimension_numbers<[1], [0], [0], [1], [0, 0, 1, 1], [], []>} : vector<24x16xbf16>, vector<16x16xbf16>, vector<24x16xf32> -> vector<24x16xf32>
    %304 = arith.truncf %303 : vector<24x16xf32> to vector<24x16xbf16>
    %cst_294 = arith.constant dense<0.000000e+00> : vector<24x16xf32>
    %305 = tpu.matmul %300, %304, %cst_294 {dimension_numbers = #tpu.dot_dimension_numbers<[1], [0], [0], [1], [0, 0, 1, 1], [], []>} : vector<24x24xbf16>, vector<24x16xbf16>, vector<24x16xf32> -> vector<24x16xf32>
    %306 = arith.addf %298, %305 : vector<24x16xf32>
    %c3_295 = arith.constant 3 : index
    %c3_296 = arith.constant 3 : index
    %c0_297 = arith.constant 0 : index
    %c0_298 = arith.constant 0 : index
    %307 = vector.load %arg2[%c3_295, %c3_296, %c0_297, %c0_298] : memref<6x9x24x24xbf16, #tpu.memory_space<vmem>>, vector<1x1x24x24xbf16>
    %308 = vector.shape_cast %307 : vector<1x1x24x24xbf16> to vector<24x24xbf16>
    %c3_299 = arith.constant 3 : index
    %c0_300 = arith.constant 0 : index
    %c0_301 = arith.constant 0 : index
    %309 = vector.load %arg8[%c3_299, %c0_300, %c0_301] : memref<9x16x16xbf16, #tpu.memory_space<vmem>>, vector<1x16x16xbf16>
    %310 = vector.shape_cast %309 : vector<1x16x16xbf16> to vector<16x16xbf16>
    %cst_302 = arith.constant dense<0.000000e+00> : vector<24x16xf32>
    %311 = tpu.matmul %283, %310, %cst_302 {dimension_numbers = #tpu.dot_dimension_numbers<[1], [0], [0], [1], [0, 0, 1, 1], [], []>} : vector<24x16xbf16>, vector<16x16xbf16>, vector<24x16xf32> -> vector<24x16xf32>
    %312 = arith.truncf %311 : vector<24x16xf32> to vector<24x16xbf16>
    %cst_303 = arith.constant dense<0.000000e+00> : vector<24x16xf32>
    %313 = tpu.matmul %308, %312, %cst_303 {dimension_numbers = #tpu.dot_dimension_numbers<[1], [0], [0], [1], [0, 0, 1, 1], [], []>} : vector<24x24xbf16>, vector<24x16xbf16>, vector<24x16xf32> -> vector<24x16xf32>
    %314 = arith.addf %306, %313 : vector<24x16xf32>
    %c3_304 = arith.constant 3 : index
    %c4_305 = arith.constant 4 : index
    %c0_306 = arith.constant 0 : index
    %c0_307 = arith.constant 0 : index
    %315 = vector.load %arg2[%c3_304, %c4_305, %c0_306, %c0_307] : memref<6x9x24x24xbf16, #tpu.memory_space<vmem>>, vector<1x1x24x24xbf16>
    %316 = vector.shape_cast %315 : vector<1x1x24x24xbf16> to vector<24x24xbf16>
    %c4_308 = arith.constant 4 : index
    %c0_309 = arith.constant 0 : index
    %c0_310 = arith.constant 0 : index
    %317 = vector.load %arg8[%c4_308, %c0_309, %c0_310] : memref<9x16x16xbf16, #tpu.memory_space<vmem>>, vector<1x16x16xbf16>
    %318 = vector.shape_cast %317 : vector<1x16x16xbf16> to vector<16x16xbf16>
    %cst_311 = arith.constant dense<0.000000e+00> : vector<24x16xf32>
    %319 = tpu.matmul %283, %318, %cst_311 {dimension_numbers = #tpu.dot_dimension_numbers<[1], [0], [0], [1], [0, 0, 1, 1], [], []>} : vector<24x16xbf16>, vector<16x16xbf16>, vector<24x16xf32> -> vector<24x16xf32>
    %320 = arith.truncf %319 : vector<24x16xf32> to vector<24x16xbf16>
    %cst_312 = arith.constant dense<0.000000e+00> : vector<24x16xf32>
    %321 = tpu.matmul %316, %320, %cst_312 {dimension_numbers = #tpu.dot_dimension_numbers<[1], [0], [0], [1], [0, 0, 1, 1], [], []>} : vector<24x24xbf16>, vector<24x16xbf16>, vector<24x16xf32> -> vector<24x16xf32>
    %322 = arith.addf %314, %321 : vector<24x16xf32>
    %c3_313 = arith.constant 3 : index
    %c5_314 = arith.constant 5 : index
    %c0_315 = arith.constant 0 : index
    %c0_316 = arith.constant 0 : index
    %323 = vector.load %arg2[%c3_313, %c5_314, %c0_315, %c0_316] : memref<6x9x24x24xbf16, #tpu.memory_space<vmem>>, vector<1x1x24x24xbf16>
    %324 = vector.shape_cast %323 : vector<1x1x24x24xbf16> to vector<24x24xbf16>
    %c5_317 = arith.constant 5 : index
    %c0_318 = arith.constant 0 : index
    %c0_319 = arith.constant 0 : index
    %325 = vector.load %arg8[%c5_317, %c0_318, %c0_319] : memref<9x16x16xbf16, #tpu.memory_space<vmem>>, vector<1x16x16xbf16>
    %326 = vector.shape_cast %325 : vector<1x16x16xbf16> to vector<16x16xbf16>
    %cst_320 = arith.constant dense<0.000000e+00> : vector<24x16xf32>
    %327 = tpu.matmul %283, %326, %cst_320 {dimension_numbers = #tpu.dot_dimension_numbers<[1], [0], [0], [1], [0, 0, 1, 1], [], []>} : vector<24x16xbf16>, vector<16x16xbf16>, vector<24x16xf32> -> vector<24x16xf32>
    %328 = arith.truncf %327 : vector<24x16xf32> to vector<24x16xbf16>
    %cst_321 = arith.constant dense<0.000000e+00> : vector<24x16xf32>
    %329 = tpu.matmul %324, %328, %cst_321 {dimension_numbers = #tpu.dot_dimension_numbers<[1], [0], [0], [1], [0, 0, 1, 1], [], []>} : vector<24x24xbf16>, vector<24x16xbf16>, vector<24x16xf32> -> vector<24x16xf32>
    %330 = arith.addf %322, %329 : vector<24x16xf32>
    %c3_322 = arith.constant 3 : index
    %c6_323 = arith.constant 6 : index
    %c0_324 = arith.constant 0 : index
    %c0_325 = arith.constant 0 : index
    %331 = vector.load %arg2[%c3_322, %c6_323, %c0_324, %c0_325] : memref<6x9x24x24xbf16, #tpu.memory_space<vmem>>, vector<1x1x24x24xbf16>
    %332 = vector.shape_cast %331 : vector<1x1x24x24xbf16> to vector<24x24xbf16>
    %c6_326 = arith.constant 6 : index
    %c0_327 = arith.constant 0 : index
    %c0_328 = arith.constant 0 : index
    %333 = vector.load %arg8[%c6_326, %c0_327, %c0_328] : memref<9x16x16xbf16, #tpu.memory_space<vmem>>, vector<1x16x16xbf16>
    %334 = vector.shape_cast %333 : vector<1x16x16xbf16> to vector<16x16xbf16>
    %cst_329 = arith.constant dense<0.000000e+00> : vector<24x16xf32>
    %335 = tpu.matmul %283, %334, %cst_329 {dimension_numbers = #tpu.dot_dimension_numbers<[1], [0], [0], [1], [0, 0, 1, 1], [], []>} : vector<24x16xbf16>, vector<16x16xbf16>, vector<24x16xf32> -> vector<24x16xf32>
    %336 = arith.truncf %335 : vector<24x16xf32> to vector<24x16xbf16>
    %cst_330 = arith.constant dense<0.000000e+00> : vector<24x16xf32>
    %337 = tpu.matmul %332, %336, %cst_330 {dimension_numbers = #tpu.dot_dimension_numbers<[1], [0], [0], [1], [0, 0, 1, 1], [], []>} : vector<24x24xbf16>, vector<24x16xbf16>, vector<24x16xf32> -> vector<24x16xf32>
    %338 = arith.addf %330, %337 : vector<24x16xf32>
    %c3_331 = arith.constant 3 : index
    %c7_332 = arith.constant 7 : index
    %c0_333 = arith.constant 0 : index
    %c0_334 = arith.constant 0 : index
    %339 = vector.load %arg2[%c3_331, %c7_332, %c0_333, %c0_334] : memref<6x9x24x24xbf16, #tpu.memory_space<vmem>>, vector<1x1x24x24xbf16>
    %340 = vector.shape_cast %339 : vector<1x1x24x24xbf16> to vector<24x24xbf16>
    %c7_335 = arith.constant 7 : index
    %c0_336 = arith.constant 0 : index
    %c0_337 = arith.constant 0 : index
    %341 = vector.load %arg8[%c7_335, %c0_336, %c0_337] : memref<9x16x16xbf16, #tpu.memory_space<vmem>>, vector<1x16x16xbf16>
    %342 = vector.shape_cast %341 : vector<1x16x16xbf16> to vector<16x16xbf16>
    %cst_338 = arith.constant dense<0.000000e+00> : vector<24x16xf32>
    %343 = tpu.matmul %283, %342, %cst_338 {dimension_numbers = #tpu.dot_dimension_numbers<[1], [0], [0], [1], [0, 0, 1, 1], [], []>} : vector<24x16xbf16>, vector<16x16xbf16>, vector<24x16xf32> -> vector<24x16xf32>
    %344 = arith.truncf %343 : vector<24x16xf32> to vector<24x16xbf16>
    %cst_339 = arith.constant dense<0.000000e+00> : vector<24x16xf32>
    %345 = tpu.matmul %340, %344, %cst_339 {dimension_numbers = #tpu.dot_dimension_numbers<[1], [0], [0], [1], [0, 0, 1, 1], [], []>} : vector<24x24xbf16>, vector<24x16xbf16>, vector<24x16xf32> -> vector<24x16xf32>
    %346 = arith.addf %338, %345 : vector<24x16xf32>
    %c3_340 = arith.constant 3 : index
    %c8_341 = arith.constant 8 : index
    %c0_342 = arith.constant 0 : index
    %c0_343 = arith.constant 0 : index
    %347 = vector.load %arg2[%c3_340, %c8_341, %c0_342, %c0_343] : memref<6x9x24x24xbf16, #tpu.memory_space<vmem>>, vector<1x1x24x24xbf16>
    %348 = vector.shape_cast %347 : vector<1x1x24x24xbf16> to vector<24x24xbf16>
    %c8_344 = arith.constant 8 : index
    %c0_345 = arith.constant 0 : index
    %c0_346 = arith.constant 0 : index
    %349 = vector.load %arg8[%c8_344, %c0_345, %c0_346] : memref<9x16x16xbf16, #tpu.memory_space<vmem>>, vector<1x16x16xbf16>
    %350 = vector.shape_cast %349 : vector<1x16x16xbf16> to vector<16x16xbf16>
    %cst_347 = arith.constant dense<0.000000e+00> : vector<24x16xf32>
    %351 = tpu.matmul %283, %350, %cst_347 {dimension_numbers = #tpu.dot_dimension_numbers<[1], [0], [0], [1], [0, 0, 1, 1], [], []>} : vector<24x16xbf16>, vector<16x16xbf16>, vector<24x16xf32> -> vector<24x16xf32>
    %352 = arith.truncf %351 : vector<24x16xf32> to vector<24x16xbf16>
    %cst_348 = arith.constant dense<0.000000e+00> : vector<24x16xf32>
    %353 = tpu.matmul %348, %352, %cst_348 {dimension_numbers = #tpu.dot_dimension_numbers<[1], [0], [0], [1], [0, 0, 1, 1], [], []>} : vector<24x24xbf16>, vector<24x16xbf16>, vector<24x16xf32> -> vector<24x16xf32>
    %354 = arith.addf %346, %353 : vector<24x16xf32>
    %c3_349 = arith.constant 3 : index
    %c0_350 = arith.constant 0 : index
    %c0_351 = arith.constant 0 : index
    %355 = vector.load %arg3[%c3_349, %c0_350, %c0_351] : memref<6x24x1xf32, #tpu.memory_space<vmem>>, vector<1x24x1xf32>
    %356 = vector.shape_cast %355 : vector<1x24x1xf32> to vector<24x1xf32>
    %357 = vector.broadcast %356 : vector<24x1xf32> to vector<24x16xf32>
    %358 = arith.addf %354, %357 : vector<24x16xf32>
    %cst_352 = arith.constant 2.000000e-01 : f32
    %359 = vector.broadcast %cst_352 : f32 to vector<24x16xf32>
    %360 = arith.mulf %359, %358 : vector<24x16xf32>
    %361 = arith.maximumf %358, %360 : vector<24x16xf32>
    %c0_353 = arith.constant 0 : index
    %c0_354 = arith.constant 0 : index
    %c0_355 = arith.constant 0 : index
    %362 = vector.load %arg4[%c0_353, %c0_354, %c0_355] : memref<4x24x24xbf16, #tpu.memory_space<vmem>>, vector<1x24x24xbf16>
    %363 = vector.shape_cast %362 : vector<1x24x24xbf16> to vector<24x24xbf16>
    %364 = arith.truncf %187 : vector<24x64xf32> to vector<24x64xbf16>
    %cst_356 = arith.constant dense<0.000000e+00> : vector<24x64xf32>
    %365 = tpu.matmul %363, %364, %cst_356 {dimension_numbers = #tpu.dot_dimension_numbers<[1], [0], [0], [1], [0, 0, 1, 1], [], []>} : vector<24x24xbf16>, vector<24x64xbf16>, vector<24x64xf32> -> vector<24x64xf32>
    %c1_357 = arith.constant 1 : index
    %c0_358 = arith.constant 0 : index
    %c0_359 = arith.constant 0 : index
    %366 = vector.load %arg4[%c1_357, %c0_358, %c0_359] : memref<4x24x24xbf16, #tpu.memory_space<vmem>>, vector<1x24x24xbf16>
    %367 = vector.shape_cast %366 : vector<1x24x24xbf16> to vector<24x24xbf16>
    %368 = arith.truncf %361 : vector<24x16xf32> to vector<24x16xbf16>
    %cst_360 = arith.constant dense<0.000000e+00> : vector<24x16xf32>
    %369 = tpu.matmul %367, %368, %cst_360 {dimension_numbers = #tpu.dot_dimension_numbers<[1], [0], [0], [1], [0, 0, 1, 1], [], []>} : vector<24x24xbf16>, vector<24x16xbf16>, vector<24x16xf32> -> vector<24x16xf32>
    %370 = arith.truncf %369 : vector<24x16xf32> to vector<24x16xbf16>
    %c0_361 = arith.constant 0 : index
    %c0_362 = arith.constant 0 : index
    %371 = vector.load %arg11[%c0_361, %c0_362] : memref<16x64xbf16, #tpu.memory_space<vmem>>, vector<16x64xbf16>
    %cst_363 = arith.constant dense<0.000000e+00> : vector<24x64xf32>
    %372 = tpu.matmul %370, %371, %cst_363 {dimension_numbers = #tpu.dot_dimension_numbers<[1], [0], [0], [1], [0, 0, 1, 1], [], []>} : vector<24x16xbf16>, vector<16x64xbf16>, vector<24x64xf32> -> vector<24x64xf32>
    %373 = arith.addf %365, %372 : vector<24x64xf32>
    %c0_364 = arith.constant 0 : index
    %c0_365 = arith.constant 0 : index
    %c0_366 = arith.constant 0 : index
    %374 = vector.load %arg5[%c0_364, %c0_365, %c0_366] : memref<2x24x1xf32, #tpu.memory_space<vmem>>, vector<1x24x1xf32>
    %375 = vector.shape_cast %374 : vector<1x24x1xf32> to vector<24x1xf32>
    %376 = vector.broadcast %375 : vector<24x1xf32> to vector<24x64xf32>
    %377 = arith.addf %373, %376 : vector<24x64xf32>
    %cst_367 = arith.constant 2.000000e-01 : f32
    %378 = vector.broadcast %cst_367 : f32 to vector<24x64xf32>
    %379 = arith.mulf %378, %377 : vector<24x64xf32>
    %380 = arith.maximumf %377, %379 : vector<24x64xf32>
    %381 = arith.truncf %380 : vector<24x64xf32> to vector<24x64xbf16>
    %c4_368 = arith.constant 4 : index
    %c0_369 = arith.constant 0 : index
    %c0_370 = arith.constant 0 : index
    %c0_371 = arith.constant 0 : index
    %382 = vector.load %arg2[%c4_368, %c0_369, %c0_370, %c0_371] : memref<6x9x24x24xbf16, #tpu.memory_space<vmem>>, vector<1x1x24x24xbf16>
    %383 = vector.shape_cast %382 : vector<1x1x24x24xbf16> to vector<24x24xbf16>
    %c0_372 = arith.constant 0 : index
    %c0_373 = arith.constant 0 : index
    %c0_374 = arith.constant 0 : index
    %384 = vector.load %arg7[%c0_372, %c0_373, %c0_374] : memref<9x64x64xbf16, #tpu.memory_space<vmem>>, vector<1x64x64xbf16>
    %385 = vector.shape_cast %384 : vector<1x64x64xbf16> to vector<64x64xbf16>
    %cst_375 = arith.constant dense<0.000000e+00> : vector<24x64xf32>
    %386 = tpu.matmul %381, %385, %cst_375 {dimension_numbers = #tpu.dot_dimension_numbers<[1], [0], [0], [1], [0, 0, 1, 1], [], []>} : vector<24x64xbf16>, vector<64x64xbf16>, vector<24x64xf32> -> vector<24x64xf32>
    %387 = arith.truncf %386 : vector<24x64xf32> to vector<24x64xbf16>
    %cst_376 = arith.constant dense<0.000000e+00> : vector<24x64xf32>
    %388 = tpu.matmul %383, %387, %cst_376 {dimension_numbers = #tpu.dot_dimension_numbers<[1], [0], [0], [1], [0, 0, 1, 1], [], []>} : vector<24x24xbf16>, vector<24x64xbf16>, vector<24x64xf32> -> vector<24x64xf32>
    %c4_377 = arith.constant 4 : index
    %c1_378 = arith.constant 1 : index
    %c0_379 = arith.constant 0 : index
    %c0_380 = arith.constant 0 : index
    %389 = vector.load %arg2[%c4_377, %c1_378, %c0_379, %c0_380] : memref<6x9x24x24xbf16, #tpu.memory_space<vmem>>, vector<1x1x24x24xbf16>
    %390 = vector.shape_cast %389 : vector<1x1x24x24xbf16> to vector<24x24xbf16>
    %c1_381 = arith.constant 1 : index
    %c0_382 = arith.constant 0 : index
    %c0_383 = arith.constant 0 : index
    %391 = vector.load %arg7[%c1_381, %c0_382, %c0_383] : memref<9x64x64xbf16, #tpu.memory_space<vmem>>, vector<1x64x64xbf16>
    %392 = vector.shape_cast %391 : vector<1x64x64xbf16> to vector<64x64xbf16>
    %cst_384 = arith.constant dense<0.000000e+00> : vector<24x64xf32>
    %393 = tpu.matmul %381, %392, %cst_384 {dimension_numbers = #tpu.dot_dimension_numbers<[1], [0], [0], [1], [0, 0, 1, 1], [], []>} : vector<24x64xbf16>, vector<64x64xbf16>, vector<24x64xf32> -> vector<24x64xf32>
    %394 = arith.truncf %393 : vector<24x64xf32> to vector<24x64xbf16>
    %cst_385 = arith.constant dense<0.000000e+00> : vector<24x64xf32>
    %395 = tpu.matmul %390, %394, %cst_385 {dimension_numbers = #tpu.dot_dimension_numbers<[1], [0], [0], [1], [0, 0, 1, 1], [], []>} : vector<24x24xbf16>, vector<24x64xbf16>, vector<24x64xf32> -> vector<24x64xf32>
    %396 = arith.addf %388, %395 : vector<24x64xf32>
    %c4_386 = arith.constant 4 : index
    %c2_387 = arith.constant 2 : index
    %c0_388 = arith.constant 0 : index
    %c0_389 = arith.constant 0 : index
    %397 = vector.load %arg2[%c4_386, %c2_387, %c0_388, %c0_389] : memref<6x9x24x24xbf16, #tpu.memory_space<vmem>>, vector<1x1x24x24xbf16>
    %398 = vector.shape_cast %397 : vector<1x1x24x24xbf16> to vector<24x24xbf16>
    %c2_390 = arith.constant 2 : index
    %c0_391 = arith.constant 0 : index
    %c0_392 = arith.constant 0 : index
    %399 = vector.load %arg7[%c2_390, %c0_391, %c0_392] : memref<9x64x64xbf16, #tpu.memory_space<vmem>>, vector<1x64x64xbf16>
    %400 = vector.shape_cast %399 : vector<1x64x64xbf16> to vector<64x64xbf16>
    %cst_393 = arith.constant dense<0.000000e+00> : vector<24x64xf32>
    %401 = tpu.matmul %381, %400, %cst_393 {dimension_numbers = #tpu.dot_dimension_numbers<[1], [0], [0], [1], [0, 0, 1, 1], [], []>} : vector<24x64xbf16>, vector<64x64xbf16>, vector<24x64xf32> -> vector<24x64xf32>
    %402 = arith.truncf %401 : vector<24x64xf32> to vector<24x64xbf16>
    %cst_394 = arith.constant dense<0.000000e+00> : vector<24x64xf32>
    %403 = tpu.matmul %398, %402, %cst_394 {dimension_numbers = #tpu.dot_dimension_numbers<[1], [0], [0], [1], [0, 0, 1, 1], [], []>} : vector<24x24xbf16>, vector<24x64xbf16>, vector<24x64xf32> -> vector<24x64xf32>
    %404 = arith.addf %396, %403 : vector<24x64xf32>
    %c4_395 = arith.constant 4 : index
    %c3_396 = arith.constant 3 : index
    %c0_397 = arith.constant 0 : index
    %c0_398 = arith.constant 0 : index
    %405 = vector.load %arg2[%c4_395, %c3_396, %c0_397, %c0_398] : memref<6x9x24x24xbf16, #tpu.memory_space<vmem>>, vector<1x1x24x24xbf16>
    %406 = vector.shape_cast %405 : vector<1x1x24x24xbf16> to vector<24x24xbf16>
    %c3_399 = arith.constant 3 : index
    %c0_400 = arith.constant 0 : index
    %c0_401 = arith.constant 0 : index
    %407 = vector.load %arg7[%c3_399, %c0_400, %c0_401] : memref<9x64x64xbf16, #tpu.memory_space<vmem>>, vector<1x64x64xbf16>
    %408 = vector.shape_cast %407 : vector<1x64x64xbf16> to vector<64x64xbf16>
    %cst_402 = arith.constant dense<0.000000e+00> : vector<24x64xf32>
    %409 = tpu.matmul %381, %408, %cst_402 {dimension_numbers = #tpu.dot_dimension_numbers<[1], [0], [0], [1], [0, 0, 1, 1], [], []>} : vector<24x64xbf16>, vector<64x64xbf16>, vector<24x64xf32> -> vector<24x64xf32>
    %410 = arith.truncf %409 : vector<24x64xf32> to vector<24x64xbf16>
    %cst_403 = arith.constant dense<0.000000e+00> : vector<24x64xf32>
    %411 = tpu.matmul %406, %410, %cst_403 {dimension_numbers = #tpu.dot_dimension_numbers<[1], [0], [0], [1], [0, 0, 1, 1], [], []>} : vector<24x24xbf16>, vector<24x64xbf16>, vector<24x64xf32> -> vector<24x64xf32>
    %412 = arith.addf %404, %411 : vector<24x64xf32>
    %c4_404 = arith.constant 4 : index
    %c4_405 = arith.constant 4 : index
    %c0_406 = arith.constant 0 : index
    %c0_407 = arith.constant 0 : index
    %413 = vector.load %arg2[%c4_404, %c4_405, %c0_406, %c0_407] : memref<6x9x24x24xbf16, #tpu.memory_space<vmem>>, vector<1x1x24x24xbf16>
    %414 = vector.shape_cast %413 : vector<1x1x24x24xbf16> to vector<24x24xbf16>
    %c4_408 = arith.constant 4 : index
    %c0_409 = arith.constant 0 : index
    %c0_410 = arith.constant 0 : index
    %415 = vector.load %arg7[%c4_408, %c0_409, %c0_410] : memref<9x64x64xbf16, #tpu.memory_space<vmem>>, vector<1x64x64xbf16>
    %416 = vector.shape_cast %415 : vector<1x64x64xbf16> to vector<64x64xbf16>
    %cst_411 = arith.constant dense<0.000000e+00> : vector<24x64xf32>
    %417 = tpu.matmul %381, %416, %cst_411 {dimension_numbers = #tpu.dot_dimension_numbers<[1], [0], [0], [1], [0, 0, 1, 1], [], []>} : vector<24x64xbf16>, vector<64x64xbf16>, vector<24x64xf32> -> vector<24x64xf32>
    %418 = arith.truncf %417 : vector<24x64xf32> to vector<24x64xbf16>
    %cst_412 = arith.constant dense<0.000000e+00> : vector<24x64xf32>
    %419 = tpu.matmul %414, %418, %cst_412 {dimension_numbers = #tpu.dot_dimension_numbers<[1], [0], [0], [1], [0, 0, 1, 1], [], []>} : vector<24x24xbf16>, vector<24x64xbf16>, vector<24x64xf32> -> vector<24x64xf32>
    %420 = arith.addf %412, %419 : vector<24x64xf32>
    %c4_413 = arith.constant 4 : index
    %c5_414 = arith.constant 5 : index
    %c0_415 = arith.constant 0 : index
    %c0_416 = arith.constant 0 : index
    %421 = vector.load %arg2[%c4_413, %c5_414, %c0_415, %c0_416] : memref<6x9x24x24xbf16, #tpu.memory_space<vmem>>, vector<1x1x24x24xbf16>
    %422 = vector.shape_cast %421 : vector<1x1x24x24xbf16> to vector<24x24xbf16>
    %c5_417 = arith.constant 5 : index
    %c0_418 = arith.constant 0 : index
    %c0_419 = arith.constant 0 : index
    %423 = vector.load %arg7[%c5_417, %c0_418, %c0_419] : memref<9x64x64xbf16, #tpu.memory_space<vmem>>, vector<1x64x64xbf16>
    %424 = vector.shape_cast %423 : vector<1x64x64xbf16> to vector<64x64xbf16>
    %cst_420 = arith.constant dense<0.000000e+00> : vector<24x64xf32>
    %425 = tpu.matmul %381, %424, %cst_420 {dimension_numbers = #tpu.dot_dimension_numbers<[1], [0], [0], [1], [0, 0, 1, 1], [], []>} : vector<24x64xbf16>, vector<64x64xbf16>, vector<24x64xf32> -> vector<24x64xf32>
    %426 = arith.truncf %425 : vector<24x64xf32> to vector<24x64xbf16>
    %cst_421 = arith.constant dense<0.000000e+00> : vector<24x64xf32>
    %427 = tpu.matmul %422, %426, %cst_421 {dimension_numbers = #tpu.dot_dimension_numbers<[1], [0], [0], [1], [0, 0, 1, 1], [], []>} : vector<24x24xbf16>, vector<24x64xbf16>, vector<24x64xf32> -> vector<24x64xf32>
    %428 = arith.addf %420, %427 : vector<24x64xf32>
    %c4_422 = arith.constant 4 : index
    %c6_423 = arith.constant 6 : index
    %c0_424 = arith.constant 0 : index
    %c0_425 = arith.constant 0 : index
    %429 = vector.load %arg2[%c4_422, %c6_423, %c0_424, %c0_425] : memref<6x9x24x24xbf16, #tpu.memory_space<vmem>>, vector<1x1x24x24xbf16>
    %430 = vector.shape_cast %429 : vector<1x1x24x24xbf16> to vector<24x24xbf16>
    %c6_426 = arith.constant 6 : index
    %c0_427 = arith.constant 0 : index
    %c0_428 = arith.constant 0 : index
    %431 = vector.load %arg7[%c6_426, %c0_427, %c0_428] : memref<9x64x64xbf16, #tpu.memory_space<vmem>>, vector<1x64x64xbf16>
    %432 = vector.shape_cast %431 : vector<1x64x64xbf16> to vector<64x64xbf16>
    %cst_429 = arith.constant dense<0.000000e+00> : vector<24x64xf32>
    %433 = tpu.matmul %381, %432, %cst_429 {dimension_numbers = #tpu.dot_dimension_numbers<[1], [0], [0], [1], [0, 0, 1, 1], [], []>} : vector<24x64xbf16>, vector<64x64xbf16>, vector<24x64xf32> -> vector<24x64xf32>
    %434 = arith.truncf %433 : vector<24x64xf32> to vector<24x64xbf16>
    %cst_430 = arith.constant dense<0.000000e+00> : vector<24x64xf32>
    %435 = tpu.matmul %430, %434, %cst_430 {dimension_numbers = #tpu.dot_dimension_numbers<[1], [0], [0], [1], [0, 0, 1, 1], [], []>} : vector<24x24xbf16>, vector<24x64xbf16>, vector<24x64xf32> -> vector<24x64xf32>
    %436 = arith.addf %428, %435 : vector<24x64xf32>
    %c4_431 = arith.constant 4 : index
    %c7_432 = arith.constant 7 : index
    %c0_433 = arith.constant 0 : index
    %c0_434 = arith.constant 0 : index
    %437 = vector.load %arg2[%c4_431, %c7_432, %c0_433, %c0_434] : memref<6x9x24x24xbf16, #tpu.memory_space<vmem>>, vector<1x1x24x24xbf16>
    %438 = vector.shape_cast %437 : vector<1x1x24x24xbf16> to vector<24x24xbf16>
    %c7_435 = arith.constant 7 : index
    %c0_436 = arith.constant 0 : index
    %c0_437 = arith.constant 0 : index
    %439 = vector.load %arg7[%c7_435, %c0_436, %c0_437] : memref<9x64x64xbf16, #tpu.memory_space<vmem>>, vector<1x64x64xbf16>
    %440 = vector.shape_cast %439 : vector<1x64x64xbf16> to vector<64x64xbf16>
    %cst_438 = arith.constant dense<0.000000e+00> : vector<24x64xf32>
    %441 = tpu.matmul %381, %440, %cst_438 {dimension_numbers = #tpu.dot_dimension_numbers<[1], [0], [0], [1], [0, 0, 1, 1], [], []>} : vector<24x64xbf16>, vector<64x64xbf16>, vector<24x64xf32> -> vector<24x64xf32>
    %442 = arith.truncf %441 : vector<24x64xf32> to vector<24x64xbf16>
    %cst_439 = arith.constant dense<0.000000e+00> : vector<24x64xf32>
    %443 = tpu.matmul %438, %442, %cst_439 {dimension_numbers = #tpu.dot_dimension_numbers<[1], [0], [0], [1], [0, 0, 1, 1], [], []>} : vector<24x24xbf16>, vector<24x64xbf16>, vector<24x64xf32> -> vector<24x64xf32>
    %444 = arith.addf %436, %443 : vector<24x64xf32>
    %c4_440 = arith.constant 4 : index
    %c8_441 = arith.constant 8 : index
    %c0_442 = arith.constant 0 : index
    %c0_443 = arith.constant 0 : index
    %445 = vector.load %arg2[%c4_440, %c8_441, %c0_442, %c0_443] : memref<6x9x24x24xbf16, #tpu.memory_space<vmem>>, vector<1x1x24x24xbf16>
    %446 = vector.shape_cast %445 : vector<1x1x24x24xbf16> to vector<24x24xbf16>
    %c8_444 = arith.constant 8 : index
    %c0_445 = arith.constant 0 : index
    %c0_446 = arith.constant 0 : index
    %447 = vector.load %arg7[%c8_444, %c0_445, %c0_446] : memref<9x64x64xbf16, #tpu.memory_space<vmem>>, vector<1x64x64xbf16>
    %448 = vector.shape_cast %447 : vector<1x64x64xbf16> to vector<64x64xbf16>
    %cst_447 = arith.constant dense<0.000000e+00> : vector<24x64xf32>
    %449 = tpu.matmul %381, %448, %cst_447 {dimension_numbers = #tpu.dot_dimension_numbers<[1], [0], [0], [1], [0, 0, 1, 1], [], []>} : vector<24x64xbf16>, vector<64x64xbf16>, vector<24x64xf32> -> vector<24x64xf32>
    %450 = arith.truncf %449 : vector<24x64xf32> to vector<24x64xbf16>
    %cst_448 = arith.constant dense<0.000000e+00> : vector<24x64xf32>
    %451 = tpu.matmul %446, %450, %cst_448 {dimension_numbers = #tpu.dot_dimension_numbers<[1], [0], [0], [1], [0, 0, 1, 1], [], []>} : vector<24x24xbf16>, vector<24x64xbf16>, vector<24x64xf32> -> vector<24x64xf32>
    %452 = arith.addf %444, %451 : vector<24x64xf32>
    %c4_449 = arith.constant 4 : index
    %c0_450 = arith.constant 0 : index
    %c0_451 = arith.constant 0 : index
    %453 = vector.load %arg3[%c4_449, %c0_450, %c0_451] : memref<6x24x1xf32, #tpu.memory_space<vmem>>, vector<1x24x1xf32>
    %454 = vector.shape_cast %453 : vector<1x24x1xf32> to vector<24x1xf32>
    %455 = vector.broadcast %454 : vector<24x1xf32> to vector<24x64xf32>
    %456 = arith.addf %452, %455 : vector<24x64xf32>
    %cst_452 = arith.constant 2.000000e-01 : f32
    %457 = vector.broadcast %cst_452 : f32 to vector<24x64xf32>
    %458 = arith.mulf %457, %456 : vector<24x64xf32>
    %459 = arith.maximumf %456, %458 : vector<24x64xf32>
    %c2_453 = arith.constant 2 : index
    %c0_454 = arith.constant 0 : index
    %c0_455 = arith.constant 0 : index
    %460 = vector.load %arg4[%c2_453, %c0_454, %c0_455] : memref<4x24x24xbf16, #tpu.memory_space<vmem>>, vector<1x24x24xbf16>
    %461 = vector.shape_cast %460 : vector<1x24x24xbf16> to vector<24x24xbf16>
    %462 = arith.truncf %92 : vector<24x256xf32> to vector<24x256xbf16>
    %cst_456 = arith.constant dense<0.000000e+00> : vector<24x256xf32>
    %463 = tpu.matmul %461, %462, %cst_456 {dimension_numbers = #tpu.dot_dimension_numbers<[1], [0], [0], [1], [0, 0, 1, 1], [], []>} : vector<24x24xbf16>, vector<24x256xbf16>, vector<24x256xf32> -> vector<24x256xf32>
    %c3_457 = arith.constant 3 : index
    %c0_458 = arith.constant 0 : index
    %c0_459 = arith.constant 0 : index
    %464 = vector.load %arg4[%c3_457, %c0_458, %c0_459] : memref<4x24x24xbf16, #tpu.memory_space<vmem>>, vector<1x24x24xbf16>
    %465 = vector.shape_cast %464 : vector<1x24x24xbf16> to vector<24x24xbf16>
    %466 = arith.truncf %459 : vector<24x64xf32> to vector<24x64xbf16>
    %cst_460 = arith.constant dense<0.000000e+00> : vector<24x64xf32>
    %467 = tpu.matmul %465, %466, %cst_460 {dimension_numbers = #tpu.dot_dimension_numbers<[1], [0], [0], [1], [0, 0, 1, 1], [], []>} : vector<24x24xbf16>, vector<24x64xbf16>, vector<24x64xf32> -> vector<24x64xf32>
    %468 = arith.truncf %467 : vector<24x64xf32> to vector<24x64xbf16>
    %c0_461 = arith.constant 0 : index
    %c0_462 = arith.constant 0 : index
    %469 = vector.load %arg12[%c0_461, %c0_462] : memref<64x256xbf16, #tpu.memory_space<vmem>>, vector<64x256xbf16>
    %cst_463 = arith.constant dense<0.000000e+00> : vector<24x256xf32>
    %470 = tpu.matmul %468, %469, %cst_463 {dimension_numbers = #tpu.dot_dimension_numbers<[1], [0], [0], [1], [0, 0, 1, 1], [], []>} : vector<24x64xbf16>, vector<64x256xbf16>, vector<24x256xf32> -> vector<24x256xf32>
    %471 = arith.addf %463, %470 : vector<24x256xf32>
    %c1_464 = arith.constant 1 : index
    %c0_465 = arith.constant 0 : index
    %c0_466 = arith.constant 0 : index
    %472 = vector.load %arg5[%c1_464, %c0_465, %c0_466] : memref<2x24x1xf32, #tpu.memory_space<vmem>>, vector<1x24x1xf32>
    %473 = vector.shape_cast %472 : vector<1x24x1xf32> to vector<24x1xf32>
    %474 = vector.broadcast %473 : vector<24x1xf32> to vector<24x256xf32>
    %475 = arith.addf %471, %474 : vector<24x256xf32>
    %cst_467 = arith.constant 2.000000e-01 : f32
    %476 = vector.broadcast %cst_467 : f32 to vector<24x256xf32>
    %477 = arith.mulf %476, %475 : vector<24x256xf32>
    %478 = arith.maximumf %475, %477 : vector<24x256xf32>
    %479 = arith.truncf %478 : vector<24x256xf32> to vector<24x256xbf16>
    %c5_468 = arith.constant 5 : index
    %c0_469 = arith.constant 0 : index
    %c0_470 = arith.constant 0 : index
    %c0_471 = arith.constant 0 : index
    %480 = vector.load %arg2[%c5_468, %c0_469, %c0_470, %c0_471] : memref<6x9x24x24xbf16, #tpu.memory_space<vmem>>, vector<1x1x24x24xbf16>
    %481 = vector.shape_cast %480 : vector<1x1x24x24xbf16> to vector<24x24xbf16>
    %c17_i32_472 = arith.constant 17 : i32
    %482 = tpu.dynamic_rotate %478 by %c17_i32_472 dim 1 : vector<24x256xf32>, i32 -> vector<24x256xf32>
    %c0_473 = arith.constant 0 : index
    %c0_474 = arith.constant 0 : index
    %c0_475 = arith.constant 0 : index
    %483 = vector.load %arg6[%c0_473, %c0_474, %c0_475] : memref<9x1x256xf32, #tpu.memory_space<vmem>>, vector<1x1x256xf32>
    %484 = vector.shape_cast %483 : vector<1x1x256xf32> to vector<1x256xf32>
    %485 = vector.broadcast %484 : vector<1x256xf32> to vector<24x256xf32>
    %486 = arith.mulf %482, %485 : vector<24x256xf32>
    %487 = arith.truncf %486 : vector<24x256xf32> to vector<24x256xbf16>
    %cst_476 = arith.constant dense<0.000000e+00> : vector<24x256xf32>
    %488 = tpu.matmul %481, %487, %cst_476 {dimension_numbers = #tpu.dot_dimension_numbers<[1], [0], [0], [1], [0, 0, 1, 1], [], []>} : vector<24x24xbf16>, vector<24x256xbf16>, vector<24x256xf32> -> vector<24x256xf32>
    %c5_477 = arith.constant 5 : index
    %c1_478 = arith.constant 1 : index
    %c0_479 = arith.constant 0 : index
    %c0_480 = arith.constant 0 : index
    %489 = vector.load %arg2[%c5_477, %c1_478, %c0_479, %c0_480] : memref<6x9x24x24xbf16, #tpu.memory_space<vmem>>, vector<1x1x24x24xbf16>
    %490 = vector.shape_cast %489 : vector<1x1x24x24xbf16> to vector<24x24xbf16>
    %c16_i32_481 = arith.constant 16 : i32
    %491 = tpu.dynamic_rotate %478 by %c16_i32_481 dim 1 : vector<24x256xf32>, i32 -> vector<24x256xf32>
    %c1_482 = arith.constant 1 : index
    %c0_483 = arith.constant 0 : index
    %c0_484 = arith.constant 0 : index
    %492 = vector.load %arg6[%c1_482, %c0_483, %c0_484] : memref<9x1x256xf32, #tpu.memory_space<vmem>>, vector<1x1x256xf32>
    %493 = vector.shape_cast %492 : vector<1x1x256xf32> to vector<1x256xf32>
    %494 = vector.broadcast %493 : vector<1x256xf32> to vector<24x256xf32>
    %495 = arith.mulf %491, %494 : vector<24x256xf32>
    %496 = arith.truncf %495 : vector<24x256xf32> to vector<24x256xbf16>
    %cst_485 = arith.constant dense<0.000000e+00> : vector<24x256xf32>
    %497 = tpu.matmul %490, %496, %cst_485 {dimension_numbers = #tpu.dot_dimension_numbers<[1], [0], [0], [1], [0, 0, 1, 1], [], []>} : vector<24x24xbf16>, vector<24x256xbf16>, vector<24x256xf32> -> vector<24x256xf32>
    %498 = arith.addf %488, %497 : vector<24x256xf32>
    %c5_486 = arith.constant 5 : index
    %c2_487 = arith.constant 2 : index
    %c0_488 = arith.constant 0 : index
    %c0_489 = arith.constant 0 : index
    %499 = vector.load %arg2[%c5_486, %c2_487, %c0_488, %c0_489] : memref<6x9x24x24xbf16, #tpu.memory_space<vmem>>, vector<1x1x24x24xbf16>
    %500 = vector.shape_cast %499 : vector<1x1x24x24xbf16> to vector<24x24xbf16>
    %c15_i32_490 = arith.constant 15 : i32
    %501 = tpu.dynamic_rotate %478 by %c15_i32_490 dim 1 : vector<24x256xf32>, i32 -> vector<24x256xf32>
    %c2_491 = arith.constant 2 : index
    %c0_492 = arith.constant 0 : index
    %c0_493 = arith.constant 0 : index
    %502 = vector.load %arg6[%c2_491, %c0_492, %c0_493] : memref<9x1x256xf32, #tpu.memory_space<vmem>>, vector<1x1x256xf32>
    %503 = vector.shape_cast %502 : vector<1x1x256xf32> to vector<1x256xf32>
    %504 = vector.broadcast %503 : vector<1x256xf32> to vector<24x256xf32>
    %505 = arith.mulf %501, %504 : vector<24x256xf32>
    %506 = arith.truncf %505 : vector<24x256xf32> to vector<24x256xbf16>
    %cst_494 = arith.constant dense<0.000000e+00> : vector<24x256xf32>
    %507 = tpu.matmul %500, %506, %cst_494 {dimension_numbers = #tpu.dot_dimension_numbers<[1], [0], [0], [1], [0, 0, 1, 1], [], []>} : vector<24x24xbf16>, vector<24x256xbf16>, vector<24x256xf32> -> vector<24x256xf32>
    %508 = arith.addf %498, %507 : vector<24x256xf32>
    %c5_495 = arith.constant 5 : index
    %c3_496 = arith.constant 3 : index
    %c0_497 = arith.constant 0 : index
    %c0_498 = arith.constant 0 : index
    %509 = vector.load %arg2[%c5_495, %c3_496, %c0_497, %c0_498] : memref<6x9x24x24xbf16, #tpu.memory_space<vmem>>, vector<1x1x24x24xbf16>
    %510 = vector.shape_cast %509 : vector<1x1x24x24xbf16> to vector<24x24xbf16>
    %c1_i32_499 = arith.constant 1 : i32
    %511 = tpu.dynamic_rotate %478 by %c1_i32_499 dim 1 : vector<24x256xf32>, i32 -> vector<24x256xf32>
    %c3_500 = arith.constant 3 : index
    %c0_501 = arith.constant 0 : index
    %c0_502 = arith.constant 0 : index
    %512 = vector.load %arg6[%c3_500, %c0_501, %c0_502] : memref<9x1x256xf32, #tpu.memory_space<vmem>>, vector<1x1x256xf32>
    %513 = vector.shape_cast %512 : vector<1x1x256xf32> to vector<1x256xf32>
    %514 = vector.broadcast %513 : vector<1x256xf32> to vector<24x256xf32>
    %515 = arith.mulf %511, %514 : vector<24x256xf32>
    %516 = arith.truncf %515 : vector<24x256xf32> to vector<24x256xbf16>
    %cst_503 = arith.constant dense<0.000000e+00> : vector<24x256xf32>
    %517 = tpu.matmul %510, %516, %cst_503 {dimension_numbers = #tpu.dot_dimension_numbers<[1], [0], [0], [1], [0, 0, 1, 1], [], []>} : vector<24x24xbf16>, vector<24x256xbf16>, vector<24x256xf32> -> vector<24x256xf32>
    %518 = arith.addf %508, %517 : vector<24x256xf32>
    %c5_504 = arith.constant 5 : index
    %c4_505 = arith.constant 4 : index
    %c0_506 = arith.constant 0 : index
    %c0_507 = arith.constant 0 : index
    %519 = vector.load %arg2[%c5_504, %c4_505, %c0_506, %c0_507] : memref<6x9x24x24xbf16, #tpu.memory_space<vmem>>, vector<1x1x24x24xbf16>
    %520 = vector.shape_cast %519 : vector<1x1x24x24xbf16> to vector<24x24xbf16>
    %cst_508 = arith.constant dense<0.000000e+00> : vector<24x256xf32>
    %521 = tpu.matmul %520, %479, %cst_508 {dimension_numbers = #tpu.dot_dimension_numbers<[1], [0], [0], [1], [0, 0, 1, 1], [], []>} : vector<24x24xbf16>, vector<24x256xbf16>, vector<24x256xf32> -> vector<24x256xf32>
    %522 = arith.addf %518, %521 : vector<24x256xf32>
    %c5_509 = arith.constant 5 : index
    %c5_510 = arith.constant 5 : index
    %c0_511 = arith.constant 0 : index
    %c0_512 = arith.constant 0 : index
    %523 = vector.load %arg2[%c5_509, %c5_510, %c0_511, %c0_512] : memref<6x9x24x24xbf16, #tpu.memory_space<vmem>>, vector<1x1x24x24xbf16>
    %524 = vector.shape_cast %523 : vector<1x1x24x24xbf16> to vector<24x24xbf16>
    %c255_i32_513 = arith.constant 255 : i32
    %525 = tpu.dynamic_rotate %478 by %c255_i32_513 dim 1 : vector<24x256xf32>, i32 -> vector<24x256xf32>
    %c5_514 = arith.constant 5 : index
    %c0_515 = arith.constant 0 : index
    %c0_516 = arith.constant 0 : index
    %526 = vector.load %arg6[%c5_514, %c0_515, %c0_516] : memref<9x1x256xf32, #tpu.memory_space<vmem>>, vector<1x1x256xf32>
    %527 = vector.shape_cast %526 : vector<1x1x256xf32> to vector<1x256xf32>
    %528 = vector.broadcast %527 : vector<1x256xf32> to vector<24x256xf32>
    %529 = arith.mulf %525, %528 : vector<24x256xf32>
    %530 = arith.truncf %529 : vector<24x256xf32> to vector<24x256xbf16>
    %cst_517 = arith.constant dense<0.000000e+00> : vector<24x256xf32>
    %531 = tpu.matmul %524, %530, %cst_517 {dimension_numbers = #tpu.dot_dimension_numbers<[1], [0], [0], [1], [0, 0, 1, 1], [], []>} : vector<24x24xbf16>, vector<24x256xbf16>, vector<24x256xf32> -> vector<24x256xf32>
    %532 = arith.addf %522, %531 : vector<24x256xf32>
    %c5_518 = arith.constant 5 : index
    %c6_519 = arith.constant 6 : index
    %c0_520 = arith.constant 0 : index
    %c0_521 = arith.constant 0 : index
    %533 = vector.load %arg2[%c5_518, %c6_519, %c0_520, %c0_521] : memref<6x9x24x24xbf16, #tpu.memory_space<vmem>>, vector<1x1x24x24xbf16>
    %534 = vector.shape_cast %533 : vector<1x1x24x24xbf16> to vector<24x24xbf16>
    %c241_i32_522 = arith.constant 241 : i32
    %535 = tpu.dynamic_rotate %478 by %c241_i32_522 dim 1 : vector<24x256xf32>, i32 -> vector<24x256xf32>
    %c6_523 = arith.constant 6 : index
    %c0_524 = arith.constant 0 : index
    %c0_525 = arith.constant 0 : index
    %536 = vector.load %arg6[%c6_523, %c0_524, %c0_525] : memref<9x1x256xf32, #tpu.memory_space<vmem>>, vector<1x1x256xf32>
    %537 = vector.shape_cast %536 : vector<1x1x256xf32> to vector<1x256xf32>
    %538 = vector.broadcast %537 : vector<1x256xf32> to vector<24x256xf32>
    %539 = arith.mulf %535, %538 : vector<24x256xf32>
    %540 = arith.truncf %539 : vector<24x256xf32> to vector<24x256xbf16>
    %cst_526 = arith.constant dense<0.000000e+00> : vector<24x256xf32>
    %541 = tpu.matmul %534, %540, %cst_526 {dimension_numbers = #tpu.dot_dimension_numbers<[1], [0], [0], [1], [0, 0, 1, 1], [], []>} : vector<24x24xbf16>, vector<24x256xbf16>, vector<24x256xf32> -> vector<24x256xf32>
    %542 = arith.addf %532, %541 : vector<24x256xf32>
    %c5_527 = arith.constant 5 : index
    %c7_528 = arith.constant 7 : index
    %c0_529 = arith.constant 0 : index
    %c0_530 = arith.constant 0 : index
    %543 = vector.load %arg2[%c5_527, %c7_528, %c0_529, %c0_530] : memref<6x9x24x24xbf16, #tpu.memory_space<vmem>>, vector<1x1x24x24xbf16>
    %544 = vector.shape_cast %543 : vector<1x1x24x24xbf16> to vector<24x24xbf16>
    %c240_i32_531 = arith.constant 240 : i32
    %545 = tpu.dynamic_rotate %478 by %c240_i32_531 dim 1 : vector<24x256xf32>, i32 -> vector<24x256xf32>
    %c7_532 = arith.constant 7 : index
    %c0_533 = arith.constant 0 : index
    %c0_534 = arith.constant 0 : index
    %546 = vector.load %arg6[%c7_532, %c0_533, %c0_534] : memref<9x1x256xf32, #tpu.memory_space<vmem>>, vector<1x1x256xf32>
    %547 = vector.shape_cast %546 : vector<1x1x256xf32> to vector<1x256xf32>
    %548 = vector.broadcast %547 : vector<1x256xf32> to vector<24x256xf32>
    %549 = arith.mulf %545, %548 : vector<24x256xf32>
    %550 = arith.truncf %549 : vector<24x256xf32> to vector<24x256xbf16>
    %cst_535 = arith.constant dense<0.000000e+00> : vector<24x256xf32>
    %551 = tpu.matmul %544, %550, %cst_535 {dimension_numbers = #tpu.dot_dimension_numbers<[1], [0], [0], [1], [0, 0, 1, 1], [], []>} : vector<24x24xbf16>, vector<24x256xbf16>, vector<24x256xf32> -> vector<24x256xf32>
    %552 = arith.addf %542, %551 : vector<24x256xf32>
    %c5_536 = arith.constant 5 : index
    %c8_537 = arith.constant 8 : index
    %c0_538 = arith.constant 0 : index
    %c0_539 = arith.constant 0 : index
    %553 = vector.load %arg2[%c5_536, %c8_537, %c0_538, %c0_539] : memref<6x9x24x24xbf16, #tpu.memory_space<vmem>>, vector<1x1x24x24xbf16>
    %554 = vector.shape_cast %553 : vector<1x1x24x24xbf16> to vector<24x24xbf16>
    %c239_i32_540 = arith.constant 239 : i32
    %555 = tpu.dynamic_rotate %478 by %c239_i32_540 dim 1 : vector<24x256xf32>, i32 -> vector<24x256xf32>
    %c8_541 = arith.constant 8 : index
    %c0_542 = arith.constant 0 : index
    %c0_543 = arith.constant 0 : index
    %556 = vector.load %arg6[%c8_541, %c0_542, %c0_543] : memref<9x1x256xf32, #tpu.memory_space<vmem>>, vector<1x1x256xf32>
    %557 = vector.shape_cast %556 : vector<1x1x256xf32> to vector<1x256xf32>
    %558 = vector.broadcast %557 : vector<1x256xf32> to vector<24x256xf32>
    %559 = arith.mulf %555, %558 : vector<24x256xf32>
    %560 = arith.truncf %559 : vector<24x256xf32> to vector<24x256xbf16>
    %cst_544 = arith.constant dense<0.000000e+00> : vector<24x256xf32>
    %561 = tpu.matmul %554, %560, %cst_544 {dimension_numbers = #tpu.dot_dimension_numbers<[1], [0], [0], [1], [0, 0, 1, 1], [], []>} : vector<24x24xbf16>, vector<24x256xbf16>, vector<24x256xf32> -> vector<24x256xf32>
    %562 = arith.addf %552, %561 : vector<24x256xf32>
    %c5_545 = arith.constant 5 : index
    %c0_546 = arith.constant 0 : index
    %c0_547 = arith.constant 0 : index
    %563 = vector.load %arg3[%c5_545, %c0_546, %c0_547] : memref<6x24x1xf32, #tpu.memory_space<vmem>>, vector<1x24x1xf32>
    %564 = vector.shape_cast %563 : vector<1x24x1xf32> to vector<24x1xf32>
    %565 = vector.broadcast %564 : vector<24x1xf32> to vector<24x256xf32>
    %566 = arith.addf %562, %565 : vector<24x256xf32>
    %cst_548 = arith.constant 2.000000e-01 : f32
    %567 = vector.broadcast %cst_548 : f32 to vector<24x256xf32>
    %568 = arith.mulf %567, %566 : vector<24x256xf32>
    %569 = arith.maximumf %566, %568 : vector<24x256xf32>
    %c0_549 = arith.constant 0 : index
    %c0_550 = arith.constant 0 : index
    %c0_551 = arith.constant 0 : index
    %570 = vector.load %arg1[%c0_549, %c0_550, %c0_551] : memref<1x24x256xf32, #tpu.memory_space<vmem>>, vector<1x24x256xf32>
    %571 = vector.shape_cast %570 : vector<1x24x256xf32> to vector<24x256xf32>
    %572 = arith.addf %569, %571 : vector<24x256xf32>
    %c0_552 = arith.constant 0 : index
    %c0_553 = arith.constant 0 : index
    %c0_554 = arith.constant 0 : index
    %573 = vector.load %arg13[%c0_552, %c0_553, %c0_554] : memref<1x24x256xf32, #tpu.memory_space<vmem>>, vector<1x24x256xf32>
    %574 = vector.shape_cast %573 : vector<1x24x256xf32> to vector<24x256xf32>
    %575 = vector.shape_cast %572 : vector<24x256xf32> to vector<1x24x256xf32>
    tpu.vector_store %arg13[%c0_552, %c0_553, %c0_554], %575 {strides = array<i32>} : memref<1x24x256xf32, #tpu.memory_space<vmem>>, vector<1x24x256xf32>,
    return
  }
  func.func @transform_0(%arg0: i32) -> (i32, i32, i32) {
    %c0_i32 = arith.constant 0 : i32
    %c0_i32_0 = arith.constant 0 : i32
    %c0_i32_1 = arith.constant 0 : i32
    return %arg0, %c0_i32, %c0_i32_0 : i32, i32, i32
  }
  func.func @transform_1(%arg0: i32) -> (i32, i32, i32, i32) {
    %c0_i32 = arith.constant 0 : i32
    %c0_i32_0 = arith.constant 0 : i32
    %c0_i32_1 = arith.constant 0 : i32
    %c0_i32_2 = arith.constant 0 : i32
    %c0_i32_3 = arith.constant 0 : i32
    return %c0_i32, %c0_i32_0, %c0_i32_1, %c0_i32_2 : i32, i32, i32, i32
  }
  func.func @transform_2(%arg0: i32) -> (i32, i32, i32) {
    %c0_i32 = arith.constant 0 : i32
    %c0_i32_0 = arith.constant 0 : i32
    %c0_i32_1 = arith.constant 0 : i32
    %c0_i32_2 = arith.constant 0 : i32
    return %c0_i32, %c0_i32_0, %c0_i32_1 : i32, i32, i32
  }
  func.func @transform_3(%arg0: i32) -> (i32, i32, i32) {
    %c0_i32 = arith.constant 0 : i32
    %c0_i32_0 = arith.constant 0 : i32
    %c0_i32_1 = arith.constant 0 : i32
    %c0_i32_2 = arith.constant 0 : i32
    return %c0_i32, %c0_i32_0, %c0_i32_1 : i32, i32, i32
  }
  func.func @transform_4(%arg0: i32) -> (i32, i32, i32) {
    %c0_i32 = arith.constant 0 : i32
    %c0_i32_0 = arith.constant 0 : i32
    %c0_i32_1 = arith.constant 0 : i32
    %c0_i32_2 = arith.constant 0 : i32
    return %c0_i32, %c0_i32_0, %c0_i32_1 : i32, i32, i32
  }
  func.func @transform_5(%arg0: i32) -> (i32, i32, i32) {
    %c0_i32 = arith.constant 0 : i32
    %c0_i32_0 = arith.constant 0 : i32
    %c0_i32_1 = arith.constant 0 : i32
    %c0_i32_2 = arith.constant 0 : i32
    return %c0_i32, %c0_i32_0, %c0_i32_1 : i32, i32, i32
  }
  func.func @transform_6(%arg0: i32) -> (i32, i32, i32) {
    %c0_i32 = arith.constant 0 : i32
    %c0_i32_0 = arith.constant 0 : i32
    %c0_i32_1 = arith.constant 0 : i32
    %c0_i32_2 = arith.constant 0 : i32
    return %c0_i32, %c0_i32_0, %c0_i32_1 : i32, i32, i32
  }
  func.func @transform_7(%arg0: i32) -> (i32, i32, i32) {
    %c0_i32 = arith.constant 0 : i32
    %c0_i32_0 = arith.constant 0 : i32
    %c0_i32_1 = arith.constant 0 : i32
    %c0_i32_2 = arith.constant 0 : i32
    return %c0_i32, %c0_i32_0, %c0_i32_1 : i32, i32, i32
  }
  func.func @transform_8(%arg0: i32) -> (i32, i32, i32) {
    %c0_i32 = arith.constant 0 : i32
    %c0_i32_0 = arith.constant 0 : i32
    %c0_i32_1 = arith.constant 0 : i32
    %c0_i32_2 = arith.constant 0 : i32
    return %c0_i32, %c0_i32_0, %c0_i32_1 : i32, i32, i32
  }
  func.func @transform_9(%arg0: i32) -> (i32, i32, i32) {
    %c0_i32 = arith.constant 0 : i32
    %c0_i32_0 = arith.constant 0 : i32
    %c0_i32_1 = arith.constant 0 : i32
    %c0_i32_2 = arith.constant 0 : i32
    return %c0_i32, %c0_i32_0, %c0_i32_1 : i32, i32, i32
  }
  func.func @transform_10(%arg0: i32) -> (i32, i32) {
    %c0_i32 = arith.constant 0 : i32
    %c0_i32_0 = arith.constant 0 : i32
    %c0_i32_1 = arith.constant 0 : i32
    return %c0_i32, %c0_i32_0 : i32, i32
  }
  func.func @transform_11(%arg0: i32) -> (i32, i32) {
    %c0_i32 = arith.constant 0 : i32
    %c0_i32_0 = arith.constant 0 : i32
    %c0_i32_1 = arith.constant 0 : i32
    return %c0_i32, %c0_i32_0 : i32, i32
  }
  func.func @transform_12(%arg0: i32) -> (i32, i32, i32) {
    %c0_i32 = arith.constant 0 : i32
    %c0_i32_0 = arith.constant 0 : i32
    %c0_i32_1 = arith.constant 0 : i32
    return %arg0, %c0_i32, %c0_i32_0 : i32, i32, i32
  }
}

</mosaic_0001>

<llo_original>
// kernel: tpu_custom_call.1
$region0: #{tpu_custom_call.1}
  #allocation0 [shape = 'u32[]', space=smem, size = 0x4, offset = 0x4, fixed_abs, tag = 'smem constant byte address 0x4 - core index']
  #allocation1 [shape = 'u32[144,128]{1,0:T(1,128)}', space=vmem, size = 0x12000, scoped, tag = 'internal scratch']
  %s0 = inlined_call_operand.vmem [shape: f32[2,24,256], index: 0, kind: input, shape index: {}]
  %s1 = inlined_call_operand.vmem [shape: bf16[6,9,24,24], index: 1, kind: input, shape index: {}]
  %s2 = inlined_call_operand.vmem [shape: f32[6,24,1], index: 2, kind: input, shape index: {}]
  %s3 = inlined_call_operand.hbm [shape: bf16[4,24,24], index: 3, kind: input, shape index: {}]
  %s4 = inlined_call_operand.vmem [shape: f32[2,24,1], index: 4, kind: input, shape index: {}]
  %s5 = inlined_call_operand.hbm [shape: f32[9,1,256], index: 5, kind: input, shape index: {}]
  %s6 = inlined_call_operand.vmem [shape: bf16[9,64,64], index: 6, kind: input, shape index: {}]
  %s7 = inlined_call_operand.vmem [shape: bf16[9,16,16], index: 7, kind: input, shape index: {}]
  %s8 = inlined_call_operand.vmem [shape: bf16[4,256,64], index: 8, kind: input, shape index: {}]
  %s9 = inlined_call_operand.vmem [shape: bf16[4,64,16], index: 9, kind: input, shape index: {}]
  %s10 = inlined_call_operand.vmem [shape: bf16[16,64], index: 10, kind: input, shape index: {}]
  %s11 = inlined_call_operand.hbm [shape: bf16[64,256], index: 11, kind: input, shape index: {}]
  %s12 = inlined_call_operand.hbm [shape: f32[2,24,256], index: 12, kind: output, shape index: {}]
  %s13 = sld [smem:[#allocation0]]
  $region93: #{tpu_custom_call.1} parent=0
    _
  %s15 = ssub.s32 1, %s13
  %s16 = scalar_select 0, %s15, %s13
  $region1: #{tpu_custom_call.1} parent=0
    #allocation2 [shape = 'u8[24576]{0}', space=vmem, size = 0x6000, scoped, tag = 'input window, operand 3, single buffered']
    #allocation3 [shape = 's32[2]{0}', space=sflag, size = 0x8, scoped, tag = 'scoped memory for tpu_custom_call.1']
    #allocation4 [shape = 's32[2]{0}', space=sflag, size = 0x8, scoped, tag = 'scoped memory for tpu_custom_call.1']
    #allocation5 [shape = 'u8[9216]{0}', space=vmem, size = 0x2400, scoped, tag = 'input window, operand 5, single buffered']
    #allocation6 [shape = 's32[1]{0}', space=sflag, size = 0x4, scoped, tag = 'scoped memory for tpu_custom_call.1']
    #allocation7 [shape = 'u8[32768]{0}', space=vmem, size = 0x8000, scoped, tag = 'input window, operand 11, single buffered']
    #allocation8 [shape = 'u8[49152]{0}', space=vmem, size = 0xc000, scoped, tag = 'output window, operand 0']
    %17 = vsyncpa [#allocation3], 0
    %18 = vsyncpa [#allocation6], 0
    %19 = vsyncpa [#allocation4], 0
    %s20 = scalar_lea.sflag [#allocation4], 1
    %21 = vsyncpa %s20, 0
    loop: start=0, step=1, limit=4
    $region2: #{tpu_custom_call.1} parent=1 // loop_pre_header
      _
    $region3: #{tpu_custom_call.1} parent=1 // loop_header
      %s23 = sphi 0, %s27
      %p24 = scmp.ge.s32.totalorder %s23, 4
      %s33 = sphi 0, %s35
      %s36 = sphi 0, %s33
      %s37 = sphi 0, %s36
      %s53 = sphi 0, %s37
      %s57 = sphi 0, %s57
      %s59 = sphi 0, %s57
      %s60 = sphi 0, %s59
      %s74 = sphi 0, %s60
      %s78 = sphi 0, %s78
      %s80 = sphi 0, %s78
      %s81 = sphi 0, %s80
      %s95 = sphi 0, %s81
      %s99 = sphi 0, %s99
      %s101 = sphi 0, %s99
      %s102 = sphi 0, %s101
      %s116 = sphi 0, %s102
      %s120 = sphi 0, %s120
      %s122 = sphi 0, %s120
      %s123 = sphi 0, %s122
      %s137 = sphi 0, %s123
      %s141 = sphi 0, %s141
      %s143 = sphi 0, %s141
      %s144 = sphi 0, %s143
      %s158 = sphi 0, %s144
      %s162 = sphi 0, %s162
      %s164 = sphi 0, %s162
      %s165 = sphi 0, %s164
      %s179 = sphi 0, %s165
      %s183 = sphi 0, %s183
      %s185 = sphi 0, %s183
      %s186 = sphi 0, %s185
      %s200 = sphi 0, %s186
      %s204 = sphi 0, %s204
      %s206 = sphi 0, %s204
      %s207 = sphi 0, %s206
      %s221 = sphi 0, %s207
      %s225 = sphi 0, %s225
      %s227 = sphi 0, %s225
      %s228 = sphi 0, %s227
      %s242 = sphi 0, %s228
      %s246 = sphi 0, %s246
      %s248 = sphi 0, %s246
      %s249 = sphi 0, %s248
      %s263 = sphi 0, %s249
      %s267 = sphi 0, %s267
      %s269 = sphi 0, %s267
      %s270 = sphi 0, %s269
      %s284 = sphi 0, %s270
      %s290 = sphi 0, %s292
      %s293 = sphi 0, %s290
      %s294 = sphi 0, %s293
      %s310 = sphi 0, %s294
    $region4: #{tpu_custom_call.1} parent=1 // loop_header_branch
      %26 = sbr.rel (%p24) target = $region8
    $region5: #{tpu_custom_call.1} parent=1 // loop_body
      %s28 = ssub.s32 %s23, 1
      %s29 = ssub.s32 %s23, 2
      %s30 = sadd.s32 %s23, 1
      %s31 = ssub.s32 %s23, %s30
      %p32 = scmp.eq.s32.totalorder %s31, 0
      %s34 = sadd.s32 %s33, 1
      %s35 = scalar_select %p32, %s33, %s34
      %p38 = pneg %p32
      %p39 = scmp.eq.s32.totalorder %s23, 1
      %p40 = por %p38, %p39
      %p41 = scmp.ne.s32.totalorder %s33, %s36
      %p42 = scmp.eq.s32.totalorder %s23, 0
      %p43 = por %p41, %p42
      %p44 = scmp.ne.s32.totalorder %s33, %s36
      %p45 = scmp.eq.s32.totalorder %s28, 1
      %p46 = por %p44, %p45
      %p47 = scmp.ne.s32.totalorder %s36, %s37
      %p48 = scmp.eq.s32.totalorder %s28, 0
      %p49 = por %p47, %p48
      %p50 = scmp.ne.s32.totalorder %s36, %s37
      %p51 = scmp.eq.s32.totalorder %s29, 1
      %p52 = por %p50, %p51
      %p54 = scmp.ne.s32.totalorder %s37, %s53
      %p55 = scmp.eq.s32.totalorder %s29, 0
      %p56 = por %p54, %p55
      %s58 = sadd.s32 %s57, 1
      %p61 = scmp.eq.s32.totalorder %s23, 1
      %p62 = scmp.ne.s32.totalorder %s57, %s59
      %p63 = scmp.eq.s32.totalorder %s23, 0
      %p64 = por %p62, %p63
      %p65 = scmp.ne.s32.totalorder %s57, %s59
      %p66 = scmp.eq.s32.totalorder %s28, 1
      %p67 = por %p65, %p66
      %p68 = scmp.ne.s32.totalorder %s59, %s60
      %p69 = scmp.eq.s32.totalorder %s28, 0
      %p70 = por %p68, %p69
      %p71 = scmp.ne.s32.totalorder %s59, %s60
      %p72 = scmp.eq.s32.totalorder %s29, 1
      %p73 = por %p71, %p72
      %p75 = scmp.ne.s32.totalorder %s60, %s74
      %p76 = scmp.eq.s32.totalorder %s29, 0
      %p77 = por %p75, %p76
      %s79 = sadd.s32 %s78, 1
      %p82 = scmp.eq.s32.totalorder %s23, 1
      %p83 = scmp.ne.s32.totalorder %s78, %s80
      %p84 = scmp.eq.s32.totalorder %s23, 0
      %p85 = por %p83, %p84
      %p86 = scmp.ne.s32.totalorder %s78, %s80
      %p87 = scmp.eq.s32.totalorder %s28, 1
      %p88 = por %p86, %p87
      %p89 = scmp.ne.s32.totalorder %s80, %s81
      %p90 = scmp.eq.s32.totalorder %s28, 0
      %p91 = por %p89, %p90
      %p92 = scmp.ne.s32.totalorder %s80, %s81
      %p93 = scmp.eq.s32.totalorder %s29, 1
      %p94 = por %p92, %p93
      %p96 = scmp.ne.s32.totalorder %s81, %s95
      %p97 = scmp.eq.s32.totalorder %s29, 0
      %p98 = por %p96, %p97
      %s100 = sadd.s32 %s99, 1
      %p103 = scmp.eq.s32.totalorder %s23, 1
      %p104 = scmp.ne.s32.totalorder %s99, %s101
      %p105 = scmp.eq.s32.totalorder %s23, 0
      %p106 = por %p104, %p105
      %p107 = scmp.ne.s32.totalorder %s99, %s101
      %p108 = scmp.eq.s32.totalorder %s28, 1
      %p109 = por %p107, %p108
      %p110 = scmp.ne.s32.totalorder %s101, %s102
      %p111 = scmp.eq.s32.totalorder %s28, 0
      %p112 = por %p110, %p111
      %p113 = scmp.ne.s32.totalorder %s101, %s102
      %p114 = scmp.eq.s32.totalorder %s29, 1
      %p115 = por %p113, %p114
      %p117 = scmp.ne.s32.totalorder %s102, %s116
      %p118 = scmp.eq.s32.totalorder %s29, 0
      %p119 = por %p117, %p118
      %s121 = sadd.s32 %s120, 1
      %p124 = scmp.eq.s32.totalorder %s23, 1
      %p125 = scmp.ne.s32.totalorder %s120, %s122
      %p126 = scmp.eq.s32.totalorder %s23, 0
      %p127 = por %p125, %p126
      %p128 = scmp.ne.s32.totalorder %s120, %s122
      %p129 = scmp.eq.s32.totalorder %s28, 1
      %p130 = por %p128, %p129
      %p131 = scmp.ne.s32.totalorder %s122, %s123
      %p132 = scmp.eq.s32.totalorder %s28, 0
      %p133 = por %p131, %p132
      %p134 = scmp.ne.s32.totalorder %s122, %s123
      %p135 = scmp.eq.s32.totalorder %s29, 1
      %p136 = por %p134, %p135
      %p138 = scmp.ne.s32.totalorder %s123, %s137
      %p139 = scmp.eq.s32.totalorder %s29, 0
      %p140 = por %p138, %p139
      %s142 = sadd.s32 %s141, 1
      %p145 = scmp.eq.s32.totalorder %s23, 1
      %p146 = scmp.ne.s32.totalorder %s141, %s143
      %p147 = scmp.eq.s32.totalorder %s23, 0
      %p148 = por %p146, %p147
      %p149 = scmp.ne.s32.totalorder %s141, %s143
      %p150 = scmp.eq.s32.totalorder %s28, 1
      %p151 = por %p149, %p150
      %p152 = scmp.ne.s32.totalorder %s143, %s144
      %p153 = scmp.eq.s32.totalorder %s28, 0
      %p154 = por %p152, %p153
      %p155 = scmp.ne.s32.totalorder %s143, %s144
      %p156 = scmp.eq.s32.totalorder %s29, 1
      %p157 = por %p155, %p156
      %p159 = scmp.ne.s32.totalorder %s144, %s158
      %p160 = scmp.eq.s32.totalorder %s29, 0
      %p161 = por %p159, %p160
      %s163 = sadd.s32 %s162, 1
      %p166 = scmp.eq.s32.totalorder %s23, 1
      %p167 = scmp.ne.s32.totalorder %s162, %s164
      %p168 = scmp.eq.s32.totalorder %s23, 0
      %p169 = por %p167, %p168
      %p170 = scmp.ne.s32.totalorder %s162, %s164
      %p171 = scmp.eq.s32.totalorder %s28, 1
      %p172 = por %p170, %p171
      %p173 = scmp.ne.s32.totalorder %s164, %s165
      %p174 = scmp.eq.s32.totalorder %s28, 0
      %p175 = por %p173, %p174
      %p176 = scmp.ne.s32.totalorder %s164, %s165
      %p177 = scmp.eq.s32.totalorder %s29, 1
      %p178 = por %p176, %p177
      %p180 = scmp.ne.s32.totalorder %s165, %s179
      %p181 = scmp.eq.s32.totalorder %s29, 0
      %p182 = por %p180, %p181
      %s184 = sadd.s32 %s183, 1
      %p187 = scmp.eq.s32.totalorder %s23, 1
      %p188 = scmp.ne.s32.totalorder %s183, %s185
      %p189 = scmp.eq.s32.totalorder %s23, 0
      %p190 = por %p188, %p189
      %p191 = scmp.ne.s32.totalorder %s183, %s185
      %p192 = scmp.eq.s32.totalorder %s28, 1
      %p193 = por %p191, %p192
      %p194 = scmp.ne.s32.totalorder %s185, %s186
      %p195 = scmp.eq.s32.totalorder %s28, 0
      %p196 = por %p194, %p195
      %p197 = scmp.ne.s32.totalorder %s185, %s186
      %p198 = scmp.eq.s32.totalorder %s29, 1
      %p199 = por %p197, %p198
      %p201 = scmp.ne.s32.totalorder %s186, %s200
      %p202 = scmp.eq.s32.totalorder %s29, 0
      %p203 = por %p201, %p202
      %s205 = sadd.s32 %s204, 1
      %p208 = scmp.eq.s32.totalorder %s23, 1
      %p209 = scmp.ne.s32.totalorder %s204, %s206
      %p210 = scmp.eq.s32.totalorder %s23, 0
      %p211 = por %p209, %p210
      %p212 = scmp.ne.s32.totalorder %s204, %s206
      %p213 = scmp.eq.s32.totalorder %s28, 1
      %p214 = por %p212, %p213
      %p215 = scmp.ne.s32.totalorder %s206, %s207
      %p216 = scmp.eq.s32.totalorder %s28, 0
      %p217 = por %p215, %p216
      %p218 = scmp.ne.s32.totalorder %s206, %s207
      %p219 = scmp.eq.s32.totalorder %s29, 1
      %p220 = por %p218, %p219
      %p222 = scmp.ne.s32.totalorder %s207, %s221
      %p223 = scmp.eq.s32.totalorder %s29, 0
      %p224 = por %p222, %p223
      %s226 = sadd.s32 %s225, 1
      %p229 = scmp.eq.s32.totalorder %s23, 1
      %p230 = scmp.ne.s32.totalorder %s225, %s227
      %p231 = scmp.eq.s32.totalorder %s23, 0
      %p232 = por %p230, %p231
      %p233 = scmp.ne.s32.totalorder %s225, %s227
      %p234 = scmp.eq.s32.totalorder %s28, 1
      %p235 = por %p233, %p234
      %p236 = scmp.ne.s32.totalorder %s227, %s228
      %p237 = scmp.eq.s32.totalorder %s28, 0
      %p238 = por %p236, %p237
      %p239 = scmp.ne.s32.totalorder %s227, %s228
      %p240 = scmp.eq.s32.totalorder %s29, 1
      %p241 = por %p239, %p240
      %p243 = scmp.ne.s32.totalorder %s228, %s242
      %p244 = scmp.eq.s32.totalorder %s29, 0
      %p245 = por %p243, %p244
      %s247 = sadd.s32 %s246, 1
      %p250 = scmp.eq.s32.totalorder %s23, 1
      %p251 = scmp.ne.s32.totalorder %s246, %s248
      %p252 = scmp.eq.s32.totalorder %s23, 0
      %p253 = por %p251, %p252
      %p254 = scmp.ne.s32.totalorder %s246, %s248
      %p255 = scmp.eq.s32.totalorder %s28, 1
      %p256 = por %p254, %p255
      %p257 = scmp.ne.s32.totalorder %s248, %s249
      %p258 = scmp.eq.s32.totalorder %s28, 0
      %p259 = por %p257, %p258
      %p260 = scmp.ne.s32.totalorder %s248, %s249
      %p261 = scmp.eq.s32.totalorder %s29, 1
      %p262 = por %p260, %p261
      %p264 = scmp.ne.s32.totalorder %s249, %s263
      %p265 = scmp.eq.s32.totalorder %s29, 0
      %p266 = por %p264, %p265
      %s268 = sadd.s32 %s267, 1
      %p271 = scmp.eq.s32.totalorder %s23, 1
      %p272 = scmp.ne.s32.totalorder %s267, %s269
      %p273 = scmp.eq.s32.totalorder %s23, 0
      %p274 = por %p272, %p273
      %p275 = scmp.ne.s32.totalorder %s267, %s269
      %p276 = scmp.eq.s32.totalorder %s28, 1
      %p277 = por %p275, %p276
      %p278 = scmp.ne.s32.totalorder %s269, %s270
      %p279 = scmp.eq.s32.totalorder %s28, 0
      %p280 = por %p278, %p279
      %p281 = scmp.ne.s32.totalorder %s269, %s270
      %p282 = scmp.eq.s32.totalorder %s29, 1
      %p283 = por %p281, %p282
      %p285 = scmp.ne.s32.totalorder %s270, %s284
      %p286 = scmp.eq.s32.totalorder %s29, 0
      %p287 = por %p285, %p286
      %s288 = ssub.s32 %s23, %s30
      %p289 = scmp.eq.s32.totalorder %s288, 0
      %s291 = sadd.s32 %s290, 1
      %s292 = scalar_select %p289, %s290, %s291
      %p295 = pneg %p289
      %p296 = scmp.eq.s32.totalorder %s23, 1
      %p297 = por %p295, %p296
      %p298 = scmp.ne.s32.totalorder %s290, %s293
      %p299 = scmp.eq.s32.totalorder %s23, 0
      %p300 = por %p298, %p299
      %p301 = scmp.ne.s32.totalorder %s290, %s293
      %p302 = scmp.eq.s32.totalorder %s28, 1
      %p303 = por %p301, %p302
      %p304 = scmp.ne.s32.totalorder %s293, %s294
      %p305 = scmp.eq.s32.totalorder %s28, 0
      %p306 = por %p304, %p305
      %p307 = scmp.ne.s32.totalorder %s293, %s294
      %p308 = scmp.eq.s32.totalorder %s29, 1
      %p309 = por %p307, %p308
      %p311 = scmp.ne.s32.totalorder %s294, %s310
      %p312 = scmp.eq.s32.totalorder %s29, 0
      %p313 = por %p311, %p312
      %p314 = scmp.le.s32.totalorder 1, %s23
      %p315 = scmp.lt.s32.totalorder %s23, 3
      %p316 = pnand %p314, %p315
      %p317 = pneg %p316
      // Predicated region
      $region9: #{tpu_custom_call.1} parent=5 // pred_check
        _
      $region10: #{tpu_custom_call.1} parent=5 // pred_check_branch
        %319 = sbr.rel (%p316) target = $region12
      $region11: #{tpu_custom_call.1} parent=5 // pred_region
        %s320 = ssub.s32 %s23, 1
        // Predicated region
        $region13: #{tpu_custom_call.1} parent=11 // pred_check
          %p321 = pneg %p70
        $region14: #{tpu_custom_call.1} parent=11 // pred_check_branch
          %323 = sbr.rel (%p321) target = $region16
        $region15: #{tpu_custom_call.1} parent=11 // pred_region
          _
        $region16: #{tpu_custom_call.1} parent=11 // pred_fallthru
          _
        // Predicated region
        $region17: #{tpu_custom_call.1} parent=11 // pred_check
          %p324 = pneg %p91
        $region18: #{tpu_custom_call.1} parent=11 // pred_check_branch
          %326 = sbr.rel (%p324) target = $region20
        $region19: #{tpu_custom_call.1} parent=11 // pred_region
          _
        $region20: #{tpu_custom_call.1} parent=11 // pred_fallthru
          _
        // Predicated region
        $region21: #{tpu_custom_call.1} parent=11 // pred_check
          %p327 = pneg %p112
        $region22: #{tpu_custom_call.1} parent=11 // pred_check_branch
          %329 = sbr.rel (%p327) target = $region24
        $region23: #{tpu_custom_call.1} parent=11 // pred_region
          %s331 = ssub.s32 768, 768
          %332 = vsyncadd [#allocation3], %s331
          %s333 = sshll.u32 [#allocation2], 4
          %s334 = int_to_ptr.vmem [resolvable:$true] %s333
          %339 = dma.hbm_to_vmem [thread:$0]  %s3, 768, %s334, [#allocation3], 64, 64, 4
        $region24: #{tpu_custom_call.1} parent=11 // pred_fallthru
          _
        // Predicated region
        $region25: #{tpu_custom_call.1} parent=11 // pred_check
          %p340 = pneg %p133
        $region26: #{tpu_custom_call.1} parent=11 // pred_check_branch
          %342 = sbr.rel (%p340) target = $region28
        $region27: #{tpu_custom_call.1} parent=11 // pred_region
          _
        $region28: #{tpu_custom_call.1} parent=11 // pred_fallthru
          _
        // Predicated region
        $region29: #{tpu_custom_call.1} parent=11 // pred_check
          %p343 = pneg %p154
        $region30: #{tpu_custom_call.1} parent=11 // pred_check_branch
          %345 = sbr.rel (%p343) target = $region32
        $region31: #{tpu_custom_call.1} parent=11 // pred_region
          %s347 = ssub.s32 288, 288
          %348 = vsyncadd [#allocation6], %s347
          %s349 = sshll.u32 [#allocation5], 4
          %s350 = int_to_ptr.vmem [resolvable:$true] %s349
          %355 = dma.hbm_to_vmem [thread:$0]  %s5, 288, %s350, [#allocation6], 32, 32, 2
        $region32: #{tpu_custom_call.1} parent=11 // pred_fallthru
          _
        // Predicated region
        $region33: #{tpu_custom_call.1} parent=11 // pred_check
          %p356 = pneg %p175
        $region34: #{tpu_custom_call.1} parent=11 // pred_check_branch
          %358 = sbr.rel (%p356) target = $region36
        $region35: #{tpu_custom_call.1} parent=11 // pred_region
          _
        $region36: #{tpu_custom_call.1} parent=11 // pred_fallthru
          _
        // Predicated region
        $region37: #{tpu_custom_call.1} parent=11 // pred_check
          %p359 = pneg %p196
        $region38: #{tpu_custom_call.1} parent=11 // pred_check_branch
          %361 = sbr.rel (%p359) target = $region40
        $region39: #{tpu_custom_call.1} parent=11 // pred_region
          _
        $region40: #{tpu_custom_call.1} parent=11 // pred_fallthru
          _
        // Predicated region
        $region41: #{tpu_custom_call.1} parent=11 // pred_check
          %p362 = pneg %p217
        $region42: #{tpu_custom_call.1} parent=11 // pred_check_branch
          %364 = sbr.rel (%p362) target = $region44
        $region43: #{tpu_custom_call.1} parent=11 // pred_region
          _
        $region44: #{tpu_custom_call.1} parent=11 // pred_fallthru
          _
        // Predicated region
        $region45: #{tpu_custom_call.1} parent=11 // pred_check
          %p365 = pneg %p238
        $region46: #{tpu_custom_call.1} parent=11 // pred_check_branch
          %367 = sbr.rel (%p365) target = $region48
        $region47: #{tpu_custom_call.1} parent=11 // pred_region
          _
        $region48: #{tpu_custom_call.1} parent=11 // pred_fallthru
          _
        // Predicated region
        $region49: #{tpu_custom_call.1} parent=11 // pred_check
          %p368 = pneg %p259
        $region50: #{tpu_custom_call.1} parent=11 // pred_check_branch
          %370 = sbr.rel (%p368) target = $region52
        $region51: #{tpu_custom_call.1} parent=11 // pred_region
          _
        $region52: #{tpu_custom_call.1} parent=11 // pred_fallthru
          _
        // Predicated region
        $region53: #{tpu_custom_call.1} parent=11 // pred_check
          %p371 = pneg %p280
        $region54: #{tpu_custom_call.1} parent=11 // pred_check_branch
          %373 = sbr.rel (%p371) target = $region56
        $region55: #{tpu_custom_call.1} parent=11 // pred_region
          %s375 = ssub.s32 1024, 1024
          %376 = vsyncadd [#allocation6], %s375
          %s377 = sshll.u32 [#allocation7], 4
          %s378 = int_to_ptr.vmem [resolvable:$true] %s377
          %383 = dma.hbm_to_vmem [thread:$0]  %s11, 1024, %s378, [#allocation6], 128, 128, 8
        $region56: #{tpu_custom_call.1} parent=11 // pred_fallthru
          _
      $region12: #{tpu_custom_call.1} parent=5 // pred_fallthru
        _
      %p384 = scmp.lt.s32.totalorder %s23, 2
      // Predicated region
      $region57: #{tpu_custom_call.1} parent=5 // pred_check
        %p385 = pneg %p384
      $region58: #{tpu_custom_call.1} parent=5 // pred_check_branch
        %387 = sbr.rel (%p385) target = $region60
      $region59: #{tpu_custom_call.1} parent=5 // pred_region
        // Predicated region
        $region61: #{tpu_custom_call.1} parent=59 // pred_check
          %p388 = pneg %p43
        $region62: #{tpu_custom_call.1} parent=59 // pred_check_branch
          %390 = sbr.rel (%p388) target = $region64
        $region63: #{tpu_custom_call.1} parent=59 // pred_region
          %p391 = scmp.lt.s32.totalorder %s23, 1
          %s392 = scalar_select %p391, %s23, 1
          %s393 = smul.addr %s392, 6
          %s394 = smul.addr %s393, 8
          %s395 = scalar_lea.vmem %s0, %s394
        $region64: #{tpu_custom_call.1} parent=59 // pred_fallthru
          _
      $region60: #{tpu_custom_call.1} parent=5 // pred_fallthru
        _
      %p396 = scmp.le.s32.totalorder 1, %s23
      %p397 = scmp.lt.s32.totalorder %s23, 3
      %p398 = pnand %p396, %p397
      %p399 = pneg %p398
      // Predicated region
      $region65: #{tpu_custom_call.1} parent=5 // pred_check
        _
      $region66: #{tpu_custom_call.1} parent=5 // pred_check_branch
        %401 = sbr.rel (%p398) target = $region68
      $region67: #{tpu_custom_call.1} parent=5 // pred_region
        %s402 = ssub.s32 %s23, 1
        // Predicated region
        $region69: #{tpu_custom_call.1} parent=67 // pred_check
          %p403 = pneg %p112
        $region70: #{tpu_custom_call.1} parent=67 // pred_check_branch
          %405 = sbr.rel (%p403) target = $region72
        $region71: #{tpu_custom_call.1} parent=67 // pred_region
          %406 = dma.done [#allocation3], 768
        $region72: #{tpu_custom_call.1} parent=67 // pred_fallthru
          _
        // Predicated region
        $region73: #{tpu_custom_call.1} parent=67 // pred_check
          %p407 = pneg %p154
        $region74: #{tpu_custom_call.1} parent=67 // pred_check_branch
          %409 = sbr.rel (%p407) target = $region76
        $region75: #{tpu_custom_call.1} parent=67 // pred_region
          %410 = dma.done [#allocation6], 288
        $region76: #{tpu_custom_call.1} parent=67 // pred_fallthru
          _
        // Predicated region
        $region77: #{tpu_custom_call.1} parent=67 // pred_check
          %p411 = pneg %p280
        $region78: #{tpu_custom_call.1} parent=67 // pred_check_branch
          %413 = sbr.rel (%p411) target = $region80
        $region79: #{tpu_custom_call.1} parent=67 // pred_region
          %414 = dma.done [#allocation6], 1024
        $region80: #{tpu_custom_call.1} parent=67 // pred_fallthru
          _
        %p415 = scmp.lt.s32.totalorder %s28, 1
        %s416 = scalar_select %p415, %s28, 1
        %s417 = smul.addr %s416, 6
        %s418 = smul.addr %s417, 8
        %s419 = scalar_lea.vmem %s0, %s418
        %p420 = pneg %p49
        %p421 = pneg %p46
        %p422 = pneg %p70
        %p423 = pneg %p67
        %p424 = pneg %p91
        %p425 = pneg %p88
        %p426 = pneg %p112
        %p427 = pneg %p109
        %p428 = pneg %p133
        %p429 = pneg %p130
        %p430 = pneg %p154
        %p431 = pneg %p151
        %p432 = pneg %p175
        %p433 = pneg %p172
        %p434 = pneg %p196
        %p435 = pneg %p193
        %p436 = pneg %p217
        %p437 = pneg %p214
        %p438 = pneg %p238
        %p439 = pneg %p235
        %p440 = pneg %p259
        %p441 = pneg %p256
        %p442 = pneg %p280
        %p443 = pneg %p277
        %p444 = pneg %p306
        %p445 = pneg %p303
        %s446 = sand.u32 %s293, 1
        %s447 = scalar_lea.sflag [#allocation4], %s446
        %s448 = sand.u32 %s293, 1
        %s449 = smul.addr %s448, 48
        %s450 = scalar_lea.vmem [#allocation8], %s449
        %p451 = scmp.lt.s32.totalorder %s28, 1
        %s452 = scalar_select %p451, %s28, 1
        %s453 = smul.addr %s452, 6
        %s454 = smul.addr %s453, 8
        %s455 = scalar_lea.vmem %s0, %s454
        %v457 = vld [vmem:[%s455] sm:$0xff]
        %v458 = vld [vmem:[%s455 + $0x8] sm:$0xff]
        %v459 = vld [vmem:[%s455 + $0x10] sm:$0xff]
        %v460 = vld [vmem:[%s455 + $0x18] sm:$0xff]
        %v461 = vld [vmem:[%s455 + $0x20] sm:$0xff]
        %v462 = vld [vmem:[%s455 + $0x28] sm:$0xff]
        %v463 = vpack.c.bf16 %v459, %v457
        %v464 = vpack.c.bf16 %v460, %v458
        %v465 = vpack.c.bf16 %v461, %v461
        %v466 = vpack.c.bf16 %v462, %v462
        %v467 = vld [vmem:[%s1] sm:$0xf]
        %v468 = vld [vmem:[%s1 + $0x4] sm:$0xf]
        %v469 = vld [vmem:[%s1 + $0x8] sm:$0xf]
        %470 = vrot.lane.b32.xlu0 %v457, 17
        %v471 = vpop.permute.xlu0 %470
        %472 = vrot.lane.b32.xlu0 %v459, 17
        %v473 = vpop.permute.xlu0 %472
        %474 = vrot.lane.b32.xlu0 %v461, 17
        %v475 = vpop.permute.xlu0 %474
        %476 = vrot.lane.b32.xlu0 %v458, 17
        %v477 = vpop.permute.xlu0 %476
        %478 = vrot.lane.b32.xlu0 %v460, 17
        %v479 = vpop.permute.xlu0 %478
        %480 = vrot.lane.b32.xlu0 %v462, 17
        %v481 = vpop.permute.xlu0 %480
        %v482 = vlaneseq
        %v483 = vand.u32 %v482, 127
        %vm484 = vcmp.lt.s32.totalorder %v483, 17
        %v485 = vsel %vm484, %v471, %v477
        %v486 = vsel %vm484, %v473, %v479
        %v487 = vsel %vm484, %v475, %v481
        %v488 = vsel %vm484, %v477, %v471
        %v489 = vsel %vm484, %v479, %v473
        %v490 = vsel %vm484, %v481, %v475
        %v491 = vld [vmem:[#allocation5] sm:$0x3]
        %v493 = vlaneseq
        %v494 = vshrl.u32 %v493, 7
        %v495 = vsub.s32 0, %v494
        %v496 = vrot.slane %v491, %v495
        %v497 = vlaneseq
        %v498 = vshrl.u32 %v497, 7
        %v499 = vsub.s32 1, %v498
        %v500 = vrot.slane %v491, %v499
        %v503 = vmul.f32 %v488, %v496
        %v504 = vmul.f32 %v485, %v500
        %v505 = vmul.f32 %v489, %v496
        %v506 = vmul.f32 %v486, %v500
        %v507 = vmul.f32 %v490, %v496
        %v508 = vmul.f32 %v487, %v500
        %v509 = vpack.c.bf16 %v505, %v503
        %v510 = vpack.c.bf16 %v506, %v504
        %v511 = vpack.c.bf16 %v507, %v507
        %v512 = vpack.c.bf16 %v508, %v508
        %s513 = scalar_lea.vmem %s1, 12
        %v514 = vld [vmem:[%s513] sm:$0xf]
        %v515 = vld [vmem:[%s513 + $0x4] sm:$0xf]
        %v516 = vld [vmem:[%s513 + $0x8] sm:$0xf]
        %517 = vrot.lane.b32.xlu0 %v457, 16
        %v518 = vpop.permute.xlu0 %517
        %519 = vrot.lane.b32.xlu0 %v459, 16
        %v520 = vpop.permute.xlu0 %519
        %521 = vrot.lane.b32.xlu0 %v461, 16
        %v522 = vpop.permute.xlu0 %521
        %523 = vrot.lane.b32.xlu0 %v458, 16
        %v524 = vpop.permute.xlu0 %523
        %525 = vrot.lane.b32.xlu0 %v460, 16
        %v526 = vpop.permute.xlu0 %525
        %527 = vrot.lane.b32.xlu0 %v462, 16
        %v528 = vpop.permute.xlu0 %527
        %vm529 = vcmp.lt.s32.totalorder %v483, 16
        %v530 = vsel %vm529, %v518, %v524
        %v531 = vsel %vm529, %v520, %v526
        %v532 = vsel %vm529, %v522, %v528
        %v533 = vsel %vm529, %v524, %v518
        %v534 = vsel %vm529, %v526, %v520
        %v535 = vsel %vm529, %v528, %v522
        %s536 = scalar_lea.vmem [#allocation5], 2
        %v537 = vld [vmem:[%s536] sm:$0x3]
        %v539 = vlaneseq
        %v540 = vshrl.u32 %v539, 7
        %v541 = vsub.s32 0, %v540
        %v542 = vrot.slane %v537, %v541
        %v543 = vlaneseq
        %v544 = vshrl.u32 %v543, 7
        %v545 = vsub.s32 1, %v544
        %v546 = vrot.slane %v537, %v545
        %v549 = vmul.f32 %v533, %v542
        %v550 = vmul.f32 %v530, %v546
        %v551 = vmul.f32 %v534, %v542
        %v552 = vmul.f32 %v531, %v546
        %v553 = vmul.f32 %v535, %v542
        %v554 = vmul.f32 %v532, %v546
        %v555 = vpack.c.bf16 %v551, %v549
        %v556 = vpack.c.bf16 %v552, %v550
        %v557 = vpack.c.bf16 %v553, %v553
        %v558 = vpack.c.bf16 %v554, %v554
        %v562 = vunpack.c.l.b16 %v514
        %v563 = vunpack.c.l.b16 %v515
        %v564 = vunpack.c.l.b16 %v516
        %v565 = vpack.c.b16 %v563, %v562
        %v566 = vpack.c.b16 %v564, %v564
        %vm567 = vcmask 195584
        %v569 = vsel %vm567, %v565, 0
        %v572 = vsel %vm567, %v566, 0
        %vm574 = vcmask 1043456
        %v576 = vsel %vm574, %v557, 0
        %v579 = vsel %vm574, %v558, 0
        %581 = vmatprep.subr.bf16.mxu0 %v556
        %582 = vmatpush1.bf16.msra.mxu0 %v555
        %583 = vmatprep.subr.bf16.mxu0 %v579
        %584 = vmatpush1.bf16.msra.mxu0 %v576
        %585 = vmatprep.subr.bf16.mxu0 0
        %586 = vmatpush1.bf16.msra.mxu0 0
        %587 = vmatprep.subr.bf16.mxu0 0
        %588 = vmatpush1.bf16.msra.mxu0 0
        %589 = vmatprep.subr.bf16.mxu0 0
        %590 = vmatpush1.bf16.msra.mxu0 0
        %591 = vmatprep.subr.bf16.mxu0 0
        %592 = vmatpush1.bf16.msra.mxu0 0
        %593 = vmatprep.subr.bf16.mxu0 0
        %594 = vmatpush1.bf16.msra.mxu0 0
        %595 = vmatprep.subr.bf16.mxu0 0
        %596 = vmatpush1.bf16.msra.mxu0 0
        %597 = vmatprep.subr.bf16.mxu0 0
        %598 = vmatpush1.bf16.msra.mxu0 0
        %599 = vmatprep.subr.bf16.mxu0 0
        %600 = vmatpush1.bf16.msra.mxu0 0
        %601 = vmatprep.subr.bf16.mxu0 0
        %602 = vmatpush1.bf16.msra.mxu0 0
        %603 = vmatprep.subr.bf16.mxu0 0
        %604 = vmatpush1.bf16.msra.mxu0 0
        %605 = vmatprep.subr.bf16.mxu0 0
        %606 = vmatpush1.bf16.msra.mxu0 0
        %607 = vmatprep.subr.bf16.mxu0 0
        %608 = vmatpush1.bf16.msra.mxu0 0
        %609 = vmatprep.subr.bf16.mxu0 0
        %610 = vmatpush1.bf16.msra.mxu0 0
        %611 = vmatprep.subr.bf16.mxu0 0
        %612 = vmatpush1.bf16.msra.mxu0 0
        %613 = vmatprep.mubr.bf16.mxu0 0
        %614 = vmatmul.mubr.bf16.gmra.mrb[0].mxu0 %v569
        %v615 = vpop.f32.mrb[0].mxu0
        %v616 = vadd.f32 0.0, %v615
        %v617 = vpop.f32.mrb[0].mxu0
        %v618 = vadd.f32 0.0, %v617
        %v619 = vpop.f32.mrb[0].mxu0
        %v620 = vadd.f32 0.0, %v619
        %v621 = vpop.f32.mrb[0].mxu0
        %v622 = vadd.f32 0.0, %v621
        %623 = vmatprep.mubr.bf16.mxu0 0
        %624 = vmatmul.mubr.bf16.gmra.mrb[0].mxu0 %v572
        %v625 = vpop.f32.mrb[0].mxu0
        %v626 = vadd.f32 0.0, %v625
        %v627 = vpop.f32.mrb[0].mxu0
        %v628 = vadd.f32 0.0, %v627
        %v629 = vpop.f32.mrb[0].mxu0
        %v630 = vpop.f32.mrb[0].mxu0
        %631 = vdwg.mxu0
        %v635 = vunpack.c.l.b16 %v467
        %v636 = vunpack.c.l.b16 %v468
        %v637 = vunpack.c.l.b16 %v469
        %v638 = vpack.c.b16 %v636, %v635
        %v639 = vpack.c.b16 %v637, %v637
        %v641 = vsel %vm567, %v638, 0
        %v644 = vsel %vm567, %v639, 0
        %v647 = vsel %vm574, %v511, 0
        %v650 = vsel %vm574, %v512, 0
        %652 = vmatprep.subr.bf16.mxu0 %v510
        %653 = vmatpush1.bf16.msra.mxu0 %v509
        %654 = vmatprep.subr.bf16.mxu0 %v650
        %655 = vmatpush1.bf16.msra.mxu0 %v647
        %656 = vmatprep.subr.bf16.mxu0 0
        %657 = vmatpush1.bf16.msra.mxu0 0
        %658 = vmatprep.subr.bf16.mxu0 0
        %659 = vmatpush1.bf16.msra.mxu0 0
        %660 = vmatprep.subr.bf16.mxu0 0
        %661 = vmatpush1.bf16.msra.mxu0 0
        %662 = vmatprep.subr.bf16.mxu0 0
        %663 = vmatpush1.bf16.msra.mxu0 0
        %664 = vmatprep.subr.bf16.mxu0 0
        %665 = vmatpush1.bf16.msra.mxu0 0
        %666 = vmatprep.subr.bf16.mxu0 0
        %667 = vmatpush1.bf16.msra.mxu0 0
        %668 = vmatprep.subr.bf16.mxu0 0
        %669 = vmatpush1.bf16.msra.mxu0 0
        %670 = vmatprep.subr.bf16.mxu0 0
        %671 = vmatpush1.bf16.msra.mxu0 0
        %672 = vmatprep.subr.bf16.mxu0 0
        %673 = vmatpush1.bf16.msra.mxu0 0
        %674 = vmatprep.subr.bf16.mxu0 0
        %675 = vmatpush1.bf16.msra.mxu0 0
        %676 = vmatprep.subr.bf16.mxu0 0
        %677 = vmatpush1.bf16.msra.mxu0 0
        %678 = vmatprep.subr.bf16.mxu0 0
        %679 = vmatpush1.bf16.msra.mxu0 0
        %680 = vmatprep.subr.bf16.mxu0 0
        %681 = vmatpush1.bf16.msra.mxu0 0
        %682 = vmatprep.subr.bf16.mxu0 0
        %683 = vmatpush1.bf16.msra.mxu0 0
        %684 = vmatprep.mubr.bf16.mxu0 0
        %685 = vmatmul.mubr.bf16.gmra.mrb[0].mxu0 %v641
        %v686 = vpop.f32.mrb[0].mxu0
        %v687 = vadd.f32 %v616, %v686
        %v688 = vpop.f32.mrb[0].mxu0
        %v689 = vadd.f32 %v618, %v688
        %v690 = vpop.f32.mrb[0].mxu0
        %v691 = vadd.f32 %v620, %v690
        %v692 = vpop.f32.mrb[0].mxu0
        %v693 = vadd.f32 %v622, %v692
        %694 = vmatprep.mubr.bf16.mxu0 0
        %695 = vmatmul.mubr.bf16.gmra.mrb[0].mxu0 %v644
        %v696 = vpop.f32.mrb[0].mxu0
        %v697 = vadd.f32 %v626, %v696
        %v698 = vpop.f32.mrb[0].mxu0
        %v699 = vadd.f32 %v628, %v698
        %v700 = vpop.f32.mrb[0].mxu0
        %v701 = vpop.f32.mrb[0].mxu0
        %702 = vdwg.mxu0
        %s703 = scalar_lea.vmem %s1, 24
        %v704 = vld [vmem:[%s703] sm:$0xf]
        %v705 = vld [vmem:[%s703 + $0x4] sm:$0xf]
        %v706 = vld [vmem:[%s703 + $0x8] sm:$0xf]
        %707 = vrot.lane.b32.xlu0 %v457, 15
        %v708 = vpop.permute.xlu0 %707
        %709 = vrot.lane.b32.xlu0 %v459, 15
        %v710 = vpop.permute.xlu0 %709
        %711 = vrot.lane.b32.xlu0 %v461, 15
        %v712 = vpop.permute.xlu0 %711
        %713 = vrot.lane.b32.xlu0 %v458, 15
        %v714 = vpop.permute.xlu0 %713
        %715 = vrot.lane.b32.xlu0 %v460, 15
        %v716 = vpop.permute.xlu0 %715
        %717 = vrot.lane.b32.xlu0 %v462, 15
        %v718 = vpop.permute.xlu0 %717
        %vm719 = vcmp.lt.s32.totalorder %v483, 15
        %v720 = vsel %vm719, %v708, %v714
        %v721 = vsel %vm719, %v710, %v716
        %v722 = vsel %vm719, %v712, %v718
        %v723 = vsel %vm719, %v714, %v708
        %v724 = vsel %vm719, %v716, %v710
        %v725 = vsel %vm719, %v718, %v712
        %s726 = scalar_lea.vmem [#allocation5], 4
        %v727 = vld [vmem:[%s726] sm:$0x3]
        %v729 = vlaneseq
        %v730 = vshrl.u32 %v729, 7
        %v731 = vsub.s32 0, %v730
        %v732 = vrot.slane %v727, %v731
        %v733 = vlaneseq
        %v734 = vshrl.u32 %v733, 7
        %v735 = vsub.s32 1, %v734
        %v736 = vrot.slane %v727, %v735
        %v739 = vmul.f32 %v723, %v732
        %v740 = vmul.f32 %v720, %v736
        %v741 = vmul.f32 %v724, %v732
        %v742 = vmul.f32 %v721, %v736
        %v743 = vmul.f32 %v725, %v732
        %v744 = vmul.f32 %v722, %v736
        %v745 = vpack.c.bf16 %v741, %v739
        %v746 = vpack.c.bf16 %v742, %v740
        %v747 = vpack.c.bf16 %v743, %v743
        %v748 = vpack.c.bf16 %v744, %v744
        %v752 = vunpack.c.l.b16 %v704
        %v753 = vunpack.c.l.b16 %v705
        %v754 = vunpack.c.l.b16 %v706
        %v755 = vpack.c.b16 %v753, %v752
        %v756 = vpack.c.b16 %v754, %v754
        %v758 = vsel %vm567, %v755, 0
        %v761 = vsel %vm567, %v756, 0
        %v764 = vsel %vm574, %v747, 0
        %v767 = vsel %vm574, %v748, 0
        %769 = vmatprep.subr.bf16.mxu0 %v746
        %770 = vmatpush1.bf16.msra.mxu0 %v745
        %771 = vmatprep.subr.bf16.mxu0 %v767
        %772 = vmatpush1.bf16.msra.mxu0 %v764
        %773 = vmatprep.subr.bf16.mxu0 0
        %774 = vmatpush1.bf16.msra.mxu0 0
        %775 = vmatprep.subr.bf16.mxu0 0
        %776 = vmatpush1.bf16.msra.mxu0 0
        %777 = vmatprep.subr.bf16.mxu0 0
        %778 = vmatpush1.bf16.msra.mxu0 0
        %779 = vmatprep.subr.bf16.mxu0 0
        %780 = vmatpush1.bf16.msra.mxu0 0
        %781 = vmatprep.subr.bf16.mxu0 0
        %782 = vmatpush1.bf16.msra.mxu0 0
        %783 = vmatprep.subr.bf16.mxu0 0
        %784 = vmatpush1.bf16.msra.mxu0 0
        %785 = vmatprep.subr.bf16.mxu0 0
        %786 = vmatpush1.bf16.msra.mxu0 0
        %787 = vmatprep.subr.bf16.mxu0 0
        %788 = vmatpush1.bf16.msra.mxu0 0
        %789 = vmatprep.subr.bf16.mxu0 0
        %790 = vmatpush1.bf16.msra.mxu0 0
        %791 = vmatprep.subr.bf16.mxu0 0
        %792 = vmatpush1.bf16.msra.mxu0 0
        %793 = vmatprep.subr.bf16.mxu0 0
        %794 = vmatpush1.bf16.msra.mxu0 0
        %795 = vmatprep.subr.bf16.mxu0 0
        %796 = vmatpush1.bf16.msra.mxu0 0
        %797 = vmatprep.subr.bf16.mxu0 0
        %798 = vmatpush1.bf16.msra.mxu0 0
        %799 = vmatprep.subr.bf16.mxu0 0
        %800 = vmatpush1.bf16.msra.mxu0 0
        %801 = vmatprep.mubr.bf16.mxu0 0
        %802 = vmatmul.mubr.bf16.gmra.mrb[0].mxu0 %v758
        %v803 = vpop.f32.mrb[0].mxu0
        %v804 = vadd.f32 0.0, %v803
        %v805 = vpop.f32.mrb[0].mxu0
        %v806 = vadd.f32 0.0, %v805
        %v807 = vpop.f32.mrb[0].mxu0
        %v808 = vadd.f32 0.0, %v807
        %v809 = vpop.f32.mrb[0].mxu0
        %v810 = vadd.f32 0.0, %v809
        %811 = vmatprep.mubr.bf16.mxu0 0
        %812 = vmatmul.mubr.bf16.gmra.mrb[0].mxu0 %v761
        %v813 = vpop.f32.mrb[0].mxu0
        %v814 = vadd.f32 0.0, %v813
        %v815 = vpop.f32.mrb[0].mxu0
        %v816 = vadd.f32 0.0, %v815
        %v817 = vpop.f32.mrb[0].mxu0
        %v818 = vpop.f32.mrb[0].mxu0
        %819 = vdwg.mxu0
        %v820 = vadd.f32 %v687, %v804
        %v821 = vadd.f32 %v689, %v806
        %v822 = vadd.f32 %v691, %v808
        %v823 = vadd.f32 %v693, %v810
        %v824 = vadd.f32 %v697, %v814
        %v825 = vadd.f32 %v699, %v816
        %s826 = scalar_lea.vmem %s1, 36
        %v827 = vld [vmem:[%s826] sm:$0xf]
        %v828 = vld [vmem:[%s826 + $0x4] sm:$0xf]
        %v829 = vld [vmem:[%s826 + $0x8] sm:$0xf]
        %830 = vrot.lane.b32.xlu0 %v457, 1
        %v831 = vpop.permute.xlu0 %830
        %832 = vrot.lane.b32.xlu0 %v459, 1
        %v833 = vpop.permute.xlu0 %832
        %834 = vrot.lane.b32.xlu0 %v461, 1
        %v835 = vpop.permute.xlu0 %834
        %836 = vrot.lane.b32.xlu0 %v458, 1
        %v837 = vpop.permute.xlu0 %836
        %838 = vrot.lane.b32.xlu0 %v460, 1
        %v839 = vpop.permute.xlu0 %838
        %840 = vrot.lane.b32.xlu0 %v462, 1
        %v841 = vpop.permute.xlu0 %840
        %vm842 = vcmp.lt.s32.totalorder %v483, 1
        %v843 = vsel %vm842, %v831, %v837
        %v844 = vsel %vm842, %v833, %v839
        %v845 = vsel %vm842, %v835, %v841
        %v846 = vsel %vm842, %v837, %v831
        %v847 = vsel %vm842, %v839, %v833
        %v848 = vsel %vm842, %v841, %v835
        %s849 = scalar_lea.vmem [#allocation5], 6
        %v850 = vld [vmem:[%s849] sm:$0x3]
        %v852 = vlaneseq
        %v853 = vshrl.u32 %v852, 7
        %v854 = vsub.s32 0, %v853
        %v855 = vrot.slane %v850, %v854
        %v856 = vlaneseq
        %v857 = vshrl.u32 %v856, 7
        %v858 = vsub.s32 1, %v857
        %v859 = vrot.slane %v850, %v858
        %v862 = vmul.f32 %v846, %v855
        %v863 = vmul.f32 %v843, %v859
        %v864 = vmul.f32 %v847, %v855
        %v865 = vmul.f32 %v844, %v859
        %v866 = vmul.f32 %v848, %v855
        %v867 = vmul.f32 %v845, %v859
        %v868 = vpack.c.bf16 %v864, %v862
        %v869 = vpack.c.bf16 %v865, %v863
        %v870 = vpack.c.bf16 %v866, %v866
        %v871 = vpack.c.bf16 %v867, %v867
        %v875 = vunpack.c.l.b16 %v827
        %v876 = vunpack.c.l.b16 %v828
        %v877 = vunpack.c.l.b16 %v829
        %v878 = vpack.c.b16 %v876, %v875
        %v879 = vpack.c.b16 %v877, %v877
        %v881 = vsel %vm567, %v878, 0
        %v884 = vsel %vm567, %v879, 0
        %v887 = vsel %vm574, %v870, 0
        %v890 = vsel %vm574, %v871, 0
        %892 = vmatprep.subr.bf16.mxu0 %v869
        %893 = vmatpush1.bf16.msra.mxu0 %v868
        %894 = vmatprep.subr.bf16.mxu0 %v890
        %895 = vmatpush1.bf16.msra.mxu0 %v887
        %896 = vmatprep.subr.bf16.mxu0 0
        %897 = vmatpush1.bf16.msra.mxu0 0
        %898 = vmatprep.subr.bf16.mxu0 0
        %899 = vmatpush1.bf16.msra.mxu0 0
        %900 = vmatprep.subr.bf16.mxu0 0
        %901 = vmatpush1.bf16.msra.mxu0 0
        %902 = vmatprep.subr.bf16.mxu0 0
        %903 = vmatpush1.bf16.msra.mxu0 0
        %904 = vmatprep.subr.bf16.mxu0 0
        %905 = vmatpush1.bf16.msra.mxu0 0
        %906 = vmatprep.subr.bf16.mxu0 0
        %907 = vmatpush1.bf16.msra.mxu0 0
        %908 = vmatprep.subr.bf16.mxu0 0
        %909 = vmatpush1.bf16.msra.mxu0 0
        %910 = vmatprep.subr.bf16.mxu0 0
        %911 = vmatpush1.bf16.msra.mxu0 0
        %912 = vmatprep.subr.bf16.mxu0 0
        %913 = vmatpush1.bf16.msra.mxu0 0
        %914 = vmatprep.subr.bf16.mxu0 0
        %915 = vmatpush1.bf16.msra.mxu0 0
        %916 = vmatprep.subr.bf16.mxu0 0
        %917 = vmatpush1.bf16.msra.mxu0 0
        %918 = vmatprep.subr.bf16.mxu0 0
        %919 = vmatpush1.bf16.msra.mxu0 0
        %920 = vmatprep.subr.bf16.mxu0 0
        %921 = vmatpush1.bf16.msra.mxu0 0
        %922 = vmatprep.subr.bf16.mxu0 0
        %923 = vmatpush1.bf16.msra.mxu0 0
        %924 = vmatprep.mubr.bf16.mxu0 0
        %925 = vmatmul.mubr.bf16.gmra.mrb[0].mxu0 %v881
        %v926 = vpop.f32.mrb[0].mxu0
        %v927 = vadd.f32 0.0, %v926
        %v928 = vpop.f32.mrb[0].mxu0
        %v929 = vadd.f32 0.0, %v928
        %v930 = vpop.f32.mrb[0].mxu0
        %v931 = vadd.f32 0.0, %v930
        %v932 = vpop.f32.mrb[0].mxu0
        %v933 = vadd.f32 0.0, %v932
        %934 = vmatprep.mubr.bf16.mxu0 0
        %935 = vmatmul.mubr.bf16.gmra.mrb[0].mxu0 %v884
        %v936 = vpop.f32.mrb[0].mxu0
        %v937 = vadd.f32 0.0, %v936
        %v938 = vpop.f32.mrb[0].mxu0
        %v939 = vadd.f32 0.0, %v938
        %v940 = vpop.f32.mrb[0].mxu0
        %v941 = vpop.f32.mrb[0].mxu0
        %942 = vdwg.mxu0
        %v943 = vadd.f32 %v820, %v927
        %v944 = vadd.f32 %v821, %v929
        %v945 = vadd.f32 %v822, %v931
        %v946 = vadd.f32 %v823, %v933
        %v947 = vadd.f32 %v824, %v937
        %v948 = vadd.f32 %v825, %v939
        %s949 = scalar_lea.vmem %s1, 48
        %v950 = vld [vmem:[%s949] sm:$0xf]
        %v951 = vld [vmem:[%s949 + $0x4] sm:$0xf]
        %v952 = vld [vmem:[%s949 + $0x8] sm:$0xf]
        %v956 = vunpack.c.l.b16 %v950
        %v957 = vunpack.c.l.b16 %v951
        %v958 = vunpack.c.l.b16 %v952
        %v959 = vpack.c.b16 %v957, %v956
        %v960 = vpack.c.b16 %v958, %v958
        %v962 = vsel %vm567, %v959, 0
        %v965 = vsel %vm567, %v960, 0
        %v968 = vsel %vm574, %v465, 0
        %v971 = vsel %vm574, %v466, 0
        %973 = vmatprep.subr.bf16.mxu0 %v464
        %974 = vmatpush1.bf16.msra.mxu0 %v463
        %975 = vmatprep.subr.bf16.mxu0 %v971
        %976 = vmatpush1.bf16.msra.mxu0 %v968
        %977 = vmatprep.subr.bf16.mxu0 0
        %978 = vmatpush1.bf16.msra.mxu0 0
        %979 = vmatprep.subr.bf16.mxu0 0
        %980 = vmatpush1.bf16.msra.mxu0 0
        %981 = vmatprep.subr.bf16.mxu0 0
        %982 = vmatpush1.bf16.msra.mxu0 0
        %983 = vmatprep.subr.bf16.mxu0 0
        %984 = vmatpush1.bf16.msra.mxu0 0
        %985 = vmatprep.subr.bf16.mxu0 0
        %986 = vmatpush1.bf16.msra.mxu0 0
        %987 = vmatprep.subr.bf16.mxu0 0
        %988 = vmatpush1.bf16.msra.mxu0 0
        %989 = vmatprep.subr.bf16.mxu0 0
        %990 = vmatpush1.bf16.msra.mxu0 0
        %991 = vmatprep.subr.bf16.mxu0 0
        %992 = vmatpush1.bf16.msra.mxu0 0
        %993 = vmatprep.subr.bf16.mxu0 0
        %994 = vmatpush1.bf16.msra.mxu0 0
        %995 = vmatprep.subr.bf16.mxu0 0
        %996 = vmatpush1.bf16.msra.mxu0 0
        %997 = vmatprep.subr.bf16.mxu0 0
        %998 = vmatpush1.bf16.msra.mxu0 0
        %999 = vmatprep.subr.bf16.mxu0 0
        %1000 = vmatpush1.bf16.msra.mxu0 0
        %1001 = vmatprep.subr.bf16.mxu0 0
        %1002 = vmatpush1.bf16.msra.mxu0 0
        %1003 = vmatprep.subr.bf16.mxu0 0
        %1004 = vmatpush1.bf16.msra.mxu0 0
        %1005 = vmatprep.mubr.bf16.mxu0 0
        %1006 = vmatmul.mubr.bf16.gmra.mrb[0].mxu0 %v962
        %v1007 = vpop.f32.mrb[0].mxu0
        %v1008 = vadd.f32 0.0, %v1007
        %v1009 = vpop.f32.mrb[0].mxu0
        %v1010 = vadd.f32 0.0, %v1009
        %v1011 = vpop.f32.mrb[0].mxu0
        %v1012 = vadd.f32 0.0, %v1011
        %v1013 = vpop.f32.mrb[0].mxu0
        %v1014 = vadd.f32 0.0, %v1013
        %1015 = vmatprep.mubr.bf16.mxu0 0
        %1016 = vmatmul.mubr.bf16.gmra.mrb[0].mxu0 %v965
        %v1017 = vpop.f32.mrb[0].mxu0
        %v1018 = vadd.f32 0.0, %v1017
        %v1019 = vpop.f32.mrb[0].mxu0
        %v1020 = vadd.f32 0.0, %v1019
        %v1021 = vpop.f32.mrb[0].mxu0
        %v1022 = vpop.f32.mrb[0].mxu0
        %1023 = vdwg.mxu0
        %v1024 = vadd.f32 %v943, %v1008
        %v1025 = vadd.f32 %v944, %v1010
        %v1026 = vadd.f32 %v945, %v1012
        %v1027 = vadd.f32 %v946, %v1014
        %v1028 = vadd.f32 %v947, %v1018
        %v1029 = vadd.f32 %v948, %v1020
        %s1030 = scalar_lea.vmem %s1, 60
        %v1031 = vld [vmem:[%s1030] sm:$0xf]
        %v1032 = vld [vmem:[%s1030 + $0x4] sm:$0xf]
        %v1033 = vld [vmem:[%s1030 + $0x8] sm:$0xf]
        %1034 = vrot.lane.b32.xlu0 %v457, 127
        %v1035 = vpop.permute.xlu0 %1034
        %1036 = vrot.lane.b32.xlu0 %v459, 127
        %v1037 = vpop.permute.xlu0 %1036
        %1038 = vrot.lane.b32.xlu0 %v461, 127
        %v1039 = vpop.permute.xlu0 %1038
        %1040 = vrot.lane.b32.xlu0 %v458, 127
        %v1041 = vpop.permute.xlu0 %1040
        %1042 = vrot.lane.b32.xlu0 %v460, 127
        %v1043 = vpop.permute.xlu0 %1042
        %1044 = vrot.lane.b32.xlu0 %v462, 127
        %v1045 = vpop.permute.xlu0 %1044
        %vm1046 = vcmp.lt.s32.totalorder %v483, 127
        %v1047 = vsel %vm1046, %v1035, %v1041
        %v1048 = vsel %vm1046, %v1037, %v1043
        %v1049 = vsel %vm1046, %v1039, %v1045
        %v1050 = vsel %vm1046, %v1041, %v1035
        %v1051 = vsel %vm1046, %v1043, %v1037
        %v1052 = vsel %vm1046, %v1045, %v1039
        %s1053 = scalar_lea.vmem [#allocation5], 10
        %v1054 = vld [vmem:[%s1053] sm:$0x3]
        %v1056 = vlaneseq
        %v1057 = vshrl.u32 %v1056, 7
        %v1058 = vsub.s32 0, %v1057
        %v1059 = vrot.slane %v1054, %v1058
        %v1060 = vlaneseq
        %v1061 = vshrl.u32 %v1060, 7
        %v1062 = vsub.s32 1, %v1061
        %v1063 = vrot.slane %v1054, %v1062
        %v1066 = vmul.f32 %v1047, %v1059
        %v1067 = vmul.f32 %v1050, %v1063
        %v1068 = vmul.f32 %v1048, %v1059
        %v1069 = vmul.f32 %v1051, %v1063
        %v1070 = vmul.f32 %v1049, %v1059
        %v1071 = vmul.f32 %v1052, %v1063
        %v1072 = vpack.c.bf16 %v1068, %v1066
        %v1073 = vpack.c.bf16 %v1069, %v1067
        %v1074 = vpack.c.bf16 %v1070, %v1070
        %v1075 = vpack.c.bf16 %v1071, %v1071
        %v1079 = vunpack.c.l.b16 %v1031
        %v1080 = vunpack.c.l.b16 %v1032
        %v1081 = vunpack.c.l.b16 %v1033
        %v1082 = vpack.c.b16 %v1080, %v1079
        %v1083 = vpack.c.b16 %v1081, %v1081
        %v1085 = vsel %vm567, %v1082, 0
        %v1088 = vsel %vm567, %v1083, 0
        %v1091 = vsel %vm574, %v1074, 0
        %v1094 = vsel %vm574, %v1075, 0
        %1096 = vmatprep.subr.bf16.mxu0 %v1073
        %1097 = vmatpush1.bf16.msra.mxu0 %v1072
        %1098 = vmatprep.subr.bf16.mxu0 %v1094
        %1099 = vmatpush1.bf16.msra.mxu0 %v1091
        %1100 = vmatprep.subr.bf16.mxu0 0
        %1101 = vmatpush1.bf16.msra.mxu0 0
        %1102 = vmatprep.subr.bf16.mxu0 0
        %1103 = vmatpush1.bf16.msra.mxu0 0
        %1104 = vmatprep.subr.bf16.mxu0 0
        %1105 = vmatpush1.bf16.msra.mxu0 0
        %1106 = vmatprep.subr.bf16.mxu0 0
        %1107 = vmatpush1.bf16.msra.mxu0 0
        %1108 = vmatprep.subr.bf16.mxu0 0
        %1109 = vmatpush1.bf16.msra.mxu0 0
        %1110 = vmatprep.subr.bf16.mxu0 0
        %1111 = vmatpush1.bf16.msra.mxu0 0
        %1112 = vmatprep.subr.bf16.mxu0 0
        %1113 = vmatpush1.bf16.msra.mxu0 0
        %1114 = vmatprep.subr.bf16.mxu0 0
        %1115 = vmatpush1.bf16.msra.mxu0 0
        %1116 = vmatprep.subr.bf16.mxu0 0
        %1117 = vmatpush1.bf16.msra.mxu0 0
        %1118 = vmatprep.subr.bf16.mxu0 0
        %1119 = vmatpush1.bf16.msra.mxu0 0
        %1120 = vmatprep.subr.bf16.mxu0 0
        %1121 = vmatpush1.bf16.msra.mxu0 0
        %1122 = vmatprep.subr.bf16.mxu0 0
        %1123 = vmatpush1.bf16.msra.mxu0 0
        %1124 = vmatprep.subr.bf16.mxu0 0
        %1125 = vmatpush1.bf16.msra.mxu0 0
        %1126 = vmatprep.subr.bf16.mxu0 0
        %1127 = vmatpush1.bf16.msra.mxu0 0
        %1128 = vmatprep.mubr.bf16.mxu0 0
        %1129 = vmatmul.mubr.bf16.gmra.mrb[0].mxu0 %v1085
        %v1130 = vpop.f32.mrb[0].mxu0
        %v1131 = vadd.f32 0.0, %v1130
        %v1132 = vpop.f32.mrb[0].mxu0
        %v1133 = vadd.f32 0.0, %v1132
        %v1134 = vpop.f32.mrb[0].mxu0
        %v1135 = vadd.f32 0.0, %v1134
        %v1136 = vpop.f32.mrb[0].mxu0
        %v1137 = vadd.f32 0.0, %v1136
        %1138 = vmatprep.mubr.bf16.mxu0 0
        %1139 = vmatmul.mubr.bf16.gmra.mrb[0].mxu0 %v1088
        %v1140 = vpop.f32.mrb[0].mxu0
        %v1141 = vadd.f32 0.0, %v1140
        %v1142 = vpop.f32.mrb[0].mxu0
        %v1143 = vadd.f32 0.0, %v1142
        %v1144 = vpop.f32.mrb[0].mxu0
        %v1145 = vpop.f32.mrb[0].mxu0
        %1146 = vdwg.mxu0
        %v1147 = vadd.f32 %v1024, %v1131
        %v1148 = vadd.f32 %v1025, %v1133
        %v1149 = vadd.f32 %v1026, %v1135
        %v1150 = vadd.f32 %v1027, %v1137
        %v1151 = vadd.f32 %v1028, %v1141
        %v1152 = vadd.f32 %v1029, %v1143
        %s1153 = scalar_lea.vmem %s1, 72
        %v1154 = vld [vmem:[%s1153] sm:$0xf]
        %v1155 = vld [vmem:[%s1153 + $0x4] sm:$0xf]
        %v1156 = vld [vmem:[%s1153 + $0x8] sm:$0xf]
        %1157 = vrot.lane.b32.xlu0 %v457, 113
        %v1158 = vpop.permute.xlu0 %1157
        %1159 = vrot.lane.b32.xlu0 %v459, 113
        %v1160 = vpop.permute.xlu0 %1159
        %1161 = vrot.lane.b32.xlu0 %v461, 113
        %v1162 = vpop.permute.xlu0 %1161
        %1163 = vrot.lane.b32.xlu0 %v458, 113
        %v1164 = vpop.permute.xlu0 %1163
        %1165 = vrot.lane.b32.xlu0 %v460, 113
        %v1166 = vpop.permute.xlu0 %1165
        %1167 = vrot.lane.b32.xlu0 %v462, 113
        %v1168 = vpop.permute.xlu0 %1167
        %vm1169 = vcmp.lt.s32.totalorder %v483, 113
        %v1170 = vsel %vm1169, %v1158, %v1164
        %v1171 = vsel %vm1169, %v1160, %v1166
        %v1172 = vsel %vm1169, %v1162, %v1168
        %v1173 = vsel %vm1169, %v1164, %v1158
        %v1174 = vsel %vm1169, %v1166, %v1160
        %v1175 = vsel %vm1169, %v1168, %v1162
        %s1176 = scalar_lea.vmem [#allocation5], 12
        %v1177 = vld [vmem:[%s1176] sm:$0x3]
        %v1179 = vlaneseq
        %v1180 = vshrl.u32 %v1179, 7
        %v1181 = vsub.s32 0, %v1180
        %v1182 = vrot.slane %v1177, %v1181
        %v1183 = vlaneseq
        %v1184 = vshrl.u32 %v1183, 7
        %v1185 = vsub.s32 1, %v1184
        %v1186 = vrot.slane %v1177, %v1185
        %v1189 = vmul.f32 %v1170, %v1182
        %v1190 = vmul.f32 %v1173, %v1186
        %v1191 = vmul.f32 %v1171, %v1182
        %v1192 = vmul.f32 %v1174, %v1186
        %v1193 = vmul.f32 %v1172, %v1182
        %v1194 = vmul.f32 %v1175, %v1186
        %v1195 = vpack.c.bf16 %v1191, %v1189
        %v1196 = vpack.c.bf16 %v1192, %v1190
        %v1197 = vpack.c.bf16 %v1193, %v1193
        %v1198 = vpack.c.bf16 %v1194, %v1194
        %v1202 = vunpack.c.l.b16 %v1154
        %v1203 = vunpack.c.l.b16 %v1155
        %v1204 = vunpack.c.l.b16 %v1156
        %v1205 = vpack.c.b16 %v1203, %v1202
        %v1206 = vpack.c.b16 %v1204, %v1204
        %v1208 = vsel %vm567, %v1205, 0
        %v1211 = vsel %vm567, %v1206, 0
        %v1214 = vsel %vm574, %v1197, 0
        %v1217 = vsel %vm574, %v1198, 0
        %1219 = vmatprep.subr.bf16.mxu0 %v1196
        %1220 = vmatpush1.bf16.msra.mxu0 %v1195
        %1221 = vmatprep.subr.bf16.mxu0 %v1217
        %1222 = vmatpush1.bf16.msra.mxu0 %v1214
        %1223 = vmatprep.subr.bf16.mxu0 0
        %1224 = vmatpush1.bf16.msra.mxu0 0
        %1225 = vmatprep.subr.bf16.mxu0 0
        %1226 = vmatpush1.bf16.msra.mxu0 0
        %1227 = vmatprep.subr.bf16.mxu0 0
        %1228 = vmatpush1.bf16.msra.mxu0 0
        %1229 = vmatprep.subr.bf16.mxu0 0
        %1230 = vmatpush1.bf16.msra.mxu0 0
        %1231 = vmatprep.subr.bf16.mxu0 0
        %1232 = vmatpush1.bf16.msra.mxu0 0
        %1233 = vmatprep.subr.bf16.mxu0 0
        %1234 = vmatpush1.bf16.msra.mxu0 0
        %1235 = vmatprep.subr.bf16.mxu0 0
        %1236 = vmatpush1.bf16.msra.mxu0 0
        %1237 = vmatprep.subr.bf16.mxu0 0
        %1238 = vmatpush1.bf16.msra.mxu0 0
        %1239 = vmatprep.subr.bf16.mxu0 0
        %1240 = vmatpush1.bf16.msra.mxu0 0
        %1241 = vmatprep.subr.bf16.mxu0 0
        %1242 = vmatpush1.bf16.msra.mxu0 0
        %1243 = vmatprep.subr.bf16.mxu0 0
        %1244 = vmatpush1.bf16.msra.mxu0 0
        %1245 = vmatprep.subr.bf16.mxu0 0
        %1246 = vmatpush1.bf16.msra.mxu0 0
        %1247 = vmatprep.subr.bf16.mxu0 0
        %1248 = vmatpush1.bf16.msra.mxu0 0
        %1249 = vmatprep.subr.bf16.mxu0 0
        %1250 = vmatpush1.bf16.msra.mxu0 0
        %1251 = vmatprep.mubr.bf16.mxu0 0
        %1252 = vmatmul.mubr.bf16.gmra.mrb[0].mxu0 %v1208
        %v1253 = vpop.f32.mrb[0].mxu0
        %v1254 = vadd.f32 0.0, %v1253
        %v1255 = vpop.f32.mrb[0].mxu0
        %v1256 = vadd.f32 0.0, %v1255
        %v1257 = vpop.f32.mrb[0].mxu0
        %v1258 = vadd.f32 0.0, %v1257
        %v1259 = vpop.f32.mrb[0].mxu0
        %v1260 = vadd.f32 0.0, %v1259
        %1261 = vmatprep.mubr.bf16.mxu0 0
        %1262 = vmatmul.mubr.bf16.gmra.mrb[0].mxu0 %v1211
        %v1263 = vpop.f32.mrb[0].mxu0
        %v1264 = vadd.f32 0.0, %v1263
        %v1265 = vpop.f32.mrb[0].mxu0
        %v1266 = vadd.f32 0.0, %v1265
        %v1267 = vpop.f32.mrb[0].mxu0
        %v1268 = vpop.f32.mrb[0].mxu0
        %1269 = vdwg.mxu0
        %v1270 = vadd.f32 %v1147, %v1254
        %v1271 = vadd.f32 %v1148, %v1256
        %v1272 = vadd.f32 %v1149, %v1258
        %v1273 = vadd.f32 %v1150, %v1260
        %v1274 = vadd.f32 %v1151, %v1264
        %v1275 = vadd.f32 %v1152, %v1266
        %s1276 = scalar_lea.vmem %s1, 84
        %v1277 = vld [vmem:[%s1276] sm:$0xf]
        %v1278 = vld [vmem:[%s1276 + $0x4] sm:$0xf]
        %v1279 = vld [vmem:[%s1276 + $0x8] sm:$0xf]
        %1280 = vrot.lane.b32.xlu0 %v457, 112
        %v1281 = vpop.permute.xlu0 %1280
        %1282 = vrot.lane.b32.xlu0 %v459, 112
        %v1283 = vpop.permute.xlu0 %1282
        %1284 = vrot.lane.b32.xlu0 %v461, 112
        %v1285 = vpop.permute.xlu0 %1284
        %1286 = vrot.lane.b32.xlu0 %v458, 112
        %v1287 = vpop.permute.xlu0 %1286
        %1288 = vrot.lane.b32.xlu0 %v460, 112
        %v1289 = vpop.permute.xlu0 %1288
        %1290 = vrot.lane.b32.xlu0 %v462, 112
        %v1291 = vpop.permute.xlu0 %1290
        %vm1292 = vcmp.lt.s32.totalorder %v483, 112
        %v1293 = vsel %vm1292, %v1281, %v1287
        %v1294 = vsel %vm1292, %v1283, %v1289
        %v1295 = vsel %vm1292, %v1285, %v1291
        %v1296 = vsel %vm1292, %v1287, %v1281
        %v1297 = vsel %vm1292, %v1289, %v1283
        %v1298 = vsel %vm1292, %v1291, %v1285
        %s1299 = scalar_lea.vmem [#allocation5], 14
        %v1300 = vld [vmem:[%s1299] sm:$0x3]
        %v1302 = vlaneseq
        %v1303 = vshrl.u32 %v1302, 7
        %v1304 = vsub.s32 0, %v1303
        %v1305 = vrot.slane %v1300, %v1304
        %v1306 = vlaneseq
        %v1307 = vshrl.u32 %v1306, 7
        %v1308 = vsub.s32 1, %v1307
        %v1309 = vrot.slane %v1300, %v1308
        %v1312 = vmul.f32 %v1293, %v1305
        %v1313 = vmul.f32 %v1296, %v1309
        %v1314 = vmul.f32 %v1294, %v1305
        %v1315 = vmul.f32 %v1297, %v1309
        %v1316 = vmul.f32 %v1295, %v1305
        %v1317 = vmul.f32 %v1298, %v1309
        %v1318 = vpack.c.bf16 %v1314, %v1312
        %v1319 = vpack.c.bf16 %v1315, %v1313
        %v1320 = vpack.c.bf16 %v1316, %v1316
        %v1321 = vpack.c.bf16 %v1317, %v1317
        %v1325 = vunpack.c.l.b16 %v1277
        %v1326 = vunpack.c.l.b16 %v1278
        %v1327 = vunpack.c.l.b16 %v1279
        %v1328 = vpack.c.b16 %v1326, %v1325
        %v1329 = vpack.c.b16 %v1327, %v1327
        %v1331 = vsel %vm567, %v1328, 0
        %v1334 = vsel %vm567, %v1329, 0
        %v1337 = vsel %vm574, %v1320, 0
        %v1340 = vsel %vm574, %v1321, 0
        %1342 = vmatprep.subr.bf16.mxu0 %v1319
        %1343 = vmatpush1.bf16.msra.mxu0 %v1318
        %1344 = vmatprep.subr.bf16.mxu0 %v1340
        %1345 = vmatpush1.bf16.msra.mxu0 %v1337
        %1346 = vmatprep.subr.bf16.mxu0 0
        %1347 = vmatpush1.bf16.msra.mxu0 0
        %1348 = vmatprep.subr.bf16.mxu0 0
        %1349 = vmatpush1.bf16.msra.mxu0 0
        %1350 = vmatprep.subr.bf16.mxu0 0
        %1351 = vmatpush1.bf16.msra.mxu0 0
        %1352 = vmatprep.subr.bf16.mxu0 0
        %1353 = vmatpush1.bf16.msra.mxu0 0
        %1354 = vmatprep.subr.bf16.mxu0 0
        %1355 = vmatpush1.bf16.msra.mxu0 0
        %1356 = vmatprep.subr.bf16.mxu0 0
        %1357 = vmatpush1.bf16.msra.mxu0 0
        %1358 = vmatprep.subr.bf16.mxu0 0
        %1359 = vmatpush1.bf16.msra.mxu0 0
        %1360 = vmatprep.subr.bf16.mxu0 0
        %1361 = vmatpush1.bf16.msra.mxu0 0
        %1362 = vmatprep.subr.bf16.mxu0 0
        %1363 = vmatpush1.bf16.msra.mxu0 0
        %1364 = vmatprep.subr.bf16.mxu0 0
        %1365 = vmatpush1.bf16.msra.mxu0 0
        %1366 = vmatprep.subr.bf16.mxu0 0
        %1367 = vmatpush1.bf16.msra.mxu0 0
        %1368 = vmatprep.subr.bf16.mxu0 0
        %1369 = vmatpush1.bf16.msra.mxu0 0
        %1370 = vmatprep.subr.bf16.mxu0 0
        %1371 = vmatpush1.bf16.msra.mxu0 0
        %1372 = vmatprep.subr.bf16.mxu0 0
        %1373 = vmatpush1.bf16.msra.mxu0 0
        %1374 = vmatprep.mubr.bf16.mxu0 0
        %1375 = vmatmul.mubr.bf16.gmra.mrb[0].mxu0 %v1331
        %v1376 = vpop.f32.mrb[0].mxu0
        %v1377 = vadd.f32 0.0, %v1376
        %v1378 = vpop.f32.mrb[0].mxu0
        %v1379 = vadd.f32 0.0, %v1378
        %v1380 = vpop.f32.mrb[0].mxu0
        %v1381 = vadd.f32 0.0, %v1380
        %v1382 = vpop.f32.mrb[0].mxu0
        %v1383 = vadd.f32 0.0, %v1382
        %1384 = vmatprep.mubr.bf16.mxu0 0
        %1385 = vmatmul.mubr.bf16.gmra.mrb[0].mxu0 %v1334
        %v1386 = vpop.f32.mrb[0].mxu0
        %v1387 = vadd.f32 0.0, %v1386
        %v1388 = vpop.f32.mrb[0].mxu0
        %v1389 = vadd.f32 0.0, %v1388
        %v1390 = vpop.f32.mrb[0].mxu0
        %v1391 = vpop.f32.mrb[0].mxu0
        %1392 = vdwg.mxu0
        %v1393 = vadd.f32 %v1270, %v1377
        %v1394 = vadd.f32 %v1271, %v1379
        %v1395 = vadd.f32 %v1272, %v1381
        %v1396 = vadd.f32 %v1273, %v1383
        %v1397 = vadd.f32 %v1274, %v1387
        %v1398 = vadd.f32 %v1275, %v1389
        %s1399 = scalar_lea.vmem %s1, 96
        %v1400 = vld [vmem:[%s1399] sm:$0xf]
        %v1401 = vld [vmem:[%s1399 + $0x4] sm:$0xf]
        %v1402 = vld [vmem:[%s1399 + $0x8] sm:$0xf]
        %1403 = vrot.lane.b32.xlu0 %v457, 111
        %v1404 = vpop.permute.xlu0 %1403
        %1405 = vrot.lane.b32.xlu0 %v459, 111
        %v1406 = vpop.permute.xlu0 %1405
        %1407 = vrot.lane.b32.xlu0 %v461, 111
        %v1408 = vpop.permute.xlu0 %1407
        %1409 = vrot.lane.b32.xlu0 %v458, 111
        %v1410 = vpop.permute.xlu0 %1409
        %1411 = vrot.lane.b32.xlu0 %v460, 111
        %v1412 = vpop.permute.xlu0 %1411
        %1413 = vrot.lane.b32.xlu0 %v462, 111
        %v1414 = vpop.permute.xlu0 %1413
        %vm1415 = vcmp.lt.s32.totalorder %v483, 111
        %v1416 = vsel %vm1415, %v1404, %v1410
        %v1417 = vsel %vm1415, %v1406, %v1412
        %v1418 = vsel %vm1415, %v1408, %v1414
        %v1419 = vsel %vm1415, %v1410, %v1404
        %v1420 = vsel %vm1415, %v1412, %v1406
        %v1421 = vsel %vm1415, %v1414, %v1408
        %s1422 = scalar_lea.vmem [#allocation5], 16
        %v1423 = vld [vmem:[%s1422] sm:$0x3]
        %v1425 = vlaneseq
        %v1426 = vshrl.u32 %v1425, 7
        %v1427 = vsub.s32 0, %v1426
        %v1428 = vrot.slane %v1423, %v1427
        %v1429 = vlaneseq
        %v1430 = vshrl.u32 %v1429, 7
        %v1431 = vsub.s32 1, %v1430
        %v1432 = vrot.slane %v1423, %v1431
        %v1435 = vmul.f32 %v1416, %v1428
        %v1436 = vmul.f32 %v1419, %v1432
        %v1437 = vmul.f32 %v1417, %v1428
        %v1438 = vmul.f32 %v1420, %v1432
        %v1439 = vmul.f32 %v1418, %v1428
        %v1440 = vmul.f32 %v1421, %v1432
        %v1441 = vpack.c.bf16 %v1437, %v1435
        %v1442 = vpack.c.bf16 %v1438, %v1436
        %v1443 = vpack.c.bf16 %v1439, %v1439
        %v1444 = vpack.c.bf16 %v1440, %v1440
        %v1448 = vunpack.c.l.b16 %v1400
        %v1449 = vunpack.c.l.b16 %v1401
        %v1450 = vunpack.c.l.b16 %v1402
        %v1451 = vpack.c.b16 %v1449, %v1448
        %v1452 = vpack.c.b16 %v1450, %v1450
        %v1454 = vsel %vm567, %v1451, 0
        %v1457 = vsel %vm567, %v1452, 0
        %v1460 = vsel %vm574, %v1443, 0
        %v1463 = vsel %vm574, %v1444, 0
        %1465 = vmatprep.subr.bf16.mxu0 %v1442
        %1466 = vmatpush1.bf16.msra.mxu0 %v1441
        %1467 = vmatprep.subr.bf16.mxu0 %v1463
        %1468 = vmatpush1.bf16.msra.mxu0 %v1460
        %1469 = vmatprep.subr.bf16.mxu0 0
        %1470 = vmatpush1.bf16.msra.mxu0 0
        %1471 = vmatprep.subr.bf16.mxu0 0
        %1472 = vmatpush1.bf16.msra.mxu0 0
        %1473 = vmatprep.subr.bf16.mxu0 0
        %1474 = vmatpush1.bf16.msra.mxu0 0
        %1475 = vmatprep.subr.bf16.mxu0 0
        %1476 = vmatpush1.bf16.msra.mxu0 0
        %1477 = vmatprep.subr.bf16.mxu0 0
        %1478 = vmatpush1.bf16.msra.mxu0 0
        %1479 = vmatprep.subr.bf16.mxu0 0
        %1480 = vmatpush1.bf16.msra.mxu0 0
        %1481 = vmatprep.subr.bf16.mxu0 0
        %1482 = vmatpush1.bf16.msra.mxu0 0
        %1483 = vmatprep.subr.bf16.mxu0 0
        %1484 = vmatpush1.bf16.msra.mxu0 0
        %1485 = vmatprep.subr.bf16.mxu0 0
        %1486 = vmatpush1.bf16.msra.mxu0 0
        %1487 = vmatprep.subr.bf16.mxu0 0
        %1488 = vmatpush1.bf16.msra.mxu0 0
        %1489 = vmatprep.subr.bf16.mxu0 0
        %1490 = vmatpush1.bf16.msra.mxu0 0
        %1491 = vmatprep.subr.bf16.mxu0 0
        %1492 = vmatpush1.bf16.msra.mxu0 0
        %1493 = vmatprep.subr.bf16.mxu0 0
        %1494 = vmatpush1.bf16.msra.mxu0 0
        %1495 = vmatprep.subr.bf16.mxu0 0
        %1496 = vmatpush1.bf16.msra.mxu0 0
        %1497 = vmatprep.mubr.bf16.mxu0 0
        %1498 = vmatmul.mubr.bf16.gmra.mrb[0].mxu0 %v1454
        %v1499 = vpop.f32.mrb[0].mxu0
        %v1500 = vadd.f32 0.0, %v1499
        %v1501 = vpop.f32.mrb[0].mxu0
        %v1502 = vadd.f32 0.0, %v1501
        %v1503 = vpop.f32.mrb[0].mxu0
        %v1504 = vadd.f32 0.0, %v1503
        %v1505 = vpop.f32.mrb[0].mxu0
        %v1506 = vadd.f32 0.0, %v1505
        %1507 = vmatprep.mubr.bf16.mxu0 0
        %1508 = vmatmul.mubr.bf16.gmra.mrb[0].mxu0 %v1457
        %v1509 = vpop.f32.mrb[0].mxu0
        %v1510 = vadd.f32 0.0, %v1509
        %v1511 = vpop.f32.mrb[0].mxu0
        %v1512 = vadd.f32 0.0, %v1511
        %v1513 = vpop.f32.mrb[0].mxu0
        %v1514 = vpop.f32.mrb[0].mxu0
        %1515 = vdwg.mxu0
        %v1516 = vadd.f32 %v1393, %v1500
        %v1517 = vadd.f32 %v1394, %v1502
        %v1518 = vadd.f32 %v1395, %v1504
        %v1519 = vadd.f32 %v1396, %v1506
        %v1520 = vadd.f32 %v1397, %v1510
        %v1521 = vadd.f32 %v1398, %v1512
        %v1522 = vld [vmem:[%s2] sm:$0xff]
        %v1523 = vld [vmem:[%s2 + $0x8] sm:$0xff]
        %v1524 = vld [vmem:[%s2 + $0x10] sm:$0xff]
        %1526 = vset.pattern.permute.xlu0 0
        %1527 = vperm.xlu0 %1526, %v1522
        %v1528 = vpop.permute.xlu0 %1527
        %1531 = vset.pattern.permute.xlu0 0
        %1532 = vperm.xlu0 %1531, %v1523
        %v1533 = vpop.permute.xlu0 %1532
        %1536 = vset.pattern.permute.xlu0 0
        %1537 = vperm.xlu0 %1536, %v1524
        %v1538 = vpop.permute.xlu0 %1537
        %v1540 = vadd.f32 %v1516, %v1528
        %v1541 = vadd.f32 %v1517, %v1528
        %v1542 = vadd.f32 %v1518, %v1533
        %v1543 = vadd.f32 %v1519, %v1533
        %v1544 = vadd.f32 %v1520, %v1538
        %v1545 = vadd.f32 %v1521, %v1538
        %v1546 = vmul.f32 %v1540, 0.2
        %v1547 = vmul.f32 %v1541, 0.2
        %v1548 = vmul.f32 %v1542, 0.2
        %v1549 = vmul.f32 %v1543, 0.2
        %v1550 = vmul.f32 %v1544, 0.2
        %v1551 = vmul.f32 %v1545, 0.2
        %v1552 = vmax.f32 %v1540, %v1546
        %v1553 = vmax.f32 %v1541, %v1547
        %v1554 = vmax.f32 %v1542, %v1548
        %v1555 = vmax.f32 %v1543, %v1549
        %v1556 = vmax.f32 %v1544, %v1550
        %v1557 = vmax.f32 %v1545, %v1551
        %v1558 = vpack.c.bf16 %v1554, %v1552
        %v1559 = vpack.c.bf16 %v1555, %v1553
        %v1560 = vpack.c.bf16 %v1556, %v1556
        %v1561 = vpack.c.bf16 %v1557, %v1557
        %v1562 = vld [vmem:[%s8] sm:$0xf]
        %v1563 = vld [vmem:[%s8 + $0x4] sm:$0xf]
        %v1564 = vld [vmem:[%s8 + $0x8] sm:$0xf]
        %v1565 = vld [vmem:[%s8 + $0xc] sm:$0xf]
        %v1566 = vld [vmem:[%s8 + $0x10] sm:$0xf]
        %v1567 = vld [vmem:[%s8 + $0x14] sm:$0xf]
        %v1568 = vld [vmem:[%s8 + $0x18] sm:$0xf]
        %v1569 = vld [vmem:[%s8 + $0x1c] sm:$0xf]
        %v1570 = vld [vmem:[%s8 + $0x20] sm:$0xf]
        %v1571 = vld [vmem:[%s8 + $0x24] sm:$0xf]
        %v1572 = vld [vmem:[%s8 + $0x28] sm:$0xf]
        %v1573 = vld [vmem:[%s8 + $0x2c] sm:$0xf]
        %v1574 = vld [vmem:[%s8 + $0x30] sm:$0xf]
        %v1575 = vld [vmem:[%s8 + $0x34] sm:$0xf]
        %v1576 = vld [vmem:[%s8 + $0x38] sm:$0xf]
        %v1577 = vld [vmem:[%s8 + $0x3c] sm:$0xf]
        %v1578 = vld [vmem:[%s8 + $0x40] sm:$0xf]
        %v1579 = vld [vmem:[%s8 + $0x44] sm:$0xf]
        %v1580 = vld [vmem:[%s8 + $0x48] sm:$0xf]
        %v1581 = vld [vmem:[%s8 + $0x4c] sm:$0xf]
        %v1582 = vld [vmem:[%s8 + $0x50] sm:$0xf]
        %v1583 = vld [vmem:[%s8 + $0x54] sm:$0xf]
        %v1584 = vld [vmem:[%s8 + $0x58] sm:$0xf]
        %v1585 = vld [vmem:[%s8 + $0x5c] sm:$0xf]
        %v1586 = vld [vmem:[%s8 + $0x60] sm:$0xf]
        %v1587 = vld [vmem:[%s8 + $0x64] sm:$0xf]
        %v1588 = vld [vmem:[%s8 + $0x68] sm:$0xf]
        %v1589 = vld [vmem:[%s8 + $0x6c] sm:$0xf]
        %v1590 = vld [vmem:[%s8 + $0x70] sm:$0xf]
        %v1591 = vld [vmem:[%s8 + $0x74] sm:$0xf]
        %v1592 = vld [vmem:[%s8 + $0x78] sm:$0xf]
        %v1593 = vld [vmem:[%s8 + $0x7c] sm:$0xf]
        %v1626 = vunpack.c.l.b16 %v1562
        %v1627 = vunpack.c.l.b16 %v1563
        %v1628 = vunpack.c.l.b16 %v1564
        %v1629 = vunpack.c.l.b16 %v1565
        %v1630 = vunpack.c.l.b16 %v1566
        %v1631 = vunpack.c.l.b16 %v1567
        %v1632 = vunpack.c.l.b16 %v1568
        %v1633 = vunpack.c.l.b16 %v1569
        %v1634 = vunpack.c.l.b16 %v1570
        %v1635 = vunpack.c.l.b16 %v1571
        %v1636 = vunpack.c.l.b16 %v1572
        %v1637 = vunpack.c.l.b16 %v1573
        %v1638 = vunpack.c.l.b16 %v1574
        %v1639 = vunpack.c.l.b16 %v1575
        %v1640 = vunpack.c.l.b16 %v1576
        %v1641 = vunpack.c.l.b16 %v1577
        %v1642 = vunpack.c.l.b16 %v1578
        %v1643 = vunpack.c.l.b16 %v1579
        %v1644 = vunpack.c.l.b16 %v1580
        %v1645 = vunpack.c.l.b16 %v1581
        %v1646 = vunpack.c.l.b16 %v1582
        %v1647 = vunpack.c.l.b16 %v1583
        %v1648 = vunpack.c.l.b16 %v1584
        %v1649 = vunpack.c.l.b16 %v1585
        %v1650 = vunpack.c.l.b16 %v1586
        %v1651 = vunpack.c.l.b16 %v1587
        %v1652 = vunpack.c.l.b16 %v1588
        %v1653 = vunpack.c.l.b16 %v1589
        %v1654 = vunpack.c.l.b16 %v1590
        %v1655 = vunpack.c.l.b16 %v1591
        %v1656 = vunpack.c.l.b16 %v1592
        %v1657 = vunpack.c.l.b16 %v1593
        %v1658 = vpack.c.b16 %v1627, %v1626
        %v1659 = vpack.c.b16 %v1629, %v1628
        %v1660 = vpack.c.b16 %v1631, %v1630
        %v1661 = vpack.c.b16 %v1633, %v1632
        %v1662 = vpack.c.b16 %v1635, %v1634
        %v1663 = vpack.c.b16 %v1637, %v1636
        %v1664 = vpack.c.b16 %v1639, %v1638
        %v1665 = vpack.c.b16 %v1641, %v1640
        %v1666 = vpack.c.b16 %v1643, %v1642
        %v1667 = vpack.c.b16 %v1645, %v1644
        %v1668 = vpack.c.b16 %v1647, %v1646
        %v1669 = vpack.c.b16 %v1649, %v1648
        %v1670 = vpack.c.b16 %v1651, %v1650
        %v1671 = vpack.c.b16 %v1653, %v1652
        %v1672 = vpack.c.b16 %v1655, %v1654
        %v1673 = vpack.c.b16 %v1657, %v1656
        %1690 = vmatprep.subr.bf16.mxu0 0
        %1691 = vmatpush1.bf16.msra.mxu0 %v1658
        %1692 = vmatprep.subr.bf16.mxu0 0
        %1693 = vmatpush1.bf16.msra.mxu0 %v1659
        %1694 = vmatprep.subr.bf16.mxu0 0
        %1695 = vmatpush1.bf16.msra.mxu0 %v1660
        %1696 = vmatprep.subr.bf16.mxu0 0
        %1697 = vmatpush1.bf16.msra.mxu0 %v1661
        %1698 = vmatprep.subr.bf16.mxu0 0
        %1699 = vmatpush1.bf16.msra.mxu0 %v1662
        %1700 = vmatprep.subr.bf16.mxu0 0
        %1701 = vmatpush1.bf16.msra.mxu0 %v1663
        %1702 = vmatprep.subr.bf16.mxu0 0
        %1703 = vmatpush1.bf16.msra.mxu0 %v1664
        %1704 = vmatprep.subr.bf16.mxu0 0
        %1705 = vmatpush1.bf16.msra.mxu0 %v1665
        %1706 = vmatprep.subr.bf16.mxu0 0
        %1707 = vmatpush1.bf16.msra.mxu0 %v1666
        %1708 = vmatprep.subr.bf16.mxu0 0
        %1709 = vmatpush1.bf16.msra.mxu0 %v1667
        %1710 = vmatprep.subr.bf16.mxu0 0
        %1711 = vmatpush1.bf16.msra.mxu0 %v1668
        %1712 = vmatprep.subr.bf16.mxu0 0
        %1713 = vmatpush1.bf16.msra.mxu0 %v1669
        %1714 = vmatprep.subr.bf16.mxu0 0
        %1715 = vmatpush1.bf16.msra.mxu0 %v1670
        %1716 = vmatprep.subr.bf16.mxu0 0
        %1717 = vmatpush1.bf16.msra.mxu0 %v1671
        %1718 = vmatprep.subr.bf16.mxu0 0
        %1719 = vmatpush1.bf16.msra.mxu0 %v1672
        %1720 = vmatprep.subr.bf16.mxu0 0
        %1721 = vmatpush1.bf16.msra.mxu0 %v1673
        %1722 = vmatprep.mubr.bf16.mxu0 %v1559
        %1723 = vmatmul.mubr.bf16.gmra.mrb[0].mxu0 %v1558
        %v1724 = vpop.f32.mrb[0].mxu0
        %v1725 = vadd.f32 0.0, %v1724
        %v1726 = vpop.f32.mrb[0].mxu0
        %v1727 = vpop.f32.mrb[0].mxu0
        %v1728 = vadd.f32 0.0, %v1727
        %v1729 = vpop.f32.mrb[0].mxu0
        %1730 = vmatprep.mubr.bf16.mxu0 %v1561
        %1731 = vmatmul.mubr.bf16.gmra.mrb[0].mxu0 %v1560
        %v1732 = vpop.f32.mrb[0].mxu0
        %v1733 = vadd.f32 0.0, %v1732
        %v1734 = vpop.f32.mrb[0].mxu0
        %v1735 = vpop.f32.mrb[0].mxu0
        %v1736 = vpop.f32.mrb[0].mxu0
        %1737 = vdwg.mxu0
        %s1738 = scalar_lea.vmem %s8, 128
        %v1739 = vld [vmem:[%s1738] sm:$0xf]
        %v1740 = vld [vmem:[%s1738 + $0x4] sm:$0xf]
        %v1741 = vld [vmem:[%s1738 + $0x8] sm:$0xf]
        %v1742 = vld [vmem:[%s1738 + $0xc] sm:$0xf]
        %v1743 = vld [vmem:[%s1738 + $0x10] sm:$0xf]
        %v1744 = vld [vmem:[%s1738 + $0x14] sm:$0xf]
        %v1745 = vld [vmem:[%s1738 + $0x18] sm:$0xf]
        %v1746 = vld [vmem:[%s1738 + $0x1c] sm:$0xf]
        %v1747 = vld [vmem:[%s1738 + $0x20] sm:$0xf]
        %v1748 = vld [vmem:[%s1738 + $0x24] sm:$0xf]
        %v1749 = vld [vmem:[%s1738 + $0x28] sm:$0xf]
        %v1750 = vld [vmem:[%s1738 + $0x2c] sm:$0xf]
        %v1751 = vld [vmem:[%s1738 + $0x30] sm:$0xf]
        %v1752 = vld [vmem:[%s1738 + $0x34] sm:$0xf]
        %v1753 = vld [vmem:[%s1738 + $0x38] sm:$0xf]
        %v1754 = vld [vmem:[%s1738 + $0x3c] sm:$0xf]
        %v1755 = vld [vmem:[%s1738 + $0x40] sm:$0xf]
        %v1756 = vld [vmem:[%s1738 + $0x44] sm:$0xf]
        %v1757 = vld [vmem:[%s1738 + $0x48] sm:$0xf]
        %v1758 = vld [vmem:[%s1738 + $0x4c] sm:$0xf]
        %v1759 = vld [vmem:[%s1738 + $0x50] sm:$0xf]
        %v1760 = vld [vmem:[%s1738 + $0x54] sm:$0xf]
        %v1761 = vld [vmem:[%s1738 + $0x58] sm:$0xf]
        %v1762 = vld [vmem:[%s1738 + $0x5c] sm:$0xf]
        %v1763 = vld [vmem:[%s1738 + $0x60] sm:$0xf]
        %v1764 = vld [vmem:[%s1738 + $0x64] sm:$0xf]
        %v1765 = vld [vmem:[%s1738 + $0x68] sm:$0xf]
        %v1766 = vld [vmem:[%s1738 + $0x6c] sm:$0xf]
        %v1767 = vld [vmem:[%s1738 + $0x70] sm:$0xf]
        %v1768 = vld [vmem:[%s1738 + $0x74] sm:$0xf]
        %v1769 = vld [vmem:[%s1738 + $0x78] sm:$0xf]
        %v1770 = vld [vmem:[%s1738 + $0x7c] sm:$0xf]
        %v1803 = vunpack.c.l.b16 %v1739
        %v1804 = vunpack.c.l.b16 %v1740
        %v1805 = vunpack.c.l.b16 %v1741
        %v1806 = vunpack.c.l.b16 %v1742
        %v1807 = vunpack.c.l.b16 %v1743
        %v1808 = vunpack.c.l.b16 %v1744
        %v1809 = vunpack.c.l.b16 %v1745
        %v1810 = vunpack.c.l.b16 %v1746
        %v1811 = vunpack.c.l.b16 %v1747
        %v1812 = vunpack.c.l.b16 %v1748
        %v1813 = vunpack.c.l.b16 %v1749
        %v1814 = vunpack.c.l.b16 %v1750
        %v1815 = vunpack.c.l.b16 %v1751
        %v1816 = vunpack.c.l.b16 %v1752
        %v1817 = vunpack.c.l.b16 %v1753
        %v1818 = vunpack.c.l.b16 %v1754
        %v1819 = vunpack.c.l.b16 %v1755
        %v1820 = vunpack.c.l.b16 %v1756
        %v1821 = vunpack.c.l.b16 %v1757
        %v1822 = vunpack.c.l.b16 %v1758
        %v1823 = vunpack.c.l.b16 %v1759
        %v1824 = vunpack.c.l.b16 %v1760
        %v1825 = vunpack.c.l.b16 %v1761
        %v1826 = vunpack.c.l.b16 %v1762
        %v1827 = vunpack.c.l.b16 %v1763
        %v1828 = vunpack.c.l.b16 %v1764
        %v1829 = vunpack.c.l.b16 %v1765
        %v1830 = vunpack.c.l.b16 %v1766
        %v1831 = vunpack.c.l.b16 %v1767
        %v1832 = vunpack.c.l.b16 %v1768
        %v1833 = vunpack.c.l.b16 %v1769
        %v1834 = vunpack.c.l.b16 %v1770
        %v1835 = vpack.c.b16 %v1804, %v1803
        %v1836 = vpack.c.b16 %v1806, %v1805
        %v1837 = vpack.c.b16 %v1808, %v1807
        %v1838 = vpack.c.b16 %v1810, %v1809
        %v1839 = vpack.c.b16 %v1812, %v1811
        %v1840 = vpack.c.b16 %v1814, %v1813
        %v1841 = vpack.c.b16 %v1816, %v1815
        %v1842 = vpack.c.b16 %v1818, %v1817
        %v1843 = vpack.c.b16 %v1820, %v1819
        %v1844 = vpack.c.b16 %v1822, %v1821
        %v1845 = vpack.c.b16 %v1824, %v1823
        %v1846 = vpack.c.b16 %v1826, %v1825
        %v1847 = vpack.c.b16 %v1828, %v1827
        %v1848 = vpack.c.b16 %v1830, %v1829
        %v1849 = vpack.c.b16 %v1832, %v1831
        %v1850 = vpack.c.b16 %v1834, %v1833
        %1867 = vmatprep.subr.bf16.mxu0 0
        %1868 = vmatpush1.bf16.msra.mxu0 %v1835
        %1869 = vmatprep.subr.bf16.mxu0 0
        %1870 = vmatpush1.bf16.msra.mxu0 %v1836
        %1871 = vmatprep.subr.bf16.mxu0 0
        %1872 = vmatpush1.bf16.msra.mxu0 %v1837
        %1873 = vmatprep.subr.bf16.mxu0 0
        %1874 = vmatpush1.bf16.msra.mxu0 %v1838
        %1875 = vmatprep.subr.bf16.mxu0 0
        %1876 = vmatpush1.bf16.msra.mxu0 %v1839
        %1877 = vmatprep.subr.bf16.mxu0 0
        %1878 = vmatpush1.bf16.msra.mxu0 %v1840
        %1879 = vmatprep.subr.bf16.mxu0 0
        %1880 = vmatpush1.bf16.msra.mxu0 %v1841
        %1881 = vmatprep.subr.bf16.mxu0 0
        %1882 = vmatpush1.bf16.msra.mxu0 %v1842
        %1883 = vmatprep.subr.bf16.mxu0 0
        %1884 = vmatpush1.bf16.msra.mxu0 %v1843
        %1885 = vmatprep.subr.bf16.mxu0 0
        %1886 = vmatpush1.bf16.msra.mxu0 %v1844
        %1887 = vmatprep.subr.bf16.mxu0 0
        %1888 = vmatpush1.bf16.msra.mxu0 %v1845
        %1889 = vmatprep.subr.bf16.mxu0 0
        %1890 = vmatpush1.bf16.msra.mxu0 %v1846
        %1891 = vmatprep.subr.bf16.mxu0 0
        %1892 = vmatpush1.bf16.msra.mxu0 %v1847
        %1893 = vmatprep.subr.bf16.mxu0 0
        %1894 = vmatpush1.bf16.msra.mxu0 %v1848
        %1895 = vmatprep.subr.bf16.mxu0 0
        %1896 = vmatpush1.bf16.msra.mxu0 %v1849
        %1897 = vmatprep.subr.bf16.mxu0 0
        %1898 = vmatpush1.bf16.msra.mxu0 %v1850
        %1899 = vmatprep.mubr.bf16.mxu0 %v1559
        %1900 = vmatmul.mubr.bf16.gmra.mrb[0].mxu0 %v1558
        %v1901 = vpop.f32.mrb[0].mxu0
        %v1902 = vadd.f32 0.0, %v1901
        %v1903 = vpop.f32.mrb[0].mxu0
        %v1904 = vpop.f32.mrb[0].mxu0
        %v1905 = vadd.f32 0.0, %v1904
        %v1906 = vpop.f32.mrb[0].mxu0
        %1907 = vmatprep.mubr.bf16.mxu0 %v1561
        %1908 = vmatmul.mubr.bf16.gmra.mrb[0].mxu0 %v1560
        %v1909 = vpop.f32.mrb[0].mxu0
        %v1910 = vadd.f32 0.0, %v1909
        %v1911 = vpop.f32.mrb[0].mxu0
        %v1912 = vpop.f32.mrb[0].mxu0
        %v1913 = vpop.f32.mrb[0].mxu0
        %1914 = vdwg.mxu0
        %s1915 = scalar_lea.vmem %s8, 256
        %v1916 = vld [vmem:[%s1915] sm:$0xf]
        %v1917 = vld [vmem:[%s1915 + $0x4] sm:$0xf]
        %v1918 = vld [vmem:[%s1915 + $0x8] sm:$0xf]
        %v1919 = vld [vmem:[%s1915 + $0xc] sm:$0xf]
        %v1920 = vld [vmem:[%s1915 + $0x10] sm:$0xf]
        %v1921 = vld [vmem:[%s1915 + $0x14] sm:$0xf]
        %v1922 = vld [vmem:[%s1915 + $0x18] sm:$0xf]
        %v1923 = vld [vmem:[%s1915 + $0x1c] sm:$0xf]
        %v1924 = vld [vmem:[%s1915 + $0x20] sm:$0xf]
        %v1925 = vld [vmem:[%s1915 + $0x24] sm:$0xf]
        %v1926 = vld [vmem:[%s1915 + $0x28] sm:$0xf]
        %v1927 = vld [vmem:[%s1915 + $0x2c] sm:$0xf]
        %v1928 = vld [vmem:[%s1915 + $0x30] sm:$0xf]
        %v1929 = vld [vmem:[%s1915 + $0x34] sm:$0xf]
        %v1930 = vld [vmem:[%s1915 + $0x38] sm:$0xf]
        %v1931 = vld [vmem:[%s1915 + $0x3c] sm:$0xf]
        %v1932 = vld [vmem:[%s1915 + $0x40] sm:$0xf]
        %v1933 = vld [vmem:[%s1915 + $0x44] sm:$0xf]
        %v1934 = vld [vmem:[%s1915 + $0x48] sm:$0xf]
        %v1935 = vld [vmem:[%s1915 + $0x4c] sm:$0xf]
        %v1936 = vld [vmem:[%s1915 + $0x50] sm:$0xf]
        %v1937 = vld [vmem:[%s1915 + $0x54] sm:$0xf]
        %v1938 = vld [vmem:[%s1915 + $0x58] sm:$0xf]
        %v1939 = vld [vmem:[%s1915 + $0x5c] sm:$0xf]
        %v1940 = vld [vmem:[%s1915 + $0x60] sm:$0xf]
        %v1941 = vld [vmem:[%s1915 + $0x64] sm:$0xf]
        %v1942 = vld [vmem:[%s1915 + $0x68] sm:$0xf]
        %v1943 = vld [vmem:[%s1915 + $0x6c] sm:$0xf]
        %v1944 = vld [vmem:[%s1915 + $0x70] sm:$0xf]
        %v1945 = vld [vmem:[%s1915 + $0x74] sm:$0xf]
        %v1946 = vld [vmem:[%s1915 + $0x78] sm:$0xf]
        %v1947 = vld [vmem:[%s1915 + $0x7c] sm:$0xf]
        %v1980 = vunpack.c.l.b16 %v1916
        %v1981 = vunpack.c.l.b16 %v1917
        %v1982 = vunpack.c.l.b16 %v1918
        %v1983 = vunpack.c.l.b16 %v1919
        %v1984 = vunpack.c.l.b16 %v1920
        %v1985 = vunpack.c.l.b16 %v1921
        %v1986 = vunpack.c.l.b16 %v1922
        %v1987 = vunpack.c.l.b16 %v1923
        %v1988 = vunpack.c.l.b16 %v1924
        %v1989 = vunpack.c.l.b16 %v1925
        %v1990 = vunpack.c.l.b16 %v1926
        %v1991 = vunpack.c.l.b16 %v1927
        %v1992 = vunpack.c.l.b16 %v1928
        %v1993 = vunpack.c.l.b16 %v1929
        %v1994 = vunpack.c.l.b16 %v1930
        %v1995 = vunpack.c.l.b16 %v1931
        %v1996 = vunpack.c.l.b16 %v1932
        %v1997 = vunpack.c.l.b16 %v1933
        %v1998 = vunpack.c.l.b16 %v1934
        %v1999 = vunpack.c.l.b16 %v1935
        %v2000 = vunpack.c.l.b16 %v1936
        %v2001 = vunpack.c.l.b16 %v1937
        %v2002 = vunpack.c.l.b16 %v1938
        %v2003 = vunpack.c.l.b16 %v1939
        %v2004 = vunpack.c.l.b16 %v1940
        %v2005 = vunpack.c.l.b16 %v1941
        %v2006 = vunpack.c.l.b16 %v1942
        %v2007 = vunpack.c.l.b16 %v1943
        %v2008 = vunpack.c.l.b16 %v1944
        %v2009 = vunpack.c.l.b16 %v1945
        %v2010 = vunpack.c.l.b16 %v1946
        %v2011 = vunpack.c.l.b16 %v1947
        %v2012 = vpack.c.b16 %v1981, %v1980
        %v2013 = vpack.c.b16 %v1983, %v1982
        %v2014 = vpack.c.b16 %v1985, %v1984
        %v2015 = vpack.c.b16 %v1987, %v1986
        %v2016 = vpack.c.b16 %v1989, %v1988
        %v2017 = vpack.c.b16 %v1991, %v1990
        %v2018 = vpack.c.b16 %v1993, %v1992
        %v2019 = vpack.c.b16 %v1995, %v1994
        %v2020 = vpack.c.b16 %v1997, %v1996
        %v2021 = vpack.c.b16 %v1999, %v1998
        %v2022 = vpack.c.b16 %v2001, %v2000
        %v2023 = vpack.c.b16 %v2003, %v2002
        %v2024 = vpack.c.b16 %v2005, %v2004
        %v2025 = vpack.c.b16 %v2007, %v2006
        %v2026 = vpack.c.b16 %v2009, %v2008
        %v2027 = vpack.c.b16 %v2011, %v2010
        %2044 = vmatprep.subr.bf16.mxu0 0
        %2045 = vmatpush1.bf16.msra.mxu0 %v2012
        %2046 = vmatprep.subr.bf16.mxu0 0
        %2047 = vmatpush1.bf16.msra.mxu0 %v2013
        %2048 = vmatprep.subr.bf16.mxu0 0
        %2049 = vmatpush1.bf16.msra.mxu0 %v2014
        %2050 = vmatprep.subr.bf16.mxu0 0
        %2051 = vmatpush1.bf16.msra.mxu0 %v2015
        %2052 = vmatprep.subr.bf16.mxu0 0
        %2053 = vmatpush1.bf16.msra.mxu0 %v2016
        %2054 = vmatprep.subr.bf16.mxu0 0
        %2055 = vmatpush1.bf16.msra.mxu0 %v2017
        %2056 = vmatprep.subr.bf16.mxu0 0
        %2057 = vmatpush1.bf16.msra.mxu0 %v2018
        %2058 = vmatprep.subr.bf16.mxu0 0
        %2059 = vmatpush1.bf16.msra.mxu0 %v2019
        %2060 = vmatprep.subr.bf16.mxu0 0
        %2061 = vmatpush1.bf16.msra.mxu0 %v2020
        %2062 = vmatprep.subr.bf16.mxu0 0
        %2063 = vmatpush1.bf16.msra.mxu0 %v2021
        %2064 = vmatprep.subr.bf16.mxu0 0
        %2065 = vmatpush1.bf16.msra.mxu0 %v2022
        %2066 = vmatprep.subr.bf16.mxu0 0
        %2067 = vmatpush1.bf16.msra.mxu0 %v2023
        %2068 = vmatprep.subr.bf16.mxu0 0
        %2069 = vmatpush1.bf16.msra.mxu0 %v2024
        %2070 = vmatprep.subr.bf16.mxu0 0
        %2071 = vmatpush1.bf16.msra.mxu0 %v2025
        %2072 = vmatprep.subr.bf16.mxu0 0
        %2073 = vmatpush1.bf16.msra.mxu0 %v2026
        %2074 = vmatprep.subr.bf16.mxu0 0
        %2075 = vmatpush1.bf16.msra.mxu0 %v2027
        %2076 = vmatprep.mubr.bf16.mxu0 %v1559
        %2077 = vmatmul.mubr.bf16.gmra.mrb[0].mxu0 %v1558
        %v2078 = vpop.f32.mrb[0].mxu0
        %v2079 = vadd.f32 0.0, %v2078
        %v2080 = vpop.f32.mrb[0].mxu0
        %v2081 = vpop.f32.mrb[0].mxu0
        %v2082 = vadd.f32 0.0, %v2081
        %v2083 = vpop.f32.mrb[0].mxu0
        %2084 = vmatprep.mubr.bf16.mxu0 %v1561
        %2085 = vmatmul.mubr.bf16.gmra.mrb[0].mxu0 %v1560
        %v2086 = vpop.f32.mrb[0].mxu0
        %v2087 = vadd.f32 0.0, %v2086
        %v2088 = vpop.f32.mrb[0].mxu0
        %v2089 = vpop.f32.mrb[0].mxu0
        %v2090 = vpop.f32.mrb[0].mxu0
        %2091 = vdwg.mxu0
        %s2092 = scalar_lea.vmem %s8, 384
        %v2093 = vld [vmem:[%s2092] sm:$0xf]
        %v2094 = vld [vmem:[%s2092 + $0x4] sm:$0xf]
        %v2095 = vld [vmem:[%s2092 + $0x8] sm:$0xf]
        %v2096 = vld [vmem:[%s2092 + $0xc] sm:$0xf]
        %v2097 = vld [vmem:[%s2092 + $0x10] sm:$0xf]
        %v2098 = vld [vmem:[%s2092 + $0x14] sm:$0xf]
        %v2099 = vld [vmem:[%s2092 + $0x18] sm:$0xf]
        %v2100 = vld [vmem:[%s2092 + $0x1c] sm:$0xf]
        %v2101 = vld [vmem:[%s2092 + $0x20] sm:$0xf]
        %v2102 = vld [vmem:[%s2092 + $0x24] sm:$0xf]
        %v2103 = vld [vmem:[%s2092 + $0x28] sm:$0xf]
        %v2104 = vld [vmem:[%s2092 + $0x2c] sm:$0xf]
        %v2105 = vld [vmem:[%s2092 + $0x30] sm:$0xf]
        %v2106 = vld [vmem:[%s2092 + $0x34] sm:$0xf]
        %v2107 = vld [vmem:[%s2092 + $0x38] sm:$0xf]
        %v2108 = vld [vmem:[%s2092 + $0x3c] sm:$0xf]
        %v2109 = vld [vmem:[%s2092 + $0x40] sm:$0xf]
        %v2110 = vld [vmem:[%s2092 + $0x44] sm:$0xf]
        %v2111 = vld [vmem:[%s2092 + $0x48] sm:$0xf]
        %v2112 = vld [vmem:[%s2092 + $0x4c] sm:$0xf]
        %v2113 = vld [vmem:[%s2092 + $0x50] sm:$0xf]
        %v2114 = vld [vmem:[%s2092 + $0x54] sm:$0xf]
        %v2115 = vld [vmem:[%s2092 + $0x58] sm:$0xf]
        %v2116 = vld [vmem:[%s2092 + $0x5c] sm:$0xf]
        %v2117 = vld [vmem:[%s2092 + $0x60] sm:$0xf]
        %v2118 = vld [vmem:[%s2092 + $0x64] sm:$0xf]
        %v2119 = vld [vmem:[%s2092 + $0x68] sm:$0xf]
        %v2120 = vld [vmem:[%s2092 + $0x6c] sm:$0xf]
        %v2121 = vld [vmem:[%s2092 + $0x70] sm:$0xf]
        %v2122 = vld [vmem:[%s2092 + $0x74] sm:$0xf]
        %v2123 = vld [vmem:[%s2092 + $0x78] sm:$0xf]
        %v2124 = vld [vmem:[%s2092 + $0x7c] sm:$0xf]
        %v2157 = vunpack.c.l.b16 %v2093
        %v2158 = vunpack.c.l.b16 %v2094
        %v2159 = vunpack.c.l.b16 %v2095
        %v2160 = vunpack.c.l.b16 %v2096
        %v2161 = vunpack.c.l.b16 %v2097
        %v2162 = vunpack.c.l.b16 %v2098
        %v2163 = vunpack.c.l.b16 %v2099
        %v2164 = vunpack.c.l.b16 %v2100
        %v2165 = vunpack.c.l.b16 %v2101
        %v2166 = vunpack.c.l.b16 %v2102
        %v2167 = vunpack.c.l.b16 %v2103
        %v2168 = vunpack.c.l.b16 %v2104
        %v2169 = vunpack.c.l.b16 %v2105
        %v2170 = vunpack.c.l.b16 %v2106
        %v2171 = vunpack.c.l.b16 %v2107
        %v2172 = vunpack.c.l.b16 %v2108
        %v2173 = vunpack.c.l.b16 %v2109
        %v2174 = vunpack.c.l.b16 %v2110
        %v2175 = vunpack.c.l.b16 %v2111
        %v2176 = vunpack.c.l.b16 %v2112
        %v2177 = vunpack.c.l.b16 %v2113
        %v2178 = vunpack.c.l.b16 %v2114
        %v2179 = vunpack.c.l.b16 %v2115
        %v2180 = vunpack.c.l.b16 %v2116
        %v2181 = vunpack.c.l.b16 %v2117
        %v2182 = vunpack.c.l.b16 %v2118
        %v2183 = vunpack.c.l.b16 %v2119
        %v2184 = vunpack.c.l.b16 %v2120
        %v2185 = vunpack.c.l.b16 %v2121
        %v2186 = vunpack.c.l.b16 %v2122
        %v2187 = vunpack.c.l.b16 %v2123
        %v2188 = vunpack.c.l.b16 %v2124
        %v2189 = vpack.c.b16 %v2158, %v2157
        %v2190 = vpack.c.b16 %v2160, %v2159
        %v2191 = vpack.c.b16 %v2162, %v2161
        %v2192 = vpack.c.b16 %v2164, %v2163
        %v2193 = vpack.c.b16 %v2166, %v2165
        %v2194 = vpack.c.b16 %v2168, %v2167
        %v2195 = vpack.c.b16 %v2170, %v2169
        %v2196 = vpack.c.b16 %v2172, %v2171
        %v2197 = vpack.c.b16 %v2174, %v2173
        %v2198 = vpack.c.b16 %v2176, %v2175
        %v2199 = vpack.c.b16 %v2178, %v2177
        %v2200 = vpack.c.b16 %v2180, %v2179
        %v2201 = vpack.c.b16 %v2182, %v2181
        %v2202 = vpack.c.b16 %v2184, %v2183
        %v2203 = vpack.c.b16 %v2186, %v2185
        %v2204 = vpack.c.b16 %v2188, %v2187
        %2221 = vmatprep.subr.bf16.mxu0 0
        %2222 = vmatpush1.bf16.msra.mxu0 %v2189
        %2223 = vmatprep.subr.bf16.mxu0 0
        %2224 = vmatpush1.bf16.msra.mxu0 %v2190
        %2225 = vmatprep.subr.bf16.mxu0 0
        %2226 = vmatpush1.bf16.msra.mxu0 %v2191
        %2227 = vmatprep.subr.bf16.mxu0 0
        %2228 = vmatpush1.bf16.msra.mxu0 %v2192
        %2229 = vmatprep.subr.bf16.mxu0 0
        %2230 = vmatpush1.bf16.msra.mxu0 %v2193
        %2231 = vmatprep.subr.bf16.mxu0 0
        %2232 = vmatpush1.bf16.msra.mxu0 %v2194
        %2233 = vmatprep.subr.bf16.mxu0 0
        %2234 = vmatpush1.bf16.msra.mxu0 %v2195
        %2235 = vmatprep.subr.bf16.mxu0 0
        %2236 = vmatpush1.bf16.msra.mxu0 %v2196
        %2237 = vmatprep.subr.bf16.mxu0 0
        %2238 = vmatpush1.bf16.msra.mxu0 %v2197
        %2239 = vmatprep.subr.bf16.mxu0 0
        %2240 = vmatpush1.bf16.msra.mxu0 %v2198
        %2241 = vmatprep.subr.bf16.mxu0 0
        %2242 = vmatpush1.bf16.msra.mxu0 %v2199
        %2243 = vmatprep.subr.bf16.mxu0 0
        %2244 = vmatpush1.bf16.msra.mxu0 %v2200
        %2245 = vmatprep.subr.bf16.mxu0 0
        %2246 = vmatpush1.bf16.msra.mxu0 %v2201
        %2247 = vmatprep.subr.bf16.mxu0 0
        %2248 = vmatpush1.bf16.msra.mxu0 %v2202
        %2249 = vmatprep.subr.bf16.mxu0 0
        %2250 = vmatpush1.bf16.msra.mxu0 %v2203
        %2251 = vmatprep.subr.bf16.mxu0 0
        %2252 = vmatpush1.bf16.msra.mxu0 %v2204
        %2253 = vmatprep.mubr.bf16.mxu0 %v1559
        %2254 = vmatmul.mubr.bf16.gmra.mrb[0].mxu0 %v1558
        %v2255 = vpop.f32.mrb[0].mxu0
        %v2256 = vadd.f32 0.0, %v2255
        %v2257 = vpop.f32.mrb[0].mxu0
        %v2258 = vpop.f32.mrb[0].mxu0
        %v2259 = vadd.f32 0.0, %v2258
        %v2260 = vpop.f32.mrb[0].mxu0
        %2261 = vmatprep.mubr.bf16.mxu0 %v1561
        %2262 = vmatmul.mubr.bf16.gmra.mrb[0].mxu0 %v1560
        %v2263 = vpop.f32.mrb[0].mxu0
        %v2264 = vadd.f32 0.0, %v2263
        %v2265 = vpop.f32.mrb[0].mxu0
        %v2266 = vpop.f32.mrb[0].mxu0
        %v2267 = vpop.f32.mrb[0].mxu0
        %2268 = vdwg.mxu0
        %v2269 = vmax.f32 %v1725, %v1902
        %v2270 = vmax.f32 %v1728, %v1905
        %v2271 = vmax.f32 %v1733, %v1910
        %v2272 = vmax.f32 %v2079, %v2256
        %v2273 = vmax.f32 %v2082, %v2259
        %v2274 = vmax.f32 %v2087, %v2264
        %v2275 = vmax.f32 %v2269, %v2272
        %v2276 = vmax.f32 %v2270, %v2273
        %v2277 = vmax.f32 %v2271, %v2274
        %v2278 = vpack.c.bf16 %v2276, %v2275
        %v2279 = vpack.c.bf16 %v2277, %v2277
        %s2280 = scalar_lea.vmem %s1, 108
        %v2281 = vld [vmem:[%s2280] sm:$0xf]
        %v2282 = vld [vmem:[%s2280 + $0x4] sm:$0xf]
        %v2283 = vld [vmem:[%s2280 + $0x8] sm:$0xf]
        %v2284 = vld [vmem:[%s6] sm:$0xf]
        %v2285 = vld [vmem:[%s6 + $0x4] sm:$0xf]
        %v2286 = vld [vmem:[%s6 + $0x8] sm:$0xf]
        %v2287 = vld [vmem:[%s6 + $0xc] sm:$0xf]
        %v2288 = vld [vmem:[%s6 + $0x10] sm:$0xf]
        %v2289 = vld [vmem:[%s6 + $0x14] sm:$0xf]
        %v2290 = vld [vmem:[%s6 + $0x18] sm:$0xf]
        %v2291 = vld [vmem:[%s6 + $0x1c] sm:$0xf]
        %v2300 = vunpack.c.l.b16 %v2284
        %v2301 = vunpack.c.l.b16 %v2285
        %v2302 = vunpack.c.l.b16 %v2286
        %v2303 = vunpack.c.l.b16 %v2287
        %v2304 = vunpack.c.l.b16 %v2288
        %v2305 = vunpack.c.l.b16 %v2289
        %v2306 = vunpack.c.l.b16 %v2290
        %v2307 = vunpack.c.l.b16 %v2291
        %v2308 = vpack.c.b16 %v2301, %v2300
        %v2309 = vpack.c.b16 %v2303, %v2302
        %v2310 = vpack.c.b16 %v2305, %v2304
        %v2311 = vpack.c.b16 %v2307, %v2306
        %vm2316 = vcmask 523264
        %v2318 = vsel %vm2316, %v2278, 0
        %v2321 = vsel %vm2316, %v2279, 0
        %2323 = vmatprep.subr.bf16.mxu0 0
        %2324 = vmatpush1.bf16.msra.mxu0 %v2308
        %2325 = vmatprep.subr.bf16.mxu0 0
        %2326 = vmatpush1.bf16.msra.mxu0 %v2309
        %2327 = vmatprep.subr.bf16.mxu0 0
        %2328 = vmatpush1.bf16.msra.mxu0 %v2310
        %2329 = vmatprep.subr.bf16.mxu0 0
        %2330 = vmatpush1.bf16.msra.mxu0 %v2311
        %2331 = vmatprep.subr.bf16.mxu0 0
        %2332 = vmatpush1.bf16.msra.mxu0 0
        %2333 = vmatprep.subr.bf16.mxu0 0
        %2334 = vmatpush1.bf16.msra.mxu0 0
        %2335 = vmatprep.subr.bf16.mxu0 0
        %2336 = vmatpush1.bf16.msra.mxu0 0
        %2337 = vmatprep.subr.bf16.mxu0 0
        %2338 = vmatpush1.bf16.msra.mxu0 0
        %2339 = vmatprep.subr.bf16.mxu0 0
        %2340 = vmatpush1.bf16.msra.mxu0 0
        %2341 = vmatprep.subr.bf16.mxu0 0
        %2342 = vmatpush1.bf16.msra.mxu0 0
        %2343 = vmatprep.subr.bf16.mxu0 0
        %2344 = vmatpush1.bf16.msra.mxu0 0
        %2345 = vmatprep.subr.bf16.mxu0 0
        %2346 = vmatpush1.bf16.msra.mxu0 0
        %2347 = vmatprep.subr.bf16.mxu0 0
        %2348 = vmatpush1.bf16.msra.mxu0 0
        %2349 = vmatprep.subr.bf16.mxu0 0
        %2350 = vmatpush1.bf16.msra.mxu0 0
        %2351 = vmatprep.subr.bf16.mxu0 0
        %2352 = vmatpush1.bf16.msra.mxu0 0
        %2353 = vmatprep.subr.bf16.mxu0 0
        %2354 = vmatpush1.bf16.msra.mxu0 0
        %2355 = vmatprep.mubr.bf16.mxu0 0
        %2356 = vmatmul.mubr.bf16.gmra.mrb[0].mxu0 %v2318
        %v2357 = vpop.f32.mrb[0].mxu0
        %v2358 = vadd.f32 0.0, %v2357
        %v2359 = vpop.f32.mrb[0].mxu0
        %v2360 = vpop.f32.mrb[0].mxu0
        %v2361 = vadd.f32 0.0, %v2360
        %v2362 = vpop.f32.mrb[0].mxu0
        %2363 = vmatprep.mubr.bf16.mxu0 0
        %2364 = vmatmul.mubr.bf16.gmra.mrb[0].mxu0 %v2321
        %v2365 = vpop.f32.mrb[0].mxu0
        %v2366 = vadd.f32 0.0, %v2365
        %v2367 = vpop.f32.mrb[0].mxu0
        %v2368 = vpop.f32.mrb[0].mxu0
        %v2369 = vpop.f32.mrb[0].mxu0
        %2370 = vdwg.mxu0
        %v2371 = vpack.c.bf16 %v2361, %v2358
        %v2372 = vpack.c.bf16 %v2366, %v2366
        %s2373 = scalar_lea.vmem %s1, 120
        %v2374 = vld [vmem:[%s2373] sm:$0xf]
        %v2375 = vld [vmem:[%s2373 + $0x4] sm:$0xf]
        %v2376 = vld [vmem:[%s2373 + $0x8] sm:$0xf]
        %s2377 = scalar_lea.vmem %s6, 32
        %v2378 = vld [vmem:[%s2377] sm:$0xf]
        %v2379 = vld [vmem:[%s2377 + $0x4] sm:$0xf]
        %v2380 = vld [vmem:[%s2377 + $0x8] sm:$0xf]
        %v2381 = vld [vmem:[%s2377 + $0xc] sm:$0xf]
        %v2382 = vld [vmem:[%s2377 + $0x10] sm:$0xf]
        %v2383 = vld [vmem:[%s2377 + $0x14] sm:$0xf]
        %v2384 = vld [vmem:[%s2377 + $0x18] sm:$0xf]
        %v2385 = vld [vmem:[%s2377 + $0x1c] sm:$0xf]
        %v2394 = vunpack.c.l.b16 %v2378
        %v2395 = vunpack.c.l.b16 %v2379
        %v2396 = vunpack.c.l.b16 %v2380
        %v2397 = vunpack.c.l.b16 %v2381
        %v2398 = vunpack.c.l.b16 %v2382
        %v2399 = vunpack.c.l.b16 %v2383
        %v2400 = vunpack.c.l.b16 %v2384
        %v2401 = vunpack.c.l.b16 %v2385
        %v2402 = vpack.c.b16 %v2395, %v2394
        %v2403 = vpack.c.b16 %v2397, %v2396
        %v2404 = vpack.c.b16 %v2399, %v2398
        %v2405 = vpack.c.b16 %v2401, %v2400
        %2410 = vmatprep.subr.bf16.mxu0 0
        %2411 = vmatpush1.bf16.msra.mxu0 %v2402
        %2412 = vmatprep.subr.bf16.mxu0 0
        %2413 = vmatpush1.bf16.msra.mxu0 %v2403
        %2414 = vmatprep.subr.bf16.mxu0 0
        %2415 = vmatpush1.bf16.msra.mxu0 %v2404
        %2416 = vmatprep.subr.bf16.mxu0 0
        %2417 = vmatpush1.bf16.msra.mxu0 %v2405
        %2418 = vmatprep.subr.bf16.mxu0 0
        %2419 = vmatpush1.bf16.msra.mxu0 0
        %2420 = vmatprep.subr.bf16.mxu0 0
        %2421 = vmatpush1.bf16.msra.mxu0 0
        %2422 = vmatprep.subr.bf16.mxu0 0
        %2423 = vmatpush1.bf16.msra.mxu0 0
        %2424 = vmatprep.subr.bf16.mxu0 0
        %2425 = vmatpush1.bf16.msra.mxu0 0
        %2426 = vmatprep.subr.bf16.mxu0 0
        %2427 = vmatpush1.bf16.msra.mxu0 0
        %2428 = vmatprep.subr.bf16.mxu0 0
        %2429 = vmatpush1.bf16.msra.mxu0 0
        %2430 = vmatprep.subr.bf16.mxu0 0
        %2431 = vmatpush1.bf16.msra.mxu0 0
        %2432 = vmatprep.subr.bf16.mxu0 0
        %2433 = vmatpush1.bf16.msra.mxu0 0
        %2434 = vmatprep.subr.bf16.mxu0 0
        %2435 = vmatpush1.bf16.msra.mxu0 0
        %2436 = vmatprep.subr.bf16.mxu0 0
        %2437 = vmatpush1.bf16.msra.mxu0 0
        %2438 = vmatprep.subr.bf16.mxu0 0
        %2439 = vmatpush1.bf16.msra.mxu0 0
        %2440 = vmatprep.subr.bf16.mxu0 0
        %2441 = vmatpush1.bf16.msra.mxu0 0
        %2442 = vmatprep.mubr.bf16.mxu0 0
        %2443 = vmatmul.mubr.bf16.gmra.mrb[0].mxu0 %v2318
        %v2444 = vpop.f32.mrb[0].mxu0
        %v2445 = vadd.f32 0.0, %v2444
        %v2446 = vpop.f32.mrb[0].mxu0
        %v2447 = vpop.f32.mrb[0].mxu0
        %v2448 = vadd.f32 0.0, %v2447
        %v2449 = vpop.f32.mrb[0].mxu0
        %2450 = vmatprep.mubr.bf16.mxu0 0
        %2451 = vmatmul.mubr.bf16.gmra.mrb[0].mxu0 %v2321
        %v2452 = vpop.f32.mrb[0].mxu0
        %v2453 = vadd.f32 0.0, %v2452
        %v2454 = vpop.f32.mrb[0].mxu0
        %v2455 = vpop.f32.mrb[0].mxu0
        %v2456 = vpop.f32.mrb[0].mxu0
        %2457 = vdwg.mxu0
        %v2458 = vpack.c.bf16 %v2448, %v2445
        %v2459 = vpack.c.bf16 %v2453, %v2453
        %v2463 = vunpack.c.l.b16 %v2374
        %v2464 = vunpack.c.l.b16 %v2375
        %v2465 = vunpack.c.l.b16 %v2376
        %v2466 = vpack.c.b16 %v2464, %v2463
        %v2467 = vpack.c.b16 %v2465, %v2465
        %v2469 = vsel %vm567, %v2466, 0
        %v2472 = vsel %vm567, %v2467, 0
        %v2475 = vsel %vm574, %v2459, 0
        %2477 = vmatprep.subr.bf16.mxu0 0
        %2478 = vmatpush1.bf16.msra.mxu0 %v2458
        %2479 = vmatprep.subr.bf16.mxu0 0
        %2480 = vmatpush1.bf16.msra.mxu0 %v2475
        %2481 = vmatprep.subr.bf16.mxu0 0
        %2482 = vmatpush1.bf16.msra.mxu0 0
        %2483 = vmatprep.subr.bf16.mxu0 0
        %2484 = vmatpush1.bf16.msra.mxu0 0
        %2485 = vmatprep.subr.bf16.mxu0 0
        %2486 = vmatpush1.bf16.msra.mxu0 0
        %2487 = vmatprep.subr.bf16.mxu0 0
        %2488 = vmatpush1.bf16.msra.mxu0 0
        %2489 = vmatprep.subr.bf16.mxu0 0
        %2490 = vmatpush1.bf16.msra.mxu0 0
        %2491 = vmatprep.subr.bf16.mxu0 0
        %2492 = vmatpush1.bf16.msra.mxu0 0
        %2493 = vmatprep.subr.bf16.mxu0 0
        %2494 = vmatpush1.bf16.msra.mxu0 0
        %2495 = vmatprep.subr.bf16.mxu0 0
        %2496 = vmatpush1.bf16.msra.mxu0 0
        %2497 = vmatprep.subr.bf16.mxu0 0
        %2498 = vmatpush1.bf16.msra.mxu0 0
        %2499 = vmatprep.subr.bf16.mxu0 0
        %2500 = vmatpush1.bf16.msra.mxu0 0
        %2501 = vmatprep.subr.bf16.mxu0 0
        %2502 = vmatpush1.bf16.msra.mxu0 0
        %2503 = vmatprep.subr.bf16.mxu0 0
        %2504 = vmatpush1.bf16.msra.mxu0 0
        %2505 = vmatprep.subr.bf16.mxu0 0
        %2506 = vmatpush1.bf16.msra.mxu0 0
        %2507 = vmatprep.subr.bf16.mxu0 0
        %2508 = vmatpush1.bf16.msra.mxu0 0
        %2509 = vmatprep.mubr.bf16.mxu0 0
        %2510 = vmatmul.mubr.bf16.gmra.mrb[0].mxu0 %v2469
        %v2511 = vpop.f32.mrb[0].mxu0
        %v2512 = vadd.f32 0.0, %v2511
        %v2513 = vpop.f32.mrb[0].mxu0
        %v2514 = vpop.f32.mrb[0].mxu0
        %v2515 = vadd.f32 0.0, %v2514
        %v2516 = vpop.f32.mrb[0].mxu0
        %2517 = vmatprep.mubr.bf16.mxu0 0
        %2518 = vmatmul.mubr.bf16.gmra.mrb[0].mxu0 %v2472
        %v2519 = vpop.f32.mrb[0].mxu0
        %v2520 = vadd.f32 0.0, %v2519
        %v2521 = vpop.f32.mrb[0].mxu0
        %v2522 = vpop.f32.mrb[0].mxu0
        %v2523 = vpop.f32.mrb[0].mxu0
        %2524 = vdwg.mxu0
        %v2528 = vunpack.c.l.b16 %v2281
        %v2529 = vunpack.c.l.b16 %v2282
        %v2530 = vunpack.c.l.b16 %v2283
        %v2531 = vpack.c.b16 %v2529, %v2528
        %v2532 = vpack.c.b16 %v2530, %v2530
        %v2534 = vsel %vm567, %v2531, 0
        %v2537 = vsel %vm567, %v2532, 0
        %v2540 = vsel %vm574, %v2372, 0
        %2542 = vmatprep.subr.bf16.mxu0 0
        %2543 = vmatpush1.bf16.msra.mxu0 %v2371
        %2544 = vmatprep.subr.bf16.mxu0 0
        %2545 = vmatpush1.bf16.msra.mxu0 %v2540
        %2546 = vmatprep.subr.bf16.mxu0 0
        %2547 = vmatpush1.bf16.msra.mxu0 0
        %2548 = vmatprep.subr.bf16.mxu0 0
        %2549 = vmatpush1.bf16.msra.mxu0 0
        %2550 = vmatprep.subr.bf16.mxu0 0
        %2551 = vmatpush1.bf16.msra.mxu0 0
        %2552 = vmatprep.subr.bf16.mxu0 0
        %2553 = vmatpush1.bf16.msra.mxu0 0
        %2554 = vmatprep.subr.bf16.mxu0 0
        %2555 = vmatpush1.bf16.msra.mxu0 0
        %2556 = vmatprep.subr.bf16.mxu0 0
        %2557 = vmatpush1.bf16.msra.mxu0 0
        %2558 = vmatprep.subr.bf16.mxu0 0
        %2559 = vmatpush1.bf16.msra.mxu0 0
        %2560 = vmatprep.subr.bf16.mxu0 0
        %2561 = vmatpush1.bf16.msra.mxu0 0
        %2562 = vmatprep.subr.bf16.mxu0 0
        %2563 = vmatpush1.bf16.msra.mxu0 0
        %2564 = vmatprep.subr.bf16.mxu0 0
        %2565 = vmatpush1.bf16.msra.mxu0 0
        %2566 = vmatprep.subr.bf16.mxu0 0
        %2567 = vmatpush1.bf16.msra.mxu0 0
        %2568 = vmatprep.subr.bf16.mxu0 0
        %2569 = vmatpush1.bf16.msra.mxu0 0
        %2570 = vmatprep.subr.bf16.mxu0 0
        %2571 = vmatpush1.bf16.msra.mxu0 0
        %2572 = vmatprep.subr.bf16.mxu0 0
        %2573 = vmatpush1.bf16.msra.mxu0 0
        %2574 = vmatprep.mubr.bf16.mxu0 0
        %2575 = vmatmul.mubr.bf16.gmra.mrb[0].mxu0 %v2534
        %v2576 = vpop.f32.mrb[0].mxu0
        %v2577 = vadd.f32 %v2512, %v2576
        %v2578 = vpop.f32.mrb[0].mxu0
        %v2579 = vpop.f32.mrb[0].mxu0
        %v2580 = vadd.f32 %v2515, %v2579
        %v2581 = vpop.f32.mrb[0].mxu0
        %2582 = vmatprep.mubr.bf16.mxu0 0
        %2583 = vmatmul.mubr.bf16.gmra.mrb[0].mxu0 %v2537
        %v2584 = vpop.f32.mrb[0].mxu0
        %v2585 = vadd.f32 %v2520, %v2584
        %v2586 = vpop.f32.mrb[0].mxu0
        %v2587 = vpop.f32.mrb[0].mxu0
        %v2588 = vpop.f32.mrb[0].mxu0
        %2589 = vdwg.mxu0
        %s2590 = scalar_lea.vmem %s1, 132
        %v2591 = vld [vmem:[%s2590] sm:$0xf]
        %v2592 = vld [vmem:[%s2590 + $0x4] sm:$0xf]
        %v2593 = vld [vmem:[%s2590 + $0x8] sm:$0xf]
        %s2594 = scalar_lea.vmem %s6, 64
        %v2595 = vld [vmem:[%s2594] sm:$0xf]
        %v2596 = vld [vmem:[%s2594 + $0x4] sm:$0xf]
        %v2597 = vld [vmem:[%s2594 + $0x8] sm:$0xf]
        %v2598 = vld [vmem:[%s2594 + $0xc] sm:$0xf]
        %v2599 = vld [vmem:[%s2594 + $0x10] sm:$0xf]
        %v2600 = vld [vmem:[%s2594 + $0x14] sm:$0xf]
        %v2601 = vld [vmem:[%s2594 + $0x18] sm:$0xf]
        %v2602 = vld [vmem:[%s2594 + $0x1c] sm:$0xf]
        %v2611 = vunpack.c.l.b16 %v2595
        %v2612 = vunpack.c.l.b16 %v2596
        %v2613 = vunpack.c.l.b16 %v2597
        %v2614 = vunpack.c.l.b16 %v2598
        %v2615 = vunpack.c.l.b16 %v2599
        %v2616 = vunpack.c.l.b16 %v2600
        %v2617 = vunpack.c.l.b16 %v2601
        %v2618 = vunpack.c.l.b16 %v2602
        %v2619 = vpack.c.b16 %v2612, %v2611
        %v2620 = vpack.c.b16 %v2614, %v2613
        %v2621 = vpack.c.b16 %v2616, %v2615
        %v2622 = vpack.c.b16 %v2618, %v2617
        %2627 = vmatprep.subr.bf16.mxu0 0
        %2628 = vmatpush1.bf16.msra.mxu0 %v2619
        %2629 = vmatprep.subr.bf16.mxu0 0
        %2630 = vmatpush1.bf16.msra.mxu0 %v2620
        %2631 = vmatprep.subr.bf16.mxu0 0
        %2632 = vmatpush1.bf16.msra.mxu0 %v2621
        %2633 = vmatprep.subr.bf16.mxu0 0
        %2634 = vmatpush1.bf16.msra.mxu0 %v2622
        %2635 = vmatprep.subr.bf16.mxu0 0
        %2636 = vmatpush1.bf16.msra.mxu0 0
        %2637 = vmatprep.subr.bf16.mxu0 0
        %2638 = vmatpush1.bf16.msra.mxu0 0
        %2639 = vmatprep.subr.bf16.mxu0 0
        %2640 = vmatpush1.bf16.msra.mxu0 0
        %2641 = vmatprep.subr.bf16.mxu0 0
        %2642 = vmatpush1.bf16.msra.mxu0 0
        %2643 = vmatprep.subr.bf16.mxu0 0
        %2644 = vmatpush1.bf16.msra.mxu0 0
        %2645 = vmatprep.subr.bf16.mxu0 0
        %2646 = vmatpush1.bf16.msra.mxu0 0
        %2647 = vmatprep.subr.bf16.mxu0 0
        %2648 = vmatpush1.bf16.msra.mxu0 0
        %2649 = vmatprep.subr.bf16.mxu0 0
        %2650 = vmatpush1.bf16.msra.mxu0 0
        %2651 = vmatprep.subr.bf16.mxu0 0
        %2652 = vmatpush1.bf16.msra.mxu0 0
        %2653 = vmatprep.subr.bf16.mxu0 0
        %2654 = vmatpush1.bf16.msra.mxu0 0
        %2655 = vmatprep.subr.bf16.mxu0 0
        %2656 = vmatpush1.bf16.msra.mxu0 0
        %2657 = vmatprep.subr.bf16.mxu0 0
        %2658 = vmatpush1.bf16.msra.mxu0 0
        %2659 = vmatprep.mubr.bf16.mxu0 0
        %2660 = vmatmul.mubr.bf16.gmra.mrb[0].mxu0 %v2318
        %v2661 = vpop.f32.mrb[0].mxu0
        %v2662 = vadd.f32 0.0, %v2661
        %v2663 = vpop.f32.mrb[0].mxu0
        %v2664 = vpop.f32.mrb[0].mxu0
        %v2665 = vadd.f32 0.0, %v2664
        %v2666 = vpop.f32.mrb[0].mxu0
        %2667 = vmatprep.mubr.bf16.mxu0 0
        %2668 = vmatmul.mubr.bf16.gmra.mrb[0].mxu0 %v2321
        %v2669 = vpop.f32.mrb[0].mxu0
        %v2670 = vadd.f32 0.0, %v2669
        %v2671 = vpop.f32.mrb[0].mxu0
        %v2672 = vpop.f32.mrb[0].mxu0
        %v2673 = vpop.f32.mrb[0].mxu0
        %2674 = vdwg.mxu0
        %v2675 = vpack.c.bf16 %v2665, %v2662
        %v2676 = vpack.c.bf16 %v2670, %v2670
        %v2680 = vunpack.c.l.b16 %v2591
        %v2681 = vunpack.c.l.b16 %v2592
        %v2682 = vunpack.c.l.b16 %v2593
        %v2683 = vpack.c.b16 %v2681, %v2680
        %v2684 = vpack.c.b16 %v2682, %v2682
        %v2686 = vsel %vm567, %v2683, 0
        %v2689 = vsel %vm567, %v2684, 0
        %v2692 = vsel %vm574, %v2676, 0
        %2694 = vmatprep.subr.bf16.mxu0 0
        %2695 = vmatpush1.bf16.msra.mxu0 %v2675
        %2696 = vmatprep.subr.bf16.mxu0 0
        %2697 = vmatpush1.bf16.msra.mxu0 %v2692
        %2698 = vmatprep.subr.bf16.mxu0 0
        %2699 = vmatpush1.bf16.msra.mxu0 0
        %2700 = vmatprep.subr.bf16.mxu0 0
        %2701 = vmatpush1.bf16.msra.mxu0 0
        %2702 = vmatprep.subr.bf16.mxu0 0
        %2703 = vmatpush1.bf16.msra.mxu0 0
        %2704 = vmatprep.subr.bf16.mxu0 0
        %2705 = vmatpush1.bf16.msra.mxu0 0
        %2706 = vmatprep.subr.bf16.mxu0 0
        %2707 = vmatpush1.bf16.msra.mxu0 0
        %2708 = vmatprep.subr.bf16.mxu0 0
        %2709 = vmatpush1.bf16.msra.mxu0 0
        %2710 = vmatprep.subr.bf16.mxu0 0
        %2711 = vmatpush1.bf16.msra.mxu0 0
        %2712 = vmatprep.subr.bf16.mxu0 0
        %2713 = vmatpush1.bf16.msra.mxu0 0
        %2714 = vmatprep.subr.bf16.mxu0 0
        %2715 = vmatpush1.bf16.msra.mxu0 0
        %2716 = vmatprep.subr.bf16.mxu0 0
        %2717 = vmatpush1.bf16.msra.mxu0 0
        %2718 = vmatprep.subr.bf16.mxu0 0
        %2719 = vmatpush1.bf16.msra.mxu0 0
        %2720 = vmatprep.subr.bf16.mxu0 0
        %2721 = vmatpush1.bf16.msra.mxu0 0
        %2722 = vmatprep.subr.bf16.mxu0 0
        %2723 = vmatpush1.bf16.msra.mxu0 0
        %2724 = vmatprep.subr.bf16.mxu0 0
        %2725 = vmatpush1.bf16.msra.mxu0 0
        %2726 = vmatprep.mubr.bf16.mxu0 0
        %2727 = vmatmul.mubr.bf16.gmra.mrb[0].mxu0 %v2686
        %v2728 = vpop.f32.mrb[0].mxu0
        %v2729 = vadd.f32 0.0, %v2728
        %v2730 = vpop.f32.mrb[0].mxu0
        %v2731 = vpop.f32.mrb[0].mxu0
        %v2732 = vadd.f32 0.0, %v2731
        %v2733 = vpop.f32.mrb[0].mxu0
        %2734 = vmatprep.mubr.bf16.mxu0 0
        %2735 = vmatmul.mubr.bf16.gmra.mrb[0].mxu0 %v2689
        %v2736 = vpop.f32.mrb[0].mxu0
        %v2737 = vadd.f32 0.0, %v2736
        %v2738 = vpop.f32.mrb[0].mxu0
        %v2739 = vpop.f32.mrb[0].mxu0
        %v2740 = vpop.f32.mrb[0].mxu0
        %2741 = vdwg.mxu0
        %v2742 = vadd.f32 %v2577, %v2729
        %v2743 = vadd.f32 %v2580, %v2732
        %v2744 = vadd.f32 %v2585, %v2737
        %s2745 = scalar_lea.vmem %s1, 144
        %v2746 = vld [vmem:[%s2745] sm:$0xf]
        %v2747 = vld [vmem:[%s2745 + $0x4] sm:$0xf]
        %v2748 = vld [vmem:[%s2745 + $0x8] sm:$0xf]
        %s2749 = scalar_lea.vmem %s6, 96
        %v2750 = vld [vmem:[%s2749] sm:$0xf]
        %v2751 = vld [vmem:[%s2749 + $0x4] sm:$0xf]
        %v2752 = vld [vmem:[%s2749 + $0x8] sm:$0xf]
        %v2753 = vld [vmem:[%s2749 + $0xc] sm:$0xf]
        %v2754 = vld [vmem:[%s2749 + $0x10] sm:$0xf]
        %v2755 = vld [vmem:[%s2749 + $0x14] sm:$0xf]
        %v2756 = vld [vmem:[%s2749 + $0x18] sm:$0xf]
        %v2757 = vld [vmem:[%s2749 + $0x1c] sm:$0xf]
        %v2766 = vunpack.c.l.b16 %v2750
        %v2767 = vunpack.c.l.b16 %v2751
        %v2768 = vunpack.c.l.b16 %v2752
        %v2769 = vunpack.c.l.b16 %v2753
        %v2770 = vunpack.c.l.b16 %v2754
        %v2771 = vunpack.c.l.b16 %v2755
        %v2772 = vunpack.c.l.b16 %v2756
        %v2773 = vunpack.c.l.b16 %v2757
        %v2774 = vpack.c.b16 %v2767, %v2766
        %v2775 = vpack.c.b16 %v2769, %v2768
        %v2776 = vpack.c.b16 %v2771, %v2770
        %v2777 = vpack.c.b16 %v2773, %v2772
        %2782 = vmatprep.subr.bf16.mxu0 0
        %2783 = vmatpush1.bf16.msra.mxu0 %v2774
        %2784 = vmatprep.subr.bf16.mxu0 0
        %2785 = vmatpush1.bf16.msra.mxu0 %v2775
        %2786 = vmatprep.subr.bf16.mxu0 0
        %2787 = vmatpush1.bf16.msra.mxu0 %v2776
        %2788 = vmatprep.subr.bf16.mxu0 0
        %2789 = vmatpush1.bf16.msra.mxu0 %v2777
        %2790 = vmatprep.subr.bf16.mxu0 0
        %2791 = vmatpush1.bf16.msra.mxu0 0
        %2792 = vmatprep.subr.bf16.mxu0 0
        %2793 = vmatpush1.bf16.msra.mxu0 0
        %2794 = vmatprep.subr.bf16.mxu0 0
        %2795 = vmatpush1.bf16.msra.mxu0 0
        %2796 = vmatprep.subr.bf16.mxu0 0
        %2797 = vmatpush1.bf16.msra.mxu0 0
        %2798 = vmatprep.subr.bf16.mxu0 0
        %2799 = vmatpush1.bf16.msra.mxu0 0
        %2800 = vmatprep.subr.bf16.mxu0 0
        %2801 = vmatpush1.bf16.msra.mxu0 0
        %2802 = vmatprep.subr.bf16.mxu0 0
        %2803 = vmatpush1.bf16.msra.mxu0 0
        %2804 = vmatprep.subr.bf16.mxu0 0
        %2805 = vmatpush1.bf16.msra.mxu0 0
        %2806 = vmatprep.subr.bf16.mxu0 0
        %2807 = vmatpush1.bf16.msra.mxu0 0
        %2808 = vmatprep.subr.bf16.mxu0 0
        %2809 = vmatpush1.bf16.msra.mxu0 0
        %2810 = vmatprep.subr.bf16.mxu0 0
        %2811 = vmatpush1.bf16.msra.mxu0 0
        %2812 = vmatprep.subr.bf16.mxu0 0
        %2813 = vmatpush1.bf16.msra.mxu0 0
        %2814 = vmatprep.mubr.bf16.mxu0 0
        %2815 = vmatmul.mubr.bf16.gmra.mrb[0].mxu0 %v2318
        %v2816 = vpop.f32.mrb[0].mxu0
        %v2817 = vadd.f32 0.0, %v2816
        %v2818 = vpop.f32.mrb[0].mxu0
        %v2819 = vpop.f32.mrb[0].mxu0
        %v2820 = vadd.f32 0.0, %v2819
        %v2821 = vpop.f32.mrb[0].mxu0
        %2822 = vmatprep.mubr.bf16.mxu0 0
        %2823 = vmatmul.mubr.bf16.gmra.mrb[0].mxu0 %v2321
        %v2824 = vpop.f32.mrb[0].mxu0
        %v2825 = vadd.f32 0.0, %v2824
        %v2826 = vpop.f32.mrb[0].mxu0
        %v2827 = vpop.f32.mrb[0].mxu0
        %v2828 = vpop.f32.mrb[0].mxu0
        %2829 = vdwg.mxu0
        %v2830 = vpack.c.bf16 %v2820, %v2817
        %v2831 = vpack.c.bf16 %v2825, %v2825
        %v2835 = vunpack.c.l.b16 %v2746
        %v2836 = vunpack.c.l.b16 %v2747
        %v2837 = vunpack.c.l.b16 %v2748
        %v2838 = vpack.c.b16 %v2836, %v2835
        %v2839 = vpack.c.b16 %v2837, %v2837
        %v2841 = vsel %vm567, %v2838, 0
        %v2844 = vsel %vm567, %v2839, 0
        %v2847 = vsel %vm574, %v2831, 0
        %2849 = vmatprep.subr.bf16.mxu0 0
        %2850 = vmatpush1.bf16.msra.mxu0 %v2830
        %2851 = vmatprep.subr.bf16.mxu0 0
        %2852 = vmatpush1.bf16.msra.mxu0 %v2847
        %2853 = vmatprep.subr.bf16.mxu0 0
        %2854 = vmatpush1.bf16.msra.mxu0 0
        %2855 = vmatprep.subr.bf16.mxu0 0
        %2856 = vmatpush1.bf16.msra.mxu0 0
        %2857 = vmatprep.subr.bf16.mxu0 0
        %2858 = vmatpush1.bf16.msra.mxu0 0
        %2859 = vmatprep.subr.bf16.mxu0 0
        %2860 = vmatpush1.bf16.msra.mxu0 0
        %2861 = vmatprep.subr.bf16.mxu0 0
        %2862 = vmatpush1.bf16.msra.mxu0 0
        %2863 = vmatprep.subr.bf16.mxu0 0
        %2864 = vmatpush1.bf16.msra.mxu0 0
        %2865 = vmatprep.subr.bf16.mxu0 0
        %2866 = vmatpush1.bf16.msra.mxu0 0
        %2867 = vmatprep.subr.bf16.mxu0 0
        %2868 = vmatpush1.bf16.msra.mxu0 0
        %2869 = vmatprep.subr.bf16.mxu0 0
        %2870 = vmatpush1.bf16.msra.mxu0 0
        %2871 = vmatprep.subr.bf16.mxu0 0
        %2872 = vmatpush1.bf16.msra.mxu0 0
        %2873 = vmatprep.subr.bf16.mxu0 0
        %2874 = vmatpush1.bf16.msra.mxu0 0
        %2875 = vmatprep.subr.bf16.mxu0 0
        %2876 = vmatpush1.bf16.msra.mxu0 0
        %2877 = vmatprep.subr.bf16.mxu0 0
        %2878 = vmatpush1.bf16.msra.mxu0 0
        %2879 = vmatprep.subr.bf16.mxu0 0
        %2880 = vmatpush1.bf16.msra.mxu0 0
        %2881 = vmatprep.mubr.bf16.mxu0 0
        %2882 = vmatmul.mubr.bf16.gmra.mrb[0].mxu0 %v2841
        %v2883 = vpop.f32.mrb[0].mxu0
        %v2884 = vadd.f32 0.0, %v2883
        %v2885 = vpop.f32.mrb[0].mxu0
        %v2886 = vpop.f32.mrb[0].mxu0
        %v2887 = vadd.f32 0.0, %v2886
        %v2888 = vpop.f32.mrb[0].mxu0
        %2889 = vmatprep.mubr.bf16.mxu0 0
        %2890 = vmatmul.mubr.bf16.gmra.mrb[0].mxu0 %v2844
        %v2891 = vpop.f32.mrb[0].mxu0
        %v2892 = vadd.f32 0.0, %v2891
        %v2893 = vpop.f32.mrb[0].mxu0
        %v2894 = vpop.f32.mrb[0].mxu0
        %v2895 = vpop.f32.mrb[0].mxu0
        %2896 = vdwg.mxu0
        %v2897 = vadd.f32 %v2742, %v2884
        %v2898 = vadd.f32 %v2743, %v2887
        %v2899 = vadd.f32 %v2744, %v2892
        %s2900 = scalar_lea.vmem %s1, 156
        %v2901 = vld [vmem:[%s2900] sm:$0xf]
        %v2902 = vld [vmem:[%s2900 + $0x4] sm:$0xf]
        %v2903 = vld [vmem:[%s2900 + $0x8] sm:$0xf]
        %s2904 = scalar_lea.vmem %s6, 128
        %v2905 = vld [vmem:[%s2904] sm:$0xf]
        %v2906 = vld [vmem:[%s2904 + $0x4] sm:$0xf]
        %v2907 = vld [vmem:[%s2904 + $0x8] sm:$0xf]
        %v2908 = vld [vmem:[%s2904 + $0xc] sm:$0xf]
        %v2909 = vld [vmem:[%s2904 + $0x10] sm:$0xf]
        %v2910 = vld [vmem:[%s2904 + $0x14] sm:$0xf]
        %v2911 = vld [vmem:[%s2904 + $0x18] sm:$0xf]
        %v2912 = vld [vmem:[%s2904 + $0x1c] sm:$0xf]
        %v2921 = vunpack.c.l.b16 %v2905
        %v2922 = vunpack.c.l.b16 %v2906
        %v2923 = vunpack.c.l.b16 %v2907
        %v2924 = vunpack.c.l.b16 %v2908
        %v2925 = vunpack.c.l.b16 %v2909
        %v2926 = vunpack.c.l.b16 %v2910
        %v2927 = vunpack.c.l.b16 %v2911
        %v2928 = vunpack.c.l.b16 %v2912
        %v2929 = vpack.c.b16 %v2922, %v2921
        %v2930 = vpack.c.b16 %v2924, %v2923
        %v2931 = vpack.c.b16 %v2926, %v2925
        %v2932 = vpack.c.b16 %v2928, %v2927
        %2937 = vmatprep.subr.bf16.mxu0 0
        %2938 = vmatpush1.bf16.msra.mxu0 %v2929
        %2939 = vmatprep.subr.bf16.mxu0 0
        %2940 = vmatpush1.bf16.msra.mxu0 %v2930
        %2941 = vmatprep.subr.bf16.mxu0 0
        %2942 = vmatpush1.bf16.msra.mxu0 %v2931
        %2943 = vmatprep.subr.bf16.mxu0 0
        %2944 = vmatpush1.bf16.msra.mxu0 %v2932
        %2945 = vmatprep.subr.bf16.mxu0 0
        %2946 = vmatpush1.bf16.msra.mxu0 0
        %2947 = vmatprep.subr.bf16.mxu0 0
        %2948 = vmatpush1.bf16.msra.mxu0 0
        %2949 = vmatprep.subr.bf16.mxu0 0
        %2950 = vmatpush1.bf16.msra.mxu0 0
        %2951 = vmatprep.subr.bf16.mxu0 0
        %2952 = vmatpush1.bf16.msra.mxu0 0
        %2953 = vmatprep.subr.bf16.mxu0 0
        %2954 = vmatpush1.bf16.msra.mxu0 0
        %2955 = vmatprep.subr.bf16.mxu0 0
        %2956 = vmatpush1.bf16.msra.mxu0 0
        %2957 = vmatprep.subr.bf16.mxu0 0
        %2958 = vmatpush1.bf16.msra.mxu0 0
        %2959 = vmatprep.subr.bf16.mxu0 0
        %2960 = vmatpush1.bf16.msra.mxu0 0
        %2961 = vmatprep.subr.bf16.mxu0 0
        %2962 = vmatpush1.bf16.msra.mxu0 0
        %2963 = vmatprep.subr.bf16.mxu0 0
        %2964 = vmatpush1.bf16.msra.mxu0 0
        %2965 = vmatprep.subr.bf16.mxu0 0
        %2966 = vmatpush1.bf16.msra.mxu0 0
        %2967 = vmatprep.subr.bf16.mxu0 0
        %2968 = vmatpush1.bf16.msra.mxu0 0
        %2969 = vmatprep.mubr.bf16.mxu0 0
        %2970 = vmatmul.mubr.bf16.gmra.mrb[0].mxu0 %v2318
        %v2971 = vpop.f32.mrb[0].mxu0
        %v2972 = vadd.f32 0.0, %v2971
        %v2973 = vpop.f32.mrb[0].mxu0
        %v2974 = vpop.f32.mrb[0].mxu0
        %v2975 = vadd.f32 0.0, %v2974
        %v2976 = vpop.f32.mrb[0].mxu0
        %2977 = vmatprep.mubr.bf16.mxu0 0
        %2978 = vmatmul.mubr.bf16.gmra.mrb[0].mxu0 %v2321
        %v2979 = vpop.f32.mrb[0].mxu0
        %v2980 = vadd.f32 0.0, %v2979
        %v2981 = vpop.f32.mrb[0].mxu0
        %v2982 = vpop.f32.mrb[0].mxu0
        %v2983 = vpop.f32.mrb[0].mxu0
        %2984 = vdwg.mxu0
        %v2985 = vpack.c.bf16 %v2975, %v2972
        %v2986 = vpack.c.bf16 %v2980, %v2980
        %v2990 = vunpack.c.l.b16 %v2901
        %v2991 = vunpack.c.l.b16 %v2902
        %v2992 = vunpack.c.l.b16 %v2903
        %v2993 = vpack.c.b16 %v2991, %v2990
        %v2994 = vpack.c.b16 %v2992, %v2992
        %v2996 = vsel %vm567, %v2993, 0
        %v2999 = vsel %vm567, %v2994, 0
        %v3002 = vsel %vm574, %v2986, 0
        %3004 = vmatprep.subr.bf16.mxu0 0
        %3005 = vmatpush1.bf16.msra.mxu0 %v2985
        %3006 = vmatprep.subr.bf16.mxu0 0
        %3007 = vmatpush1.bf16.msra.mxu0 %v3002
        %3008 = vmatprep.subr.bf16.mxu0 0
        %3009 = vmatpush1.bf16.msra.mxu0 0
        %3010 = vmatprep.subr.bf16.mxu0 0
        %3011 = vmatpush1.bf16.msra.mxu0 0
        %3012 = vmatprep.subr.bf16.mxu0 0
        %3013 = vmatpush1.bf16.msra.mxu0 0
        %3014 = vmatprep.subr.bf16.mxu0 0
        %3015 = vmatpush1.bf16.msra.mxu0 0
        %3016 = vmatprep.subr.bf16.mxu0 0
        %3017 = vmatpush1.bf16.msra.mxu0 0
        %3018 = vmatprep.subr.bf16.mxu0 0
        %3019 = vmatpush1.bf16.msra.mxu0 0
        %3020 = vmatprep.subr.bf16.mxu0 0
        %3021 = vmatpush1.bf16.msra.mxu0 0
        %3022 = vmatprep.subr.bf16.mxu0 0
        %3023 = vmatpush1.bf16.msra.mxu0 0
        %3024 = vmatprep.subr.bf16.mxu0 0
        %3025 = vmatpush1.bf16.msra.mxu0 0
        %3026 = vmatprep.subr.bf16.mxu0 0
        %3027 = vmatpush1.bf16.msra.mxu0 0
        %3028 = vmatprep.subr.bf16.mxu0 0
        %3029 = vmatpush1.bf16.msra.mxu0 0
        %3030 = vmatprep.subr.bf16.mxu0 0
        %3031 = vmatpush1.bf16.msra.mxu0 0
        %3032 = vmatprep.subr.bf16.mxu0 0
        %3033 = vmatpush1.bf16.msra.mxu0 0
        %3034 = vmatprep.subr.bf16.mxu0 0
        %3035 = vmatpush1.bf16.msra.mxu0 0
        %3036 = vmatprep.mubr.bf16.mxu0 0
        %3037 = vmatmul.mubr.bf16.gmra.mrb[0].mxu0 %v2996
        %v3038 = vpop.f32.mrb[0].mxu0
        %v3039 = vadd.f32 0.0, %v3038
        %v3040 = vpop.f32.mrb[0].mxu0
        %v3041 = vpop.f32.mrb[0].mxu0
        %v3042 = vadd.f32 0.0, %v3041
        %v3043 = vpop.f32.mrb[0].mxu0
        %3044 = vmatprep.mubr.bf16.mxu0 0
        %3045 = vmatmul.mubr.bf16.gmra.mrb[0].mxu0 %v2999
        %v3046 = vpop.f32.mrb[0].mxu0
        %v3047 = vadd.f32 0.0, %v3046
        %v3048 = vpop.f32.mrb[0].mxu0
        %v3049 = vpop.f32.mrb[0].mxu0
        %v3050 = vpop.f32.mrb[0].mxu0
        %3051 = vdwg.mxu0
        %v3052 = vadd.f32 %v2897, %v3039
        %v3053 = vadd.f32 %v2898, %v3042
        %v3054 = vadd.f32 %v2899, %v3047
        %s3055 = scalar_lea.vmem %s1, 168
        %v3056 = vld [vmem:[%s3055] sm:$0xf]
        %v3057 = vld [vmem:[%s3055 + $0x4] sm:$0xf]
        %v3058 = vld [vmem:[%s3055 + $0x8] sm:$0xf]
        %s3059 = scalar_lea.vmem %s6, 160
        %v3060 = vld [vmem:[%s3059] sm:$0xf]
        %v3061 = vld [vmem:[%s3059 + $0x4] sm:$0xf]
        %v3062 = vld [vmem:[%s3059 + $0x8] sm:$0xf]
        %v3063 = vld [vmem:[%s3059 + $0xc] sm:$0xf]
        %v3064 = vld [vmem:[%s3059 + $0x10] sm:$0xf]
        %v3065 = vld [vmem:[%s3059 + $0x14] sm:$0xf]
        %v3066 = vld [vmem:[%s3059 + $0x18] sm:$0xf]
        %v3067 = vld [vmem:[%s3059 + $0x1c] sm:$0xf]
        %v3076 = vunpack.c.l.b16 %v3060
        %v3077 = vunpack.c.l.b16 %v3061
        %v3078 = vunpack.c.l.b16 %v3062
        %v3079 = vunpack.c.l.b16 %v3063
        %v3080 = vunpack.c.l.b16 %v3064
        %v3081 = vunpack.c.l.b16 %v3065
        %v3082 = vunpack.c.l.b16 %v3066
        %v3083 = vunpack.c.l.b16 %v3067
        %v3084 = vpack.c.b16 %v3077, %v3076
        %v3085 = vpack.c.b16 %v3079, %v3078
        %v3086 = vpack.c.b16 %v3081, %v3080
        %v3087 = vpack.c.b16 %v3083, %v3082
        %3092 = vmatprep.subr.bf16.mxu0 0
        %3093 = vmatpush1.bf16.msra.mxu0 %v3084
        %3094 = vmatprep.subr.bf16.mxu0 0
        %3095 = vmatpush1.bf16.msra.mxu0 %v3085
        %3096 = vmatprep.subr.bf16.mxu0 0
        %3097 = vmatpush1.bf16.msra.mxu0 %v3086
        %3098 = vmatprep.subr.bf16.mxu0 0
        %3099 = vmatpush1.bf16.msra.mxu0 %v3087
        %3100 = vmatprep.subr.bf16.mxu0 0
        %3101 = vmatpush1.bf16.msra.mxu0 0
        %3102 = vmatprep.subr.bf16.mxu0 0
        %3103 = vmatpush1.bf16.msra.mxu0 0
        %3104 = vmatprep.subr.bf16.mxu0 0
        %3105 = vmatpush1.bf16.msra.mxu0 0
        %3106 = vmatprep.subr.bf16.mxu0 0
        %3107 = vmatpush1.bf16.msra.mxu0 0
        %3108 = vmatprep.subr.bf16.mxu0 0
        %3109 = vmatpush1.bf16.msra.mxu0 0
        %3110 = vmatprep.subr.bf16.mxu0 0
        %3111 = vmatpush1.bf16.msra.mxu0 0
        %3112 = vmatprep.subr.bf16.mxu0 0
        %3113 = vmatpush1.bf16.msra.mxu0 0
        %3114 = vmatprep.subr.bf16.mxu0 0
        %3115 = vmatpush1.bf16.msra.mxu0 0
        %3116 = vmatprep.subr.bf16.mxu0 0
        %3117 = vmatpush1.bf16.msra.mxu0 0
        %3118 = vmatprep.subr.bf16.mxu0 0
        %3119 = vmatpush1.bf16.msra.mxu0 0
        %3120 = vmatprep.subr.bf16.mxu0 0
        %3121 = vmatpush1.bf16.msra.mxu0 0
        %3122 = vmatprep.subr.bf16.mxu0 0
        %3123 = vmatpush1.bf16.msra.mxu0 0
        %3124 = vmatprep.mubr.bf16.mxu0 0
        %3125 = vmatmul.mubr.bf16.gmra.mrb[0].mxu0 %v2318
        %v3126 = vpop.f32.mrb[0].mxu0
        %v3127 = vadd.f32 0.0, %v3126
        %v3128 = vpop.f32.mrb[0].mxu0
        %v3129 = vpop.f32.mrb[0].mxu0
        %v3130 = vadd.f32 0.0, %v3129
        %v3131 = vpop.f32.mrb[0].mxu0
        %3132 = vmatprep.mubr.bf16.mxu0 0
        %3133 = vmatmul.mubr.bf16.gmra.mrb[0].mxu0 %v2321
        %v3134 = vpop.f32.mrb[0].mxu0
        %v3135 = vadd.f32 0.0, %v3134
        %v3136 = vpop.f32.mrb[0].mxu0
        %v3137 = vpop.f32.mrb[0].mxu0
        %v3138 = vpop.f32.mrb[0].mxu0
        %3139 = vdwg.mxu0
        %v3140 = vpack.c.bf16 %v3130, %v3127
        %v3141 = vpack.c.bf16 %v3135, %v3135
        %v3145 = vunpack.c.l.b16 %v3056
        %v3146 = vunpack.c.l.b16 %v3057
        %v3147 = vunpack.c.l.b16 %v3058
        %v3148 = vpack.c.b16 %v3146, %v3145
        %v3149 = vpack.c.b16 %v3147, %v3147
        %v3151 = vsel %vm567, %v3148, 0
        %v3154 = vsel %vm567, %v3149, 0
        %v3157 = vsel %vm574, %v3141, 0
        %3159 = vmatprep.subr.bf16.mxu0 0
        %3160 = vmatpush1.bf16.msra.mxu0 %v3140
        %3161 = vmatprep.subr.bf16.mxu0 0
        %3162 = vmatpush1.bf16.msra.mxu0 %v3157
        %3163 = vmatprep.subr.bf16.mxu0 0
        %3164 = vmatpush1.bf16.msra.mxu0 0
        %3165 = vmatprep.subr.bf16.mxu0 0
        %3166 = vmatpush1.bf16.msra.mxu0 0
        %3167 = vmatprep.subr.bf16.mxu0 0
        %3168 = vmatpush1.bf16.msra.mxu0 0
        %3169 = vmatprep.subr.bf16.mxu0 0
        %3170 = vmatpush1.bf16.msra.mxu0 0
        %3171 = vmatprep.subr.bf16.mxu0 0
        %3172 = vmatpush1.bf16.msra.mxu0 0
        %3173 = vmatprep.subr.bf16.mxu0 0
        %3174 = vmatpush1.bf16.msra.mxu0 0
        %3175 = vmatprep.subr.bf16.mxu0 0
        %3176 = vmatpush1.bf16.msra.mxu0 0
        %3177 = vmatprep.subr.bf16.mxu0 0
        %3178 = vmatpush1.bf16.msra.mxu0 0
        %3179 = vmatprep.subr.bf16.mxu0 0
        %3180 = vmatpush1.bf16.msra.mxu0 0
        %3181 = vmatprep.subr.bf16.mxu0 0
        %3182 = vmatpush1.bf16.msra.mxu0 0
        %3183 = vmatprep.subr.bf16.mxu0 0
        %3184 = vmatpush1.bf16.msra.mxu0 0
        %3185 = vmatprep.subr.bf16.mxu0 0
        %3186 = vmatpush1.bf16.msra.mxu0 0
        %3187 = vmatprep.subr.bf16.mxu0 0
        %3188 = vmatpush1.bf16.msra.mxu0 0
        %3189 = vmatprep.subr.bf16.mxu0 0
        %3190 = vmatpush1.bf16.msra.mxu0 0
        %3191 = vmatprep.mubr.bf16.mxu0 0
        %3192 = vmatmul.mubr.bf16.gmra.mrb[0].mxu0 %v3151
        %v3193 = vpop.f32.mrb[0].mxu0
        %v3194 = vadd.f32 0.0, %v3193
        %v3195 = vpop.f32.mrb[0].mxu0
        %v3196 = vpop.f32.mrb[0].mxu0
        %v3197 = vadd.f32 0.0, %v3196
        %v3198 = vpop.f32.mrb[0].mxu0
        %3199 = vmatprep.mubr.bf16.mxu0 0
        %3200 = vmatmul.mubr.bf16.gmra.mrb[0].mxu0 %v3154
        %v3201 = vpop.f32.mrb[0].mxu0
        %v3202 = vadd.f32 0.0, %v3201
        %v3203 = vpop.f32.mrb[0].mxu0
        %v3204 = vpop.f32.mrb[0].mxu0
        %v3205 = vpop.f32.mrb[0].mxu0
        %3206 = vdwg.mxu0
        %v3207 = vadd.f32 %v3052, %v3194
        %v3208 = vadd.f32 %v3053, %v3197
        %v3209 = vadd.f32 %v3054, %v3202
        %s3210 = scalar_lea.vmem %s1, 180
        %v3211 = vld [vmem:[%s3210] sm:$0xf]
        %v3212 = vld [vmem:[%s3210 + $0x4] sm:$0xf]
        %v3213 = vld [vmem:[%s3210 + $0x8] sm:$0xf]
        %s3214 = scalar_lea.vmem %s6, 192
        %v3215 = vld [vmem:[%s3214] sm:$0xf]
        %v3216 = vld [vmem:[%s3214 + $0x4] sm:$0xf]
        %v3217 = vld [vmem:[%s3214 + $0x8] sm:$0xf]
        %v3218 = vld [vmem:[%s3214 + $0xc] sm:$0xf]
        %v3219 = vld [vmem:[%s3214 + $0x10] sm:$0xf]
        %v3220 = vld [vmem:[%s3214 + $0x14] sm:$0xf]
        %v3221 = vld [vmem:[%s3214 + $0x18] sm:$0xf]
        %v3222 = vld [vmem:[%s3214 + $0x1c] sm:$0xf]
        %v3231 = vunpack.c.l.b16 %v3215
        %v3232 = vunpack.c.l.b16 %v3216
        %v3233 = vunpack.c.l.b16 %v3217
        %v3234 = vunpack.c.l.b16 %v3218
        %v3235 = vunpack.c.l.b16 %v3219
        %v3236 = vunpack.c.l.b16 %v3220
        %v3237 = vunpack.c.l.b16 %v3221
        %v3238 = vunpack.c.l.b16 %v3222
        %v3239 = vpack.c.b16 %v3232, %v3231
        %v3240 = vpack.c.b16 %v3234, %v3233
        %v3241 = vpack.c.b16 %v3236, %v3235
        %v3242 = vpack.c.b16 %v3238, %v3237
        %3247 = vmatprep.subr.bf16.mxu0 0
        %3248 = vmatpush1.bf16.msra.mxu0 %v3239
        %3249 = vmatprep.subr.bf16.mxu0 0
        %3250 = vmatpush1.bf16.msra.mxu0 %v3240
        %3251 = vmatprep.subr.bf16.mxu0 0
        %3252 = vmatpush1.bf16.msra.mxu0 %v3241
        %3253 = vmatprep.subr.bf16.mxu0 0
        %3254 = vmatpush1.bf16.msra.mxu0 %v3242
        %3255 = vmatprep.subr.bf16.mxu0 0
        %3256 = vmatpush1.bf16.msra.mxu0 0
        %3257 = vmatprep.subr.bf16.mxu0 0
        %3258 = vmatpush1.bf16.msra.mxu0 0
        %3259 = vmatprep.subr.bf16.mxu0 0
        %3260 = vmatpush1.bf16.msra.mxu0 0
        %3261 = vmatprep.subr.bf16.mxu0 0
        %3262 = vmatpush1.bf16.msra.mxu0 0
        %3263 = vmatprep.subr.bf16.mxu0 0
        %3264 = vmatpush1.bf16.msra.mxu0 0
        %3265 = vmatprep.subr.bf16.mxu0 0
        %3266 = vmatpush1.bf16.msra.mxu0 0
        %3267 = vmatprep.subr.bf16.mxu0 0
        %3268 = vmatpush1.bf16.msra.mxu0 0
        %3269 = vmatprep.subr.bf16.mxu0 0
        %3270 = vmatpush1.bf16.msra.mxu0 0
        %3271 = vmatprep.subr.bf16.mxu0 0
        %3272 = vmatpush1.bf16.msra.mxu0 0
        %3273 = vmatprep.subr.bf16.mxu0 0
        %3274 = vmatpush1.bf16.msra.mxu0 0
        %3275 = vmatprep.subr.bf16.mxu0 0
        %3276 = vmatpush1.bf16.msra.mxu0 0
        %3277 = vmatprep.subr.bf16.mxu0 0
        %3278 = vmatpush1.bf16.msra.mxu0 0
        %3279 = vmatprep.mubr.bf16.mxu0 0
        %3280 = vmatmul.mubr.bf16.gmra.mrb[0].mxu0 %v2318
        %v3281 = vpop.f32.mrb[0].mxu0
        %v3282 = vadd.f32 0.0, %v3281
        %v3283 = vpop.f32.mrb[0].mxu0
        %v3284 = vpop.f32.mrb[0].mxu0
        %v3285 = vadd.f32 0.0, %v3284
        %v3286 = vpop.f32.mrb[0].mxu0
        %3287 = vmatprep.mubr.bf16.mxu0 0
        %3288 = vmatmul.mubr.bf16.gmra.mrb[0].mxu0 %v2321
        %v3289 = vpop.f32.mrb[0].mxu0
        %v3290 = vadd.f32 0.0, %v3289
        %v3291 = vpop.f32.mrb[0].mxu0
        %v3292 = vpop.f32.mrb[0].mxu0
        %v3293 = vpop.f32.mrb[0].mxu0
        %3294 = vdwg.mxu0
        %v3295 = vpack.c.bf16 %v3285, %v3282
        %v3296 = vpack.c.bf16 %v3290, %v3290
        %v3300 = vunpack.c.l.b16 %v3211
        %v3301 = vunpack.c.l.b16 %v3212
        %v3302 = vunpack.c.l.b16 %v3213
        %v3303 = vpack.c.b16 %v3301, %v3300
        %v3304 = vpack.c.b16 %v3302, %v3302
        %v3306 = vsel %vm567, %v3303, 0
        %v3309 = vsel %vm567, %v3304, 0
        %v3312 = vsel %vm574, %v3296, 0
        %3314 = vmatprep.subr.bf16.mxu0 0
        %3315 = vmatpush1.bf16.msra.mxu0 %v3295
        %3316 = vmatprep.subr.bf16.mxu0 0
        %3317 = vmatpush1.bf16.msra.mxu0 %v3312
        %3318 = vmatprep.subr.bf16.mxu0 0
        %3319 = vmatpush1.bf16.msra.mxu0 0
        %3320 = vmatprep.subr.bf16.mxu0 0
        %3321 = vmatpush1.bf16.msra.mxu0 0
        %3322 = vmatprep.subr.bf16.mxu0 0
        %3323 = vmatpush1.bf16.msra.mxu0 0
        %3324 = vmatprep.subr.bf16.mxu0 0
        %3325 = vmatpush1.bf16.msra.mxu0 0
        %3326 = vmatprep.subr.bf16.mxu0 0
        %3327 = vmatpush1.bf16.msra.mxu0 0
        %3328 = vmatprep.subr.bf16.mxu0 0
        %3329 = vmatpush1.bf16.msra.mxu0 0
        %3330 = vmatprep.subr.bf16.mxu0 0
        %3331 = vmatpush1.bf16.msra.mxu0 0
        %3332 = vmatprep.subr.bf16.mxu0 0
        %3333 = vmatpush1.bf16.msra.mxu0 0
        %3334 = vmatprep.subr.bf16.mxu0 0
        %3335 = vmatpush1.bf16.msra.mxu0 0
        %3336 = vmatprep.subr.bf16.mxu0 0
        %3337 = vmatpush1.bf16.msra.mxu0 0
        %3338 = vmatprep.subr.bf16.mxu0 0
        %3339 = vmatpush1.bf16.msra.mxu0 0
        %3340 = vmatprep.subr.bf16.mxu0 0
        %3341 = vmatpush1.bf16.msra.mxu0 0
        %3342 = vmatprep.subr.bf16.mxu0 0
        %3343 = vmatpush1.bf16.msra.mxu0 0
        %3344 = vmatprep.subr.bf16.mxu0 0
        %3345 = vmatpush1.bf16.msra.mxu0 0
        %3346 = vmatprep.mubr.bf16.mxu0 0
        %3347 = vmatmul.mubr.bf16.gmra.mrb[0].mxu0 %v3306
        %v3348 = vpop.f32.mrb[0].mxu0
        %v3349 = vadd.f32 0.0, %v3348
        %v3350 = vpop.f32.mrb[0].mxu0
        %v3351 = vpop.f32.mrb[0].mxu0
        %v3352 = vadd.f32 0.0, %v3351
        %v3353 = vpop.f32.mrb[0].mxu0
        %3354 = vmatprep.mubr.bf16.mxu0 0
        %3355 = vmatmul.mubr.bf16.gmra.mrb[0].mxu0 %v3309
        %v3356 = vpop.f32.mrb[0].mxu0
        %v3357 = vadd.f32 0.0, %v3356
        %v3358 = vpop.f32.mrb[0].mxu0
        %v3359 = vpop.f32.mrb[0].mxu0
        %v3360 = vpop.f32.mrb[0].mxu0
        %3361 = vdwg.mxu0
        %v3362 = vadd.f32 %v3207, %v3349
        %v3363 = vadd.f32 %v3208, %v3352
        %v3364 = vadd.f32 %v3209, %v3357
        %s3365 = scalar_lea.vmem %s1, 192
        %v3366 = vld [vmem:[%s3365] sm:$0xf]
        %v3367 = vld [vmem:[%s3365 + $0x4] sm:$0xf]
        %v3368 = vld [vmem:[%s3365 + $0x8] sm:$0xf]
        %s3369 = scalar_lea.vmem %s6, 224
        %v3370 = vld [vmem:[%s3369] sm:$0xf]
        %v3371 = vld [vmem:[%s3369 + $0x4] sm:$0xf]
        %v3372 = vld [vmem:[%s3369 + $0x8] sm:$0xf]
        %v3373 = vld [vmem:[%s3369 + $0xc] sm:$0xf]
        %v3374 = vld [vmem:[%s3369 + $0x10] sm:$0xf]
        %v3375 = vld [vmem:[%s3369 + $0x14] sm:$0xf]
        %v3376 = vld [vmem:[%s3369 + $0x18] sm:$0xf]
        %v3377 = vld [vmem:[%s3369 + $0x1c] sm:$0xf]
        %v3386 = vunpack.c.l.b16 %v3370
        %v3387 = vunpack.c.l.b16 %v3371
        %v3388 = vunpack.c.l.b16 %v3372
        %v3389 = vunpack.c.l.b16 %v3373
        %v3390 = vunpack.c.l.b16 %v3374
        %v3391 = vunpack.c.l.b16 %v3375
        %v3392 = vunpack.c.l.b16 %v3376
        %v3393 = vunpack.c.l.b16 %v3377
        %v3394 = vpack.c.b16 %v3387, %v3386
        %v3395 = vpack.c.b16 %v3389, %v3388
        %v3396 = vpack.c.b16 %v3391, %v3390
        %v3397 = vpack.c.b16 %v3393, %v3392
        %3402 = vmatprep.subr.bf16.mxu0 0
        %3403 = vmatpush1.bf16.msra.mxu0 %v3394
        %3404 = vmatprep.subr.bf16.mxu0 0
        %3405 = vmatpush1.bf16.msra.mxu0 %v3395
        %3406 = vmatprep.subr.bf16.mxu0 0
        %3407 = vmatpush1.bf16.msra.mxu0 %v3396
        %3408 = vmatprep.subr.bf16.mxu0 0
        %3409 = vmatpush1.bf16.msra.mxu0 %v3397
        %3410 = vmatprep.subr.bf16.mxu0 0
        %3411 = vmatpush1.bf16.msra.mxu0 0
        %3412 = vmatprep.subr.bf16.mxu0 0
        %3413 = vmatpush1.bf16.msra.mxu0 0
        %3414 = vmatprep.subr.bf16.mxu0 0
        %3415 = vmatpush1.bf16.msra.mxu0 0
        %3416 = vmatprep.subr.bf16.mxu0 0
        %3417 = vmatpush1.bf16.msra.mxu0 0
        %3418 = vmatprep.subr.bf16.mxu0 0
        %3419 = vmatpush1.bf16.msra.mxu0 0
        %3420 = vmatprep.subr.bf16.mxu0 0
        %3421 = vmatpush1.bf16.msra.mxu0 0
        %3422 = vmatprep.subr.bf16.mxu0 0
        %3423 = vmatpush1.bf16.msra.mxu0 0
        %3424 = vmatprep.subr.bf16.mxu0 0
        %3425 = vmatpush1.bf16.msra.mxu0 0
        %3426 = vmatprep.subr.bf16.mxu0 0
        %3427 = vmatpush1.bf16.msra.mxu0 0
        %3428 = vmatprep.subr.bf16.mxu0 0
        %3429 = vmatpush1.bf16.msra.mxu0 0
        %3430 = vmatprep.subr.bf16.mxu0 0
        %3431 = vmatpush1.bf16.msra.mxu0 0
        %3432 = vmatprep.subr.bf16.mxu0 0
        %3433 = vmatpush1.bf16.msra.mxu0 0
        %3434 = vmatprep.mubr.bf16.mxu0 0
        %3435 = vmatmul.mubr.bf16.gmra.mrb[0].mxu0 %v2318
        %v3436 = vpop.f32.mrb[0].mxu0
        %v3437 = vadd.f32 0.0, %v3436
        %v3438 = vpop.f32.mrb[0].mxu0
        %v3439 = vpop.f32.mrb[0].mxu0
        %v3440 = vadd.f32 0.0, %v3439
        %v3441 = vpop.f32.mrb[0].mxu0
        %3442 = vmatprep.mubr.bf16.mxu0 0
        %3443 = vmatmul.mubr.bf16.gmra.mrb[0].mxu0 %v2321
        %v3444 = vpop.f32.mrb[0].mxu0
        %v3445 = vadd.f32 0.0, %v3444
        %v3446 = vpop.f32.mrb[0].mxu0
        %v3447 = vpop.f32.mrb[0].mxu0
        %v3448 = vpop.f32.mrb[0].mxu0
        %3449 = vdwg.mxu0
        %v3450 = vpack.c.bf16 %v3440, %v3437
        %v3451 = vpack.c.bf16 %v3445, %v3445
        %v3455 = vunpack.c.l.b16 %v3366
        %v3456 = vunpack.c.l.b16 %v3367
        %v3457 = vunpack.c.l.b16 %v3368
        %v3458 = vpack.c.b16 %v3456, %v3455
        %v3459 = vpack.c.b16 %v3457, %v3457
        %v3461 = vsel %vm567, %v3458, 0
        %v3464 = vsel %vm567, %v3459, 0
        %v3467 = vsel %vm574, %v3451, 0
        %3469 = vmatprep.subr.bf16.mxu0 0
        %3470 = vmatpush1.bf16.msra.mxu0 %v3450
        %3471 = vmatprep.subr.bf16.mxu0 0
        %3472 = vmatpush1.bf16.msra.mxu0 %v3467
        %3473 = vmatprep.subr.bf16.mxu0 0
        %3474 = vmatpush1.bf16.msra.mxu0 0
        %3475 = vmatprep.subr.bf16.mxu0 0
        %3476 = vmatpush1.bf16.msra.mxu0 0
        %3477 = vmatprep.subr.bf16.mxu0 0
        %3478 = vmatpush1.bf16.msra.mxu0 0
        %3479 = vmatprep.subr.bf16.mxu0 0
        %3480 = vmatpush1.bf16.msra.mxu0 0
        %3481 = vmatprep.subr.bf16.mxu0 0
        %3482 = vmatpush1.bf16.msra.mxu0 0
        %3483 = vmatprep.subr.bf16.mxu0 0
        %3484 = vmatpush1.bf16.msra.mxu0 0
        %3485 = vmatprep.subr.bf16.mxu0 0
        %3486 = vmatpush1.bf16.msra.mxu0 0
        %3487 = vmatprep.subr.bf16.mxu0 0
        %3488 = vmatpush1.bf16.msra.mxu0 0
        %3489 = vmatprep.subr.bf16.mxu0 0
        %3490 = vmatpush1.bf16.msra.mxu0 0
        %3491 = vmatprep.subr.bf16.mxu0 0
        %3492 = vmatpush1.bf16.msra.mxu0 0
        %3493 = vmatprep.subr.bf16.mxu0 0
        %3494 = vmatpush1.bf16.msra.mxu0 0
        %3495 = vmatprep.subr.bf16.mxu0 0
        %3496 = vmatpush1.bf16.msra.mxu0 0
        %3497 = vmatprep.subr.bf16.mxu0 0
        %3498 = vmatpush1.bf16.msra.mxu0 0
        %3499 = vmatprep.subr.bf16.mxu0 0
        %3500 = vmatpush1.bf16.msra.mxu0 0
        %3501 = vmatprep.mubr.bf16.mxu0 0
        %3502 = vmatmul.mubr.bf16.gmra.mrb[0].mxu0 %v3461
        %v3503 = vpop.f32.mrb[0].mxu0
        %v3504 = vadd.f32 0.0, %v3503
        %v3505 = vpop.f32.mrb[0].mxu0
        %v3506 = vpop.f32.mrb[0].mxu0
        %v3507 = vadd.f32 0.0, %v3506
        %v3508 = vpop.f32.mrb[0].mxu0
        %3509 = vmatprep.mubr.bf16.mxu0 0
        %3510 = vmatmul.mubr.bf16.gmra.mrb[0].mxu0 %v3464
        %v3511 = vpop.f32.mrb[0].mxu0
        %v3512 = vadd.f32 0.0, %v3511
        %v3513 = vpop.f32.mrb[0].mxu0
        %v3514 = vpop.f32.mrb[0].mxu0
        %v3515 = vpop.f32.mrb[0].mxu0
        %3516 = vdwg.mxu0
        %v3517 = vadd.f32 %v3362, %v3504
        %v3518 = vadd.f32 %v3363, %v3507
        %v3519 = vadd.f32 %v3364, %v3512
        %s3520 = scalar_lea.vmem %s1, 204
        %v3521 = vld [vmem:[%s3520] sm:$0xf]
        %v3522 = vld [vmem:[%s3520 + $0x4] sm:$0xf]
        %v3523 = vld [vmem:[%s3520 + $0x8] sm:$0xf]
        %s3524 = scalar_lea.vmem %s6, 256
        %v3525 = vld [vmem:[%s3524] sm:$0xf]
        %v3526 = vld [vmem:[%s3524 + $0x4] sm:$0xf]
        %v3527 = vld [vmem:[%s3524 + $0x8] sm:$0xf]
        %v3528 = vld [vmem:[%s3524 + $0xc] sm:$0xf]
        %v3529 = vld [vmem:[%s3524 + $0x10] sm:$0xf]
        %v3530 = vld [vmem:[%s3524 + $0x14] sm:$0xf]
        %v3531 = vld [vmem:[%s3524 + $0x18] sm:$0xf]
        %v3532 = vld [vmem:[%s3524 + $0x1c] sm:$0xf]
        %v3541 = vunpack.c.l.b16 %v3525
        %v3542 = vunpack.c.l.b16 %v3526
        %v3543 = vunpack.c.l.b16 %v3527
        %v3544 = vunpack.c.l.b16 %v3528
        %v3545 = vunpack.c.l.b16 %v3529
        %v3546 = vunpack.c.l.b16 %v3530
        %v3547 = vunpack.c.l.b16 %v3531
        %v3548 = vunpack.c.l.b16 %v3532
        %v3549 = vpack.c.b16 %v3542, %v3541
        %v3550 = vpack.c.b16 %v3544, %v3543
        %v3551 = vpack.c.b16 %v3546, %v3545
        %v3552 = vpack.c.b16 %v3548, %v3547
        %3557 = vmatprep.subr.bf16.mxu0 0
        %3558 = vmatpush1.bf16.msra.mxu0 %v3549
        %3559 = vmatprep.subr.bf16.mxu0 0
        %3560 = vmatpush1.bf16.msra.mxu0 %v3550
        %3561 = vmatprep.subr.bf16.mxu0 0
        %3562 = vmatpush1.bf16.msra.mxu0 %v3551
        %3563 = vmatprep.subr.bf16.mxu0 0
        %3564 = vmatpush1.bf16.msra.mxu0 %v3552
        %3565 = vmatprep.subr.bf16.mxu0 0
        %3566 = vmatpush1.bf16.msra.mxu0 0
        %3567 = vmatprep.subr.bf16.mxu0 0
        %3568 = vmatpush1.bf16.msra.mxu0 0
        %3569 = vmatprep.subr.bf16.mxu0 0
        %3570 = vmatpush1.bf16.msra.mxu0 0
        %3571 = vmatprep.subr.bf16.mxu0 0
        %3572 = vmatpush1.bf16.msra.mxu0 0
        %3573 = vmatprep.subr.bf16.mxu0 0
        %3574 = vmatpush1.bf16.msra.mxu0 0
        %3575 = vmatprep.subr.bf16.mxu0 0
        %3576 = vmatpush1.bf16.msra.mxu0 0
        %3577 = vmatprep.subr.bf16.mxu0 0
        %3578 = vmatpush1.bf16.msra.mxu0 0
        %3579 = vmatprep.subr.bf16.mxu0 0
        %3580 = vmatpush1.bf16.msra.mxu0 0
        %3581 = vmatprep.subr.bf16.mxu0 0
        %3582 = vmatpush1.bf16.msra.mxu0 0
        %3583 = vmatprep.subr.bf16.mxu0 0
        %3584 = vmatpush1.bf16.msra.mxu0 0
        %3585 = vmatprep.subr.bf16.mxu0 0
        %3586 = vmatpush1.bf16.msra.mxu0 0
        %3587 = vmatprep.subr.bf16.mxu0 0
        %3588 = vmatpush1.bf16.msra.mxu0 0
        %3589 = vmatprep.mubr.bf16.mxu0 0
        %3590 = vmatmul.mubr.bf16.gmra.mrb[0].mxu0 %v2318
        %v3591 = vpop.f32.mrb[0].mxu0
        %v3592 = vadd.f32 0.0, %v3591
        %v3593 = vpop.f32.mrb[0].mxu0
        %v3594 = vpop.f32.mrb[0].mxu0
        %v3595 = vadd.f32 0.0, %v3594
        %v3596 = vpop.f32.mrb[0].mxu0
        %3597 = vmatprep.mubr.bf16.mxu0 0
        %3598 = vmatmul.mubr.bf16.gmra.mrb[0].mxu0 %v2321
        %v3599 = vpop.f32.mrb[0].mxu0
        %v3600 = vadd.f32 0.0, %v3599
        %v3601 = vpop.f32.mrb[0].mxu0
        %v3602 = vpop.f32.mrb[0].mxu0
        %v3603 = vpop.f32.mrb[0].mxu0
        %3604 = vdwg.mxu0
        %v3605 = vpack.c.bf16 %v3595, %v3592
        %v3606 = vpack.c.bf16 %v3600, %v3600
        %v3610 = vunpack.c.l.b16 %v3521
        %v3611 = vunpack.c.l.b16 %v3522
        %v3612 = vunpack.c.l.b16 %v3523
        %v3613 = vpack.c.b16 %v3611, %v3610
        %v3614 = vpack.c.b16 %v3612, %v3612
        %v3616 = vsel %vm567, %v3613, 0
        %v3619 = vsel %vm567, %v3614, 0
        %v3622 = vsel %vm574, %v3606, 0
        %3624 = vmatprep.subr.bf16.mxu0 0
        %3625 = vmatpush1.bf16.msra.mxu0 %v3605
        %3626 = vmatprep.subr.bf16.mxu0 0
        %3627 = vmatpush1.bf16.msra.mxu0 %v3622
        %3628 = vmatprep.subr.bf16.mxu0 0
        %3629 = vmatpush1.bf16.msra.mxu0 0
        %3630 = vmatprep.subr.bf16.mxu0 0
        %3631 = vmatpush1.bf16.msra.mxu0 0
        %3632 = vmatprep.subr.bf16.mxu0 0
        %3633 = vmatpush1.bf16.msra.mxu0 0
        %3634 = vmatprep.subr.bf16.mxu0 0
        %3635 = vmatpush1.bf16.msra.mxu0 0
        %3636 = vmatprep.subr.bf16.mxu0 0
        %3637 = vmatpush1.bf16.msra.mxu0 0
        %3638 = vmatprep.subr.bf16.mxu0 0
        %3639 = vmatpush1.bf16.msra.mxu0 0
        %3640 = vmatprep.subr.bf16.mxu0 0
        %3641 = vmatpush1.bf16.msra.mxu0 0
        %3642 = vmatprep.subr.bf16.mxu0 0
        %3643 = vmatpush1.bf16.msra.mxu0 0
        %3644 = vmatprep.subr.bf16.mxu0 0
        %3645 = vmatpush1.bf16.msra.mxu0 0
        %3646 = vmatprep.subr.bf16.mxu0 0
        %3647 = vmatpush1.bf16.msra.mxu0 0
        %3648 = vmatprep.subr.bf16.mxu0 0
        %3649 = vmatpush1.bf16.msra.mxu0 0
        %3650 = vmatprep.subr.bf16.mxu0 0
        %3651 = vmatpush1.bf16.msra.mxu0 0
        %3652 = vmatprep.subr.bf16.mxu0 0
        %3653 = vmatpush1.bf16.msra.mxu0 0
        %3654 = vmatprep.subr.bf16.mxu0 0
        %3655 = vmatpush1.bf16.msra.mxu0 0
        %3656 = vmatprep.mubr.bf16.mxu0 0
        %3657 = vmatmul.mubr.bf16.gmra.mrb[0].mxu0 %v3616
        %v3658 = vpop.f32.mrb[0].mxu0
        %v3659 = vadd.f32 0.0, %v3658
        %v3660 = vpop.f32.mrb[0].mxu0
        %v3661 = vpop.f32.mrb[0].mxu0
        %v3662 = vadd.f32 0.0, %v3661
        %v3663 = vpop.f32.mrb[0].mxu0
        %3664 = vmatprep.mubr.bf16.mxu0 0
        %3665 = vmatmul.mubr.bf16.gmra.mrb[0].mxu0 %v3619
        %v3666 = vpop.f32.mrb[0].mxu0
        %v3667 = vadd.f32 0.0, %v3666
        %v3668 = vpop.f32.mrb[0].mxu0
        %v3669 = vpop.f32.mrb[0].mxu0
        %v3670 = vpop.f32.mrb[0].mxu0
        %3671 = vdwg.mxu0
        %v3672 = vadd.f32 %v3517, %v3659
        %v3673 = vadd.f32 %v3518, %v3662
        %v3674 = vadd.f32 %v3519, %v3667
        %s3675 = scalar_lea.vmem %s2, 24
        %v3676 = vld [vmem:[%s3675] sm:$0xff]
        %v3677 = vld [vmem:[%s3675 + $0x8] sm:$0xff]
        %v3678 = vld [vmem:[%s3675 + $0x10] sm:$0xff]
        %3680 = vset.pattern.permute.xlu0 0
        %3681 = vperm.xlu0 %3680, %v3676
        %v3682 = vpop.permute.xlu0 %3681
        %3685 = vset.pattern.permute.xlu0 0
        %3686 = vperm.xlu0 %3685, %v3677
        %v3687 = vpop.permute.xlu0 %3686
        %3690 = vset.pattern.permute.xlu0 0
        %3691 = vperm.xlu0 %3690, %v3678
        %v3692 = vpop.permute.xlu0 %3691
        %v3694 = vadd.f32 %v3672, %v3682
        %v3695 = vadd.f32 %v3673, %v3687
        %v3696 = vadd.f32 %v3674, %v3692
        %v3697 = vmul.f32 %v3694, 0.2
        %v3698 = vmul.f32 %v3695, 0.2
        %v3699 = vmul.f32 %v3696, 0.2
        %v3700 = vmax.f32 %v3694, %v3697
        %v3701 = vmax.f32 %v3695, %v3698
        %v3702 = vmax.f32 %v3696, %v3699
        %v3703 = vpack.c.bf16 %v3701, %v3700
        %v3704 = vpack.c.bf16 %v3702, %v3702
        %v3705 = vld [vmem:[%s9] sm:$0xf]
        %v3706 = vld [vmem:[%s9 + $0x4] sm:$0xf]
        %v3707 = vld [vmem:[%s9 + $0x8] sm:$0xf]
        %v3708 = vld [vmem:[%s9 + $0xc] sm:$0xf]
        %v3709 = vld [vmem:[%s9 + $0x10] sm:$0xf]
        %v3710 = vld [vmem:[%s9 + $0x14] sm:$0xf]
        %v3711 = vld [vmem:[%s9 + $0x18] sm:$0xf]
        %v3712 = vld [vmem:[%s9 + $0x1c] sm:$0xf]
        %v3721 = vunpack.c.l.b16 %v3705
        %v3722 = vunpack.c.l.b16 %v3706
        %v3723 = vunpack.c.l.b16 %v3707
        %v3724 = vunpack.c.l.b16 %v3708
        %v3725 = vunpack.c.l.b16 %v3709
        %v3726 = vunpack.c.l.b16 %v3710
        %v3727 = vunpack.c.l.b16 %v3711
        %v3728 = vunpack.c.l.b16 %v3712
        %v3729 = vpack.c.b16 %v3722, %v3721
        %v3730 = vpack.c.b16 %v3724, %v3723
        %v3731 = vpack.c.b16 %v3726, %v3725
        %v3732 = vpack.c.b16 %v3728, %v3727
        %v3738 = vsel %vm2316, %v3703, 0
        %v3741 = vsel %vm2316, %v3704, 0
        %3743 = vmatprep.subr.bf16.mxu0 0
        %3744 = vmatpush1.bf16.msra.mxu0 %v3729
        %3745 = vmatprep.subr.bf16.mxu0 0
        %3746 = vmatpush1.bf16.msra.mxu0 %v3730
        %3747 = vmatprep.subr.bf16.mxu0 0
        %3748 = vmatpush1.bf16.msra.mxu0 %v3731
        %3749 = vmatprep.subr.bf16.mxu0 0
        %3750 = vmatpush1.bf16.msra.mxu0 %v3732
        %3751 = vmatprep.subr.bf16.mxu0 0
        %3752 = vmatpush1.bf16.msra.mxu0 0
        %3753 = vmatprep.subr.bf16.mxu0 0
        %3754 = vmatpush1.bf16.msra.mxu0 0
        %3755 = vmatprep.subr.bf16.mxu0 0
        %3756 = vmatpush1.bf16.msra.mxu0 0
        %3757 = vmatprep.subr.bf16.mxu0 0
        %3758 = vmatpush1.bf16.msra.mxu0 0
        %3759 = vmatprep.subr.bf16.mxu0 0
        %3760 = vmatpush1.bf16.msra.mxu0 0
        %3761 = vmatprep.subr.bf16.mxu0 0
        %3762 = vmatpush1.bf16.msra.mxu0 0
        %3763 = vmatprep.subr.bf16.mxu0 0
        %3764 = vmatpush1.bf16.msra.mxu0 0
        %3765 = vmatprep.subr.bf16.mxu0 0
        %3766 = vmatpush1.bf16.msra.mxu0 0
        %3767 = vmatprep.subr.bf16.mxu0 0
        %3768 = vmatpush1.bf16.msra.mxu0 0
        %3769 = vmatprep.subr.bf16.mxu0 0
        %3770 = vmatpush1.bf16.msra.mxu0 0
        %3771 = vmatprep.subr.bf16.mxu0 0
        %3772 = vmatpush1.bf16.msra.mxu0 0
        %3773 = vmatprep.subr.bf16.mxu0 0
        %3774 = vmatpush1.bf16.msra.mxu0 0
        %3775 = vmatprep.mubr.bf16.mxu0 0
        %3776 = vmatmul.mubr.bf16.gmra.mrb[0].mxu0 %v3738
        %v3777 = vpop.f32.mrb[0].mxu0
        %v3778 = vadd.f32 0.0, %v3777
        %v3779 = vpop.f32.mrb[0].mxu0
        %v3780 = vpop.f32.mrb[0].mxu0
        %v3781 = vadd.f32 0.0, %v3780
        %v3782 = vpop.f32.mrb[0].mxu0
        %3783 = vmatprep.mubr.bf16.mxu0 0
        %3784 = vmatmul.mubr.bf16.gmra.mrb[0].mxu0 %v3741
        %v3785 = vpop.f32.mrb[0].mxu0
        %v3786 = vadd.f32 0.0, %v3785
        %v3787 = vpop.f32.mrb[0].mxu0
        %v3788 = vpop.f32.mrb[0].mxu0
        %v3789 = vpop.f32.mrb[0].mxu0
        %3790 = vdwg.mxu0
        %s3791 = scalar_lea.vmem %s9, 32
        %v3792 = vld [vmem:[%s3791] sm:$0xf]
        %v3793 = vld [vmem:[%s3791 + $0x4] sm:$0xf]
        %v3794 = vld [vmem:[%s3791 + $0x8] sm:$0xf]
        %v3795 = vld [vmem:[%s3791 + $0xc] sm:$0xf]
        %v3796 = vld [vmem:[%s3791 + $0x10] sm:$0xf]
        %v3797 = vld [vmem:[%s3791 + $0x14] sm:$0xf]
        %v3798 = vld [vmem:[%s3791 + $0x18] sm:$0xf]
        %v3799 = vld [vmem:[%s3791 + $0x1c] sm:$0xf]
        %v3808 = vunpack.c.l.b16 %v3792
        %v3809 = vunpack.c.l.b16 %v3793
        %v3810 = vunpack.c.l.b16 %v3794
        %v3811 = vunpack.c.l.b16 %v3795
        %v3812 = vunpack.c.l.b16 %v3796
        %v3813 = vunpack.c.l.b16 %v3797
        %v3814 = vunpack.c.l.b16 %v3798
        %v3815 = vunpack.c.l.b16 %v3799
        %v3816 = vpack.c.b16 %v3809, %v3808
        %v3817 = vpack.c.b16 %v3811, %v3810
        %v3818 = vpack.c.b16 %v3813, %v3812
        %v3819 = vpack.c.b16 %v3815, %v3814
        %3824 = vmatprep.subr.bf16.mxu0 0
        %3825 = vmatpush1.bf16.msra.mxu0 %v3816
        %3826 = vmatprep.subr.bf16.mxu0 0
        %3827 = vmatpush1.bf16.msra.mxu0 %v3817
        %3828 = vmatprep.subr.bf16.mxu0 0
        %3829 = vmatpush1.bf16.msra.mxu0 %v3818
        %3830 = vmatprep.subr.bf16.mxu0 0
        %3831 = vmatpush1.bf16.msra.mxu0 %v3819
        %3832 = vmatprep.subr.bf16.mxu0 0
        %3833 = vmatpush1.bf16.msra.mxu0 0
        %3834 = vmatprep.subr.bf16.mxu0 0
        %3835 = vmatpush1.bf16.msra.mxu0 0
        %3836 = vmatprep.subr.bf16.mxu0 0
        %3837 = vmatpush1.bf16.msra.mxu0 0
        %3838 = vmatprep.subr.bf16.mxu0 0
        %3839 = vmatpush1.bf16.msra.mxu0 0
        %3840 = vmatprep.subr.bf16.mxu0 0
        %3841 = vmatpush1.bf16.msra.mxu0 0
        %3842 = vmatprep.subr.bf16.mxu0 0
        %3843 = vmatpush1.bf16.msra.mxu0 0
        %3844 = vmatprep.subr.bf16.mxu0 0
        %3845 = vmatpush1.bf16.msra.mxu0 0
        %3846 = vmatprep.subr.bf16.mxu0 0
        %3847 = vmatpush1.bf16.msra.mxu0 0
        %3848 = vmatprep.subr.bf16.mxu0 0
        %3849 = vmatpush1.bf16.msra.mxu0 0
        %3850 = vmatprep.subr.bf16.mxu0 0
        %3851 = vmatpush1.bf16.msra.mxu0 0
        %3852 = vmatprep.subr.bf16.mxu0 0
        %3853 = vmatpush1.bf16.msra.mxu0 0
        %3854 = vmatprep.subr.bf16.mxu0 0
        %3855 = vmatpush1.bf16.msra.mxu0 0
        %3856 = vmatprep.mubr.bf16.mxu0 0
        %3857 = vmatmul.mubr.bf16.gmra.mrb[0].mxu0 %v3738
        %v3858 = vpop.f32.mrb[0].mxu0
        %v3859 = vadd.f32 0.0, %v3858
        %v3860 = vpop.f32.mrb[0].mxu0
        %v3861 = vpop.f32.mrb[0].mxu0
        %v3862 = vadd.f32 0.0, %v3861
        %v3863 = vpop.f32.mrb[0].mxu0
        %3864 = vmatprep.mubr.bf16.mxu0 0
        %3865 = vmatmul.mubr.bf16.gmra.mrb[0].mxu0 %v3741
        %v3866 = vpop.f32.mrb[0].mxu0
        %v3867 = vadd.f32 0.0, %v3866
        %v3868 = vpop.f32.mrb[0].mxu0
        %v3869 = vpop.f32.mrb[0].mxu0
        %v3870 = vpop.f32.mrb[0].mxu0
        %3871 = vdwg.mxu0
        %s3872 = scalar_lea.vmem %s9, 64
        %v3873 = vld [vmem:[%s3872] sm:$0xf]
        %v3874 = vld [vmem:[%s3872 + $0x4] sm:$0xf]
        %v3875 = vld [vmem:[%s3872 + $0x8] sm:$0xf]
        %v3876 = vld [vmem:[%s3872 + $0xc] sm:$0xf]
        %v3877 = vld [vmem:[%s3872 + $0x10] sm:$0xf]
        %v3878 = vld [vmem:[%s3872 + $0x14] sm:$0xf]
        %v3879 = vld [vmem:[%s3872 + $0x18] sm:$0xf]
        %v3880 = vld [vmem:[%s3872 + $0x1c] sm:$0xf]
        %v3889 = vunpack.c.l.b16 %v3873
        %v3890 = vunpack.c.l.b16 %v3874
        %v3891 = vunpack.c.l.b16 %v3875
        %v3892 = vunpack.c.l.b16 %v3876
        %v3893 = vunpack.c.l.b16 %v3877
        %v3894 = vunpack.c.l.b16 %v3878
        %v3895 = vunpack.c.l.b16 %v3879
        %v3896 = vunpack.c.l.b16 %v3880
        %v3897 = vpack.c.b16 %v3890, %v3889
        %v3898 = vpack.c.b16 %v3892, %v3891
        %v3899 = vpack.c.b16 %v3894, %v3893
        %v3900 = vpack.c.b16 %v3896, %v3895
        %3905 = vmatprep.subr.bf16.mxu0 0
        %3906 = vmatpush1.bf16.msra.mxu0 %v3897
        %3907 = vmatprep.subr.bf16.mxu0 0
        %3908 = vmatpush1.bf16.msra.mxu0 %v3898
        %3909 = vmatprep.subr.bf16.mxu0 0
        %3910 = vmatpush1.bf16.msra.mxu0 %v3899
        %3911 = vmatprep.subr.bf16.mxu0 0
        %3912 = vmatpush1.bf16.msra.mxu0 %v3900
        %3913 = vmatprep.subr.bf16.mxu0 0
        %3914 = vmatpush1.bf16.msra.mxu0 0
        %3915 = vmatprep.subr.bf16.mxu0 0
        %3916 = vmatpush1.bf16.msra.mxu0 0
        %3917 = vmatprep.subr.bf16.mxu0 0
        %3918 = vmatpush1.bf16.msra.mxu0 0
        %3919 = vmatprep.subr.bf16.mxu0 0
        %3920 = vmatpush1.bf16.msra.mxu0 0
        %3921 = vmatprep.subr.bf16.mxu0 0
        %3922 = vmatpush1.bf16.msra.mxu0 0
        %3923 = vmatprep.subr.bf16.mxu0 0
        %3924 = vmatpush1.bf16.msra.mxu0 0
        %3925 = vmatprep.subr.bf16.mxu0 0
        %3926 = vmatpush1.bf16.msra.mxu0 0
        %3927 = vmatprep.subr.bf16.mxu0 0
        %3928 = vmatpush1.bf16.msra.mxu0 0
        %3929 = vmatprep.subr.bf16.mxu0 0
        %3930 = vmatpush1.bf16.msra.mxu0 0
        %3931 = vmatprep.subr.bf16.mxu0 0
        %3932 = vmatpush1.bf16.msra.mxu0 0
        %3933 = vmatprep.subr.bf16.mxu0 0
        %3934 = vmatpush1.bf16.msra.mxu0 0
        %3935 = vmatprep.subr.bf16.mxu0 0
        %3936 = vmatpush1.bf16.msra.mxu0 0
        %3937 = vmatprep.mubr.bf16.mxu0 0
        %3938 = vmatmul.mubr.bf16.gmra.mrb[0].mxu0 %v3738
        %v3939 = vpop.f32.mrb[0].mxu0
        %v3940 = vadd.f32 0.0, %v3939
        %v3941 = vpop.f32.mrb[0].mxu0
        %v3942 = vpop.f32.mrb[0].mxu0
        %v3943 = vadd.f32 0.0, %v3942
        %v3944 = vpop.f32.mrb[0].mxu0
        %3945 = vmatprep.mubr.bf16.mxu0 0
        %3946 = vmatmul.mubr.bf16.gmra.mrb[0].mxu0 %v3741
        %v3947 = vpop.f32.mrb[0].mxu0
        %v3948 = vadd.f32 0.0, %v3947
        %v3949 = vpop.f32.mrb[0].mxu0
        %v3950 = vpop.f32.mrb[0].mxu0
        %v3951 = vpop.f32.mrb[0].mxu0
        %3952 = vdwg.mxu0
        %s3953 = scalar_lea.vmem %s9, 96
        %v3954 = vld [vmem:[%s3953] sm:$0xf]
        %v3955 = vld [vmem:[%s3953 + $0x4] sm:$0xf]
        %v3956 = vld [vmem:[%s3953 + $0x8] sm:$0xf]
        %v3957 = vld [vmem:[%s3953 + $0xc] sm:$0xf]
        %v3958 = vld [vmem:[%s3953 + $0x10] sm:$0xf]
        %v3959 = vld [vmem:[%s3953 + $0x14] sm:$0xf]
        %v3960 = vld [vmem:[%s3953 + $0x18] sm:$0xf]
        %v3961 = vld [vmem:[%s3953 + $0x1c] sm:$0xf]
        %v3970 = vunpack.c.l.b16 %v3954
        %v3971 = vunpack.c.l.b16 %v3955
        %v3972 = vunpack.c.l.b16 %v3956
        %v3973 = vunpack.c.l.b16 %v3957
        %v3974 = vunpack.c.l.b16 %v3958
        %v3975 = vunpack.c.l.b16 %v3959
        %v3976 = vunpack.c.l.b16 %v3960
        %v3977 = vunpack.c.l.b16 %v3961
        %v3978 = vpack.c.b16 %v3971, %v3970
        %v3979 = vpack.c.b16 %v3973, %v3972
        %v3980 = vpack.c.b16 %v3975, %v3974
        %v3981 = vpack.c.b16 %v3977, %v3976
        %3986 = vmatprep.subr.bf16.mxu0 0
        %3987 = vmatpush1.bf16.msra.mxu0 %v3978
        %3988 = vmatprep.subr.bf16.mxu0 0
        %3989 = vmatpush1.bf16.msra.mxu0 %v3979
        %3990 = vmatprep.subr.bf16.mxu0 0
        %3991 = vmatpush1.bf16.msra.mxu0 %v3980
        %3992 = vmatprep.subr.bf16.mxu0 0
        %3993 = vmatpush1.bf16.msra.mxu0 %v3981
        %3994 = vmatprep.subr.bf16.mxu0 0
        %3995 = vmatpush1.bf16.msra.mxu0 0
        %3996 = vmatprep.subr.bf16.mxu0 0
        %3997 = vmatpush1.bf16.msra.mxu0 0
        %3998 = vmatprep.subr.bf16.mxu0 0
        %3999 = vmatpush1.bf16.msra.mxu0 0
        %4000 = vmatprep.subr.bf16.mxu0 0
        %4001 = vmatpush1.bf16.msra.mxu0 0
        %4002 = vmatprep.subr.bf16.mxu0 0
        %4003 = vmatpush1.bf16.msra.mxu0 0
        %4004 = vmatprep.subr.bf16.mxu0 0
        %4005 = vmatpush1.bf16.msra.mxu0 0
        %4006 = vmatprep.subr.bf16.mxu0 0
        %4007 = vmatpush1.bf16.msra.mxu0 0
        %4008 = vmatprep.subr.bf16.mxu0 0
        %4009 = vmatpush1.bf16.msra.mxu0 0
        %4010 = vmatprep.subr.bf16.mxu0 0
        %4011 = vmatpush1.bf16.msra.mxu0 0
        %4012 = vmatprep.subr.bf16.mxu0 0
        %4013 = vmatpush1.bf16.msra.mxu0 0
        %4014 = vmatprep.subr.bf16.mxu0 0
        %4015 = vmatpush1.bf16.msra.mxu0 0
        %4016 = vmatprep.subr.bf16.mxu0 0
        %4017 = vmatpush1.bf16.msra.mxu0 0
        %4018 = vmatprep.mubr.bf16.mxu0 0
        %4019 = vmatmul.mubr.bf16.gmra.mrb[0].mxu0 %v3738
        %v4020 = vpop.f32.mrb[0].mxu0
        %v4021 = vadd.f32 0.0, %v4020
        %v4022 = vpop.f32.mrb[0].mxu0
        %v4023 = vpop.f32.mrb[0].mxu0
        %v4024 = vadd.f32 0.0, %v4023
        %v4025 = vpop.f32.mrb[0].mxu0
        %4026 = vmatprep.mubr.bf16.mxu0 0
        %4027 = vmatmul.mubr.bf16.gmra.mrb[0].mxu0 %v3741
        %v4028 = vpop.f32.mrb[0].mxu0
        %v4029 = vadd.f32 0.0, %v4028
        %v4030 = vpop.f32.mrb[0].mxu0
        %v4031 = vpop.f32.mrb[0].mxu0
        %v4032 = vpop.f32.mrb[0].mxu0
        %4033 = vdwg.mxu0
        %v4034 = vmax.f32 %v3778, %v3859
        %v4035 = vmax.f32 %v3781, %v3862
        %v4036 = vmax.f32 %v3786, %v3867
        %v4037 = vmax.f32 %v3940, %v4021
        %v4038 = vmax.f32 %v3943, %v4024
        %v4039 = vmax.f32 %v3948, %v4029
        %v4040 = vmax.f32 %v4034, %v4037
        %v4041 = vmax.f32 %v4035, %v4038
        %v4042 = vmax.f32 %v4036, %v4039
        %v4043 = vpack.c.bf16 %v4041, %v4040
        %v4044 = vpack.c.bf16 %v4042, %v4042
        %s4045 = scalar_lea.vmem %s1, 216
        %v4046 = vld [vmem:[%s4045] sm:$0xf]
        %v4047 = vld [vmem:[%s4045 + $0x4] sm:$0xf]
        %v4048 = vld [vmem:[%s4045 + $0x8] sm:$0xf]
        %v4049 = vld [vmem:[%s7] sm:$0xf]
        %v4050 = vld [vmem:[%s7 + $0x4] sm:$0xf]
        %v4053 = vunpack.c.l.b16 %v4049
        %v4054 = vunpack.c.l.b16 %v4050
        %v4055 = vpack.c.b16 %v4054, %v4053
        %vm4057 = vcmask 130048
        %v4059 = vsel %vm4057, %v4043, 0
        %v4062 = vsel %vm4057, %v4044, 0
        %4064 = vmatprep.subr.bf16.mxu0 0
        %4065 = vmatpush1.bf16.msra.mxu0 %v4055
        %4066 = vmatprep.subr.bf16.mxu0 0
        %4067 = vmatpush1.bf16.msra.mxu0 0
        %4068 = vmatprep.subr.bf16.mxu0 0
        %4069 = vmatpush1.bf16.msra.mxu0 0
        %4070 = vmatprep.subr.bf16.mxu0 0
        %4071 = vmatpush1.bf16.msra.mxu0 0
        %4072 = vmatprep.subr.bf16.mxu0 0
        %4073 = vmatpush1.bf16.msra.mxu0 0
        %4074 = vmatprep.subr.bf16.mxu0 0
        %4075 = vmatpush1.bf16.msra.mxu0 0
        %4076 = vmatprep.subr.bf16.mxu0 0
        %4077 = vmatpush1.bf16.msra.mxu0 0
        %4078 = vmatprep.subr.bf16.mxu0 0
        %4079 = vmatpush1.bf16.msra.mxu0 0
        %4080 = vmatprep.subr.bf16.mxu0 0
        %4081 = vmatpush1.bf16.msra.mxu0 0
        %4082 = vmatprep.subr.bf16.mxu0 0
        %4083 = vmatpush1.bf16.msra.mxu0 0
        %4084 = vmatprep.subr.bf16.mxu0 0
        %4085 = vmatpush1.bf16.msra.mxu0 0
        %4086 = vmatprep.subr.bf16.mxu0 0
        %4087 = vmatpush1.bf16.msra.mxu0 0
        %4088 = vmatprep.subr.bf16.mxu0 0
        %4089 = vmatpush1.bf16.msra.mxu0 0
        %4090 = vmatprep.subr.bf16.mxu0 0
        %4091 = vmatpush1.bf16.msra.mxu0 0
        %4092 = vmatprep.subr.bf16.mxu0 0
        %4093 = vmatpush1.bf16.msra.mxu0 0
        %4094 = vmatprep.subr.bf16.mxu0 0
        %4095 = vmatpush1.bf16.msra.mxu0 0
        %4096 = vmatprep.mubr.bf16.mxu0 0
        %4097 = vmatmul.mubr.bf16.gmra.mrb[0].mxu0 %v4059
        %v4098 = vpop.f32.mrb[0].mxu0
        %v4099 = vadd.f32 0.0, %v4098
        %v4100 = vpop.f32.mrb[0].mxu0
        %v4101 = vpop.f32.mrb[0].mxu0
        %v4102 = vadd.f32 0.0, %v4101
        %v4103 = vpop.f32.mrb[0].mxu0
        %4104 = vmatprep.mubr.bf16.mxu0 0
        %4105 = vmatmul.mubr.bf16.gmra.mrb[0].mxu0 %v4062
        %v4106 = vpop.f32.mrb[0].mxu0
        %v4107 = vadd.f32 0.0, %v4106
        %v4108 = vpop.f32.mrb[0].mxu0
        %v4109 = vpop.f32.mrb[0].mxu0
        %v4110 = vpop.f32.mrb[0].mxu0
        %4111 = vdwg.mxu0
        %v4112 = vpack.c.bf16 %v4102, %v4099
        %v4113 = vpack.c.bf16 %v4107, %v4107
        %s4114 = scalar_lea.vmem %s1, 228
        %v4115 = vld [vmem:[%s4114] sm:$0xf]
        %v4116 = vld [vmem:[%s4114 + $0x4] sm:$0xf]
        %v4117 = vld [vmem:[%s4114 + $0x8] sm:$0xf]
        %s4118 = scalar_lea.vmem %s7, 8
        %v4119 = vld [vmem:[%s4118] sm:$0xf]
        %v4120 = vld [vmem:[%s4118 + $0x4] sm:$0xf]
        %v4123 = vunpack.c.l.b16 %v4119
        %v4124 = vunpack.c.l.b16 %v4120
        %v4125 = vpack.c.b16 %v4124, %v4123
        %4127 = vmatprep.subr.bf16.mxu0 0
        %4128 = vmatpush1.bf16.msra.mxu0 %v4125
        %4129 = vmatprep.subr.bf16.mxu0 0
        %4130 = vmatpush1.bf16.msra.mxu0 0
        %4131 = vmatprep.subr.bf16.mxu0 0
        %4132 = vmatpush1.bf16.msra.mxu0 0
        %4133 = vmatprep.subr.bf16.mxu0 0
        %4134 = vmatpush1.bf16.msra.mxu0 0
        %4135 = vmatprep.subr.bf16.mxu0 0
        %4136 = vmatpush1.bf16.msra.mxu0 0
        %4137 = vmatprep.subr.bf16.mxu0 0
        %4138 = vmatpush1.bf16.msra.mxu0 0
        %4139 = vmatprep.subr.bf16.mxu0 0
        %4140 = vmatpush1.bf16.msra.mxu0 0
        %4141 = vmatprep.subr.bf16.mxu0 0
        %4142 = vmatpush1.bf16.msra.mxu0 0
        %4143 = vmatprep.subr.bf16.mxu0 0
        %4144 = vmatpush1.bf16.msra.mxu0 0
        %4145 = vmatprep.subr.bf16.mxu0 0
        %4146 = vmatpush1.bf16.msra.mxu0 0
        %4147 = vmatprep.subr.bf16.mxu0 0
        %4148 = vmatpush1.bf16.msra.mxu0 0
        %4149 = vmatprep.subr.bf16.mxu0 0
        %4150 = vmatpush1.bf16.msra.mxu0 0
        %4151 = vmatprep.subr.bf16.mxu0 0
        %4152 = vmatpush1.bf16.msra.mxu0 0
        %4153 = vmatprep.subr.bf16.mxu0 0
        %4154 = vmatpush1.bf16.msra.mxu0 0
        %4155 = vmatprep.subr.bf16.mxu0 0
        %4156 = vmatpush1.bf16.msra.mxu0 0
        %4157 = vmatprep.subr.bf16.mxu0 0
        %4158 = vmatpush1.bf16.msra.mxu0 0
        %4159 = vmatprep.mubr.bf16.mxu0 0
        %4160 = vmatmul.mubr.bf16.gmra.mrb[0].mxu0 %v4059
        %v4161 = vpop.f32.mrb[0].mxu0
        %v4162 = vadd.f32 0.0, %v4161
        %v4163 = vpop.f32.mrb[0].mxu0
        %v4164 = vpop.f32.mrb[0].mxu0
        %v4165 = vadd.f32 0.0, %v4164
        %v4166 = vpop.f32.mrb[0].mxu0
        %4167 = vmatprep.mubr.bf16.mxu0 0
        %4168 = vmatmul.mubr.bf16.gmra.mrb[0].mxu0 %v4062
        %v4169 = vpop.f32.mrb[0].mxu0
        %v4170 = vadd.f32 0.0, %v4169
        %v4171 = vpop.f32.mrb[0].mxu0
        %v4172 = vpop.f32.mrb[0].mxu0
        %v4173 = vpop.f32.mrb[0].mxu0
        %4174 = vdwg.mxu0
        %v4175 = vpack.c.bf16 %v4165, %v4162
        %v4176 = vpack.c.bf16 %v4170, %v4170
        %v4180 = vunpack.c.l.b16 %v4115
        %v4181 = vunpack.c.l.b16 %v4116
        %v4182 = vunpack.c.l.b16 %v4117
        %v4183 = vpack.c.b16 %v4181, %v4180
        %v4184 = vpack.c.b16 %v4182, %v4182
        %v4186 = vsel %vm567, %v4183, 0
        %v4189 = vsel %vm567, %v4184, 0
        %v4192 = vsel %vm574, %v4176, 0
        %4194 = vmatprep.subr.bf16.mxu0 0
        %4195 = vmatpush1.bf16.msra.mxu0 %v4175
        %4196 = vmatprep.subr.bf16.mxu0 0
        %4197 = vmatpush1.bf16.msra.mxu0 %v4192
        %4198 = vmatprep.subr.bf16.mxu0 0
        %4199 = vmatpush1.bf16.msra.mxu0 0
        %4200 = vmatprep.subr.bf16.mxu0 0
        %4201 = vmatpush1.bf16.msra.mxu0 0
        %4202 = vmatprep.subr.bf16.mxu0 0
        %4203 = vmatpush1.bf16.msra.mxu0 0
        %4204 = vmatprep.subr.bf16.mxu0 0
        %4205 = vmatpush1.bf16.msra.mxu0 0
        %4206 = vmatprep.subr.bf16.mxu0 0
        %4207 = vmatpush1.bf16.msra.mxu0 0
        %4208 = vmatprep.subr.bf16.mxu0 0
        %4209 = vmatpush1.bf16.msra.mxu0 0
        %4210 = vmatprep.subr.bf16.mxu0 0
        %4211 = vmatpush1.bf16.msra.mxu0 0
        %4212 = vmatprep.subr.bf16.mxu0 0
        %4213 = vmatpush1.bf16.msra.mxu0 0
        %4214 = vmatprep.subr.bf16.mxu0 0
        %4215 = vmatpush1.bf16.msra.mxu0 0
        %4216 = vmatprep.subr.bf16.mxu0 0
        %4217 = vmatpush1.bf16.msra.mxu0 0
        %4218 = vmatprep.subr.bf16.mxu0 0
        %4219 = vmatpush1.bf16.msra.mxu0 0
        %4220 = vmatprep.subr.bf16.mxu0 0
        %4221 = vmatpush1.bf16.msra.mxu0 0
        %4222 = vmatprep.subr.bf16.mxu0 0
        %4223 = vmatpush1.bf16.msra.mxu0 0
        %4224 = vmatprep.subr.bf16.mxu0 0
        %4225 = vmatpush1.bf16.msra.mxu0 0
        %4226 = vmatprep.mubr.bf16.mxu0 0
        %4227 = vmatmul.mubr.bf16.gmra.mrb[0].mxu0 %v4186
        %v4228 = vpop.f32.mrb[0].mxu0
        %v4229 = vadd.f32 0.0, %v4228
        %v4230 = vpop.f32.mrb[0].mxu0
        %v4231 = vpop.f32.mrb[0].mxu0
        %v4232 = vadd.f32 0.0, %v4231
        %v4233 = vpop.f32.mrb[0].mxu0
        %4234 = vmatprep.mubr.bf16.mxu0 0
        %4235 = vmatmul.mubr.bf16.gmra.mrb[0].mxu0 %v4189
        %v4236 = vpop.f32.mrb[0].mxu0
        %v4237 = vadd.f32 0.0, %v4236
        %v4238 = vpop.f32.mrb[0].mxu0
        %v4239 = vpop.f32.mrb[0].mxu0
        %v4240 = vpop.f32.mrb[0].mxu0
        %4241 = vdwg.mxu0
        %v4245 = vunpack.c.l.b16 %v4046
        %v4246 = vunpack.c.l.b16 %v4047
        %v4247 = vunpack.c.l.b16 %v4048
        %v4248 = vpack.c.b16 %v4246, %v4245
        %v4249 = vpack.c.b16 %v4247, %v4247
        %v4251 = vsel %vm567, %v4248, 0
        %v4254 = vsel %vm567, %v4249, 0
        %v4257 = vsel %vm574, %v4113, 0
        %4259 = vmatprep.subr.bf16.mxu0 0
        %4260 = vmatpush1.bf16.msra.mxu0 %v4112
        %4261 = vmatprep.subr.bf16.mxu0 0
        %4262 = vmatpush1.bf16.msra.mxu0 %v4257
        %4263 = vmatprep.subr.bf16.mxu0 0
        %4264 = vmatpush1.bf16.msra.mxu0 0
        %4265 = vmatprep.subr.bf16.mxu0 0
        %4266 = vmatpush1.bf16.msra.mxu0 0
        %4267 = vmatprep.subr.bf16.mxu0 0
        %4268 = vmatpush1.bf16.msra.mxu0 0
        %4269 = vmatprep.subr.bf16.mxu0 0
        %4270 = vmatpush1.bf16.msra.mxu0 0
        %4271 = vmatprep.subr.bf16.mxu0 0
        %4272 = vmatpush1.bf16.msra.mxu0 0
        %4273 = vmatprep.subr.bf16.mxu0 0
        %4274 = vmatpush1.bf16.msra.mxu0 0
        %4275 = vmatprep.subr.bf16.mxu0 0
        %4276 = vmatpush1.bf16.msra.mxu0 0
        %4277 = vmatprep.subr.bf16.mxu0 0
        %4278 = vmatpush1.bf16.msra.mxu0 0
        %4279 = vmatprep.subr.bf16.mxu0 0
        %4280 = vmatpush1.bf16.msra.mxu0 0
        %4281 = vmatprep.subr.bf16.mxu0 0
        %4282 = vmatpush1.bf16.msra.mxu0 0
        %4283 = vmatprep.subr.bf16.mxu0 0
        %4284 = vmatpush1.bf16.msra.mxu0 0
        %4285 = vmatprep.subr.bf16.mxu0 0
        %4286 = vmatpush1.bf16.msra.mxu0 0
        %4287 = vmatprep.subr.bf16.mxu0 0
        %4288 = vmatpush1.bf16.msra.mxu0 0
        %4289 = vmatprep.subr.bf16.mxu0 0
        %4290 = vmatpush1.bf16.msra.mxu0 0
        %4291 = vmatprep.mubr.bf16.mxu0 0
        %4292 = vmatmul.mubr.bf16.gmra.mrb[0].mxu0 %v4251
        %v4293 = vpop.f32.mrb[0].mxu0
        %v4294 = vadd.f32 %v4229, %v4293
        %v4295 = vpop.f32.mrb[0].mxu0
        %v4296 = vpop.f32.mrb[0].mxu0
        %v4297 = vadd.f32 %v4232, %v4296
        %v4298 = vpop.f32.mrb[0].mxu0
        %4299 = vmatprep.mubr.bf16.mxu0 0
        %4300 = vmatmul.mubr.bf16.gmra.mrb[0].mxu0 %v4254
        %v4301 = vpop.f32.mrb[0].mxu0
        %v4302 = vadd.f32 %v4237, %v4301
        %v4303 = vpop.f32.mrb[0].mxu0
        %v4304 = vpop.f32.mrb[0].mxu0
        %v4305 = vpop.f32.mrb[0].mxu0
        %4306 = vdwg.mxu0
        %s4307 = scalar_lea.vmem %s1, 240
        %v4308 = vld [vmem:[%s4307] sm:$0xf]
        %v4309 = vld [vmem:[%s4307 + $0x4] sm:$0xf]
        %v4310 = vld [vmem:[%s4307 + $0x8] sm:$0xf]
        %s4311 = scalar_lea.vmem %s7, 16
        %v4312 = vld [vmem:[%s4311] sm:$0xf]
        %v4313 = vld [vmem:[%s4311 + $0x4] sm:$0xf]
        %v4316 = vunpack.c.l.b16 %v4312
        %v4317 = vunpack.c.l.b16 %v4313
        %v4318 = vpack.c.b16 %v4317, %v4316
        %4320 = vmatprep.subr.bf16.mxu0 0
        %4321 = vmatpush1.bf16.msra.mxu0 %v4318
        %4322 = vmatprep.subr.bf16.mxu0 0
        %4323 = vmatpush1.bf16.msra.mxu0 0
        %4324 = vmatprep.subr.bf16.mxu0 0
        %4325 = vmatpush1.bf16.msra.mxu0 0
        %4326 = vmatprep.subr.bf16.mxu0 0
        %4327 = vmatpush1.bf16.msra.mxu0 0
        %4328 = vmatprep.subr.bf16.mxu0 0
        %4329 = vmatpush1.bf16.msra.mxu0 0
        %4330 = vmatprep.subr.bf16.mxu0 0
        %4331 = vmatpush1.bf16.msra.mxu0 0
        %4332 = vmatprep.subr.bf16.mxu0 0
        %4333 = vmatpush1.bf16.msra.mxu0 0
        %4334 = vmatprep.subr.bf16.mxu0 0
        %4335 = vmatpush1.bf16.msra.mxu0 0
        %4336 = vmatprep.subr.bf16.mxu0 0
        %4337 = vmatpush1.bf16.msra.mxu0 0
        %4338 = vmatprep.subr.bf16.mxu0 0
        %4339 = vmatpush1.bf16.msra.mxu0 0
        %4340 = vmatprep.subr.bf16.mxu0 0
        %4341 = vmatpush1.bf16.msra.mxu0 0
        %4342 = vmatprep.subr.bf16.mxu0 0
        %4343 = vmatpush1.bf16.msra.mxu0 0
        %4344 = vmatprep.subr.bf16.mxu0 0
        %4345 = vmatpush1.bf16.msra.mxu0 0
        %4346 = vmatprep.subr.bf16.mxu0 0
        %4347 = vmatpush1.bf16.msra.mxu0 0
        %4348 = vmatprep.subr.bf16.mxu0 0
        %4349 = vmatpush1.bf16.msra.mxu0 0
        %4350 = vmatprep.subr.bf16.mxu0 0
        %4351 = vmatpush1.bf16.msra.mxu0 0
        %4352 = vmatprep.mubr.bf16.mxu0 0
        %4353 = vmatmul.mubr.bf16.gmra.mrb[0].mxu0 %v4059
        %v4354 = vpop.f32.mrb[0].mxu0
        %v4355 = vadd.f32 0.0, %v4354
        %v4356 = vpop.f32.mrb[0].mxu0
        %v4357 = vpop.f32.mrb[0].mxu0
        %v4358 = vadd.f32 0.0, %v4357
        %v4359 = vpop.f32.mrb[0].mxu0
        %4360 = vmatprep.mubr.bf16.mxu0 0
        %4361 = vmatmul.mubr.bf16.gmra.mrb[0].mxu0 %v4062
        %v4362 = vpop.f32.mrb[0].mxu0
        %v4363 = vadd.f32 0.0, %v4362
        %v4364 = vpop.f32.mrb[0].mxu0
        %v4365 = vpop.f32.mrb[0].mxu0
        %v4366 = vpop.f32.mrb[0].mxu0
        %4367 = vdwg.mxu0
        %v4368 = vpack.c.bf16 %v4358, %v4355
        %v4369 = vpack.c.bf16 %v4363, %v4363
        %v4373 = vunpack.c.l.b16 %v4308
        %v4374 = vunpack.c.l.b16 %v4309
        %v4375 = vunpack.c.l.b16 %v4310
        %v4376 = vpack.c.b16 %v4374, %v4373
        %v4377 = vpack.c.b16 %v4375, %v4375
        %v4379 = vsel %vm567, %v4376, 0
        %v4382 = vsel %vm567, %v4377, 0
        %v4385 = vsel %vm574, %v4369, 0
        %4387 = vmatprep.subr.bf16.mxu0 0
        %4388 = vmatpush1.bf16.msra.mxu0 %v4368
        %4389 = vmatprep.subr.bf16.mxu0 0
        %4390 = vmatpush1.bf16.msra.mxu0 %v4385
        %4391 = vmatprep.subr.bf16.mxu0 0
        %4392 = vmatpush1.bf16.msra.mxu0 0
        %4393 = vmatprep.subr.bf16.mxu0 0
        %4394 = vmatpush1.bf16.msra.mxu0 0
        %4395 = vmatprep.subr.bf16.mxu0 0
        %4396 = vmatpush1.bf16.msra.mxu0 0
        %4397 = vmatprep.subr.bf16.mxu0 0
        %4398 = vmatpush1.bf16.msra.mxu0 0
        %4399 = vmatprep.subr.bf16.mxu0 0
        %4400 = vmatpush1.bf16.msra.mxu0 0
        %4401 = vmatprep.subr.bf16.mxu0 0
        %4402 = vmatpush1.bf16.msra.mxu0 0
        %4403 = vmatprep.subr.bf16.mxu0 0
        %4404 = vmatpush1.bf16.msra.mxu0 0
        %4405 = vmatprep.subr.bf16.mxu0 0
        %4406 = vmatpush1.bf16.msra.mxu0 0
        %4407 = vmatprep.subr.bf16.mxu0 0
        %4408 = vmatpush1.bf16.msra.mxu0 0
        %4409 = vmatprep.subr.bf16.mxu0 0
        %4410 = vmatpush1.bf16.msra.mxu0 0
        %4411 = vmatprep.subr.bf16.mxu0 0
        %4412 = vmatpush1.bf16.msra.mxu0 0
        %4413 = vmatprep.subr.bf16.mxu0 0
        %4414 = vmatpush1.bf16.msra.mxu0 0
        %4415 = vmatprep.subr.bf16.mxu0 0
        %4416 = vmatpush1.bf16.msra.mxu0 0
        %4417 = vmatprep.subr.bf16.mxu0 0
        %4418 = vmatpush1.bf16.msra.mxu0 0
        %4419 = vmatprep.mubr.bf16.mxu0 0
        %4420 = vmatmul.mubr.bf16.gmra.mrb[0].mxu0 %v4379
        %v4421 = vpop.f32.mrb[0].mxu0
        %v4422 = vadd.f32 0.0, %v4421
        %v4423 = vpop.f32.mrb[0].mxu0
        %v4424 = vpop.f32.mrb[0].mxu0
        %v4425 = vadd.f32 0.0, %v4424
        %v4426 = vpop.f32.mrb[0].mxu0
        %4427 = vmatprep.mubr.bf16.mxu0 0
        %4428 = vmatmul.mubr.bf16.gmra.mrb[0].mxu0 %v4382
        %v4429 = vpop.f32.mrb[0].mxu0
        %v4430 = vadd.f32 0.0, %v4429
        %v4431 = vpop.f32.mrb[0].mxu0
        %v4432 = vpop.f32.mrb[0].mxu0
        %v4433 = vpop.f32.mrb[0].mxu0
        %4434 = vdwg.mxu0
        %v4435 = vadd.f32 %v4294, %v4422
        %v4436 = vadd.f32 %v4297, %v4425
        %v4437 = vadd.f32 %v4302, %v4430
        %s4438 = scalar_lea.vmem %s1, 252
        %v4439 = vld [vmem:[%s4438] sm:$0xf]
        %v4440 = vld [vmem:[%s4438 + $0x4] sm:$0xf]
        %v4441 = vld [vmem:[%s4438 + $0x8] sm:$0xf]
        %s4442 = scalar_lea.vmem %s7, 24
        %v4443 = vld [vmem:[%s4442] sm:$0xf]
        %v4444 = vld [vmem:[%s4442 + $0x4] sm:$0xf]
        %v4447 = vunpack.c.l.b16 %v4443
        %v4448 = vunpack.c.l.b16 %v4444
        %v4449 = vpack.c.b16 %v4448, %v4447
        %4451 = vmatprep.subr.bf16.mxu0 0
        %4452 = vmatpush1.bf16.msra.mxu0 %v4449
        %4453 = vmatprep.subr.bf16.mxu0 0
        %4454 = vmatpush1.bf16.msra.mxu0 0
        %4455 = vmatprep.subr.bf16.mxu0 0
        %4456 = vmatpush1.bf16.msra.mxu0 0
        %4457 = vmatprep.subr.bf16.mxu0 0
        %4458 = vmatpush1.bf16.msra.mxu0 0
        %4459 = vmatprep.subr.bf16.mxu0 0
        %4460 = vmatpush1.bf16.msra.mxu0 0
        %4461 = vmatprep.subr.bf16.mxu0 0
        %4462 = vmatpush1.bf16.msra.mxu0 0
        %4463 = vmatprep.subr.bf16.mxu0 0
        %4464 = vmatpush1.bf16.msra.mxu0 0
        %4465 = vmatprep.subr.bf16.mxu0 0
        %4466 = vmatpush1.bf16.msra.mxu0 0
        %4467 = vmatprep.subr.bf16.mxu0 0
        %4468 = vmatpush1.bf16.msra.mxu0 0
        %4469 = vmatprep.subr.bf16.mxu0 0
        %4470 = vmatpush1.bf16.msra.mxu0 0
        %4471 = vmatprep.subr.bf16.mxu0 0
        %4472 = vmatpush1.bf16.msra.mxu0 0
        %4473 = vmatprep.subr.bf16.mxu0 0
        %4474 = vmatpush1.bf16.msra.mxu0 0
        %4475 = vmatprep.subr.bf16.mxu0 0
        %4476 = vmatpush1.bf16.msra.mxu0 0
        %4477 = vmatprep.subr.bf16.mxu0 0
        %4478 = vmatpush1.bf16.msra.mxu0 0
        %4479 = vmatprep.subr.bf16.mxu0 0
        %4480 = vmatpush1.bf16.msra.mxu0 0
        %4481 = vmatprep.subr.bf16.mxu0 0
        %4482 = vmatpush1.bf16.msra.mxu0 0
        %4483 = vmatprep.mubr.bf16.mxu0 0
        %4484 = vmatmul.mubr.bf16.gmra.mrb[0].mxu0 %v4059
        %v4485 = vpop.f32.mrb[0].mxu0
        %v4486 = vadd.f32 0.0, %v4485
        %v4487 = vpop.f32.mrb[0].mxu0
        %v4488 = vpop.f32.mrb[0].mxu0
        %v4489 = vadd.f32 0.0, %v4488
        %v4490 = vpop.f32.mrb[0].mxu0
        %4491 = vmatprep.mubr.bf16.mxu0 0
        %4492 = vmatmul.mubr.bf16.gmra.mrb[0].mxu0 %v4062
        %v4493 = vpop.f32.mrb[0].mxu0
        %v4494 = vadd.f32 0.0, %v4493
        %v4495 = vpop.f32.mrb[0].mxu0
        %v4496 = vpop.f32.mrb[0].mxu0
        %v4497 = vpop.f32.mrb[0].mxu0
        %4498 = vdwg.mxu0
        %v4499 = vpack.c.bf16 %v4489, %v4486
        %v4500 = vpack.c.bf16 %v4494, %v4494
        %v4504 = vunpack.c.l.b16 %v4439
        %v4505 = vunpack.c.l.b16 %v4440
        %v4506 = vunpack.c.l.b16 %v4441
        %v4507 = vpack.c.b16 %v4505, %v4504
        %v4508 = vpack.c.b16 %v4506, %v4506
        %v4510 = vsel %vm567, %v4507, 0
        %v4513 = vsel %vm567, %v4508, 0
        %v4516 = vsel %vm574, %v4500, 0
        %4518 = vmatprep.subr.bf16.mxu0 0
        %4519 = vmatpush1.bf16.msra.mxu0 %v4499
        %4520 = vmatprep.subr.bf16.mxu0 0
        %4521 = vmatpush1.bf16.msra.mxu0 %v4516
        %4522 = vmatprep.subr.bf16.mxu0 0
        %4523 = vmatpush1.bf16.msra.mxu0 0
        %4524 = vmatprep.subr.bf16.mxu0 0
        %4525 = vmatpush1.bf16.msra.mxu0 0
        %4526 = vmatprep.subr.bf16.mxu0 0
        %4527 = vmatpush1.bf16.msra.mxu0 0
        %4528 = vmatprep.subr.bf16.mxu0 0
        %4529 = vmatpush1.bf16.msra.mxu0 0
        %4530 = vmatprep.subr.bf16.mxu0 0
        %4531 = vmatpush1.bf16.msra.mxu0 0
        %4532 = vmatprep.subr.bf16.mxu0 0
        %4533 = vmatpush1.bf16.msra.mxu0 0
        %4534 = vmatprep.subr.bf16.mxu0 0
        %4535 = vmatpush1.bf16.msra.mxu0 0
        %4536 = vmatprep.subr.bf16.mxu0 0
        %4537 = vmatpush1.bf16.msra.mxu0 0
        %4538 = vmatprep.subr.bf16.mxu0 0
        %4539 = vmatpush1.bf16.msra.mxu0 0
        %4540 = vmatprep.subr.bf16.mxu0 0
        %4541 = vmatpush1.bf16.msra.mxu0 0
        %4542 = vmatprep.subr.bf16.mxu0 0
        %4543 = vmatpush1.bf16.msra.mxu0 0
        %4544 = vmatprep.subr.bf16.mxu0 0
        %4545 = vmatpush1.bf16.msra.mxu0 0
        %4546 = vmatprep.subr.bf16.mxu0 0
        %4547 = vmatpush1.bf16.msra.mxu0 0
        %4548 = vmatprep.subr.bf16.mxu0 0
        %4549 = vmatpush1.bf16.msra.mxu0 0
        %4550 = vmatprep.mubr.bf16.mxu0 0
        %4551 = vmatmul.mubr.bf16.gmra.mrb[0].mxu0 %v4510
        %v4552 = vpop.f32.mrb[0].mxu0
        %v4553 = vadd.f32 0.0, %v4552
        %v4554 = vpop.f32.mrb[0].mxu0
        %v4555 = vpop.f32.mrb[0].mxu0
        %v4556 = vadd.f32 0.0, %v4555
        %v4557 = vpop.f32.mrb[0].mxu0
        %4558 = vmatprep.mubr.bf16.mxu0 0
        %4559 = vmatmul.mubr.bf16.gmra.mrb[0].mxu0 %v4513
        %v4560 = vpop.f32.mrb[0].mxu0
        %v4561 = vadd.f32 0.0, %v4560
        %v4562 = vpop.f32.mrb[0].mxu0
        %v4563 = vpop.f32.mrb[0].mxu0
        %v4564 = vpop.f32.mrb[0].mxu0
        %4565 = vdwg.mxu0
        %v4566 = vadd.f32 %v4435, %v4553
        %v4567 = vadd.f32 %v4436, %v4556
        %v4568 = vadd.f32 %v4437, %v4561
        %s4569 = scalar_lea.vmem %s1, 264
        %v4570 = vld [vmem:[%s4569] sm:$0xf]
        %v4571 = vld [vmem:[%s4569 + $0x4] sm:$0xf]
        %v4572 = vld [vmem:[%s4569 + $0x8] sm:$0xf]
        %s4573 = scalar_lea.vmem %s7, 32
        %v4574 = vld [vmem:[%s4573] sm:$0xf]
        %v4575 = vld [vmem:[%s4573 + $0x4] sm:$0xf]
        %v4578 = vunpack.c.l.b16 %v4574
        %v4579 = vunpack.c.l.b16 %v4575
        %v4580 = vpack.c.b16 %v4579, %v4578
        %4582 = vmatprep.subr.bf16.mxu0 0
        %4583 = vmatpush1.bf16.msra.mxu0 %v4580
        %4584 = vmatprep.subr.bf16.mxu0 0
        %4585 = vmatpush1.bf16.msra.mxu0 0
        %4586 = vmatprep.subr.bf16.mxu0 0
        %4587 = vmatpush1.bf16.msra.mxu0 0
        %4588 = vmatprep.subr.bf16.mxu0 0
        %4589 = vmatpush1.bf16.msra.mxu0 0
        %4590 = vmatprep.subr.bf16.mxu0 0
        %4591 = vmatpush1.bf16.msra.mxu0 0
        %4592 = vmatprep.subr.bf16.mxu0 0
        %4593 = vmatpush1.bf16.msra.mxu0 0
        %4594 = vmatprep.subr.bf16.mxu0 0
        %4595 = vmatpush1.bf16.msra.mxu0 0
        %4596 = vmatprep.subr.bf16.mxu0 0
        %4597 = vmatpush1.bf16.msra.mxu0 0
        %4598 = vmatprep.subr.bf16.mxu0 0
        %4599 = vmatpush1.bf16.msra.mxu0 0
        %4600 = vmatprep.subr.bf16.mxu0 0
        %4601 = vmatpush1.bf16.msra.mxu0 0
        %4602 = vmatprep.subr.bf16.mxu0 0
        %4603 = vmatpush1.bf16.msra.mxu0 0
        %4604 = vmatprep.subr.bf16.mxu0 0
        %4605 = vmatpush1.bf16.msra.mxu0 0
        %4606 = vmatprep.subr.bf16.mxu0 0
        %4607 = vmatpush1.bf16.msra.mxu0 0
        %4608 = vmatprep.subr.bf16.mxu0 0
        %4609 = vmatpush1.bf16.msra.mxu0 0
        %4610 = vmatprep.subr.bf16.mxu0 0
        %4611 = vmatpush1.bf16.msra.mxu0 0
        %4612 = vmatprep.subr.bf16.mxu0 0
        %4613 = vmatpush1.bf16.msra.mxu0 0
        %4614 = vmatprep.mubr.bf16.mxu0 0
        %4615 = vmatmul.mubr.bf16.gmra.mrb[0].mxu0 %v4059
        %v4616 = vpop.f32.mrb[0].mxu0
        %v4617 = vadd.f32 0.0, %v4616
        %v4618 = vpop.f32.mrb[0].mxu0
        %v4619 = vpop.f32.mrb[0].mxu0
        %v4620 = vadd.f32 0.0, %v4619
        %v4621 = vpop.f32.mrb[0].mxu0
        %4622 = vmatprep.mubr.bf16.mxu0 0
        %4623 = vmatmul.mubr.bf16.gmra.mrb[0].mxu0 %v4062
        %v4624 = vpop.f32.mrb[0].mxu0
        %v4625 = vadd.f32 0.0, %v4624
        %v4626 = vpop.f32.mrb[0].mxu0
        %v4627 = vpop.f32.mrb[0].mxu0
        %v4628 = vpop.f32.mrb[0].mxu0
        %4629 = vdwg.mxu0
        %v4630 = vpack.c.bf16 %v4620, %v4617
        %v4631 = vpack.c.bf16 %v4625, %v4625
        %v4635 = vunpack.c.l.b16 %v4570
        %v4636 = vunpack.c.l.b16 %v4571
        %v4637 = vunpack.c.l.b16 %v4572
        %v4638 = vpack.c.b16 %v4636, %v4635
        %v4639 = vpack.c.b16 %v4637, %v4637
        %v4641 = vsel %vm567, %v4638, 0
        %v4644 = vsel %vm567, %v4639, 0
        %v4647 = vsel %vm574, %v4631, 0
        %4649 = vmatprep.subr.bf16.mxu0 0
        %4650 = vmatpush1.bf16.msra.mxu0 %v4630
        %4651 = vmatprep.subr.bf16.mxu0 0
        %4652 = vmatpush1.bf16.msra.mxu0 %v4647
        %4653 = vmatprep.subr.bf16.mxu0 0
        %4654 = vmatpush1.bf16.msra.mxu0 0
        %4655 = vmatprep.subr.bf16.mxu0 0
        %4656 = vmatpush1.bf16.msra.mxu0 0
        %4657 = vmatprep.subr.bf16.mxu0 0
        %4658 = vmatpush1.bf16.msra.mxu0 0
        %4659 = vmatprep.subr.bf16.mxu0 0
        %4660 = vmatpush1.bf16.msra.mxu0 0
        %4661 = vmatprep.subr.bf16.mxu0 0
        %4662 = vmatpush1.bf16.msra.mxu0 0
        %4663 = vmatprep.subr.bf16.mxu0 0
        %4664 = vmatpush1.bf16.msra.mxu0 0
        %4665 = vmatprep.subr.bf16.mxu0 0
        %4666 = vmatpush1.bf16.msra.mxu0 0
        %4667 = vmatprep.subr.bf16.mxu0 0
        %4668 = vmatpush1.bf16.msra.mxu0 0
        %4669 = vmatprep.subr.bf16.mxu0 0
        %4670 = vmatpush1.bf16.msra.mxu0 0
        %4671 = vmatprep.subr.bf16.mxu0 0
        %4672 = vmatpush1.bf16.msra.mxu0 0
        %4673 = vmatprep.subr.bf16.mxu0 0
        %4674 = vmatpush1.bf16.msra.mxu0 0
        %4675 = vmatprep.subr.bf16.mxu0 0
        %4676 = vmatpush1.bf16.msra.mxu0 0
        %4677 = vmatprep.subr.bf16.mxu0 0
        %4678 = vmatpush1.bf16.msra.mxu0 0
        %4679 = vmatprep.subr.bf16.mxu0 0
        %4680 = vmatpush1.bf16.msra.mxu0 0
        %4681 = vmatprep.mubr.bf16.mxu0 0
        %4682 = vmatmul.mubr.bf16.gmra.mrb[0].mxu0 %v4641
        %v4683 = vpop.f32.mrb[0].mxu0
        %v4684 = vadd.f32 0.0, %v4683
        %v4685 = vpop.f32.mrb[0].mxu0
        %v4686 = vpop.f32.mrb[0].mxu0
        %v4687 = vadd.f32 0.0, %v4686
        %v4688 = vpop.f32.mrb[0].mxu0
        %4689 = vmatprep.mubr.bf16.mxu0 0
        %4690 = vmatmul.mubr.bf16.gmra.mrb[0].mxu0 %v4644
        %v4691 = vpop.f32.mrb[0].mxu0
        %v4692 = vadd.f32 0.0, %v4691
        %v4693 = vpop.f32.mrb[0].mxu0
        %v4694 = vpop.f32.mrb[0].mxu0
        %v4695 = vpop.f32.mrb[0].mxu0
        %4696 = vdwg.mxu0
        %v4697 = vadd.f32 %v4566, %v4684
        %v4698 = vadd.f32 %v4567, %v4687
        %v4699 = vadd.f32 %v4568, %v4692
        %s4700 = scalar_lea.vmem %s1, 276
        %v4701 = vld [vmem:[%s4700] sm:$0xf]
        %v4702 = vld [vmem:[%s4700 + $0x4] sm:$0xf]
        %v4703 = vld [vmem:[%s4700 + $0x8] sm:$0xf]
        %s4704 = scalar_lea.vmem %s7, 40
        %v4705 = vld [vmem:[%s4704] sm:$0xf]
        %v4706 = vld [vmem:[%s4704 + $0x4] sm:$0xf]
        %v4709 = vunpack.c.l.b16 %v4705
        %v4710 = vunpack.c.l.b16 %v4706
        %v4711 = vpack.c.b16 %v4710, %v4709
        %4713 = vmatprep.subr.bf16.mxu0 0
        %4714 = vmatpush1.bf16.msra.mxu0 %v4711
        %4715 = vmatprep.subr.bf16.mxu0 0
        %4716 = vmatpush1.bf16.msra.mxu0 0
        %4717 = vmatprep.subr.bf16.mxu0 0
        %4718 = vmatpush1.bf16.msra.mxu0 0
        %4719 = vmatprep.subr.bf16.mxu0 0
        %4720 = vmatpush1.bf16.msra.mxu0 0
        %4721 = vmatprep.subr.bf16.mxu0 0
        %4722 = vmatpush1.bf16.msra.mxu0 0
        %4723 = vmatprep.subr.bf16.mxu0 0
        %4724 = vmatpush1.bf16.msra.mxu0 0
        %4725 = vmatprep.subr.bf16.mxu0 0
        %4726 = vmatpush1.bf16.msra.mxu0 0
        %4727 = vmatprep.subr.bf16.mxu0 0
        %4728 = vmatpush1.bf16.msra.mxu0 0
        %4729 = vmatprep.subr.bf16.mxu0 0
        %4730 = vmatpush1.bf16.msra.mxu0 0
        %4731 = vmatprep.subr.bf16.mxu0 0
        %4732 = vmatpush1.bf16.msra.mxu0 0
        %4733 = vmatprep.subr.bf16.mxu0 0
        %4734 = vmatpush1.bf16.msra.mxu0 0
        %4735 = vmatprep.subr.bf16.mxu0 0
        %4736 = vmatpush1.bf16.msra.mxu0 0
        %4737 = vmatprep.subr.bf16.mxu0 0
        %4738 = vmatpush1.bf16.msra.mxu0 0
        %4739 = vmatprep.subr.bf16.mxu0 0
        %4740 = vmatpush1.bf16.msra.mxu0 0
        %4741 = vmatprep.subr.bf16.mxu0 0
        %4742 = vmatpush1.bf16.msra.mxu0 0
        %4743 = vmatprep.subr.bf16.mxu0 0
        %4744 = vmatpush1.bf16.msra.mxu0 0
        %4745 = vmatprep.mubr.bf16.mxu0 0
        %4746 = vmatmul.mubr.bf16.gmra.mrb[0].mxu0 %v4059
        %v4747 = vpop.f32.mrb[0].mxu0
        %v4748 = vadd.f32 0.0, %v4747
        %v4749 = vpop.f32.mrb[0].mxu0
        %v4750 = vpop.f32.mrb[0].mxu0
        %v4751 = vadd.f32 0.0, %v4750
        %v4752 = vpop.f32.mrb[0].mxu0
        %4753 = vmatprep.mubr.bf16.mxu0 0
        %4754 = vmatmul.mubr.bf16.gmra.mrb[0].mxu0 %v4062
        %v4755 = vpop.f32.mrb[0].mxu0
        %v4756 = vadd.f32 0.0, %v4755
        %v4757 = vpop.f32.mrb[0].mxu0
        %v4758 = vpop.f32.mrb[0].mxu0
        %v4759 = vpop.f32.mrb[0].mxu0
        %4760 = vdwg.mxu0
        %v4761 = vpack.c.bf16 %v4751, %v4748
        %v4762 = vpack.c.bf16 %v4756, %v4756
        %v4766 = vunpack.c.l.b16 %v4701
        %v4767 = vunpack.c.l.b16 %v4702
        %v4768 = vunpack.c.l.b16 %v4703
        %v4769 = vpack.c.b16 %v4767, %v4766
        %v4770 = vpack.c.b16 %v4768, %v4768
        %v4772 = vsel %vm567, %v4769, 0
        %v4775 = vsel %vm567, %v4770, 0
        %v4778 = vsel %vm574, %v4762, 0
        %4780 = vmatprep.subr.bf16.mxu0 0
        %4781 = vmatpush1.bf16.msra.mxu0 %v4761
        %4782 = vmatprep.subr.bf16.mxu0 0
        %4783 = vmatpush1.bf16.msra.mxu0 %v4778
        %4784 = vmatprep.subr.bf16.mxu0 0
        %4785 = vmatpush1.bf16.msra.mxu0 0
        %4786 = vmatprep.subr.bf16.mxu0 0
        %4787 = vmatpush1.bf16.msra.mxu0 0
        %4788 = vmatprep.subr.bf16.mxu0 0
        %4789 = vmatpush1.bf16.msra.mxu0 0
        %4790 = vmatprep.subr.bf16.mxu0 0
        %4791 = vmatpush1.bf16.msra.mxu0 0
        %4792 = vmatprep.subr.bf16.mxu0 0
        %4793 = vmatpush1.bf16.msra.mxu0 0
        %4794 = vmatprep.subr.bf16.mxu0 0
        %4795 = vmatpush1.bf16.msra.mxu0 0
        %4796 = vmatprep.subr.bf16.mxu0 0
        %4797 = vmatpush1.bf16.msra.mxu0 0
        %4798 = vmatprep.subr.bf16.mxu0 0
        %4799 = vmatpush1.bf16.msra.mxu0 0
        %4800 = vmatprep.subr.bf16.mxu0 0
        %4801 = vmatpush1.bf16.msra.mxu0 0
        %4802 = vmatprep.subr.bf16.mxu0 0
        %4803 = vmatpush1.bf16.msra.mxu0 0
        %4804 = vmatprep.subr.bf16.mxu0 0
        %4805 = vmatpush1.bf16.msra.mxu0 0
        %4806 = vmatprep.subr.bf16.mxu0 0
        %4807 = vmatpush1.bf16.msra.mxu0 0
        %4808 = vmatprep.subr.bf16.mxu0 0
        %4809 = vmatpush1.bf16.msra.mxu0 0
        %4810 = vmatprep.subr.bf16.mxu0 0
        %4811 = vmatpush1.bf16.msra.mxu0 0
        %4812 = vmatprep.mubr.bf16.mxu0 0
        %4813 = vmatmul.mubr.bf16.gmra.mrb[0].mxu0 %v4772
        %v4814 = vpop.f32.mrb[0].mxu0
        %v4815 = vadd.f32 0.0, %v4814
        %v4816 = vpop.f32.mrb[0].mxu0
        %v4817 = vpop.f32.mrb[0].mxu0
        %v4818 = vadd.f32 0.0, %v4817
        %v4819 = vpop.f32.mrb[0].mxu0
        %4820 = vmatprep.mubr.bf16.mxu0 0
        %4821 = vmatmul.mubr.bf16.gmra.mrb[0].mxu0 %v4775
        %v4822 = vpop.f32.mrb[0].mxu0
        %v4823 = vadd.f32 0.0, %v4822
        %v4824 = vpop.f32.mrb[0].mxu0
        %v4825 = vpop.f32.mrb[0].mxu0
        %v4826 = vpop.f32.mrb[0].mxu0
        %4827 = vdwg.mxu0
        %v4828 = vadd.f32 %v4697, %v4815
        %v4829 = vadd.f32 %v4698, %v4818
        %v4830 = vadd.f32 %v4699, %v4823
        %s4831 = scalar_lea.vmem %s1, 288
        %v4832 = vld [vmem:[%s4831] sm:$0xf]
        %v4833 = vld [vmem:[%s4831 + $0x4] sm:$0xf]
        %v4834 = vld [vmem:[%s4831 + $0x8] sm:$0xf]
        %s4835 = scalar_lea.vmem %s7, 48
        %v4836 = vld [vmem:[%s4835] sm:$0xf]
        %v4837 = vld [vmem:[%s4835 + $0x4] sm:$0xf]
        %v4840 = vunpack.c.l.b16 %v4836
        %v4841 = vunpack.c.l.b16 %v4837
        %v4842 = vpack.c.b16 %v4841, %v4840
        %4844 = vmatprep.subr.bf16.mxu0 0
        %4845 = vmatpush1.bf16.msra.mxu0 %v4842
        %4846 = vmatprep.subr.bf16.mxu0 0
        %4847 = vmatpush1.bf16.msra.mxu0 0
        %4848 = vmatprep.subr.bf16.mxu0 0
        %4849 = vmatpush1.bf16.msra.mxu0 0
        %4850 = vmatprep.subr.bf16.mxu0 0
        %4851 = vmatpush1.bf16.msra.mxu0 0
        %4852 = vmatprep.subr.bf16.mxu0 0
        %4853 = vmatpush1.bf16.msra.mxu0 0
        %4854 = vmatprep.subr.bf16.mxu0 0
        %4855 = vmatpush1.bf16.msra.mxu0 0
        %4856 = vmatprep.subr.bf16.mxu0 0
        %4857 = vmatpush1.bf16.msra.mxu0 0
        %4858 = vmatprep.subr.bf16.mxu0 0
        %4859 = vmatpush1.bf16.msra.mxu0 0
        %4860 = vmatprep.subr.bf16.mxu0 0
        %4861 = vmatpush1.bf16.msra.mxu0 0
        %4862 = vmatprep.subr.bf16.mxu0 0
        %4863 = vmatpush1.bf16.msra.mxu0 0
        %4864 = vmatprep.subr.bf16.mxu0 0
        %4865 = vmatpush1.bf16.msra.mxu0 0
        %4866 = vmatprep.subr.bf16.mxu0 0
        %4867 = vmatpush1.bf16.msra.mxu0 0
        %4868 = vmatprep.subr.bf16.mxu0 0
        %4869 = vmatpush1.bf16.msra.mxu0 0
        %4870 = vmatprep.subr.bf16.mxu0 0
        %4871 = vmatpush1.bf16.msra.mxu0 0
        %4872 = vmatprep.subr.bf16.mxu0 0
        %4873 = vmatpush1.bf16.msra.mxu0 0
        %4874 = vmatprep.subr.bf16.mxu0 0
        %4875 = vmatpush1.bf16.msra.mxu0 0
        %4876 = vmatprep.mubr.bf16.mxu0 0
        %4877 = vmatmul.mubr.bf16.gmra.mrb[0].mxu0 %v4059
        %v4878 = vpop.f32.mrb[0].mxu0
        %v4879 = vadd.f32 0.0, %v4878
        %v4880 = vpop.f32.mrb[0].mxu0
        %v4881 = vpop.f32.mrb[0].mxu0
        %v4882 = vadd.f32 0.0, %v4881
        %v4883 = vpop.f32.mrb[0].mxu0
        %4884 = vmatprep.mubr.bf16.mxu0 0
        %4885 = vmatmul.mubr.bf16.gmra.mrb[0].mxu0 %v4062
        %v4886 = vpop.f32.mrb[0].mxu0
        %v4887 = vadd.f32 0.0, %v4886
        %v4888 = vpop.f32.mrb[0].mxu0
        %v4889 = vpop.f32.mrb[0].mxu0
        %v4890 = vpop.f32.mrb[0].mxu0
        %4891 = vdwg.mxu0
        %v4892 = vpack.c.bf16 %v4882, %v4879
        %v4893 = vpack.c.bf16 %v4887, %v4887
        %v4897 = vunpack.c.l.b16 %v4832
        %v4898 = vunpack.c.l.b16 %v4833
        %v4899 = vunpack.c.l.b16 %v4834
        %v4900 = vpack.c.b16 %v4898, %v4897
        %v4901 = vpack.c.b16 %v4899, %v4899
        %v4903 = vsel %vm567, %v4900, 0
        %v4906 = vsel %vm567, %v4901, 0
        %v4909 = vsel %vm574, %v4893, 0
        %4911 = vmatprep.subr.bf16.mxu0 0
        %4912 = vmatpush1.bf16.msra.mxu0 %v4892
        %4913 = vmatprep.subr.bf16.mxu0 0
        %4914 = vmatpush1.bf16.msra.mxu0 %v4909
        %4915 = vmatprep.subr.bf16.mxu0 0
        %4916 = vmatpush1.bf16.msra.mxu0 0
        %4917 = vmatprep.subr.bf16.mxu0 0
        %4918 = vmatpush1.bf16.msra.mxu0 0
        %4919 = vmatprep.subr.bf16.mxu0 0
        %4920 = vmatpush1.bf16.msra.mxu0 0
        %4921 = vmatprep.subr.bf16.mxu0 0
        %4922 = vmatpush1.bf16.msra.mxu0 0
        %4923 = vmatprep.subr.bf16.mxu0 0
        %4924 = vmatpush1.bf16.msra.mxu0 0
        %4925 = vmatprep.subr.bf16.mxu0 0
        %4926 = vmatpush1.bf16.msra.mxu0 0
        %4927 = vmatprep.subr.bf16.mxu0 0
        %4928 = vmatpush1.bf16.msra.mxu0 0
        %4929 = vmatprep.subr.bf16.mxu0 0
        %4930 = vmatpush1.bf16.msra.mxu0 0
        %4931 = vmatprep.subr.bf16.mxu0 0
        %4932 = vmatpush1.bf16.msra.mxu0 0
        %4933 = vmatprep.subr.bf16.mxu0 0
        %4934 = vmatpush1.bf16.msra.mxu0 0
        %4935 = vmatprep.subr.bf16.mxu0 0
        %4936 = vmatpush1.bf16.msra.mxu0 0
        %4937 = vmatprep.subr.bf16.mxu0 0
        %4938 = vmatpush1.bf16.msra.mxu0 0
        %4939 = vmatprep.subr.bf16.mxu0 0
        %4940 = vmatpush1.bf16.msra.mxu0 0
        %4941 = vmatprep.subr.bf16.mxu0 0
        %4942 = vmatpush1.bf16.msra.mxu0 0
        %4943 = vmatprep.mubr.bf16.mxu0 0
        %4944 = vmatmul.mubr.bf16.gmra.mrb[0].mxu0 %v4903
        %v4945 = vpop.f32.mrb[0].mxu0
        %v4946 = vadd.f32 0.0, %v4945
        %v4947 = vpop.f32.mrb[0].mxu0
        %v4948 = vpop.f32.mrb[0].mxu0
        %v4949 = vadd.f32 0.0, %v4948
        %v4950 = vpop.f32.mrb[0].mxu0
        %4951 = vmatprep.mubr.bf16.mxu0 0
        %4952 = vmatmul.mubr.bf16.gmra.mrb[0].mxu0 %v4906
        %v4953 = vpop.f32.mrb[0].mxu0
        %v4954 = vadd.f32 0.0, %v4953
        %v4955 = vpop.f32.mrb[0].mxu0
        %v4956 = vpop.f32.mrb[0].mxu0
        %v4957 = vpop.f32.mrb[0].mxu0
        %4958 = vdwg.mxu0
        %v4959 = vadd.f32 %v4828, %v4946
        %v4960 = vadd.f32 %v4829, %v4949
        %v4961 = vadd.f32 %v4830, %v4954
        %s4962 = scalar_lea.vmem %s1, 300
        %v4963 = vld [vmem:[%s4962] sm:$0xf]
        %v4964 = vld [vmem:[%s4962 + $0x4] sm:$0xf]
        %v4965 = vld [vmem:[%s4962 + $0x8] sm:$0xf]
        %s4966 = scalar_lea.vmem %s7, 56
        %v4967 = vld [vmem:[%s4966] sm:$0xf]
        %v4968 = vld [vmem:[%s4966 + $0x4] sm:$0xf]
        %v4971 = vunpack.c.l.b16 %v4967
        %v4972 = vunpack.c.l.b16 %v4968
        %v4973 = vpack.c.b16 %v4972, %v4971
        %4975 = vmatprep.subr.bf16.mxu0 0
        %4976 = vmatpush1.bf16.msra.mxu0 %v4973
        %4977 = vmatprep.subr.bf16.mxu0 0
        %4978 = vmatpush1.bf16.msra.mxu0 0
        %4979 = vmatprep.subr.bf16.mxu0 0
        %4980 = vmatpush1.bf16.msra.mxu0 0
        %4981 = vmatprep.subr.bf16.mxu0 0
        %4982 = vmatpush1.bf16.msra.mxu0 0
        %4983 = vmatprep.subr.bf16.mxu0 0
        %4984 = vmatpush1.bf16.msra.mxu0 0
        %4985 = vmatprep.subr.bf16.mxu0 0
        %4986 = vmatpush1.bf16.msra.mxu0 0
        %4987 = vmatprep.subr.bf16.mxu0 0
        %4988 = vmatpush1.bf16.msra.mxu0 0
        %4989 = vmatprep.subr.bf16.mxu0 0
        %4990 = vmatpush1.bf16.msra.mxu0 0
        %4991 = vmatprep.subr.bf16.mxu0 0
        %4992 = vmatpush1.bf16.msra.mxu0 0
        %4993 = vmatprep.subr.bf16.mxu0 0
        %4994 = vmatpush1.bf16.msra.mxu0 0
        %4995 = vmatprep.subr.bf16.mxu0 0
        %4996 = vmatpush1.bf16.msra.mxu0 0
        %4997 = vmatprep.subr.bf16.mxu0 0
        %4998 = vmatpush1.bf16.msra.mxu0 0
        %4999 = vmatprep.subr.bf16.mxu0 0
        %5000 = vmatpush1.bf16.msra.mxu0 0
        %5001 = vmatprep.subr.bf16.mxu0 0
        %5002 = vmatpush1.bf16.msra.mxu0 0
        %5003 = vmatprep.subr.bf16.mxu0 0
        %5004 = vmatpush1.bf16.msra.mxu0 0
        %5005 = vmatprep.subr.bf16.mxu0 0
        %5006 = vmatpush1.bf16.msra.mxu0 0
        %5007 = vmatprep.mubr.bf16.mxu0 0
        %5008 = vmatmul.mubr.bf16.gmra.mrb[0].mxu0 %v4059
        %v5009 = vpop.f32.mrb[0].mxu0
        %v5010 = vadd.f32 0.0, %v5009
        %v5011 = vpop.f32.mrb[0].mxu0
        %v5012 = vpop.f32.mrb[0].mxu0
        %v5013 = vadd.f32 0.0, %v5012
        %v5014 = vpop.f32.mrb[0].mxu0
        %5015 = vmatprep.mubr.bf16.mxu0 0
        %5016 = vmatmul.mubr.bf16.gmra.mrb[0].mxu0 %v4062
        %v5017 = vpop.f32.mrb[0].mxu0
        %v5018 = vadd.f32 0.0, %v5017
        %v5019 = vpop.f32.mrb[0].mxu0
        %v5020 = vpop.f32.mrb[0].mxu0
        %v5021 = vpop.f32.mrb[0].mxu0
        %5022 = vdwg.mxu0
        %v5023 = vpack.c.bf16 %v5013, %v5010
        %v5024 = vpack.c.bf16 %v5018, %v5018
        %v5028 = vunpack.c.l.b16 %v4963
        %v5029 = vunpack.c.l.b16 %v4964
        %v5030 = vunpack.c.l.b16 %v4965
        %v5031 = vpack.c.b16 %v5029, %v5028
        %v5032 = vpack.c.b16 %v5030, %v5030
        %v5034 = vsel %vm567, %v5031, 0
        %v5037 = vsel %vm567, %v5032, 0
        %v5040 = vsel %vm574, %v5024, 0
        %5042 = vmatprep.subr.bf16.mxu0 0
        %5043 = vmatpush1.bf16.msra.mxu0 %v5023
        %5044 = vmatprep.subr.bf16.mxu0 0
        %5045 = vmatpush1.bf16.msra.mxu0 %v5040
        %5046 = vmatprep.subr.bf16.mxu0 0
        %5047 = vmatpush1.bf16.msra.mxu0 0
        %5048 = vmatprep.subr.bf16.mxu0 0
        %5049 = vmatpush1.bf16.msra.mxu0 0
        %5050 = vmatprep.subr.bf16.mxu0 0
        %5051 = vmatpush1.bf16.msra.mxu0 0
        %5052 = vmatprep.subr.bf16.mxu0 0
        %5053 = vmatpush1.bf16.msra.mxu0 0
        %5054 = vmatprep.subr.bf16.mxu0 0
        %5055 = vmatpush1.bf16.msra.mxu0 0
        %5056 = vmatprep.subr.bf16.mxu0 0
        %5057 = vmatpush1.bf16.msra.mxu0 0
        %5058 = vmatprep.subr.bf16.mxu0 0
        %5059 = vmatpush1.bf16.msra.mxu0 0
        %5060 = vmatprep.subr.bf16.mxu0 0
        %5061 = vmatpush1.bf16.msra.mxu0 0
        %5062 = vmatprep.subr.bf16.mxu0 0
        %5063 = vmatpush1.bf16.msra.mxu0 0
        %5064 = vmatprep.subr.bf16.mxu0 0
        %5065 = vmatpush1.bf16.msra.mxu0 0
        %5066 = vmatprep.subr.bf16.mxu0 0
        %5067 = vmatpush1.bf16.msra.mxu0 0
        %5068 = vmatprep.subr.bf16.mxu0 0
        %5069 = vmatpush1.bf16.msra.mxu0 0
        %5070 = vmatprep.subr.bf16.mxu0 0
        %5071 = vmatpush1.bf16.msra.mxu0 0
        %5072 = vmatprep.subr.bf16.mxu0 0
        %5073 = vmatpush1.bf16.msra.mxu0 0
        %5074 = vmatprep.mubr.bf16.mxu0 0
        %5075 = vmatmul.mubr.bf16.gmra.mrb[0].mxu0 %v5034
        %v5076 = vpop.f32.mrb[0].mxu0
        %v5077 = vadd.f32 0.0, %v5076
        %v5078 = vpop.f32.mrb[0].mxu0
        %v5079 = vpop.f32.mrb[0].mxu0
        %v5080 = vadd.f32 0.0, %v5079
        %v5081 = vpop.f32.mrb[0].mxu0
        %5082 = vmatprep.mubr.bf16.mxu0 0
        %5083 = vmatmul.mubr.bf16.gmra.mrb[0].mxu0 %v5037
        %v5084 = vpop.f32.mrb[0].mxu0
        %v5085 = vadd.f32 0.0, %v5084
        %v5086 = vpop.f32.mrb[0].mxu0
        %v5087 = vpop.f32.mrb[0].mxu0
        %v5088 = vpop.f32.mrb[0].mxu0
        %5089 = vdwg.mxu0
        %v5090 = vadd.f32 %v4959, %v5077
        %v5091 = vadd.f32 %v4960, %v5080
        %v5092 = vadd.f32 %v4961, %v5085
        %s5093 = scalar_lea.vmem %s1, 312
        %v5094 = vld [vmem:[%s5093] sm:$0xf]
        %v5095 = vld [vmem:[%s5093 + $0x4] sm:$0xf]
        %v5096 = vld [vmem:[%s5093 + $0x8] sm:$0xf]
        %s5097 = scalar_lea.vmem %s7, 64
        %v5098 = vld [vmem:[%s5097] sm:$0xf]
        %v5099 = vld [vmem:[%s5097 + $0x4] sm:$0xf]
        %v5102 = vunpack.c.l.b16 %v5098
        %v5103 = vunpack.c.l.b16 %v5099
        %v5104 = vpack.c.b16 %v5103, %v5102
        %5106 = vmatprep.subr.bf16.mxu0 0
        %5107 = vmatpush1.bf16.msra.mxu0 %v5104
        %5108 = vmatprep.subr.bf16.mxu0 0
        %5109 = vmatpush1.bf16.msra.mxu0 0
        %5110 = vmatprep.subr.bf16.mxu0 0
        %5111 = vmatpush1.bf16.msra.mxu0 0
        %5112 = vmatprep.subr.bf16.mxu0 0
        %5113 = vmatpush1.bf16.msra.mxu0 0
        %5114 = vmatprep.subr.bf16.mxu0 0
        %5115 = vmatpush1.bf16.msra.mxu0 0
        %5116 = vmatprep.subr.bf16.mxu0 0
        %5117 = vmatpush1.bf16.msra.mxu0 0
        %5118 = vmatprep.subr.bf16.mxu0 0
        %5119 = vmatpush1.bf16.msra.mxu0 0
        %5120 = vmatprep.subr.bf16.mxu0 0
        %5121 = vmatpush1.bf16.msra.mxu0 0
        %5122 = vmatprep.subr.bf16.mxu0 0
        %5123 = vmatpush1.bf16.msra.mxu0 0
        %5124 = vmatprep.subr.bf16.mxu0 0
        %5125 = vmatpush1.bf16.msra.mxu0 0
        %5126 = vmatprep.subr.bf16.mxu0 0
        %5127 = vmatpush1.bf16.msra.mxu0 0
        %5128 = vmatprep.subr.bf16.mxu0 0
        %5129 = vmatpush1.bf16.msra.mxu0 0
        %5130 = vmatprep.subr.bf16.mxu0 0
        %5131 = vmatpush1.bf16.msra.mxu0 0
        %5132 = vmatprep.subr.bf16.mxu0 0
        %5133 = vmatpush1.bf16.msra.mxu0 0
        %5134 = vmatprep.subr.bf16.mxu0 0
        %5135 = vmatpush1.bf16.msra.mxu0 0
        %5136 = vmatprep.subr.bf16.mxu0 0
        %5137 = vmatpush1.bf16.msra.mxu0 0
        %5138 = vmatprep.mubr.bf16.mxu0 0
        %5139 = vmatmul.mubr.bf16.gmra.mrb[0].mxu0 %v4059
        %v5140 = vpop.f32.mrb[0].mxu0
        %v5141 = vadd.f32 0.0, %v5140
        %v5142 = vpop.f32.mrb[0].mxu0
        %v5143 = vpop.f32.mrb[0].mxu0
        %v5144 = vadd.f32 0.0, %v5143
        %v5145 = vpop.f32.mrb[0].mxu0
        %5146 = vmatprep.mubr.bf16.mxu0 0
        %5147 = vmatmul.mubr.bf16.gmra.mrb[0].mxu0 %v4062
        %v5148 = vpop.f32.mrb[0].mxu0
        %v5149 = vadd.f32 0.0, %v5148
        %v5150 = vpop.f32.mrb[0].mxu0
        %v5151 = vpop.f32.mrb[0].mxu0
        %v5152 = vpop.f32.mrb[0].mxu0
        %5153 = vdwg.mxu0
        %v5154 = vpack.c.bf16 %v5144, %v5141
        %v5155 = vpack.c.bf16 %v5149, %v5149
        %v5159 = vunpack.c.l.b16 %v5094
        %v5160 = vunpack.c.l.b16 %v5095
        %v5161 = vunpack.c.l.b16 %v5096
        %v5162 = vpack.c.b16 %v5160, %v5159
        %v5163 = vpack.c.b16 %v5161, %v5161
        %v5165 = vsel %vm567, %v5162, 0
        %v5168 = vsel %vm567, %v5163, 0
        %v5171 = vsel %vm574, %v5155, 0
        %5173 = vmatprep.subr.bf16.mxu0 0
        %5174 = vmatpush1.bf16.msra.mxu0 %v5154
        %5175 = vmatprep.subr.bf16.mxu0 0
        %5176 = vmatpush1.bf16.msra.mxu0 %v5171
        %5177 = vmatprep.subr.bf16.mxu0 0
        %5178 = vmatpush1.bf16.msra.mxu0 0
        %5179 = vmatprep.subr.bf16.mxu0 0
        %5180 = vmatpush1.bf16.msra.mxu0 0
        %5181 = vmatprep.subr.bf16.mxu0 0
        %5182 = vmatpush1.bf16.msra.mxu0 0
        %5183 = vmatprep.subr.bf16.mxu0 0
        %5184 = vmatpush1.bf16.msra.mxu0 0
        %5185 = vmatprep.subr.bf16.mxu0 0
        %5186 = vmatpush1.bf16.msra.mxu0 0
        %5187 = vmatprep.subr.bf16.mxu0 0
        %5188 = vmatpush1.bf16.msra.mxu0 0
        %5189 = vmatprep.subr.bf16.mxu0 0
        %5190 = vmatpush1.bf16.msra.mxu0 0
        %5191 = vmatprep.subr.bf16.mxu0 0
        %5192 = vmatpush1.bf16.msra.mxu0 0
        %5193 = vmatprep.subr.bf16.mxu0 0
        %5194 = vmatpush1.bf16.msra.mxu0 0
        %5195 = vmatprep.subr.bf16.mxu0 0
        %5196 = vmatpush1.bf16.msra.mxu0 0
        %5197 = vmatprep.subr.bf16.mxu0 0
        %5198 = vmatpush1.bf16.msra.mxu0 0
        %5199 = vmatprep.subr.bf16.mxu0 0
        %5200 = vmatpush1.bf16.msra.mxu0 0
        %5201 = vmatprep.subr.bf16.mxu0 0
        %5202 = vmatpush1.bf16.msra.mxu0 0
        %5203 = vmatprep.subr.bf16.mxu0 0
        %5204 = vmatpush1.bf16.msra.mxu0 0
        %5205 = vmatprep.mubr.bf16.mxu0 0
        %5206 = vmatmul.mubr.bf16.gmra.mrb[0].mxu0 %v5165
        %v5207 = vpop.f32.mrb[0].mxu0
        %v5208 = vadd.f32 0.0, %v5207
        %v5209 = vpop.f32.mrb[0].mxu0
        %v5210 = vpop.f32.mrb[0].mxu0
        %v5211 = vadd.f32 0.0, %v5210
        %v5212 = vpop.f32.mrb[0].mxu0
        %5213 = vmatprep.mubr.bf16.mxu0 0
        %5214 = vmatmul.mubr.bf16.gmra.mrb[0].mxu0 %v5168
        %v5215 = vpop.f32.mrb[0].mxu0
        %v5216 = vadd.f32 0.0, %v5215
        %v5217 = vpop.f32.mrb[0].mxu0
        %v5218 = vpop.f32.mrb[0].mxu0
        %v5219 = vpop.f32.mrb[0].mxu0
        %5220 = vdwg.mxu0
        %v5221 = vadd.f32 %v5090, %v5208
        %v5222 = vadd.f32 %v5091, %v5211
        %v5223 = vadd.f32 %v5092, %v5216
        %s5224 = scalar_lea.vmem %s2, 48
        %v5225 = vld [vmem:[%s5224] sm:$0xff]
        %v5226 = vld [vmem:[%s5224 + $0x8] sm:$0xff]
        %v5227 = vld [vmem:[%s5224 + $0x10] sm:$0xff]
        %5229 = vset.pattern.permute.xlu0 0
        %5230 = vperm.xlu0 %5229, %v5225
        %v5231 = vpop.permute.xlu0 %5230
        %5234 = vset.pattern.permute.xlu0 0
        %5235 = vperm.xlu0 %5234, %v5226
        %v5236 = vpop.permute.xlu0 %5235
        %5239 = vset.pattern.permute.xlu0 0
        %5240 = vperm.xlu0 %5239, %v5227
        %v5241 = vpop.permute.xlu0 %5240
        %v5243 = vadd.f32 %v5221, %v5231
        %v5244 = vadd.f32 %v5222, %v5236
        %v5245 = vadd.f32 %v5223, %v5241
        %v5246 = vmul.f32 %v5243, 0.2
        %v5247 = vmul.f32 %v5244, 0.2
        %v5248 = vmul.f32 %v5245, 0.2
        %v5249 = vmax.f32 %v5243, %v5246
        %v5250 = vmax.f32 %v5244, %v5247
        %v5251 = vmax.f32 %v5245, %v5248
        %v5252 = vpack.c.bf16 %v5250, %v5249
        %v5253 = vpack.c.bf16 %v5251, %v5251
        %s5254 = scalar_lea.vmem %s1, 324
        %v5255 = vld [vmem:[%s5254] sm:$0xf]
        %v5256 = vld [vmem:[%s5254 + $0x4] sm:$0xf]
        %v5257 = vld [vmem:[%s5254 + $0x8] sm:$0xf]
        %v5259 = vsel %vm4057, %v5252, 0
        %v5262 = vsel %vm4057, %v5253, 0
        %5264 = vmatprep.subr.bf16.mxu0 0
        %5265 = vmatpush1.bf16.msra.mxu0 %v4055
        %5266 = vmatprep.subr.bf16.mxu0 0
        %5267 = vmatpush1.bf16.msra.mxu0 0
        %5268 = vmatprep.subr.bf16.mxu0 0
        %5269 = vmatpush1.bf16.msra.mxu0 0
        %5270 = vmatprep.subr.bf16.mxu0 0
        %5271 = vmatpush1.bf16.msra.mxu0 0
        %5272 = vmatprep.subr.bf16.mxu0 0
        %5273 = vmatpush1.bf16.msra.mxu0 0
        %5274 = vmatprep.subr.bf16.mxu0 0
        %5275 = vmatpush1.bf16.msra.mxu0 0
        %5276 = vmatprep.subr.bf16.mxu0 0
        %5277 = vmatpush1.bf16.msra.mxu0 0
        %5278 = vmatprep.subr.bf16.mxu0 0
        %5279 = vmatpush1.bf16.msra.mxu0 0
        %5280 = vmatprep.subr.bf16.mxu0 0
        %5281 = vmatpush1.bf16.msra.mxu0 0
        %5282 = vmatprep.subr.bf16.mxu0 0
        %5283 = vmatpush1.bf16.msra.mxu0 0
        %5284 = vmatprep.subr.bf16.mxu0 0
        %5285 = vmatpush1.bf16.msra.mxu0 0
        %5286 = vmatprep.subr.bf16.mxu0 0
        %5287 = vmatpush1.bf16.msra.mxu0 0
        %5288 = vmatprep.subr.bf16.mxu0 0
        %5289 = vmatpush1.bf16.msra.mxu0 0
        %5290 = vmatprep.subr.bf16.mxu0 0
        %5291 = vmatpush1.bf16.msra.mxu0 0
        %5292 = vmatprep.subr.bf16.mxu0 0
        %5293 = vmatpush1.bf16.msra.mxu0 0
        %5294 = vmatprep.subr.bf16.mxu0 0
        %5295 = vmatpush1.bf16.msra.mxu0 0
        %5296 = vmatprep.mubr.bf16.mxu0 0
        %5297 = vmatmul.mubr.bf16.gmra.mrb[0].mxu0 %v5259
        %v5298 = vpop.f32.mrb[0].mxu0
        %v5299 = vadd.f32 0.0, %v5298
        %v5300 = vpop.f32.mrb[0].mxu0
        %v5301 = vpop.f32.mrb[0].mxu0
        %v5302 = vadd.f32 0.0, %v5301
        %v5303 = vpop.f32.mrb[0].mxu0
        %5304 = vmatprep.mubr.bf16.mxu0 0
        %5305 = vmatmul.mubr.bf16.gmra.mrb[0].mxu0 %v5262
        %v5306 = vpop.f32.mrb[0].mxu0
        %v5307 = vadd.f32 0.0, %v5306
        %v5308 = vpop.f32.mrb[0].mxu0
        %v5309 = vpop.f32.mrb[0].mxu0
        %v5310 = vpop.f32.mrb[0].mxu0
        %5311 = vdwg.mxu0
        %v5312 = vpack.c.bf16 %v5302, %v5299
        %v5313 = vpack.c.bf16 %v5307, %v5307
        %s5314 = scalar_lea.vmem %s1, 336
        %v5315 = vld [vmem:[%s5314] sm:$0xf]
        %v5316 = vld [vmem:[%s5314 + $0x4] sm:$0xf]
        %v5317 = vld [vmem:[%s5314 + $0x8] sm:$0xf]
        %5318 = vmatprep.subr.bf16.mxu0 0
        %5319 = vmatpush1.bf16.msra.mxu0 %v4125
        %5320 = vmatprep.subr.bf16.mxu0 0
        %5321 = vmatpush1.bf16.msra.mxu0 0
        %5322 = vmatprep.subr.bf16.mxu0 0
        %5323 = vmatpush1.bf16.msra.mxu0 0
        %5324 = vmatprep.subr.bf16.mxu0 0
        %5325 = vmatpush1.bf16.msra.mxu0 0
        %5326 = vmatprep.subr.bf16.mxu0 0
        %5327 = vmatpush1.bf16.msra.mxu0 0
        %5328 = vmatprep.subr.bf16.mxu0 0
        %5329 = vmatpush1.bf16.msra.mxu0 0
        %5330 = vmatprep.subr.bf16.mxu0 0
        %5331 = vmatpush1.bf16.msra.mxu0 0
        %5332 = vmatprep.subr.bf16.mxu0 0
        %5333 = vmatpush1.bf16.msra.mxu0 0
        %5334 = vmatprep.subr.bf16.mxu0 0
        %5335 = vmatpush1.bf16.msra.mxu0 0
        %5336 = vmatprep.subr.bf16.mxu0 0
        %5337 = vmatpush1.bf16.msra.mxu0 0
        %5338 = vmatprep.subr.bf16.mxu0 0
        %5339 = vmatpush1.bf16.msra.mxu0 0
        %5340 = vmatprep.subr.bf16.mxu0 0
        %5341 = vmatpush1.bf16.msra.mxu0 0
        %5342 = vmatprep.subr.bf16.mxu0 0
        %5343 = vmatpush1.bf16.msra.mxu0 0
        %5344 = vmatprep.subr.bf16.mxu0 0
        %5345 = vmatpush1.bf16.msra.mxu0 0
        %5346 = vmatprep.subr.bf16.mxu0 0
        %5347 = vmatpush1.bf16.msra.mxu0 0
        %5348 = vmatprep.subr.bf16.mxu0 0
        %5349 = vmatpush1.bf16.msra.mxu0 0
        %5350 = vmatprep.mubr.bf16.mxu0 0
        %5351 = vmatmul.mubr.bf16.gmra.mrb[0].mxu0 %v5259
        %v5352 = vpop.f32.mrb[0].mxu0
        %v5353 = vadd.f32 0.0, %v5352
        %v5354 = vpop.f32.mrb[0].mxu0
        %v5355 = vpop.f32.mrb[0].mxu0
        %v5356 = vadd.f32 0.0, %v5355
        %v5357 = vpop.f32.mrb[0].mxu0
        %5358 = vmatprep.mubr.bf16.mxu0 0
        %5359 = vmatmul.mubr.bf16.gmra.mrb[0].mxu0 %v5262
        %v5360 = vpop.f32.mrb[0].mxu0
        %v5361 = vadd.f32 0.0, %v5360
        %v5362 = vpop.f32.mrb[0].mxu0
        %v5363 = vpop.f32.mrb[0].mxu0
        %v5364 = vpop.f32.mrb[0].mxu0
        %5365 = vdwg.mxu0
        %v5366 = vpack.c.bf16 %v5356, %v5353
        %v5367 = vpack.c.bf16 %v5361, %v5361
        %v5371 = vunpack.c.l.b16 %v5315
        %v5372 = vunpack.c.l.b16 %v5316
        %v5373 = vunpack.c.l.b16 %v5317
        %v5374 = vpack.c.b16 %v5372, %v5371
        %v5375 = vpack.c.b16 %v5373, %v5373
        %v5377 = vsel %vm567, %v5374, 0
        %v5380 = vsel %vm567, %v5375, 0
        %v5383 = vsel %vm574, %v5367, 0
        %5385 = vmatprep.subr.bf16.mxu0 0
        %5386 = vmatpush1.bf16.msra.mxu0 %v5366
        %5387 = vmatprep.subr.bf16.mxu0 0
        %5388 = vmatpush1.bf16.msra.mxu0 %v5383
        %5389 = vmatprep.subr.bf16.mxu0 0
        %5390 = vmatpush1.bf16.msra.mxu0 0
        %5391 = vmatprep.subr.bf16.mxu0 0
        %5392 = vmatpush1.bf16.msra.mxu0 0
        %5393 = vmatprep.subr.bf16.mxu0 0
        %5394 = vmatpush1.bf16.msra.mxu0 0
        %5395 = vmatprep.subr.bf16.mxu0 0
        %5396 = vmatpush1.bf16.msra.mxu0 0
        %5397 = vmatprep.subr.bf16.mxu0 0
        %5398 = vmatpush1.bf16.msra.mxu0 0
        %5399 = vmatprep.subr.bf16.mxu0 0
        %5400 = vmatpush1.bf16.msra.mxu0 0
        %5401 = vmatprep.subr.bf16.mxu0 0
        %5402 = vmatpush1.bf16.msra.mxu0 0
        %5403 = vmatprep.subr.bf16.mxu0 0
        %5404 = vmatpush1.bf16.msra.mxu0 0
        %5405 = vmatprep.subr.bf16.mxu0 0
        %5406 = vmatpush1.bf16.msra.mxu0 0
        %5407 = vmatprep.subr.bf16.mxu0 0
        %5408 = vmatpush1.bf16.msra.mxu0 0
        %5409 = vmatprep.subr.bf16.mxu0 0
        %5410 = vmatpush1.bf16.msra.mxu0 0
        %5411 = vmatprep.subr.bf16.mxu0 0
        %5412 = vmatpush1.bf16.msra.mxu0 0
        %5413 = vmatprep.subr.bf16.mxu0 0
        %5414 = vmatpush1.bf16.msra.mxu0 0
        %5415 = vmatprep.subr.bf16.mxu0 0
        %5416 = vmatpush1.bf16.msra.mxu0 0
        %5417 = vmatprep.mubr.bf16.mxu0 0
        %5418 = vmatmul.mubr.bf16.gmra.mrb[0].mxu0 %v5377
        %v5419 = vpop.f32.mrb[0].mxu0
        %v5420 = vadd.f32 0.0, %v5419
        %v5421 = vpop.f32.mrb[0].mxu0
        %v5422 = vpop.f32.mrb[0].mxu0
        %v5423 = vadd.f32 0.0, %v5422
        %v5424 = vpop.f32.mrb[0].mxu0
        %5425 = vmatprep.mubr.bf16.mxu0 0
        %5426 = vmatmul.mubr.bf16.gmra.mrb[0].mxu0 %v5380
        %v5427 = vpop.f32.mrb[0].mxu0
        %v5428 = vadd.f32 0.0, %v5427
        %v5429 = vpop.f32.mrb[0].mxu0
        %v5430 = vpop.f32.mrb[0].mxu0
        %v5431 = vpop.f32.mrb[0].mxu0
        %5432 = vdwg.mxu0
        %v5436 = vunpack.c.l.b16 %v5255
        %v5437 = vunpack.c.l.b16 %v5256
        %v5438 = vunpack.c.l.b16 %v5257
        %v5439 = vpack.c.b16 %v5437, %v5436
        %v5440 = vpack.c.b16 %v5438, %v5438
        %v5442 = vsel %vm567, %v5439, 0
        %v5445 = vsel %vm567, %v5440, 0
        %v5448 = vsel %vm574, %v5313, 0
        %5450 = vmatprep.subr.bf16.mxu0 0
        %5451 = vmatpush1.bf16.msra.mxu0 %v5312
        %5452 = vmatprep.subr.bf16.mxu0 0
        %5453 = vmatpush1.bf16.msra.mxu0 %v5448
        %5454 = vmatprep.subr.bf16.mxu0 0
        %5455 = vmatpush1.bf16.msra.mxu0 0
        %5456 = vmatprep.subr.bf16.mxu0 0
        %5457 = vmatpush1.bf16.msra.mxu0 0
        %5458 = vmatprep.subr.bf16.mxu0 0
        %5459 = vmatpush1.bf16.msra.mxu0 0
        %5460 = vmatprep.subr.bf16.mxu0 0
        %5461 = vmatpush1.bf16.msra.mxu0 0
        %5462 = vmatprep.subr.bf16.mxu0 0
        %5463 = vmatpush1.bf16.msra.mxu0 0
        %5464 = vmatprep.subr.bf16.mxu0 0
        %5465 = vmatpush1.bf16.msra.mxu0 0
        %5466 = vmatprep.subr.bf16.mxu0 0
        %5467 = vmatpush1.bf16.msra.mxu0 0
        %5468 = vmatprep.subr.bf16.mxu0 0
        %5469 = vmatpush1.bf16.msra.mxu0 0
        %5470 = vmatprep.subr.bf16.mxu0 0
        %5471 = vmatpush1.bf16.msra.mxu0 0
        %5472 = vmatprep.subr.bf16.mxu0 0
        %5473 = vmatpush1.bf16.msra.mxu0 0
        %5474 = vmatprep.subr.bf16.mxu0 0
        %5475 = vmatpush1.bf16.msra.mxu0 0
        %5476 = vmatprep.subr.bf16.mxu0 0
        %5477 = vmatpush1.bf16.msra.mxu0 0
        %5478 = vmatprep.subr.bf16.mxu0 0
        %5479 = vmatpush1.bf16.msra.mxu0 0
        %5480 = vmatprep.subr.bf16.mxu0 0
        %5481 = vmatpush1.bf16.msra.mxu0 0
        %5482 = vmatprep.mubr.bf16.mxu0 0
        %5483 = vmatmul.mubr.bf16.gmra.mrb[0].mxu0 %v5442
        %v5484 = vpop.f32.mrb[0].mxu0
        %v5485 = vadd.f32 %v5420, %v5484
        %v5486 = vpop.f32.mrb[0].mxu0
        %v5487 = vpop.f32.mrb[0].mxu0
        %v5488 = vadd.f32 %v5423, %v5487
        %v5489 = vpop.f32.mrb[0].mxu0
        %5490 = vmatprep.mubr.bf16.mxu0 0
        %5491 = vmatmul.mubr.bf16.gmra.mrb[0].mxu0 %v5445
        %v5492 = vpop.f32.mrb[0].mxu0
        %v5493 = vadd.f32 %v5428, %v5492
        %v5494 = vpop.f32.mrb[0].mxu0
        %v5495 = vpop.f32.mrb[0].mxu0
        %v5496 = vpop.f32.mrb[0].mxu0
        %5497 = vdwg.mxu0
        %s5498 = scalar_lea.vmem %s1, 348
        %v5499 = vld [vmem:[%s5498] sm:$0xf]
        %v5500 = vld [vmem:[%s5498 + $0x4] sm:$0xf]
        %v5501 = vld [vmem:[%s5498 + $0x8] sm:$0xf]
        %5502 = vmatprep.subr.bf16.mxu0 0
        %5503 = vmatpush1.bf16.msra.mxu0 %v4318
        %5504 = vmatprep.subr.bf16.mxu0 0
        %5505 = vmatpush1.bf16.msra.mxu0 0
        %5506 = vmatprep.subr.bf16.mxu0 0
        %5507 = vmatpush1.bf16.msra.mxu0 0
        %5508 = vmatprep.subr.bf16.mxu0 0
        %5509 = vmatpush1.bf16.msra.mxu0 0
        %5510 = vmatprep.subr.bf16.mxu0 0
        %5511 = vmatpush1.bf16.msra.mxu0 0
        %5512 = vmatprep.subr.bf16.mxu0 0
        %5513 = vmatpush1.bf16.msra.mxu0 0
        %5514 = vmatprep.subr.bf16.mxu0 0
        %5515 = vmatpush1.bf16.msra.mxu0 0
        %5516 = vmatprep.subr.bf16.mxu0 0
        %5517 = vmatpush1.bf16.msra.mxu0 0
        %5518 = vmatprep.subr.bf16.mxu0 0
        %5519 = vmatpush1.bf16.msra.mxu0 0
        %5520 = vmatprep.subr.bf16.mxu0 0
        %5521 = vmatpush1.bf16.msra.mxu0 0
        %5522 = vmatprep.subr.bf16.mxu0 0
        %5523 = vmatpush1.bf16.msra.mxu0 0
        %5524 = vmatprep.subr.bf16.mxu0 0
        %5525 = vmatpush1.bf16.msra.mxu0 0
        %5526 = vmatprep.subr.bf16.mxu0 0
        %5527 = vmatpush1.bf16.msra.mxu0 0
        %5528 = vmatprep.subr.bf16.mxu0 0
        %5529 = vmatpush1.bf16.msra.mxu0 0
        %5530 = vmatprep.subr.bf16.mxu0 0
        %5531 = vmatpush1.bf16.msra.mxu0 0
        %5532 = vmatprep.subr.bf16.mxu0 0
        %5533 = vmatpush1.bf16.msra.mxu0 0
        %5534 = vmatprep.mubr.bf16.mxu0 0
        %5535 = vmatmul.mubr.bf16.gmra.mrb[0].mxu0 %v5259
        %v5536 = vpop.f32.mrb[0].mxu0
        %v5537 = vadd.f32 0.0, %v5536
        %v5538 = vpop.f32.mrb[0].mxu0
        %v5539 = vpop.f32.mrb[0].mxu0
        %v5540 = vadd.f32 0.0, %v5539
        %v5541 = vpop.f32.mrb[0].mxu0
        %5542 = vmatprep.mubr.bf16.mxu0 0
        %5543 = vmatmul.mubr.bf16.gmra.mrb[0].mxu0 %v5262
        %v5544 = vpop.f32.mrb[0].mxu0
        %v5545 = vadd.f32 0.0, %v5544
        %v5546 = vpop.f32.mrb[0].mxu0
        %v5547 = vpop.f32.mrb[0].mxu0
        %v5548 = vpop.f32.mrb[0].mxu0
        %5549 = vdwg.mxu0
        %v5550 = vpack.c.bf16 %v5540, %v5537
        %v5551 = vpack.c.bf16 %v5545, %v5545
        %v5555 = vunpack.c.l.b16 %v5499
        %v5556 = vunpack.c.l.b16 %v5500
        %v5557 = vunpack.c.l.b16 %v5501
        %v5558 = vpack.c.b16 %v5556, %v5555
        %v5559 = vpack.c.b16 %v5557, %v5557
        %v5561 = vsel %vm567, %v5558, 0
        %v5564 = vsel %vm567, %v5559, 0
        %v5567 = vsel %vm574, %v5551, 0
        %5569 = vmatprep.subr.bf16.mxu0 0
        %5570 = vmatpush1.bf16.msra.mxu0 %v5550
        %5571 = vmatprep.subr.bf16.mxu0 0
        %5572 = vmatpush1.bf16.msra.mxu0 %v5567
        %5573 = vmatprep.subr.bf16.mxu0 0
        %5574 = vmatpush1.bf16.msra.mxu0 0
        %5575 = vmatprep.subr.bf16.mxu0 0
        %5576 = vmatpush1.bf16.msra.mxu0 0
        %5577 = vmatprep.subr.bf16.mxu0 0
        %5578 = vmatpush1.bf16.msra.mxu0 0
        %5579 = vmatprep.subr.bf16.mxu0 0
        %5580 = vmatpush1.bf16.msra.mxu0 0
        %5581 = vmatprep.subr.bf16.mxu0 0
        %5582 = vmatpush1.bf16.msra.mxu0 0
        %5583 = vmatprep.subr.bf16.mxu0 0
        %5584 = vmatpush1.bf16.msra.mxu0 0
        %5585 = vmatprep.subr.bf16.mxu0 0
        %5586 = vmatpush1.bf16.msra.mxu0 0
        %5587 = vmatprep.subr.bf16.mxu0 0
        %5588 = vmatpush1.bf16.msra.mxu0 0
        %5589 = vmatprep.subr.bf16.mxu0 0
        %5590 = vmatpush1.bf16.msra.mxu0 0
        %5591 = vmatprep.subr.bf16.mxu0 0
        %5592 = vmatpush1.bf16.msra.mxu0 0
        %5593 = vmatprep.subr.bf16.mxu0 0
        %5594 = vmatpush1.bf16.msra.mxu0 0
        %5595 = vmatprep.subr.bf16.mxu0 0
        %5596 = vmatpush1.bf16.msra.mxu0 0
        %5597 = vmatprep.subr.bf16.mxu0 0
        %5598 = vmatpush1.bf16.msra.mxu0 0
        %5599 = vmatprep.subr.bf16.mxu0 0
        %5600 = vmatpush1.bf16.msra.mxu0 0
        %5601 = vmatprep.mubr.bf16.mxu0 0
        %5602 = vmatmul.mubr.bf16.gmra.mrb[0].mxu0 %v5561
        %v5603 = vpop.f32.mrb[0].mxu0
        %v5604 = vadd.f32 0.0, %v5603
        %v5605 = vpop.f32.mrb[0].mxu0
        %v5606 = vpop.f32.mrb[0].mxu0
        %v5607 = vadd.f32 0.0, %v5606
        %v5608 = vpop.f32.mrb[0].mxu0
        %5609 = vmatprep.mubr.bf16.mxu0 0
        %5610 = vmatmul.mubr.bf16.gmra.mrb[0].mxu0 %v5564
        %v5611 = vpop.f32.mrb[0].mxu0
        %v5612 = vadd.f32 0.0, %v5611
        %v5613 = vpop.f32.mrb[0].mxu0
        %v5614 = vpop.f32.mrb[0].mxu0
        %v5615 = vpop.f32.mrb[0].mxu0
        %5616 = vdwg.mxu0
        %v5617 = vadd.f32 %v5485, %v5604
        %v5618 = vadd.f32 %v5488, %v5607
        %v5619 = vadd.f32 %v5493, %v5612
        %s5620 = scalar_lea.vmem %s1, 360
        %v5621 = vld [vmem:[%s5620] sm:$0xf]
        %v5622 = vld [vmem:[%s5620 + $0x4] sm:$0xf]
        %v5623 = vld [vmem:[%s5620 + $0x8] sm:$0xf]
        %5624 = vmatprep.subr.bf16.mxu0 0
        %5625 = vmatpush1.bf16.msra.mxu0 %v4449
        %5626 = vmatprep.subr.bf16.mxu0 0
        %5627 = vmatpush1.bf16.msra.mxu0 0
        %5628 = vmatprep.subr.bf16.mxu0 0
        %5629 = vmatpush1.bf16.msra.mxu0 0
        %5630 = vmatprep.subr.bf16.mxu0 0
        %5631 = vmatpush1.bf16.msra.mxu0 0
        %5632 = vmatprep.subr.bf16.mxu0 0
        %5633 = vmatpush1.bf16.msra.mxu0 0
        %5634 = vmatprep.subr.bf16.mxu0 0
        %5635 = vmatpush1.bf16.msra.mxu0 0
        %5636 = vmatprep.subr.bf16.mxu0 0
        %5637 = vmatpush1.bf16.msra.mxu0 0
        %5638 = vmatprep.subr.bf16.mxu0 0
        %5639 = vmatpush1.bf16.msra.mxu0 0
        %5640 = vmatprep.subr.bf16.mxu0 0
        %5641 = vmatpush1.bf16.msra.mxu0 0
        %5642 = vmatprep.subr.bf16.mxu0 0
        %5643 = vmatpush1.bf16.msra.mxu0 0
        %5644 = vmatprep.subr.bf16.mxu0 0
        %5645 = vmatpush1.bf16.msra.mxu0 0
        %5646 = vmatprep.subr.bf16.mxu0 0
        %5647 = vmatpush1.bf16.msra.mxu0 0
        %5648 = vmatprep.subr.bf16.mxu0 0
        %5649 = vmatpush1.bf16.msra.mxu0 0
        %5650 = vmatprep.subr.bf16.mxu0 0
        %5651 = vmatpush1.bf16.msra.mxu0 0
        %5652 = vmatprep.subr.bf16.mxu0 0
        %5653 = vmatpush1.bf16.msra.mxu0 0
        %5654 = vmatprep.subr.bf16.mxu0 0
        %5655 = vmatpush1.bf16.msra.mxu0 0
        %5656 = vmatprep.mubr.bf16.mxu0 0
        %5657 = vmatmul.mubr.bf16.gmra.mrb[0].mxu0 %v5259
        %v5658 = vpop.f32.mrb[0].mxu0
        %v5659 = vadd.f32 0.0, %v5658
        %v5660 = vpop.f32.mrb[0].mxu0
        %v5661 = vpop.f32.mrb[0].mxu0
        %v5662 = vadd.f32 0.0, %v5661
        %v5663 = vpop.f32.mrb[0].mxu0
        %5664 = vmatprep.mubr.bf16.mxu0 0
        %5665 = vmatmul.mubr.bf16.gmra.mrb[0].mxu0 %v5262
        %v5666 = vpop.f32.mrb[0].mxu0
        %v5667 = vadd.f32 0.0, %v5666
        %v5668 = vpop.f32.mrb[0].mxu0
        %v5669 = vpop.f32.mrb[0].mxu0
        %v5670 = vpop.f32.mrb[0].mxu0
        %5671 = vdwg.mxu0
        %v5672 = vpack.c.bf16 %v5662, %v5659
        %v5673 = vpack.c.bf16 %v5667, %v5667
        %v5677 = vunpack.c.l.b16 %v5621
        %v5678 = vunpack.c.l.b16 %v5622
        %v5679 = vunpack.c.l.b16 %v5623
        %v5680 = vpack.c.b16 %v5678, %v5677
        %v5681 = vpack.c.b16 %v5679, %v5679
        %v5683 = vsel %vm567, %v5680, 0
        %v5686 = vsel %vm567, %v5681, 0
        %v5689 = vsel %vm574, %v5673, 0
        %5691 = vmatprep.subr.bf16.mxu0 0
        %5692 = vmatpush1.bf16.msra.mxu0 %v5672
        %5693 = vmatprep.subr.bf16.mxu0 0
        %5694 = vmatpush1.bf16.msra.mxu0 %v5689
        %5695 = vmatprep.subr.bf16.mxu0 0
        %5696 = vmatpush1.bf16.msra.mxu0 0
        %5697 = vmatprep.subr.bf16.mxu0 0
        %5698 = vmatpush1.bf16.msra.mxu0 0
        %5699 = vmatprep.subr.bf16.mxu0 0
        %5700 = vmatpush1.bf16.msra.mxu0 0
        %5701 = vmatprep.subr.bf16.mxu0 0
        %5702 = vmatpush1.bf16.msra.mxu0 0
        %5703 = vmatprep.subr.bf16.mxu0 0
        %5704 = vmatpush1.bf16.msra.mxu0 0
        %5705 = vmatprep.subr.bf16.mxu0 0
        %5706 = vmatpush1.bf16.msra.mxu0 0
        %5707 = vmatprep.subr.bf16.mxu0 0
        %5708 = vmatpush1.bf16.msra.mxu0 0
        %5709 = vmatprep.subr.bf16.mxu0 0
        %5710 = vmatpush1.bf16.msra.mxu0 0
        %5711 = vmatprep.subr.bf16.mxu0 0
        %5712 = vmatpush1.bf16.msra.mxu0 0
        %5713 = vmatprep.subr.bf16.mxu0 0
        %5714 = vmatpush1.bf16.msra.mxu0 0
        %5715 = vmatprep.subr.bf16.mxu0 0
        %5716 = vmatpush1.bf16.msra.mxu0 0
        %5717 = vmatprep.subr.bf16.mxu0 0
        %5718 = vmatpush1.bf16.msra.mxu0 0
        %5719 = vmatprep.subr.bf16.mxu0 0
        %5720 = vmatpush1.bf16.msra.mxu0 0
        %5721 = vmatprep.subr.bf16.mxu0 0
        %5722 = vmatpush1.bf16.msra.mxu0 0
        %5723 = vmatprep.mubr.bf16.mxu0 0
        %5724 = vmatmul.mubr.bf16.gmra.mrb[0].mxu0 %v5683
        %v5725 = vpop.f32.mrb[0].mxu0
        %v5726 = vadd.f32 0.0, %v5725
        %v5727 = vpop.f32.mrb[0].mxu0
        %v5728 = vpop.f32.mrb[0].mxu0
        %v5729 = vadd.f32 0.0, %v5728
        %v5730 = vpop.f32.mrb[0].mxu0
        %5731 = vmatprep.mubr.bf16.mxu0 0
        %5732 = vmatmul.mubr.bf16.gmra.mrb[0].mxu0 %v5686
        %v5733 = vpop.f32.mrb[0].mxu0
        %v5734 = vadd.f32 0.0, %v5733
        %v5735 = vpop.f32.mrb[0].mxu0
        %v5736 = vpop.f32.mrb[0].mxu0
        %v5737 = vpop.f32.mrb[0].mxu0
        %5738 = vdwg.mxu0
        %v5739 = vadd.f32 %v5617, %v5726
        %v5740 = vadd.f32 %v5618, %v5729
        %v5741 = vadd.f32 %v5619, %v5734
        %s5742 = scalar_lea.vmem %s1, 372
        %v5743 = vld [vmem:[%s5742] sm:$0xf]
        %v5744 = vld [vmem:[%s5742 + $0x4] sm:$0xf]
        %v5745 = vld [vmem:[%s5742 + $0x8] sm:$0xf]
        %5746 = vmatprep.subr.bf16.mxu0 0
        %5747 = vmatpush1.bf16.msra.mxu0 %v4580
        %5748 = vmatprep.subr.bf16.mxu0 0
        %5749 = vmatpush1.bf16.msra.mxu0 0
        %5750 = vmatprep.subr.bf16.mxu0 0
        %5751 = vmatpush1.bf16.msra.mxu0 0
        %5752 = vmatprep.subr.bf16.mxu0 0
        %5753 = vmatpush1.bf16.msra.mxu0 0
        %5754 = vmatprep.subr.bf16.mxu0 0
        %5755 = vmatpush1.bf16.msra.mxu0 0
        %5756 = vmatprep.subr.bf16.mxu0 0
        %5757 = vmatpush1.bf16.msra.mxu0 0
        %5758 = vmatprep.subr.bf16.mxu0 0
        %5759 = vmatpush1.bf16.msra.mxu0 0
        %5760 = vmatprep.subr.bf16.mxu0 0
        %5761 = vmatpush1.bf16.msra.mxu0 0
        %5762 = vmatprep.subr.bf16.mxu0 0
        %5763 = vmatpush1.bf16.msra.mxu0 0
        %5764 = vmatprep.subr.bf16.mxu0 0
        %5765 = vmatpush1.bf16.msra.mxu0 0
        %5766 = vmatprep.subr.bf16.mxu0 0
        %5767 = vmatpush1.bf16.msra.mxu0 0
        %5768 = vmatprep.subr.bf16.mxu0 0
        %5769 = vmatpush1.bf16.msra.mxu0 0
        %5770 = vmatprep.subr.bf16.mxu0 0
        %5771 = vmatpush1.bf16.msra.mxu0 0
        %5772 = vmatprep.subr.bf16.mxu0 0
        %5773 = vmatpush1.bf16.msra.mxu0 0
        %5774 = vmatprep.subr.bf16.mxu0 0
        %5775 = vmatpush1.bf16.msra.mxu0 0
        %5776 = vmatprep.subr.bf16.mxu0 0
        %5777 = vmatpush1.bf16.msra.mxu0 0
        %5778 = vmatprep.mubr.bf16.mxu0 0
        %5779 = vmatmul.mubr.bf16.gmra.mrb[0].mxu0 %v5259
        %v5780 = vpop.f32.mrb[0].mxu0
        %v5781 = vadd.f32 0.0, %v5780
        %v5782 = vpop.f32.mrb[0].mxu0
        %v5783 = vpop.f32.mrb[0].mxu0
        %v5784 = vadd.f32 0.0, %v5783
        %v5785 = vpop.f32.mrb[0].mxu0
        %5786 = vmatprep.mubr.bf16.mxu0 0
        %5787 = vmatmul.mubr.bf16.gmra.mrb[0].mxu0 %v5262
        %v5788 = vpop.f32.mrb[0].mxu0
        %v5789 = vadd.f32 0.0, %v5788
        %v5790 = vpop.f32.mrb[0].mxu0
        %v5791 = vpop.f32.mrb[0].mxu0
        %v5792 = vpop.f32.mrb[0].mxu0
        %5793 = vdwg.mxu0
        %v5794 = vpack.c.bf16 %v5784, %v5781
        %v5795 = vpack.c.bf16 %v5789, %v5789
        %v5799 = vunpack.c.l.b16 %v5743
        %v5800 = vunpack.c.l.b16 %v5744
        %v5801 = vunpack.c.l.b16 %v5745
        %v5802 = vpack.c.b16 %v5800, %v5799
        %v5803 = vpack.c.b16 %v5801, %v5801
        %v5805 = vsel %vm567, %v5802, 0
        %v5808 = vsel %vm567, %v5803, 0
        %v5811 = vsel %vm574, %v5795, 0
        %5813 = vmatprep.subr.bf16.mxu0 0
        %5814 = vmatpush1.bf16.msra.mxu0 %v5794
        %5815 = vmatprep.subr.bf16.mxu0 0
        %5816 = vmatpush1.bf16.msra.mxu0 %v5811
        %5817 = vmatprep.subr.bf16.mxu0 0
        %5818 = vmatpush1.bf16.msra.mxu0 0
        %5819 = vmatprep.subr.bf16.mxu0 0
        %5820 = vmatpush1.bf16.msra.mxu0 0
        %5821 = vmatprep.subr.bf16.mxu0 0
        %5822 = vmatpush1.bf16.msra.mxu0 0
        %5823 = vmatprep.subr.bf16.mxu0 0
        %5824 = vmatpush1.bf16.msra.mxu0 0
        %5825 = vmatprep.subr.bf16.mxu0 0
        %5826 = vmatpush1.bf16.msra.mxu0 0
        %5827 = vmatprep.subr.bf16.mxu0 0
        %5828 = vmatpush1.bf16.msra.mxu0 0
        %5829 = vmatprep.subr.bf16.mxu0 0
        %5830 = vmatpush1.bf16.msra.mxu0 0
        %5831 = vmatprep.subr.bf16.mxu0 0
        %5832 = vmatpush1.bf16.msra.mxu0 0
        %5833 = vmatprep.subr.bf16.mxu0 0
        %5834 = vmatpush1.bf16.msra.mxu0 0
        %5835 = vmatprep.subr.bf16.mxu0 0
        %5836 = vmatpush1.bf16.msra.mxu0 0
        %5837 = vmatprep.subr.bf16.mxu0 0
        %5838 = vmatpush1.bf16.msra.mxu0 0
        %5839 = vmatprep.subr.bf16.mxu0 0
        %5840 = vmatpush1.bf16.msra.mxu0 0
        %5841 = vmatprep.subr.bf16.mxu0 0
        %5842 = vmatpush1.bf16.msra.mxu0 0
        %5843 = vmatprep.subr.bf16.mxu0 0
        %5844 = vmatpush1.bf16.msra.mxu0 0
        %5845 = vmatprep.mubr.bf16.mxu0 0
        %5846 = vmatmul.mubr.bf16.gmra.mrb[0].mxu0 %v5805
        %v5847 = vpop.f32.mrb[0].mxu0
        %v5848 = vadd.f32 0.0, %v5847
        %v5849 = vpop.f32.mrb[0].mxu0
        %v5850 = vpop.f32.mrb[0].mxu0
        %v5851 = vadd.f32 0.0, %v5850
        %v5852 = vpop.f32.mrb[0].mxu0
        %5853 = vmatprep.mubr.bf16.mxu0 0
        %5854 = vmatmul.mubr.bf16.gmra.mrb[0].mxu0 %v5808
        %v5855 = vpop.f32.mrb[0].mxu0
        %v5856 = vadd.f32 0.0, %v5855
        %v5857 = vpop.f32.mrb[0].mxu0
        %v5858 = vpop.f32.mrb[0].mxu0
        %v5859 = vpop.f32.mrb[0].mxu0
        %5860 = vdwg.mxu0
        %v5861 = vadd.f32 %v5739, %v5848
        %v5862 = vadd.f32 %v5740, %v5851
        %v5863 = vadd.f32 %v5741, %v5856
        %s5864 = scalar_lea.vmem %s1, 384
        %v5865 = vld [vmem:[%s5864] sm:$0xf]
        %v5866 = vld [vmem:[%s5864 + $0x4] sm:$0xf]
        %v5867 = vld [vmem:[%s5864 + $0x8] sm:$0xf]
        %5868 = vmatprep.subr.bf16.mxu0 0
        %5869 = vmatpush1.bf16.msra.mxu0 %v4711
        %5870 = vmatprep.subr.bf16.mxu0 0
        %5871 = vmatpush1.bf16.msra.mxu0 0
        %5872 = vmatprep.subr.bf16.mxu0 0
        %5873 = vmatpush1.bf16.msra.mxu0 0
        %5874 = vmatprep.subr.bf16.mxu0 0
        %5875 = vmatpush1.bf16.msra.mxu0 0
        %5876 = vmatprep.subr.bf16.mxu0 0
        %5877 = vmatpush1.bf16.msra.mxu0 0
        %5878 = vmatprep.subr.bf16.mxu0 0
        %5879 = vmatpush1.bf16.msra.mxu0 0
        %5880 = vmatprep.subr.bf16.mxu0 0
        %5881 = vmatpush1.bf16.msra.mxu0 0
        %5882 = vmatprep.subr.bf16.mxu0 0
        %5883 = vmatpush1.bf16.msra.mxu0 0
        %5884 = vmatprep.subr.bf16.mxu0 0
        %5885 = vmatpush1.bf16.msra.mxu0 0
        %5886 = vmatprep.subr.bf16.mxu0 0
        %5887 = vmatpush1.bf16.msra.mxu0 0
        %5888 = vmatprep.subr.bf16.mxu0 0
        %5889 = vmatpush1.bf16.msra.mxu0 0
        %5890 = vmatprep.subr.bf16.mxu0 0
        %5891 = vmatpush1.bf16.msra.mxu0 0
        %5892 = vmatprep.subr.bf16.mxu0 0
        %5893 = vmatpush1.bf16.msra.mxu0 0
        %5894 = vmatprep.subr.bf16.mxu0 0
        %5895 = vmatpush1.bf16.msra.mxu0 0
        %5896 = vmatprep.subr.bf16.mxu0 0
        %5897 = vmatpush1.bf16.msra.mxu0 0
        %5898 = vmatprep.subr.bf16.mxu0 0
        %5899 = vmatpush1.bf16.msra.mxu0 0
        %5900 = vmatprep.mubr.bf16.mxu0 0
        %5901 = vmatmul.mubr.bf16.gmra.mrb[0].mxu0 %v5259
        %v5902 = vpop.f32.mrb[0].mxu0
        %v5903 = vadd.f32 0.0, %v5902
        %v5904 = vpop.f32.mrb[0].mxu0
        %v5905 = vpop.f32.mrb[0].mxu0
        %v5906 = vadd.f32 0.0, %v5905
        %v5907 = vpop.f32.mrb[0].mxu0
        %5908 = vmatprep.mubr.bf16.mxu0 0
        %5909 = vmatmul.mubr.bf16.gmra.mrb[0].mxu0 %v5262
        %v5910 = vpop.f32.mrb[0].mxu0
        %v5911 = vadd.f32 0.0, %v5910
        %v5912 = vpop.f32.mrb[0].mxu0
        %v5913 = vpop.f32.mrb[0].mxu0
        %v5914 = vpop.f32.mrb[0].mxu0
        %5915 = vdwg.mxu0
        %v5916 = vpack.c.bf16 %v5906, %v5903
        %v5917 = vpack.c.bf16 %v5911, %v5911
        %v5921 = vunpack.c.l.b16 %v5865
        %v5922 = vunpack.c.l.b16 %v5866
        %v5923 = vunpack.c.l.b16 %v5867
        %v5924 = vpack.c.b16 %v5922, %v5921
        %v5925 = vpack.c.b16 %v5923, %v5923
        %v5927 = vsel %vm567, %v5924, 0
        %v5930 = vsel %vm567, %v5925, 0
        %v5933 = vsel %vm574, %v5917, 0
        %5935 = vmatprep.subr.bf16.mxu0 0
        %5936 = vmatpush1.bf16.msra.mxu0 %v5916
        %5937 = vmatprep.subr.bf16.mxu0 0
        %5938 = vmatpush1.bf16.msra.mxu0 %v5933
        %5939 = vmatprep.subr.bf16.mxu0 0
        %5940 = vmatpush1.bf16.msra.mxu0 0
        %5941 = vmatprep.subr.bf16.mxu0 0
        %5942 = vmatpush1.bf16.msra.mxu0 0
        %5943 = vmatprep.subr.bf16.mxu0 0
        %5944 = vmatpush1.bf16.msra.mxu0 0
        %5945 = vmatprep.subr.bf16.mxu0 0
        %5946 = vmatpush1.bf16.msra.mxu0 0
        %5947 = vmatprep.subr.bf16.mxu0 0
        %5948 = vmatpush1.bf16.msra.mxu0 0
        %5949 = vmatprep.subr.bf16.mxu0 0
        %5950 = vmatpush1.bf16.msra.mxu0 0
        %5951 = vmatprep.subr.bf16.mxu0 0
        %5952 = vmatpush1.bf16.msra.mxu0 0
        %5953 = vmatprep.subr.bf16.mxu0 0
        %5954 = vmatpush1.bf16.msra.mxu0 0
        %5955 = vmatprep.subr.bf16.mxu0 0
        %5956 = vmatpush1.bf16.msra.mxu0 0
        %5957 = vmatprep.subr.bf16.mxu0 0
        %5958 = vmatpush1.bf16.msra.mxu0 0
        %5959 = vmatprep.subr.bf16.mxu0 0
        %5960 = vmatpush1.bf16.msra.mxu0 0
        %5961 = vmatprep.subr.bf16.mxu0 0
        %5962 = vmatpush1.bf16.msra.mxu0 0
        %5963 = vmatprep.subr.bf16.mxu0 0
        %5964 = vmatpush1.bf16.msra.mxu0 0
        %5965 = vmatprep.subr.bf16.mxu0 0
        %5966 = vmatpush1.bf16.msra.mxu0 0
        %5967 = vmatprep.mubr.bf16.mxu0 0
        %5968 = vmatmul.mubr.bf16.gmra.mrb[0].mxu0 %v5927
        %v5969 = vpop.f32.mrb[0].mxu0
        %v5970 = vadd.f32 0.0, %v5969
        %v5971 = vpop.f32.mrb[0].mxu0
        %v5972 = vpop.f32.mrb[0].mxu0
        %v5973 = vadd.f32 0.0, %v5972
        %v5974 = vpop.f32.mrb[0].mxu0
        %5975 = vmatprep.mubr.bf16.mxu0 0
        %5976 = vmatmul.mubr.bf16.gmra.mrb[0].mxu0 %v5930
        %v5977 = vpop.f32.mrb[0].mxu0
        %v5978 = vadd.f32 0.0, %v5977
        %v5979 = vpop.f32.mrb[0].mxu0
        %v5980 = vpop.f32.mrb[0].mxu0
        %v5981 = vpop.f32.mrb[0].mxu0
        %5982 = vdwg.mxu0
        %v5983 = vadd.f32 %v5861, %v5970
        %v5984 = vadd.f32 %v5862, %v5973
        %v5985 = vadd.f32 %v5863, %v5978
        %s5986 = scalar_lea.vmem %s1, 396
        %v5987 = vld [vmem:[%s5986] sm:$0xf]
        %v5988 = vld [vmem:[%s5986 + $0x4] sm:$0xf]
        %v5989 = vld [vmem:[%s5986 + $0x8] sm:$0xf]
        %5990 = vmatprep.subr.bf16.mxu0 0
        %5991 = vmatpush1.bf16.msra.mxu0 %v4842
        %5992 = vmatprep.subr.bf16.mxu0 0
        %5993 = vmatpush1.bf16.msra.mxu0 0
        %5994 = vmatprep.subr.bf16.mxu0 0
        %5995 = vmatpush1.bf16.msra.mxu0 0
        %5996 = vmatprep.subr.bf16.mxu0 0
        %5997 = vmatpush1.bf16.msra.mxu0 0
        %5998 = vmatprep.subr.bf16.mxu0 0
        %5999 = vmatpush1.bf16.msra.mxu0 0
        %6000 = vmatprep.subr.bf16.mxu0 0
        %6001 = vmatpush1.bf16.msra.mxu0 0
        %6002 = vmatprep.subr.bf16.mxu0 0
        %6003 = vmatpush1.bf16.msra.mxu0 0
        %6004 = vmatprep.subr.bf16.mxu0 0
        %6005 = vmatpush1.bf16.msra.mxu0 0
        %6006 = vmatprep.subr.bf16.mxu0 0
        %6007 = vmatpush1.bf16.msra.mxu0 0
        %6008 = vmatprep.subr.bf16.mxu0 0
        %6009 = vmatpush1.bf16.msra.mxu0 0
        %6010 = vmatprep.subr.bf16.mxu0 0
        %6011 = vmatpush1.bf16.msra.mxu0 0
        %6012 = vmatprep.subr.bf16.mxu0 0
        %6013 = vmatpush1.bf16.msra.mxu0 0
        %6014 = vmatprep.subr.bf16.mxu0 0
        %6015 = vmatpush1.bf16.msra.mxu0 0
        %6016 = vmatprep.subr.bf16.mxu0 0
        %6017 = vmatpush1.bf16.msra.mxu0 0
        %6018 = vmatprep.subr.bf16.mxu0 0
        %6019 = vmatpush1.bf16.msra.mxu0 0
        %6020 = vmatprep.subr.bf16.mxu0 0
        %6021 = vmatpush1.bf16.msra.mxu0 0
        %6022 = vmatprep.mubr.bf16.mxu0 0
        %6023 = vmatmul.mubr.bf16.gmra.mrb[0].mxu0 %v5259
        %v6024 = vpop.f32.mrb[0].mxu0
        %v6025 = vadd.f32 0.0, %v6024
        %v6026 = vpop.f32.mrb[0].mxu0
        %v6027 = vpop.f32.mrb[0].mxu0
        %v6028 = vadd.f32 0.0, %v6027
        %v6029 = vpop.f32.mrb[0].mxu0
        %6030 = vmatprep.mubr.bf16.mxu0 0
        %6031 = vmatmul.mubr.bf16.gmra.mrb[0].mxu0 %v5262
        %v6032 = vpop.f32.mrb[0].mxu0
        %v6033 = vadd.f32 0.0, %v6032
        %v6034 = vpop.f32.mrb[0].mxu0
        %v6035 = vpop.f32.mrb[0].mxu0
        %v6036 = vpop.f32.mrb[0].mxu0
        %6037 = vdwg.mxu0
        %v6038 = vpack.c.bf16 %v6028, %v6025
        %v6039 = vpack.c.bf16 %v6033, %v6033
        %v6043 = vunpack.c.l.b16 %v5987
        %v6044 = vunpack.c.l.b16 %v5988
        %v6045 = vunpack.c.l.b16 %v5989
        %v6046 = vpack.c.b16 %v6044, %v6043
        %v6047 = vpack.c.b16 %v6045, %v6045
        %v6049 = vsel %vm567, %v6046, 0
        %v6052 = vsel %vm567, %v6047, 0
        %v6055 = vsel %vm574, %v6039, 0
        %6057 = vmatprep.subr.bf16.mxu0 0
        %6058 = vmatpush1.bf16.msra.mxu0 %v6038
        %6059 = vmatprep.subr.bf16.mxu0 0
        %6060 = vmatpush1.bf16.msra.mxu0 %v6055
        %6061 = vmatprep.subr.bf16.mxu0 0
        %6062 = vmatpush1.bf16.msra.mxu0 0
        %6063 = vmatprep.subr.bf16.mxu0 0
        %6064 = vmatpush1.bf16.msra.mxu0 0
        %6065 = vmatprep.subr.bf16.mxu0 0
        %6066 = vmatpush1.bf16.msra.mxu0 0
        %6067 = vmatprep.subr.bf16.mxu0 0
        %6068 = vmatpush1.bf16.msra.mxu0 0
        %6069 = vmatprep.subr.bf16.mxu0 0
        %6070 = vmatpush1.bf16.msra.mxu0 0
        %6071 = vmatprep.subr.bf16.mxu0 0
        %6072 = vmatpush1.bf16.msra.mxu0 0
        %6073 = vmatprep.subr.bf16.mxu0 0
        %6074 = vmatpush1.bf16.msra.mxu0 0
        %6075 = vmatprep.subr.bf16.mxu0 0
        %6076 = vmatpush1.bf16.msra.mxu0 0
        %6077 = vmatprep.subr.bf16.mxu0 0
        %6078 = vmatpush1.bf16.msra.mxu0 0
        %6079 = vmatprep.subr.bf16.mxu0 0
        %6080 = vmatpush1.bf16.msra.mxu0 0
        %6081 = vmatprep.subr.bf16.mxu0 0
        %6082 = vmatpush1.bf16.msra.mxu0 0
        %6083 = vmatprep.subr.bf16.mxu0 0
        %6084 = vmatpush1.bf16.msra.mxu0 0
        %6085 = vmatprep.subr.bf16.mxu0 0
        %6086 = vmatpush1.bf16.msra.mxu0 0
        %6087 = vmatprep.subr.bf16.mxu0 0
        %6088 = vmatpush1.bf16.msra.mxu0 0
        %6089 = vmatprep.mubr.bf16.mxu0 0
        %6090 = vmatmul.mubr.bf16.gmra.mrb[0].mxu0 %v6049
        %v6091 = vpop.f32.mrb[0].mxu0
        %v6092 = vadd.f32 0.0, %v6091
        %v6093 = vpop.f32.mrb[0].mxu0
        %v6094 = vpop.f32.mrb[0].mxu0
        %v6095 = vadd.f32 0.0, %v6094
        %v6096 = vpop.f32.mrb[0].mxu0
        %6097 = vmatprep.mubr.bf16.mxu0 0
        %6098 = vmatmul.mubr.bf16.gmra.mrb[0].mxu0 %v6052
        %v6099 = vpop.f32.mrb[0].mxu0
        %v6100 = vadd.f32 0.0, %v6099
        %v6101 = vpop.f32.mrb[0].mxu0
        %v6102 = vpop.f32.mrb[0].mxu0
        %v6103 = vpop.f32.mrb[0].mxu0
        %6104 = vdwg.mxu0
        %v6105 = vadd.f32 %v5983, %v6092
        %v6106 = vadd.f32 %v5984, %v6095
        %v6107 = vadd.f32 %v5985, %v6100
        %s6108 = scalar_lea.vmem %s1, 408
        %v6109 = vld [vmem:[%s6108] sm:$0xf]
        %v6110 = vld [vmem:[%s6108 + $0x4] sm:$0xf]
        %v6111 = vld [vmem:[%s6108 + $0x8] sm:$0xf]
        %6112 = vmatprep.subr.bf16.mxu0 0
        %6113 = vmatpush1.bf16.msra.mxu0 %v4973
        %6114 = vmatprep.subr.bf16.mxu0 0
        %6115 = vmatpush1.bf16.msra.mxu0 0
        %6116 = vmatprep.subr.bf16.mxu0 0
        %6117 = vmatpush1.bf16.msra.mxu0 0
        %6118 = vmatprep.subr.bf16.mxu0 0
        %6119 = vmatpush1.bf16.msra.mxu0 0
        %6120 = vmatprep.subr.bf16.mxu0 0
        %6121 = vmatpush1.bf16.msra.mxu0 0
        %6122 = vmatprep.subr.bf16.mxu0 0
        %6123 = vmatpush1.bf16.msra.mxu0 0
        %6124 = vmatprep.subr.bf16.mxu0 0
        %6125 = vmatpush1.bf16.msra.mxu0 0
        %6126 = vmatprep.subr.bf16.mxu0 0
        %6127 = vmatpush1.bf16.msra.mxu0 0
        %6128 = vmatprep.subr.bf16.mxu0 0
        %6129 = vmatpush1.bf16.msra.mxu0 0
        %6130 = vmatprep.subr.bf16.mxu0 0
        %6131 = vmatpush1.bf16.msra.mxu0 0
        %6132 = vmatprep.subr.bf16.mxu0 0
        %6133 = vmatpush1.bf16.msra.mxu0 0
        %6134 = vmatprep.subr.bf16.mxu0 0
        %6135 = vmatpush1.bf16.msra.mxu0 0
        %6136 = vmatprep.subr.bf16.mxu0 0
        %6137 = vmatpush1.bf16.msra.mxu0 0
        %6138 = vmatprep.subr.bf16.mxu0 0
        %6139 = vmatpush1.bf16.msra.mxu0 0
        %6140 = vmatprep.subr.bf16.mxu0 0
        %6141 = vmatpush1.bf16.msra.mxu0 0
        %6142 = vmatprep.subr.bf16.mxu0 0
        %6143 = vmatpush1.bf16.msra.mxu0 0
        %6144 = vmatprep.mubr.bf16.mxu0 0
        %6145 = vmatmul.mubr.bf16.gmra.mrb[0].mxu0 %v5259
        %v6146 = vpop.f32.mrb[0].mxu0
        %v6147 = vadd.f32 0.0, %v6146
        %v6148 = vpop.f32.mrb[0].mxu0
        %v6149 = vpop.f32.mrb[0].mxu0
        %v6150 = vadd.f32 0.0, %v6149
        %v6151 = vpop.f32.mrb[0].mxu0
        %6152 = vmatprep.mubr.bf16.mxu0 0
        %6153 = vmatmul.mubr.bf16.gmra.mrb[0].mxu0 %v5262
        %v6154 = vpop.f32.mrb[0].mxu0
        %v6155 = vadd.f32 0.0, %v6154
        %v6156 = vpop.f32.mrb[0].mxu0
        %v6157 = vpop.f32.mrb[0].mxu0
        %v6158 = vpop.f32.mrb[0].mxu0
        %6159 = vdwg.mxu0
        %v6160 = vpack.c.bf16 %v6150, %v6147
        %v6161 = vpack.c.bf16 %v6155, %v6155
        %v6165 = vunpack.c.l.b16 %v6109
        %v6166 = vunpack.c.l.b16 %v6110
        %v6167 = vunpack.c.l.b16 %v6111
        %v6168 = vpack.c.b16 %v6166, %v6165
        %v6169 = vpack.c.b16 %v6167, %v6167
        %v6171 = vsel %vm567, %v6168, 0
        %v6174 = vsel %vm567, %v6169, 0
        %v6177 = vsel %vm574, %v6161, 0
        %6179 = vmatprep.subr.bf16.mxu0 0
        %6180 = vmatpush1.bf16.msra.mxu0 %v6160
        %6181 = vmatprep.subr.bf16.mxu0 0
        %6182 = vmatpush1.bf16.msra.mxu0 %v6177
        %6183 = vmatprep.subr.bf16.mxu0 0
        %6184 = vmatpush1.bf16.msra.mxu0 0
        %6185 = vmatprep.subr.bf16.mxu0 0
        %6186 = vmatpush1.bf16.msra.mxu0 0
        %6187 = vmatprep.subr.bf16.mxu0 0
        %6188 = vmatpush1.bf16.msra.mxu0 0
        %6189 = vmatprep.subr.bf16.mxu0 0
        %6190 = vmatpush1.bf16.msra.mxu0 0
        %6191 = vmatprep.subr.bf16.mxu0 0
        %6192 = vmatpush1.bf16.msra.mxu0 0
        %6193 = vmatprep.subr.bf16.mxu0 0
        %6194 = vmatpush1.bf16.msra.mxu0 0
        %6195 = vmatprep.subr.bf16.mxu0 0
        %6196 = vmatpush1.bf16.msra.mxu0 0
        %6197 = vmatprep.subr.bf16.mxu0 0
        %6198 = vmatpush1.bf16.msra.mxu0 0
        %6199 = vmatprep.subr.bf16.mxu0 0
        %6200 = vmatpush1.bf16.msra.mxu0 0
        %6201 = vmatprep.subr.bf16.mxu0 0
        %6202 = vmatpush1.bf16.msra.mxu0 0
        %6203 = vmatprep.subr.bf16.mxu0 0
        %6204 = vmatpush1.bf16.msra.mxu0 0
        %6205 = vmatprep.subr.bf16.mxu0 0
        %6206 = vmatpush1.bf16.msra.mxu0 0
        %6207 = vmatprep.subr.bf16.mxu0 0
        %6208 = vmatpush1.bf16.msra.mxu0 0
        %6209 = vmatprep.subr.bf16.mxu0 0
        %6210 = vmatpush1.bf16.msra.mxu0 0
        %6211 = vmatprep.mubr.bf16.mxu0 0
        %6212 = vmatmul.mubr.bf16.gmra.mrb[0].mxu0 %v6171
        %v6213 = vpop.f32.mrb[0].mxu0
        %v6214 = vadd.f32 0.0, %v6213
        %v6215 = vpop.f32.mrb[0].mxu0
        %v6216 = vpop.f32.mrb[0].mxu0
        %v6217 = vadd.f32 0.0, %v6216
        %v6218 = vpop.f32.mrb[0].mxu0
        %6219 = vmatprep.mubr.bf16.mxu0 0
        %6220 = vmatmul.mubr.bf16.gmra.mrb[0].mxu0 %v6174
        %v6221 = vpop.f32.mrb[0].mxu0
        %v6222 = vadd.f32 0.0, %v6221
        %v6223 = vpop.f32.mrb[0].mxu0
        %v6224 = vpop.f32.mrb[0].mxu0
        %v6225 = vpop.f32.mrb[0].mxu0
        %6226 = vdwg.mxu0
        %v6227 = vadd.f32 %v6105, %v6214
        %v6228 = vadd.f32 %v6106, %v6217
        %v6229 = vadd.f32 %v6107, %v6222
        %s6230 = scalar_lea.vmem %s1, 420
        %v6231 = vld [vmem:[%s6230] sm:$0xf]
        %v6232 = vld [vmem:[%s6230 + $0x4] sm:$0xf]
        %v6233 = vld [vmem:[%s6230 + $0x8] sm:$0xf]
        %6234 = vmatprep.subr.bf16.mxu0 0
        %6235 = vmatpush1.bf16.msra.mxu0 %v5104
        %6236 = vmatprep.subr.bf16.mxu0 0
        %6237 = vmatpush1.bf16.msra.mxu0 0
        %6238 = vmatprep.subr.bf16.mxu0 0
        %6239 = vmatpush1.bf16.msra.mxu0 0
        %6240 = vmatprep.subr.bf16.mxu0 0
        %6241 = vmatpush1.bf16.msra.mxu0 0
        %6242 = vmatprep.subr.bf16.mxu0 0
        %6243 = vmatpush1.bf16.msra.mxu0 0
        %6244 = vmatprep.subr.bf16.mxu0 0
        %6245 = vmatpush1.bf16.msra.mxu0 0
        %6246 = vmatprep.subr.bf16.mxu0 0
        %6247 = vmatpush1.bf16.msra.mxu0 0
        %6248 = vmatprep.subr.bf16.mxu0 0
        %6249 = vmatpush1.bf16.msra.mxu0 0
        %6250 = vmatprep.subr.bf16.mxu0 0
        %6251 = vmatpush1.bf16.msra.mxu0 0
        %6252 = vmatprep.subr.bf16.mxu0 0
        %6253 = vmatpush1.bf16.msra.mxu0 0
        %6254 = vmatprep.subr.bf16.mxu0 0
        %6255 = vmatpush1.bf16.msra.mxu0 0
        %6256 = vmatprep.subr.bf16.mxu0 0
        %6257 = vmatpush1.bf16.msra.mxu0 0
        %6258 = vmatprep.subr.bf16.mxu0 0
        %6259 = vmatpush1.bf16.msra.mxu0 0
        %6260 = vmatprep.subr.bf16.mxu0 0
        %6261 = vmatpush1.bf16.msra.mxu0 0
        %6262 = vmatprep.subr.bf16.mxu0 0
        %6263 = vmatpush1.bf16.msra.mxu0 0
        %6264 = vmatprep.subr.bf16.mxu0 0
        %6265 = vmatpush1.bf16.msra.mxu0 0
        %6266 = vmatprep.mubr.bf16.mxu0 0
        %6267 = vmatmul.mubr.bf16.gmra.mrb[0].mxu0 %v5259
        %v6268 = vpop.f32.mrb[0].mxu0
        %v6269 = vadd.f32 0.0, %v6268
        %v6270 = vpop.f32.mrb[0].mxu0
        %v6271 = vpop.f32.mrb[0].mxu0
        %v6272 = vadd.f32 0.0, %v6271
        %v6273 = vpop.f32.mrb[0].mxu0
        %6274 = vmatprep.mubr.bf16.mxu0 0
        %6275 = vmatmul.mubr.bf16.gmra.mrb[0].mxu0 %v5262
        %v6276 = vpop.f32.mrb[0].mxu0
        %v6277 = vadd.f32 0.0, %v6276
        %v6278 = vpop.f32.mrb[0].mxu0
        %v6279 = vpop.f32.mrb[0].mxu0
        %v6280 = vpop.f32.mrb[0].mxu0
        %6281 = vdwg.mxu0
        %v6282 = vpack.c.bf16 %v6272, %v6269
        %v6283 = vpack.c.bf16 %v6277, %v6277
        %v6287 = vunpack.c.l.b16 %v6231
        %v6288 = vunpack.c.l.b16 %v6232
        %v6289 = vunpack.c.l.b16 %v6233
        %v6290 = vpack.c.b16 %v6288, %v6287
        %v6291 = vpack.c.b16 %v6289, %v6289
        %v6293 = vsel %vm567, %v6290, 0
        %v6296 = vsel %vm567, %v6291, 0
        %v6299 = vsel %vm574, %v6283, 0
        %6301 = vmatprep.subr.bf16.mxu0 0
        %6302 = vmatpush1.bf16.msra.mxu0 %v6282
        %6303 = vmatprep.subr.bf16.mxu0 0
        %6304 = vmatpush1.bf16.msra.mxu0 %v6299
        %6305 = vmatprep.subr.bf16.mxu0 0
        %6306 = vmatpush1.bf16.msra.mxu0 0
        %6307 = vmatprep.subr.bf16.mxu0 0
        %6308 = vmatpush1.bf16.msra.mxu0 0
        %6309 = vmatprep.subr.bf16.mxu0 0
        %6310 = vmatpush1.bf16.msra.mxu0 0
        %6311 = vmatprep.subr.bf16.mxu0 0
        %6312 = vmatpush1.bf16.msra.mxu0 0
        %6313 = vmatprep.subr.bf16.mxu0 0
        %6314 = vmatpush1.bf16.msra.mxu0 0
        %6315 = vmatprep.subr.bf16.mxu0 0
        %6316 = vmatpush1.bf16.msra.mxu0 0
        %6317 = vmatprep.subr.bf16.mxu0 0
        %6318 = vmatpush1.bf16.msra.mxu0 0
        %6319 = vmatprep.subr.bf16.mxu0 0
        %6320 = vmatpush1.bf16.msra.mxu0 0
        %6321 = vmatprep.subr.bf16.mxu0 0
        %6322 = vmatpush1.bf16.msra.mxu0 0
        %6323 = vmatprep.subr.bf16.mxu0 0
        %6324 = vmatpush1.bf16.msra.mxu0 0
        %6325 = vmatprep.subr.bf16.mxu0 0
        %6326 = vmatpush1.bf16.msra.mxu0 0
        %6327 = vmatprep.subr.bf16.mxu0 0
        %6328 = vmatpush1.bf16.msra.mxu0 0
        %6329 = vmatprep.subr.bf16.mxu0 0
        %6330 = vmatpush1.bf16.msra.mxu0 0
        %6331 = vmatprep.subr.bf16.mxu0 0
        %6332 = vmatpush1.bf16.msra.mxu0 0
        %6333 = vmatprep.mubr.bf16.mxu0 0
        %6334 = vmatmul.mubr.bf16.gmra.mrb[0].mxu0 %v6293
        %v6335 = vpop.f32.mrb[0].mxu0
        %v6336 = vadd.f32 0.0, %v6335
        %v6337 = vpop.f32.mrb[0].mxu0
        %v6338 = vpop.f32.mrb[0].mxu0
        %v6339 = vadd.f32 0.0, %v6338
        %v6340 = vpop.f32.mrb[0].mxu0
        %6341 = vmatprep.mubr.bf16.mxu0 0
        %6342 = vmatmul.mubr.bf16.gmra.mrb[0].mxu0 %v6296
        %v6343 = vpop.f32.mrb[0].mxu0
        %v6344 = vadd.f32 0.0, %v6343
        %v6345 = vpop.f32.mrb[0].mxu0
        %v6346 = vpop.f32.mrb[0].mxu0
        %v6347 = vpop.f32.mrb[0].mxu0
        %6348 = vdwg.mxu0
        %v6349 = vadd.f32 %v6227, %v6336
        %v6350 = vadd.f32 %v6228, %v6339
        %v6351 = vadd.f32 %v6229, %v6344
        %s6352 = scalar_lea.vmem %s2, 72
        %v6353 = vld [vmem:[%s6352] sm:$0xff]
        %v6354 = vld [vmem:[%s6352 + $0x8] sm:$0xff]
        %v6355 = vld [vmem:[%s6352 + $0x10] sm:$0xff]
        %6357 = vset.pattern.permute.xlu0 0
        %6358 = vperm.xlu0 %6357, %v6353
        %v6359 = vpop.permute.xlu0 %6358
        %6362 = vset.pattern.permute.xlu0 0
        %6363 = vperm.xlu0 %6362, %v6354
        %v6364 = vpop.permute.xlu0 %6363
        %6367 = vset.pattern.permute.xlu0 0
        %6368 = vperm.xlu0 %6367, %v6355
        %v6369 = vpop.permute.xlu0 %6368
        %v6371 = vadd.f32 %v6349, %v6359
        %v6372 = vadd.f32 %v6350, %v6364
        %v6373 = vadd.f32 %v6351, %v6369
        %v6374 = vmul.f32 %v6371, 0.2
        %v6375 = vmul.f32 %v6372, 0.2
        %v6376 = vmul.f32 %v6373, 0.2
        %v6377 = vmax.f32 %v6371, %v6374
        %v6378 = vmax.f32 %v6372, %v6375
        %v6379 = vmax.f32 %v6373, %v6376
        %v6380 = vld [vmem:[#allocation2] sm:$0xf]
        %v6381 = vld [vmem:[#allocation2 + $0x4] sm:$0xf]
        %v6382 = vld [vmem:[#allocation2 + $0x8] sm:$0xf]
        %s6383 = scalar_lea.vmem [#allocation2], 12
        %v6384 = vld [vmem:[%s6383] sm:$0xf]
        %v6385 = vld [vmem:[%s6383 + $0x4] sm:$0xf]
        %v6386 = vld [vmem:[%s6383 + $0x8] sm:$0xf]
        %v6387 = vpack.c.bf16 %v6378, %v6377
        %v6388 = vpack.c.bf16 %v6379, %v6379
        %v6392 = vunpack.c.l.b16 %v6384
        %v6393 = vunpack.c.l.b16 %v6385
        %v6394 = vunpack.c.l.b16 %v6386
        %v6395 = vpack.c.b16 %v6393, %v6392
        %v6396 = vpack.c.b16 %v6394, %v6394
        %v6398 = vsel %vm567, %v6395, 0
        %v6401 = vsel %vm567, %v6396, 0
        %v6404 = vsel %vm574, %v6388, 0
        %6406 = vmatprep.subr.bf16.mxu0 0
        %6407 = vmatpush1.bf16.msra.mxu0 %v6387
        %6408 = vmatprep.subr.bf16.mxu0 0
        %6409 = vmatpush1.bf16.msra.mxu0 %v6404
        %6410 = vmatprep.subr.bf16.mxu0 0
        %6411 = vmatpush1.bf16.msra.mxu0 0
        %6412 = vmatprep.subr.bf16.mxu0 0
        %6413 = vmatpush1.bf16.msra.mxu0 0
        %6414 = vmatprep.subr.bf16.mxu0 0
        %6415 = vmatpush1.bf16.msra.mxu0 0
        %6416 = vmatprep.subr.bf16.mxu0 0
        %6417 = vmatpush1.bf16.msra.mxu0 0
        %6418 = vmatprep.subr.bf16.mxu0 0
        %6419 = vmatpush1.bf16.msra.mxu0 0
        %6420 = vmatprep.subr.bf16.mxu0 0
        %6421 = vmatpush1.bf16.msra.mxu0 0
        %6422 = vmatprep.subr.bf16.mxu0 0
        %6423 = vmatpush1.bf16.msra.mxu0 0
        %6424 = vmatprep.subr.bf16.mxu0 0
        %6425 = vmatpush1.bf16.msra.mxu0 0
        %6426 = vmatprep.subr.bf16.mxu0 0
        %6427 = vmatpush1.bf16.msra.mxu0 0
        %6428 = vmatprep.subr.bf16.mxu0 0
        %6429 = vmatpush1.bf16.msra.mxu0 0
        %6430 = vmatprep.subr.bf16.mxu0 0
        %6431 = vmatpush1.bf16.msra.mxu0 0
        %6432 = vmatprep.subr.bf16.mxu0 0
        %6433 = vmatpush1.bf16.msra.mxu0 0
        %6434 = vmatprep.subr.bf16.mxu0 0
        %6435 = vmatpush1.bf16.msra.mxu0 0
        %6436 = vmatprep.subr.bf16.mxu0 0
        %6437 = vmatpush1.bf16.msra.mxu0 0
        %6438 = vmatprep.mubr.bf16.mxu0 0
        %6439 = vmatmul.mubr.bf16.gmra.mrb[0].mxu0 %v6398
        %v6440 = vpop.f32.mrb[0].mxu0
        %v6441 = vadd.f32 0.0, %v6440
        %v6442 = vpop.f32.mrb[0].mxu0
        %v6443 = vpop.f32.mrb[0].mxu0
        %v6444 = vadd.f32 0.0, %v6443
        %v6445 = vpop.f32.mrb[0].mxu0
        %6446 = vmatprep.mubr.bf16.mxu0 0
        %6447 = vmatmul.mubr.bf16.gmra.mrb[0].mxu0 %v6401
        %v6448 = vpop.f32.mrb[0].mxu0
        %v6449 = vadd.f32 0.0, %v6448
        %v6450 = vpop.f32.mrb[0].mxu0
        %v6451 = vpop.f32.mrb[0].mxu0
        %v6452 = vpop.f32.mrb[0].mxu0
        %6453 = vdwg.mxu0
        %v6454 = vpack.c.bf16 %v6444, %v6441
        %v6455 = vpack.c.bf16 %v6449, %v6449
        %v6456 = vld [vmem:[%s10] sm:$0xf]
        %v6457 = vld [vmem:[%s10 + $0x4] sm:$0xf]
        %v6460 = vunpack.c.l.b16 %v6456
        %v6461 = vunpack.c.l.b16 %v6457
        %v6462 = vpack.c.b16 %v6461, %v6460
        %v6465 = vsel %vm4057, %v6454, 0
        %v6468 = vsel %vm4057, %v6455, 0
        %6470 = vmatprep.subr.bf16.mxu0 0
        %6471 = vmatpush1.bf16.msra.mxu0 %v6462
        %6472 = vmatprep.subr.bf16.mxu0 0
        %6473 = vmatpush1.bf16.msra.mxu0 0
        %6474 = vmatprep.subr.bf16.mxu0 0
        %6475 = vmatpush1.bf16.msra.mxu0 0
        %6476 = vmatprep.subr.bf16.mxu0 0
        %6477 = vmatpush1.bf16.msra.mxu0 0
        %6478 = vmatprep.subr.bf16.mxu0 0
        %6479 = vmatpush1.bf16.msra.mxu0 0
        %6480 = vmatprep.subr.bf16.mxu0 0
        %6481 = vmatpush1.bf16.msra.mxu0 0
        %6482 = vmatprep.subr.bf16.mxu0 0
        %6483 = vmatpush1.bf16.msra.mxu0 0
        %6484 = vmatprep.subr.bf16.mxu0 0
        %6485 = vmatpush1.bf16.msra.mxu0 0
        %6486 = vmatprep.subr.bf16.mxu0 0
        %6487 = vmatpush1.bf16.msra.mxu0 0
        %6488 = vmatprep.subr.bf16.mxu0 0
        %6489 = vmatpush1.bf16.msra.mxu0 0
        %6490 = vmatprep.subr.bf16.mxu0 0
        %6491 = vmatpush1.bf16.msra.mxu0 0
        %6492 = vmatprep.subr.bf16.mxu0 0
        %6493 = vmatpush1.bf16.msra.mxu0 0
        %6494 = vmatprep.subr.bf16.mxu0 0
        %6495 = vmatpush1.bf16.msra.mxu0 0
        %6496 = vmatprep.subr.bf16.mxu0 0
        %6497 = vmatpush1.bf16.msra.mxu0 0
        %6498 = vmatprep.subr.bf16.mxu0 0
        %6499 = vmatpush1.bf16.msra.mxu0 0
        %6500 = vmatprep.subr.bf16.mxu0 0
        %6501 = vmatpush1.bf16.msra.mxu0 0
        %6502 = vmatprep.mubr.bf16.mxu0 0
        %6503 = vmatmul.mubr.bf16.gmra.mrb[0].mxu0 %v6465
        %v6504 = vpop.f32.mrb[0].mxu0
        %v6505 = vadd.f32 0.0, %v6504
        %v6506 = vpop.f32.mrb[0].mxu0
        %v6507 = vpop.f32.mrb[0].mxu0
        %v6508 = vadd.f32 0.0, %v6507
        %v6509 = vpop.f32.mrb[0].mxu0
        %6510 = vmatprep.mubr.bf16.mxu0 0
        %6511 = vmatmul.mubr.bf16.gmra.mrb[0].mxu0 %v6468
        %v6512 = vpop.f32.mrb[0].mxu0
        %v6513 = vadd.f32 0.0, %v6512
        %v6514 = vpop.f32.mrb[0].mxu0
        %v6515 = vpop.f32.mrb[0].mxu0
        %v6516 = vpop.f32.mrb[0].mxu0
        %6517 = vdwg.mxu0
        %v6521 = vunpack.c.l.b16 %v6380
        %v6522 = vunpack.c.l.b16 %v6381
        %v6523 = vunpack.c.l.b16 %v6382
        %v6524 = vpack.c.b16 %v6522, %v6521
        %v6525 = vpack.c.b16 %v6523, %v6523
        %v6527 = vsel %vm567, %v6524, 0
        %v6530 = vsel %vm567, %v6525, 0
        %v6532 = vsel %vm574, %v3704, 0
        %6534 = vmatprep.subr.bf16.mxu0 0
        %6535 = vmatpush1.bf16.msra.mxu0 %v3703
        %6536 = vmatprep.subr.bf16.mxu0 0
        %6537 = vmatpush1.bf16.msra.mxu0 %v6532
        %6538 = vmatprep.subr.bf16.mxu0 0
        %6539 = vmatpush1.bf16.msra.mxu0 0
        %6540 = vmatprep.subr.bf16.mxu0 0
        %6541 = vmatpush1.bf16.msra.mxu0 0
        %6542 = vmatprep.subr.bf16.mxu0 0
        %6543 = vmatpush1.bf16.msra.mxu0 0
        %6544 = vmatprep.subr.bf16.mxu0 0
        %6545 = vmatpush1.bf16.msra.mxu0 0
        %6546 = vmatprep.subr.bf16.mxu0 0
        %6547 = vmatpush1.bf16.msra.mxu0 0
        %6548 = vmatprep.subr.bf16.mxu0 0
        %6549 = vmatpush1.bf16.msra.mxu0 0
        %6550 = vmatprep.subr.bf16.mxu0 0
        %6551 = vmatpush1.bf16.msra.mxu0 0
        %6552 = vmatprep.subr.bf16.mxu0 0
        %6553 = vmatpush1.bf16.msra.mxu0 0
        %6554 = vmatprep.subr.bf16.mxu0 0
        %6555 = vmatpush1.bf16.msra.mxu0 0
        %6556 = vmatprep.subr.bf16.mxu0 0
        %6557 = vmatpush1.bf16.msra.mxu0 0
        %6558 = vmatprep.subr.bf16.mxu0 0
        %6559 = vmatpush1.bf16.msra.mxu0 0
        %6560 = vmatprep.subr.bf16.mxu0 0
        %6561 = vmatpush1.bf16.msra.mxu0 0
        %6562 = vmatprep.subr.bf16.mxu0 0
        %6563 = vmatpush1.bf16.msra.mxu0 0
        %6564 = vmatprep.subr.bf16.mxu0 0
        %6565 = vmatpush1.bf16.msra.mxu0 0
        %6566 = vmatprep.mubr.bf16.mxu0 0
        %6567 = vmatmul.mubr.bf16.gmra.mrb[0].mxu0 %v6527
        %v6568 = vpop.f32.mrb[0].mxu0
        %v6569 = vadd.f32 %v6505, %v6568
        %v6570 = vpop.f32.mrb[0].mxu0
        %v6571 = vpop.f32.mrb[0].mxu0
        %v6572 = vadd.f32 %v6508, %v6571
        %v6573 = vpop.f32.mrb[0].mxu0
        %6574 = vmatprep.mubr.bf16.mxu0 0
        %6575 = vmatmul.mubr.bf16.gmra.mrb[0].mxu0 %v6530
        %v6576 = vpop.f32.mrb[0].mxu0
        %v6577 = vadd.f32 %v6513, %v6576
        %v6578 = vpop.f32.mrb[0].mxu0
        %v6579 = vpop.f32.mrb[0].mxu0
        %v6580 = vpop.f32.mrb[0].mxu0
        %6581 = vdwg.mxu0
        %v6582 = vld [vmem:[%s4] sm:$0xff]
        %v6583 = vld [vmem:[%s4 + $0x8] sm:$0xff]
        %v6584 = vld [vmem:[%s4 + $0x10] sm:$0xff]
        %6586 = vset.pattern.permute.xlu0 0
        %6587 = vperm.xlu0 %6586, %v6582
        %v6588 = vpop.permute.xlu0 %6587
        %6591 = vset.pattern.permute.xlu0 0
        %6592 = vperm.xlu0 %6591, %v6583
        %v6593 = vpop.permute.xlu0 %6592
        %6596 = vset.pattern.permute.xlu0 0
        %6597 = vperm.xlu0 %6596, %v6584
        %v6598 = vpop.permute.xlu0 %6597
        %v6600 = vadd.f32 %v6569, %v6588
        %v6601 = vadd.f32 %v6572, %v6593
        %v6602 = vadd.f32 %v6577, %v6598
        %v6603 = vmul.f32 %v6600, 0.2
        %v6604 = vmul.f32 %v6601, 0.2
        %v6605 = vmul.f32 %v6602, 0.2
        %v6606 = vmax.f32 %v6600, %v6603
        %v6607 = vmax.f32 %v6601, %v6604
        %v6608 = vmax.f32 %v6602, %v6605
        %v6609 = vpack.c.bf16 %v6607, %v6606
        %v6610 = vpack.c.bf16 %v6608, %v6608
        %s6611 = scalar_lea.vmem %s1, 432
        %v6612 = vld [vmem:[%s6611] sm:$0xf]
        %v6613 = vld [vmem:[%s6611 + $0x4] sm:$0xf]
        %v6614 = vld [vmem:[%s6611 + $0x8] sm:$0xf]
        %v6616 = vsel %vm2316, %v6609, 0
        %v6619 = vsel %vm2316, %v6610, 0
        %6621 = vmatprep.subr.bf16.mxu0 0
        %6622 = vmatpush1.bf16.msra.mxu0 %v2308
        %6623 = vmatprep.subr.bf16.mxu0 0
        %6624 = vmatpush1.bf16.msra.mxu0 %v2309
        %6625 = vmatprep.subr.bf16.mxu0 0
        %6626 = vmatpush1.bf16.msra.mxu0 %v2310
        %6627 = vmatprep.subr.bf16.mxu0 0
        %6628 = vmatpush1.bf16.msra.mxu0 %v2311
        %6629 = vmatprep.subr.bf16.mxu0 0
        %6630 = vmatpush1.bf16.msra.mxu0 0
        %6631 = vmatprep.subr.bf16.mxu0 0
        %6632 = vmatpush1.bf16.msra.mxu0 0
        %6633 = vmatprep.subr.bf16.mxu0 0
        %6634 = vmatpush1.bf16.msra.mxu0 0
        %6635 = vmatprep.subr.bf16.mxu0 0
        %6636 = vmatpush1.bf16.msra.mxu0 0
        %6637 = vmatprep.subr.bf16.mxu0 0
        %6638 = vmatpush1.bf16.msra.mxu0 0
        %6639 = vmatprep.subr.bf16.mxu0 0
        %6640 = vmatpush1.bf16.msra.mxu0 0
        %6641 = vmatprep.subr.bf16.mxu0 0
        %6642 = vmatpush1.bf16.msra.mxu0 0
        %6643 = vmatprep.subr.bf16.mxu0 0
        %6644 = vmatpush1.bf16.msra.mxu0 0
        %6645 = vmatprep.subr.bf16.mxu0 0
        %6646 = vmatpush1.bf16.msra.mxu0 0
        %6647 = vmatprep.subr.bf16.mxu0 0
        %6648 = vmatpush1.bf16.msra.mxu0 0
        %6649 = vmatprep.subr.bf16.mxu0 0
        %6650 = vmatpush1.bf16.msra.mxu0 0
        %6651 = vmatprep.subr.bf16.mxu0 0
        %6652 = vmatpush1.bf16.msra.mxu0 0
        %6653 = vmatprep.mubr.bf16.mxu0 0
        %6654 = vmatmul.mubr.bf16.gmra.mrb[0].mxu0 %v6616
        %v6655 = vpop.f32.mrb[0].mxu0
        %v6656 = vadd.f32 0.0, %v6655
        %v6657 = vpop.f32.mrb[0].mxu0
        %v6658 = vpop.f32.mrb[0].mxu0
        %v6659 = vadd.f32 0.0, %v6658
        %v6660 = vpop.f32.mrb[0].mxu0
        %6661 = vmatprep.mubr.bf16.mxu0 0
        %6662 = vmatmul.mubr.bf16.gmra.mrb[0].mxu0 %v6619
        %v6663 = vpop.f32.mrb[0].mxu0
        %v6664 = vadd.f32 0.0, %v6663
        %v6665 = vpop.f32.mrb[0].mxu0
        %v6666 = vpop.f32.mrb[0].mxu0
        %v6667 = vpop.f32.mrb[0].mxu0
        %6668 = vdwg.mxu0
        %v6669 = vpack.c.bf16 %v6659, %v6656
        %v6670 = vpack.c.bf16 %v6664, %v6664
        %s6671 = scalar_lea.vmem %s1, 444
        %v6672 = vld [vmem:[%s6671] sm:$0xf]
        %v6673 = vld [vmem:[%s6671 + $0x4] sm:$0xf]
        %v6674 = vld [vmem:[%s6671 + $0x8] sm:$0xf]
        %6675 = vmatprep.subr.bf16.mxu0 0
        %6676 = vmatpush1.bf16.msra.mxu0 %v2402
        %6677 = vmatprep.subr.bf16.mxu0 0
        %6678 = vmatpush1.bf16.msra.mxu0 %v2403
        %6679 = vmatprep.subr.bf16.mxu0 0
        %6680 = vmatpush1.bf16.msra.mxu0 %v2404
        %6681 = vmatprep.subr.bf16.mxu0 0
        %6682 = vmatpush1.bf16.msra.mxu0 %v2405
        %6683 = vmatprep.subr.bf16.mxu0 0
        %6684 = vmatpush1.bf16.msra.mxu0 0
        %6685 = vmatprep.subr.bf16.mxu0 0
        %6686 = vmatpush1.bf16.msra.mxu0 0
        %6687 = vmatprep.subr.bf16.mxu0 0
        %6688 = vmatpush1.bf16.msra.mxu0 0
        %6689 = vmatprep.subr.bf16.mxu0 0
        %6690 = vmatpush1.bf16.msra.mxu0 0
        %6691 = vmatprep.subr.bf16.mxu0 0
        %6692 = vmatpush1.bf16.msra.mxu0 0
        %6693 = vmatprep.subr.bf16.mxu0 0
        %6694 = vmatpush1.bf16.msra.mxu0 0
        %6695 = vmatprep.subr.bf16.mxu0 0
        %6696 = vmatpush1.bf16.msra.mxu0 0
        %6697 = vmatprep.subr.bf16.mxu0 0
        %6698 = vmatpush1.bf16.msra.mxu0 0
        %6699 = vmatprep.subr.bf16.mxu0 0
        %6700 = vmatpush1.bf16.msra.mxu0 0
        %6701 = vmatprep.subr.bf16.mxu0 0
        %6702 = vmatpush1.bf16.msra.mxu0 0
        %6703 = vmatprep.subr.bf16.mxu0 0
        %6704 = vmatpush1.bf16.msra.mxu0 0
        %6705 = vmatprep.subr.bf16.mxu0 0
        %6706 = vmatpush1.bf16.msra.mxu0 0
        %6707 = vmatprep.mubr.bf16.mxu0 0
        %6708 = vmatmul.mubr.bf16.gmra.mrb[0].mxu0 %v6616
        %v6709 = vpop.f32.mrb[0].mxu0
        %v6710 = vadd.f32 0.0, %v6709
        %v6711 = vpop.f32.mrb[0].mxu0
        %v6712 = vpop.f32.mrb[0].mxu0
        %v6713 = vadd.f32 0.0, %v6712
        %v6714 = vpop.f32.mrb[0].mxu0
        %6715 = vmatprep.mubr.bf16.mxu0 0
        %6716 = vmatmul.mubr.bf16.gmra.mrb[0].mxu0 %v6619
        %v6717 = vpop.f32.mrb[0].mxu0
        %v6718 = vadd.f32 0.0, %v6717
        %v6719 = vpop.f32.mrb[0].mxu0
        %v6720 = vpop.f32.mrb[0].mxu0
        %v6721 = vpop.f32.mrb[0].mxu0
        %6722 = vdwg.mxu0
        %v6723 = vpack.c.bf16 %v6713, %v6710
        %v6724 = vpack.c.bf16 %v6718, %v6718
        %v6728 = vunpack.c.l.b16 %v6672
        %v6729 = vunpack.c.l.b16 %v6673
        %v6730 = vunpack.c.l.b16 %v6674
        %v6731 = vpack.c.b16 %v6729, %v6728
        %v6732 = vpack.c.b16 %v6730, %v6730
        %v6734 = vsel %vm567, %v6731, 0
        %v6737 = vsel %vm567, %v6732, 0
        %v6740 = vsel %vm574, %v6724, 0
        %6742 = vmatprep.subr.bf16.mxu0 0
        %6743 = vmatpush1.bf16.msra.mxu0 %v6723
        %6744 = vmatprep.subr.bf16.mxu0 0
        %6745 = vmatpush1.bf16.msra.mxu0 %v6740
        %6746 = vmatprep.subr.bf16.mxu0 0
        %6747 = vmatpush1.bf16.msra.mxu0 0
        %6748 = vmatprep.subr.bf16.mxu0 0
        %6749 = vmatpush1.bf16.msra.mxu0 0
        %6750 = vmatprep.subr.bf16.mxu0 0
        %6751 = vmatpush1.bf16.msra.mxu0 0
        %6752 = vmatprep.subr.bf16.mxu0 0
        %6753 = vmatpush1.bf16.msra.mxu0 0
        %6754 = vmatprep.subr.bf16.mxu0 0
        %6755 = vmatpush1.bf16.msra.mxu0 0
        %6756 = vmatprep.subr.bf16.mxu0 0
        %6757 = vmatpush1.bf16.msra.mxu0 0
        %6758 = vmatprep.subr.bf16.mxu0 0
        %6759 = vmatpush1.bf16.msra.mxu0 0
        %6760 = vmatprep.subr.bf16.mxu0 0
        %6761 = vmatpush1.bf16.msra.mxu0 0
        %6762 = vmatprep.subr.bf16.mxu0 0
        %6763 = vmatpush1.bf16.msra.mxu0 0
        %6764 = vmatprep.subr.bf16.mxu0 0
        %6765 = vmatpush1.bf16.msra.mxu0 0
        %6766 = vmatprep.subr.bf16.mxu0 0
        %6767 = vmatpush1.bf16.msra.mxu0 0
        %6768 = vmatprep.subr.bf16.mxu0 0
        %6769 = vmatpush1.bf16.msra.mxu0 0
        %6770 = vmatprep.subr.bf16.mxu0 0
        %6771 = vmatpush1.bf16.msra.mxu0 0
        %6772 = vmatprep.subr.bf16.mxu0 0
        %6773 = vmatpush1.bf16.msra.mxu0 0
        %6774 = vmatprep.mubr.bf16.mxu0 0
        %6775 = vmatmul.mubr.bf16.gmra.mrb[0].mxu0 %v6734
        %v6776 = vpop.f32.mrb[0].mxu0
        %v6777 = vadd.f32 0.0, %v6776
        %v6778 = vpop.f32.mrb[0].mxu0
        %v6779 = vpop.f32.mrb[0].mxu0
        %v6780 = vadd.f32 0.0, %v6779
        %v6781 = vpop.f32.mrb[0].mxu0
        %6782 = vmatprep.mubr.bf16.mxu0 0
        %6783 = vmatmul.mubr.bf16.gmra.mrb[0].mxu0 %v6737
        %v6784 = vpop.f32.mrb[0].mxu0
        %v6785 = vadd.f32 0.0, %v6784
        %v6786 = vpop.f32.mrb[0].mxu0
        %v6787 = vpop.f32.mrb[0].mxu0
        %v6788 = vpop.f32.mrb[0].mxu0
        %6789 = vdwg.mxu0
        %v6793 = vunpack.c.l.b16 %v6612
        %v6794 = vunpack.c.l.b16 %v6613
        %v6795 = vunpack.c.l.b16 %v6614
        %v6796 = vpack.c.b16 %v6794, %v6793
        %v6797 = vpack.c.b16 %v6795, %v6795
        %v6799 = vsel %vm567, %v6796, 0
        %v6802 = vsel %vm567, %v6797, 0
        %v6805 = vsel %vm574, %v6670, 0
        %6807 = vmatprep.subr.bf16.mxu0 0
        %6808 = vmatpush1.bf16.msra.mxu0 %v6669
        %6809 = vmatprep.subr.bf16.mxu0 0
        %6810 = vmatpush1.bf16.msra.mxu0 %v6805
        %6811 = vmatprep.subr.bf16.mxu0 0
        %6812 = vmatpush1.bf16.msra.mxu0 0
        %6813 = vmatprep.subr.bf16.mxu0 0
        %6814 = vmatpush1.bf16.msra.mxu0 0
        %6815 = vmatprep.subr.bf16.mxu0 0
        %6816 = vmatpush1.bf16.msra.mxu0 0
        %6817 = vmatprep.subr.bf16.mxu0 0
        %6818 = vmatpush1.bf16.msra.mxu0 0
        %6819 = vmatprep.subr.bf16.mxu0 0
        %6820 = vmatpush1.bf16.msra.mxu0 0
        %6821 = vmatprep.subr.bf16.mxu0 0
        %6822 = vmatpush1.bf16.msra.mxu0 0
        %6823 = vmatprep.subr.bf16.mxu0 0
        %6824 = vmatpush1.bf16.msra.mxu0 0
        %6825 = vmatprep.subr.bf16.mxu0 0
        %6826 = vmatpush1.bf16.msra.mxu0 0
        %6827 = vmatprep.subr.bf16.mxu0 0
        %6828 = vmatpush1.bf16.msra.mxu0 0
        %6829 = vmatprep.subr.bf16.mxu0 0
        %6830 = vmatpush1.bf16.msra.mxu0 0
        %6831 = vmatprep.subr.bf16.mxu0 0
        %6832 = vmatpush1.bf16.msra.mxu0 0
        %6833 = vmatprep.subr.bf16.mxu0 0
        %6834 = vmatpush1.bf16.msra.mxu0 0
        %6835 = vmatprep.subr.bf16.mxu0 0
        %6836 = vmatpush1.bf16.msra.mxu0 0
        %6837 = vmatprep.subr.bf16.mxu0 0
        %6838 = vmatpush1.bf16.msra.mxu0 0
        %6839 = vmatprep.mubr.bf16.mxu0 0
        %6840 = vmatmul.mubr.bf16.gmra.mrb[0].mxu0 %v6799
        %v6841 = vpop.f32.mrb[0].mxu0
        %v6842 = vadd.f32 %v6777, %v6841
        %v6843 = vpop.f32.mrb[0].mxu0
        %v6844 = vpop.f32.mrb[0].mxu0
        %v6845 = vadd.f32 %v6780, %v6844
        %v6846 = vpop.f32.mrb[0].mxu0
        %6847 = vmatprep.mubr.bf16.mxu0 0
        %6848 = vmatmul.mubr.bf16.gmra.mrb[0].mxu0 %v6802
        %v6849 = vpop.f32.mrb[0].mxu0
        %v6850 = vadd.f32 %v6785, %v6849
        %v6851 = vpop.f32.mrb[0].mxu0
        %v6852 = vpop.f32.mrb[0].mxu0
        %v6853 = vpop.f32.mrb[0].mxu0
        %6854 = vdwg.mxu0
        %s6855 = scalar_lea.vmem %s1, 456
        %v6856 = vld [vmem:[%s6855] sm:$0xf]
        %v6857 = vld [vmem:[%s6855 + $0x4] sm:$0xf]
        %v6858 = vld [vmem:[%s6855 + $0x8] sm:$0xf]
        %6859 = vmatprep.subr.bf16.mxu0 0
        %6860 = vmatpush1.bf16.msra.mxu0 %v2619
        %6861 = vmatprep.subr.bf16.mxu0 0
        %6862 = vmatpush1.bf16.msra.mxu0 %v2620
        %6863 = vmatprep.subr.bf16.mxu0 0
        %6864 = vmatpush1.bf16.msra.mxu0 %v2621
        %6865 = vmatprep.subr.bf16.mxu0 0
        %6866 = vmatpush1.bf16.msra.mxu0 %v2622
        %6867 = vmatprep.subr.bf16.mxu0 0
        %6868 = vmatpush1.bf16.msra.mxu0 0
        %6869 = vmatprep.subr.bf16.mxu0 0
        %6870 = vmatpush1.bf16.msra.mxu0 0
        %6871 = vmatprep.subr.bf16.mxu0 0
        %6872 = vmatpush1.bf16.msra.mxu0 0
        %6873 = vmatprep.subr.bf16.mxu0 0
        %6874 = vmatpush1.bf16.msra.mxu0 0
        %6875 = vmatprep.subr.bf16.mxu0 0
        %6876 = vmatpush1.bf16.msra.mxu0 0
        %6877 = vmatprep.subr.bf16.mxu0 0
        %6878 = vmatpush1.bf16.msra.mxu0 0
        %6879 = vmatprep.subr.bf16.mxu0 0
        %6880 = vmatpush1.bf16.msra.mxu0 0
        %6881 = vmatprep.subr.bf16.mxu0 0
        %6882 = vmatpush1.bf16.msra.mxu0 0
        %6883 = vmatprep.subr.bf16.mxu0 0
        %6884 = vmatpush1.bf16.msra.mxu0 0
        %6885 = vmatprep.subr.bf16.mxu0 0
        %6886 = vmatpush1.bf16.msra.mxu0 0
        %6887 = vmatprep.subr.bf16.mxu0 0
        %6888 = vmatpush1.bf16.msra.mxu0 0
        %6889 = vmatprep.subr.bf16.mxu0 0
        %6890 = vmatpush1.bf16.msra.mxu0 0
        %6891 = vmatprep.mubr.bf16.mxu0 0
        %6892 = vmatmul.mubr.bf16.gmra.mrb[0].mxu0 %v6616
        %v6893 = vpop.f32.mrb[0].mxu0
        %v6894 = vadd.f32 0.0, %v6893
        %v6895 = vpop.f32.mrb[0].mxu0
        %v6896 = vpop.f32.mrb[0].mxu0
        %v6897 = vadd.f32 0.0, %v6896
        %v6898 = vpop.f32.mrb[0].mxu0
        %6899 = vmatprep.mubr.bf16.mxu0 0
        %6900 = vmatmul.mubr.bf16.gmra.mrb[0].mxu0 %v6619
        %v6901 = vpop.f32.mrb[0].mxu0
        %v6902 = vadd.f32 0.0, %v6901
        %v6903 = vpop.f32.mrb[0].mxu0
        %v6904 = vpop.f32.mrb[0].mxu0
        %v6905 = vpop.f32.mrb[0].mxu0
        %6906 = vdwg.mxu0
        %v6907 = vpack.c.bf16 %v6897, %v6894
        %v6908 = vpack.c.bf16 %v6902, %v6902
        %v6912 = vunpack.c.l.b16 %v6856
        %v6913 = vunpack.c.l.b16 %v6857
        %v6914 = vunpack.c.l.b16 %v6858
        %v6915 = vpack.c.b16 %v6913, %v6912
        %v6916 = vpack.c.b16 %v6914, %v6914
        %v6918 = vsel %vm567, %v6915, 0
        %v6921 = vsel %vm567, %v6916, 0
        %v6924 = vsel %vm574, %v6908, 0
        %6926 = vmatprep.subr.bf16.mxu0 0
        %6927 = vmatpush1.bf16.msra.mxu0 %v6907
        %6928 = vmatprep.subr.bf16.mxu0 0
        %6929 = vmatpush1.bf16.msra.mxu0 %v6924
        %6930 = vmatprep.subr.bf16.mxu0 0
        %6931 = vmatpush1.bf16.msra.mxu0 0
        %6932 = vmatprep.subr.bf16.mxu0 0
        %6933 = vmatpush1.bf16.msra.mxu0 0
        %6934 = vmatprep.subr.bf16.mxu0 0
        %6935 = vmatpush1.bf16.msra.mxu0 0
        %6936 = vmatprep.subr.bf16.mxu0 0
        %6937 = vmatpush1.bf16.msra.mxu0 0
        %6938 = vmatprep.subr.bf16.mxu0 0
        %6939 = vmatpush1.bf16.msra.mxu0 0
        %6940 = vmatprep.subr.bf16.mxu0 0
        %6941 = vmatpush1.bf16.msra.mxu0 0
        %6942 = vmatprep.subr.bf16.mxu0 0
        %6943 = vmatpush1.bf16.msra.mxu0 0
        %6944 = vmatprep.subr.bf16.mxu0 0
        %6945 = vmatpush1.bf16.msra.mxu0 0
        %6946 = vmatprep.subr.bf16.mxu0 0
        %6947 = vmatpush1.bf16.msra.mxu0 0
        %6948 = vmatprep.subr.bf16.mxu0 0
        %6949 = vmatpush1.bf16.msra.mxu0 0
        %6950 = vmatprep.subr.bf16.mxu0 0
        %6951 = vmatpush1.bf16.msra.mxu0 0
        %6952 = vmatprep.subr.bf16.mxu0 0
        %6953 = vmatpush1.bf16.msra.mxu0 0
        %6954 = vmatprep.subr.bf16.mxu0 0
        %6955 = vmatpush1.bf16.msra.mxu0 0
        %6956 = vmatprep.subr.bf16.mxu0 0
        %6957 = vmatpush1.bf16.msra.mxu0 0
        %6958 = vmatprep.mubr.bf16.mxu0 0
        %6959 = vmatmul.mubr.bf16.gmra.mrb[0].mxu0 %v6918
        %v6960 = vpop.f32.mrb[0].mxu0
        %v6961 = vadd.f32 0.0, %v6960
        %v6962 = vpop.f32.mrb[0].mxu0
        %v6963 = vpop.f32.mrb[0].mxu0
        %v6964 = vadd.f32 0.0, %v6963
        %v6965 = vpop.f32.mrb[0].mxu0
        %6966 = vmatprep.mubr.bf16.mxu0 0
        %6967 = vmatmul.mubr.bf16.gmra.mrb[0].mxu0 %v6921
        %v6968 = vpop.f32.mrb[0].mxu0
        %v6969 = vadd.f32 0.0, %v6968
        %v6970 = vpop.f32.mrb[0].mxu0
        %v6971 = vpop.f32.mrb[0].mxu0
        %v6972 = vpop.f32.mrb[0].mxu0
        %6973 = vdwg.mxu0
        %v6974 = vadd.f32 %v6842, %v6961
        %v6975 = vadd.f32 %v6845, %v6964
        %v6976 = vadd.f32 %v6850, %v6969
        %s6977 = scalar_lea.vmem %s1, 468
        %v6978 = vld [vmem:[%s6977] sm:$0xf]
        %v6979 = vld [vmem:[%s6977 + $0x4] sm:$0xf]
        %v6980 = vld [vmem:[%s6977 + $0x8] sm:$0xf]
        %6981 = vmatprep.subr.bf16.mxu0 0
        %6982 = vmatpush1.bf16.msra.mxu0 %v2774
        %6983 = vmatprep.subr.bf16.mxu0 0
        %6984 = vmatpush1.bf16.msra.mxu0 %v2775
        %6985 = vmatprep.subr.bf16.mxu0 0
        %6986 = vmatpush1.bf16.msra.mxu0 %v2776
        %6987 = vmatprep.subr.bf16.mxu0 0
        %6988 = vmatpush1.bf16.msra.mxu0 %v2777
        %6989 = vmatprep.subr.bf16.mxu0 0
        %6990 = vmatpush1.bf16.msra.mxu0 0
        %6991 = vmatprep.subr.bf16.mxu0 0
        %6992 = vmatpush1.bf16.msra.mxu0 0
        %6993 = vmatprep.subr.bf16.mxu0 0
        %6994 = vmatpush1.bf16.msra.mxu0 0
        %6995 = vmatprep.subr.bf16.mxu0 0
        %6996 = vmatpush1.bf16.msra.mxu0 0
        %6997 = vmatprep.subr.bf16.mxu0 0
        %6998 = vmatpush1.bf16.msra.mxu0 0
        %6999 = vmatprep.subr.bf16.mxu0 0
        %7000 = vmatpush1.bf16.msra.mxu0 0
        %7001 = vmatprep.subr.bf16.mxu0 0
        %7002 = vmatpush1.bf16.msra.mxu0 0
        %7003 = vmatprep.subr.bf16.mxu0 0
        %7004 = vmatpush1.bf16.msra.mxu0 0
        %7005 = vmatprep.subr.bf16.mxu0 0
        %7006 = vmatpush1.bf16.msra.mxu0 0
        %7007 = vmatprep.subr.bf16.mxu0 0
        %7008 = vmatpush1.bf16.msra.mxu0 0
        %7009 = vmatprep.subr.bf16.mxu0 0
        %7010 = vmatpush1.bf16.msra.mxu0 0
        %7011 = vmatprep.subr.bf16.mxu0 0
        %7012 = vmatpush1.bf16.msra.mxu0 0
        %7013 = vmatprep.mubr.bf16.mxu0 0
        %7014 = vmatmul.mubr.bf16.gmra.mrb[0].mxu0 %v6616
        %v7015 = vpop.f32.mrb[0].mxu0
        %v7016 = vadd.f32 0.0, %v7015
        %v7017 = vpop.f32.mrb[0].mxu0
        %v7018 = vpop.f32.mrb[0].mxu0
        %v7019 = vadd.f32 0.0, %v7018
        %v7020 = vpop.f32.mrb[0].mxu0
        %7021 = vmatprep.mubr.bf16.mxu0 0
        %7022 = vmatmul.mubr.bf16.gmra.mrb[0].mxu0 %v6619
        %v7023 = vpop.f32.mrb[0].mxu0
        %v7024 = vadd.f32 0.0, %v7023
        %v7025 = vpop.f32.mrb[0].mxu0
        %v7026 = vpop.f32.mrb[0].mxu0
        %v7027 = vpop.f32.mrb[0].mxu0
        %7028 = vdwg.mxu0
        %v7029 = vpack.c.bf16 %v7019, %v7016
        %v7030 = vpack.c.bf16 %v7024, %v7024
        %v7034 = vunpack.c.l.b16 %v6978
        %v7035 = vunpack.c.l.b16 %v6979
        %v7036 = vunpack.c.l.b16 %v6980
        %v7037 = vpack.c.b16 %v7035, %v7034
        %v7038 = vpack.c.b16 %v7036, %v7036
        %v7040 = vsel %vm567, %v7037, 0
        %v7043 = vsel %vm567, %v7038, 0
        %v7046 = vsel %vm574, %v7030, 0
        %7048 = vmatprep.subr.bf16.mxu0 0
        %7049 = vmatpush1.bf16.msra.mxu0 %v7029
        %7050 = vmatprep.subr.bf16.mxu0 0
        %7051 = vmatpush1.bf16.msra.mxu0 %v7046
        %7052 = vmatprep.subr.bf16.mxu0 0
        %7053 = vmatpush1.bf16.msra.mxu0 0
        %7054 = vmatprep.subr.bf16.mxu0 0
        %7055 = vmatpush1.bf16.msra.mxu0 0
        %7056 = vmatprep.subr.bf16.mxu0 0
        %7057 = vmatpush1.bf16.msra.mxu0 0
        %7058 = vmatprep.subr.bf16.mxu0 0
        %7059 = vmatpush1.bf16.msra.mxu0 0
        %7060 = vmatprep.subr.bf16.mxu0 0
        %7061 = vmatpush1.bf16.msra.mxu0 0
        %7062 = vmatprep.subr.bf16.mxu0 0
        %7063 = vmatpush1.bf16.msra.mxu0 0
        %7064 = vmatprep.subr.bf16.mxu0 0
        %7065 = vmatpush1.bf16.msra.mxu0 0
        %7066 = vmatprep.subr.bf16.mxu0 0
        %7067 = vmatpush1.bf16.msra.mxu0 0
        %7068 = vmatprep.subr.bf16.mxu0 0
        %7069 = vmatpush1.bf16.msra.mxu0 0
        %7070 = vmatprep.subr.bf16.mxu0 0
        %7071 = vmatpush1.bf16.msra.mxu0 0
        %7072 = vmatprep.subr.bf16.mxu0 0
        %7073 = vmatpush1.bf16.msra.mxu0 0
        %7074 = vmatprep.subr.bf16.mxu0 0
        %7075 = vmatpush1.bf16.msra.mxu0 0
        %7076 = vmatprep.subr.bf16.mxu0 0
        %7077 = vmatpush1.bf16.msra.mxu0 0
        %7078 = vmatprep.subr.bf16.mxu0 0
        %7079 = vmatpush1.bf16.msra.mxu0 0
        %7080 = vmatprep.mubr.bf16.mxu0 0
        %7081 = vmatmul.mubr.bf16.gmra.mrb[0].mxu0 %v7040
        %v7082 = vpop.f32.mrb[0].mxu0
        %v7083 = vadd.f32 0.0, %v7082
        %v7084 = vpop.f32.mrb[0].mxu0
        %v7085 = vpop.f32.mrb[0].mxu0
        %v7086 = vadd.f32 0.0, %v7085
        %v7087 = vpop.f32.mrb[0].mxu0
        %7088 = vmatprep.mubr.bf16.mxu0 0
        %7089 = vmatmul.mubr.bf16.gmra.mrb[0].mxu0 %v7043
        %v7090 = vpop.f32.mrb[0].mxu0
        %v7091 = vadd.f32 0.0, %v7090
        %v7092 = vpop.f32.mrb[0].mxu0
        %v7093 = vpop.f32.mrb[0].mxu0
        %v7094 = vpop.f32.mrb[0].mxu0
        %7095 = vdwg.mxu0
        %v7096 = vadd.f32 %v6974, %v7083
        %v7097 = vadd.f32 %v6975, %v7086
        %v7098 = vadd.f32 %v6976, %v7091
        %s7099 = scalar_lea.vmem %s1, 480
        %v7100 = vld [vmem:[%s7099] sm:$0xf]
        %v7101 = vld [vmem:[%s7099 + $0x4] sm:$0xf]
        %v7102 = vld [vmem:[%s7099 + $0x8] sm:$0xf]
        %7103 = vmatprep.subr.bf16.mxu0 0
        %7104 = vmatpush1.bf16.msra.mxu0 %v2929
        %7105 = vmatprep.subr.bf16.mxu0 0
        %7106 = vmatpush1.bf16.msra.mxu0 %v2930
        %7107 = vmatprep.subr.bf16.mxu0 0
        %7108 = vmatpush1.bf16.msra.mxu0 %v2931
        %7109 = vmatprep.subr.bf16.mxu0 0
        %7110 = vmatpush1.bf16.msra.mxu0 %v2932
        %7111 = vmatprep.subr.bf16.mxu0 0
        %7112 = vmatpush1.bf16.msra.mxu0 0
        %7113 = vmatprep.subr.bf16.mxu0 0
        %7114 = vmatpush1.bf16.msra.mxu0 0
        %7115 = vmatprep.subr.bf16.mxu0 0
        %7116 = vmatpush1.bf16.msra.mxu0 0
        %7117 = vmatprep.subr.bf16.mxu0 0
        %7118 = vmatpush1.bf16.msra.mxu0 0
        %7119 = vmatprep.subr.bf16.mxu0 0
        %7120 = vmatpush1.bf16.msra.mxu0 0
        %7121 = vmatprep.subr.bf16.mxu0 0
        %7122 = vmatpush1.bf16.msra.mxu0 0
        %7123 = vmatprep.subr.bf16.mxu0 0
        %7124 = vmatpush1.bf16.msra.mxu0 0
        %7125 = vmatprep.subr.bf16.mxu0 0
        %7126 = vmatpush1.bf16.msra.mxu0 0
        %7127 = vmatprep.subr.bf16.mxu0 0
        %7128 = vmatpush1.bf16.msra.mxu0 0
        %7129 = vmatprep.subr.bf16.mxu0 0
        %7130 = vmatpush1.bf16.msra.mxu0 0
        %7131 = vmatprep.subr.bf16.mxu0 0
        %7132 = vmatpush1.bf16.msra.mxu0 0
        %7133 = vmatprep.subr.bf16.mxu0 0
        %7134 = vmatpush1.bf16.msra.mxu0 0
        %7135 = vmatprep.mubr.bf16.mxu0 0
        %7136 = vmatmul.mubr.bf16.gmra.mrb[0].mxu0 %v6616
        %v7137 = vpop.f32.mrb[0].mxu0
        %v7138 = vadd.f32 0.0, %v7137
        %v7139 = vpop.f32.mrb[0].mxu0
        %v7140 = vpop.f32.mrb[0].mxu0
        %v7141 = vadd.f32 0.0, %v7140
        %v7142 = vpop.f32.mrb[0].mxu0
        %7143 = vmatprep.mubr.bf16.mxu0 0
        %7144 = vmatmul.mubr.bf16.gmra.mrb[0].mxu0 %v6619
        %v7145 = vpop.f32.mrb[0].mxu0
        %v7146 = vadd.f32 0.0, %v7145
        %v7147 = vpop.f32.mrb[0].mxu0
        %v7148 = vpop.f32.mrb[0].mxu0
        %v7149 = vpop.f32.mrb[0].mxu0
        %7150 = vdwg.mxu0
        %v7151 = vpack.c.bf16 %v7141, %v7138
        %v7152 = vpack.c.bf16 %v7146, %v7146
        %v7156 = vunpack.c.l.b16 %v7100
        %v7157 = vunpack.c.l.b16 %v7101
        %v7158 = vunpack.c.l.b16 %v7102
        %v7159 = vpack.c.b16 %v7157, %v7156
        %v7160 = vpack.c.b16 %v7158, %v7158
        %v7162 = vsel %vm567, %v7159, 0
        %v7165 = vsel %vm567, %v7160, 0
        %v7168 = vsel %vm574, %v7152, 0
        %7170 = vmatprep.subr.bf16.mxu0 0
        %7171 = vmatpush1.bf16.msra.mxu0 %v7151
        %7172 = vmatprep.subr.bf16.mxu0 0
        %7173 = vmatpush1.bf16.msra.mxu0 %v7168
        %7174 = vmatprep.subr.bf16.mxu0 0
        %7175 = vmatpush1.bf16.msra.mxu0 0
        %7176 = vmatprep.subr.bf16.mxu0 0
        %7177 = vmatpush1.bf16.msra.mxu0 0
        %7178 = vmatprep.subr.bf16.mxu0 0
        %7179 = vmatpush1.bf16.msra.mxu0 0
        %7180 = vmatprep.subr.bf16.mxu0 0
        %7181 = vmatpush1.bf16.msra.mxu0 0
        %7182 = vmatprep.subr.bf16.mxu0 0
        %7183 = vmatpush1.bf16.msra.mxu0 0
        %7184 = vmatprep.subr.bf16.mxu0 0
        %7185 = vmatpush1.bf16.msra.mxu0 0
        %7186 = vmatprep.subr.bf16.mxu0 0
        %7187 = vmatpush1.bf16.msra.mxu0 0
        %7188 = vmatprep.subr.bf16.mxu0 0
        %7189 = vmatpush1.bf16.msra.mxu0 0
        %7190 = vmatprep.subr.bf16.mxu0 0
        %7191 = vmatpush1.bf16.msra.mxu0 0
        %7192 = vmatprep.subr.bf16.mxu0 0
        %7193 = vmatpush1.bf16.msra.mxu0 0
        %7194 = vmatprep.subr.bf16.mxu0 0
        %7195 = vmatpush1.bf16.msra.mxu0 0
        %7196 = vmatprep.subr.bf16.mxu0 0
        %7197 = vmatpush1.bf16.msra.mxu0 0
        %7198 = vmatprep.subr.bf16.mxu0 0
        %7199 = vmatpush1.bf16.msra.mxu0 0
        %7200 = vmatprep.subr.bf16.mxu0 0
        %7201 = vmatpush1.bf16.msra.mxu0 0
        %7202 = vmatprep.mubr.bf16.mxu0 0
        %7203 = vmatmul.mubr.bf16.gmra.mrb[0].mxu0 %v7162
        %v7204 = vpop.f32.mrb[0].mxu0
        %v7205 = vadd.f32 0.0, %v7204
        %v7206 = vpop.f32.mrb[0].mxu0
        %v7207 = vpop.f32.mrb[0].mxu0
        %v7208 = vadd.f32 0.0, %v7207
        %v7209 = vpop.f32.mrb[0].mxu0
        %7210 = vmatprep.mubr.bf16.mxu0 0
        %7211 = vmatmul.mubr.bf16.gmra.mrb[0].mxu0 %v7165
        %v7212 = vpop.f32.mrb[0].mxu0
        %v7213 = vadd.f32 0.0, %v7212
        %v7214 = vpop.f32.mrb[0].mxu0
        %v7215 = vpop.f32.mrb[0].mxu0
        %v7216 = vpop.f32.mrb[0].mxu0
        %7217 = vdwg.mxu0
        %v7218 = vadd.f32 %v7096, %v7205
        %v7219 = vadd.f32 %v7097, %v7208
        %v7220 = vadd.f32 %v7098, %v7213
        %s7221 = scalar_lea.vmem %s1, 492
        %v7222 = vld [vmem:[%s7221] sm:$0xf]
        %v7223 = vld [vmem:[%s7221 + $0x4] sm:$0xf]
        %v7224 = vld [vmem:[%s7221 + $0x8] sm:$0xf]
        %7225 = vmatprep.subr.bf16.mxu0 0
        %7226 = vmatpush1.bf16.msra.mxu0 %v3084
        %7227 = vmatprep.subr.bf16.mxu0 0
        %7228 = vmatpush1.bf16.msra.mxu0 %v3085
        %7229 = vmatprep.subr.bf16.mxu0 0
        %7230 = vmatpush1.bf16.msra.mxu0 %v3086
        %7231 = vmatprep.subr.bf16.mxu0 0
        %7232 = vmatpush1.bf16.msra.mxu0 %v3087
        %7233 = vmatprep.subr.bf16.mxu0 0
        %7234 = vmatpush1.bf16.msra.mxu0 0
        %7235 = vmatprep.subr.bf16.mxu0 0
        %7236 = vmatpush1.bf16.msra.mxu0 0
        %7237 = vmatprep.subr.bf16.mxu0 0
        %7238 = vmatpush1.bf16.msra.mxu0 0
        %7239 = vmatprep.subr.bf16.mxu0 0
        %7240 = vmatpush1.bf16.msra.mxu0 0
        %7241 = vmatprep.subr.bf16.mxu0 0
        %7242 = vmatpush1.bf16.msra.mxu0 0
        %7243 = vmatprep.subr.bf16.mxu0 0
        %7244 = vmatpush1.bf16.msra.mxu0 0
        %7245 = vmatprep.subr.bf16.mxu0 0
        %7246 = vmatpush1.bf16.msra.mxu0 0
        %7247 = vmatprep.subr.bf16.mxu0 0
        %7248 = vmatpush1.bf16.msra.mxu0 0
        %7249 = vmatprep.subr.bf16.mxu0 0
        %7250 = vmatpush1.bf16.msra.mxu0 0
        %7251 = vmatprep.subr.bf16.mxu0 0
        %7252 = vmatpush1.bf16.msra.mxu0 0
        %7253 = vmatprep.subr.bf16.mxu0 0
        %7254 = vmatpush1.bf16.msra.mxu0 0
        %7255 = vmatprep.subr.bf16.mxu0 0
        %7256 = vmatpush1.bf16.msra.mxu0 0
        %7257 = vmatprep.mubr.bf16.mxu0 0
        %7258 = vmatmul.mubr.bf16.gmra.mrb[0].mxu0 %v6616
        %v7259 = vpop.f32.mrb[0].mxu0
        %v7260 = vadd.f32 0.0, %v7259
        %v7261 = vpop.f32.mrb[0].mxu0
        %v7262 = vpop.f32.mrb[0].mxu0
        %v7263 = vadd.f32 0.0, %v7262
        %v7264 = vpop.f32.mrb[0].mxu0
        %7265 = vmatprep.mubr.bf16.mxu0 0
        %7266 = vmatmul.mubr.bf16.gmra.mrb[0].mxu0 %v6619
        %v7267 = vpop.f32.mrb[0].mxu0
        %v7268 = vadd.f32 0.0, %v7267
        %v7269 = vpop.f32.mrb[0].mxu0
        %v7270 = vpop.f32.mrb[0].mxu0
        %v7271 = vpop.f32.mrb[0].mxu0
        %7272 = vdwg.mxu0
        %v7273 = vpack.c.bf16 %v7263, %v7260
        %v7274 = vpack.c.bf16 %v7268, %v7268
        %v7278 = vunpack.c.l.b16 %v7222
        %v7279 = vunpack.c.l.b16 %v7223
        %v7280 = vunpack.c.l.b16 %v7224
        %v7281 = vpack.c.b16 %v7279, %v7278
        %v7282 = vpack.c.b16 %v7280, %v7280
        %v7284 = vsel %vm567, %v7281, 0
        %v7287 = vsel %vm567, %v7282, 0
        %v7290 = vsel %vm574, %v7274, 0
        %7292 = vmatprep.subr.bf16.mxu0 0
        %7293 = vmatpush1.bf16.msra.mxu0 %v7273
        %7294 = vmatprep.subr.bf16.mxu0 0
        %7295 = vmatpush1.bf16.msra.mxu0 %v7290
        %7296 = vmatprep.subr.bf16.mxu0 0
        %7297 = vmatpush1.bf16.msra.mxu0 0
        %7298 = vmatprep.subr.bf16.mxu0 0
        %7299 = vmatpush1.bf16.msra.mxu0 0
        %7300 = vmatprep.subr.bf16.mxu0 0
        %7301 = vmatpush1.bf16.msra.mxu0 0
        %7302 = vmatprep.subr.bf16.mxu0 0
        %7303 = vmatpush1.bf16.msra.mxu0 0
        %7304 = vmatprep.subr.bf16.mxu0 0
        %7305 = vmatpush1.bf16.msra.mxu0 0
        %7306 = vmatprep.subr.bf16.mxu0 0
        %7307 = vmatpush1.bf16.msra.mxu0 0
        %7308 = vmatprep.subr.bf16.mxu0 0
        %7309 = vmatpush1.bf16.msra.mxu0 0
        %7310 = vmatprep.subr.bf16.mxu0 0
        %7311 = vmatpush1.bf16.msra.mxu0 0
        %7312 = vmatprep.subr.bf16.mxu0 0
        %7313 = vmatpush1.bf16.msra.mxu0 0
        %7314 = vmatprep.subr.bf16.mxu0 0
        %7315 = vmatpush1.bf16.msra.mxu0 0
        %7316 = vmatprep.subr.bf16.mxu0 0
        %7317 = vmatpush1.bf16.msra.mxu0 0
        %7318 = vmatprep.subr.bf16.mxu0 0
        %7319 = vmatpush1.bf16.msra.mxu0 0
        %7320 = vmatprep.subr.bf16.mxu0 0
        %7321 = vmatpush1.bf16.msra.mxu0 0
        %7322 = vmatprep.subr.bf16.mxu0 0
        %7323 = vmatpush1.bf16.msra.mxu0 0
        %7324 = vmatprep.mubr.bf16.mxu0 0
        %7325 = vmatmul.mubr.bf16.gmra.mrb[0].mxu0 %v7284
        %v7326 = vpop.f32.mrb[0].mxu0
        %v7327 = vadd.f32 0.0, %v7326
        %v7328 = vpop.f32.mrb[0].mxu0
        %v7329 = vpop.f32.mrb[0].mxu0
        %v7330 = vadd.f32 0.0, %v7329
        %v7331 = vpop.f32.mrb[0].mxu0
        %7332 = vmatprep.mubr.bf16.mxu0 0
        %7333 = vmatmul.mubr.bf16.gmra.mrb[0].mxu0 %v7287
        %v7334 = vpop.f32.mrb[0].mxu0
        %v7335 = vadd.f32 0.0, %v7334
        %v7336 = vpop.f32.mrb[0].mxu0
        %v7337 = vpop.f32.mrb[0].mxu0
        %v7338 = vpop.f32.mrb[0].mxu0
        %7339 = vdwg.mxu0
        %v7340 = vadd.f32 %v7218, %v7327
        %v7341 = vadd.f32 %v7219, %v7330
        %v7342 = vadd.f32 %v7220, %v7335
        %s7343 = scalar_lea.vmem %s1, 504
        %v7344 = vld [vmem:[%s7343] sm:$0xf]
        %v7345 = vld [vmem:[%s7343 + $0x4] sm:$0xf]
        %v7346 = vld [vmem:[%s7343 + $0x8] sm:$0xf]
        %7347 = vmatprep.subr.bf16.mxu0 0
        %7348 = vmatpush1.bf16.msra.mxu0 %v3239
        %7349 = vmatprep.subr.bf16.mxu0 0
        %7350 = vmatpush1.bf16.msra.mxu0 %v3240
        %7351 = vmatprep.subr.bf16.mxu0 0
        %7352 = vmatpush1.bf16.msra.mxu0 %v3241
        %7353 = vmatprep.subr.bf16.mxu0 0
        %7354 = vmatpush1.bf16.msra.mxu0 %v3242
        %7355 = vmatprep.subr.bf16.mxu0 0
        %7356 = vmatpush1.bf16.msra.mxu0 0
        %7357 = vmatprep.subr.bf16.mxu0 0
        %7358 = vmatpush1.bf16.msra.mxu0 0
        %7359 = vmatprep.subr.bf16.mxu0 0
        %7360 = vmatpush1.bf16.msra.mxu0 0
        %7361 = vmatprep.subr.bf16.mxu0 0
        %7362 = vmatpush1.bf16.msra.mxu0 0
        %7363 = vmatprep.subr.bf16.mxu0 0
        %7364 = vmatpush1.bf16.msra.mxu0 0
        %7365 = vmatprep.subr.bf16.mxu0 0
        %7366 = vmatpush1.bf16.msra.mxu0 0
        %7367 = vmatprep.subr.bf16.mxu0 0
        %7368 = vmatpush1.bf16.msra.mxu0 0
        %7369 = vmatprep.subr.bf16.mxu0 0
        %7370 = vmatpush1.bf16.msra.mxu0 0
        %7371 = vmatprep.subr.bf16.mxu0 0
        %7372 = vmatpush1.bf16.msra.mxu0 0
        %7373 = vmatprep.subr.bf16.mxu0 0
        %7374 = vmatpush1.bf16.msra.mxu0 0
        %7375 = vmatprep.subr.bf16.mxu0 0
        %7376 = vmatpush1.bf16.msra.mxu0 0
        %7377 = vmatprep.subr.bf16.mxu0 0
        %7378 = vmatpush1.bf16.msra.mxu0 0
        %7379 = vmatprep.mubr.bf16.mxu0 0
        %7380 = vmatmul.mubr.bf16.gmra.mrb[0].mxu0 %v6616
        %v7381 = vpop.f32.mrb[0].mxu0
        %v7382 = vadd.f32 0.0, %v7381
        %v7383 = vpop.f32.mrb[0].mxu0
        %v7384 = vpop.f32.mrb[0].mxu0
        %v7385 = vadd.f32 0.0, %v7384
        %v7386 = vpop.f32.mrb[0].mxu0
        %7387 = vmatprep.mubr.bf16.mxu0 0
        %7388 = vmatmul.mubr.bf16.gmra.mrb[0].mxu0 %v6619
        %v7389 = vpop.f32.mrb[0].mxu0
        %v7390 = vadd.f32 0.0, %v7389
        %v7391 = vpop.f32.mrb[0].mxu0
        %v7392 = vpop.f32.mrb[0].mxu0
        %v7393 = vpop.f32.mrb[0].mxu0
        %7394 = vdwg.mxu0
        %v7395 = vpack.c.bf16 %v7385, %v7382
        %v7396 = vpack.c.bf16 %v7390, %v7390
        %v7400 = vunpack.c.l.b16 %v7344
        %v7401 = vunpack.c.l.b16 %v7345
        %v7402 = vunpack.c.l.b16 %v7346
        %v7403 = vpack.c.b16 %v7401, %v7400
        %v7404 = vpack.c.b16 %v7402, %v7402
        %v7406 = vsel %vm567, %v7403, 0
        %v7409 = vsel %vm567, %v7404, 0
        %v7412 = vsel %vm574, %v7396, 0
        %7414 = vmatprep.subr.bf16.mxu0 0
        %7415 = vmatpush1.bf16.msra.mxu0 %v7395
        %7416 = vmatprep.subr.bf16.mxu0 0
        %7417 = vmatpush1.bf16.msra.mxu0 %v7412
        %7418 = vmatprep.subr.bf16.mxu0 0
        %7419 = vmatpush1.bf16.msra.mxu0 0
        %7420 = vmatprep.subr.bf16.mxu0 0
        %7421 = vmatpush1.bf16.msra.mxu0 0
        %7422 = vmatprep.subr.bf16.mxu0 0
        %7423 = vmatpush1.bf16.msra.mxu0 0
        %7424 = vmatprep.subr.bf16.mxu0 0
        %7425 = vmatpush1.bf16.msra.mxu0 0
        %7426 = vmatprep.subr.bf16.mxu0 0
        %7427 = vmatpush1.bf16.msra.mxu0 0
        %7428 = vmatprep.subr.bf16.mxu0 0
        %7429 = vmatpush1.bf16.msra.mxu0 0
        %7430 = vmatprep.subr.bf16.mxu0 0
        %7431 = vmatpush1.bf16.msra.mxu0 0
        %7432 = vmatprep.subr.bf16.mxu0 0
        %7433 = vmatpush1.bf16.msra.mxu0 0
        %7434 = vmatprep.subr.bf16.mxu0 0
        %7435 = vmatpush1.bf16.msra.mxu0 0
        %7436 = vmatprep.subr.bf16.mxu0 0
        %7437 = vmatpush1.bf16.msra.mxu0 0
        %7438 = vmatprep.subr.bf16.mxu0 0
        %7439 = vmatpush1.bf16.msra.mxu0 0
        %7440 = vmatprep.subr.bf16.mxu0 0
        %7441 = vmatpush1.bf16.msra.mxu0 0
        %7442 = vmatprep.subr.bf16.mxu0 0
        %7443 = vmatpush1.bf16.msra.mxu0 0
        %7444 = vmatprep.subr.bf16.mxu0 0
        %7445 = vmatpush1.bf16.msra.mxu0 0
        %7446 = vmatprep.mubr.bf16.mxu0 0
        %7447 = vmatmul.mubr.bf16.gmra.mrb[0].mxu0 %v7406
        %v7448 = vpop.f32.mrb[0].mxu0
        %v7449 = vadd.f32 0.0, %v7448
        %v7450 = vpop.f32.mrb[0].mxu0
        %v7451 = vpop.f32.mrb[0].mxu0
        %v7452 = vadd.f32 0.0, %v7451
        %v7453 = vpop.f32.mrb[0].mxu0
        %7454 = vmatprep.mubr.bf16.mxu0 0
        %7455 = vmatmul.mubr.bf16.gmra.mrb[0].mxu0 %v7409
        %v7456 = vpop.f32.mrb[0].mxu0
        %v7457 = vadd.f32 0.0, %v7456
        %v7458 = vpop.f32.mrb[0].mxu0
        %v7459 = vpop.f32.mrb[0].mxu0
        %v7460 = vpop.f32.mrb[0].mxu0
        %7461 = vdwg.mxu0
        %v7462 = vadd.f32 %v7340, %v7449
        %v7463 = vadd.f32 %v7341, %v7452
        %v7464 = vadd.f32 %v7342, %v7457
        %s7465 = scalar_lea.vmem %s1, 516
        %v7466 = vld [vmem:[%s7465] sm:$0xf]
        %v7467 = vld [vmem:[%s7465 + $0x4] sm:$0xf]
        %v7468 = vld [vmem:[%s7465 + $0x8] sm:$0xf]
        %7469 = vmatprep.subr.bf16.mxu0 0
        %7470 = vmatpush1.bf16.msra.mxu0 %v3394
        %7471 = vmatprep.subr.bf16.mxu0 0
        %7472 = vmatpush1.bf16.msra.mxu0 %v3395
        %7473 = vmatprep.subr.bf16.mxu0 0
        %7474 = vmatpush1.bf16.msra.mxu0 %v3396
        %7475 = vmatprep.subr.bf16.mxu0 0
        %7476 = vmatpush1.bf16.msra.mxu0 %v3397
        %7477 = vmatprep.subr.bf16.mxu0 0
        %7478 = vmatpush1.bf16.msra.mxu0 0
        %7479 = vmatprep.subr.bf16.mxu0 0
        %7480 = vmatpush1.bf16.msra.mxu0 0
        %7481 = vmatprep.subr.bf16.mxu0 0
        %7482 = vmatpush1.bf16.msra.mxu0 0
        %7483 = vmatprep.subr.bf16.mxu0 0
        %7484 = vmatpush1.bf16.msra.mxu0 0
        %7485 = vmatprep.subr.bf16.mxu0 0
        %7486 = vmatpush1.bf16.msra.mxu0 0
        %7487 = vmatprep.subr.bf16.mxu0 0
        %7488 = vmatpush1.bf16.msra.mxu0 0
        %7489 = vmatprep.subr.bf16.mxu0 0
        %7490 = vmatpush1.bf16.msra.mxu0 0
        %7491 = vmatprep.subr.bf16.mxu0 0
        %7492 = vmatpush1.bf16.msra.mxu0 0
        %7493 = vmatprep.subr.bf16.mxu0 0
        %7494 = vmatpush1.bf16.msra.mxu0 0
        %7495 = vmatprep.subr.bf16.mxu0 0
        %7496 = vmatpush1.bf16.msra.mxu0 0
        %7497 = vmatprep.subr.bf16.mxu0 0
        %7498 = vmatpush1.bf16.msra.mxu0 0
        %7499 = vmatprep.subr.bf16.mxu0 0
        %7500 = vmatpush1.bf16.msra.mxu0 0
        %7501 = vmatprep.mubr.bf16.mxu0 0
        %7502 = vmatmul.mubr.bf16.gmra.mrb[0].mxu0 %v6616
        %v7503 = vpop.f32.mrb[0].mxu0
        %v7504 = vadd.f32 0.0, %v7503
        %v7505 = vpop.f32.mrb[0].mxu0
        %v7506 = vpop.f32.mrb[0].mxu0
        %v7507 = vadd.f32 0.0, %v7506
        %v7508 = vpop.f32.mrb[0].mxu0
        %7509 = vmatprep.mubr.bf16.mxu0 0
        %7510 = vmatmul.mubr.bf16.gmra.mrb[0].mxu0 %v6619
        %v7511 = vpop.f32.mrb[0].mxu0
        %v7512 = vadd.f32 0.0, %v7511
        %v7513 = vpop.f32.mrb[0].mxu0
        %v7514 = vpop.f32.mrb[0].mxu0
        %v7515 = vpop.f32.mrb[0].mxu0
        %7516 = vdwg.mxu0
        %v7517 = vpack.c.bf16 %v7507, %v7504
        %v7518 = vpack.c.bf16 %v7512, %v7512
        %v7522 = vunpack.c.l.b16 %v7466
        %v7523 = vunpack.c.l.b16 %v7467
        %v7524 = vunpack.c.l.b16 %v7468
        %v7525 = vpack.c.b16 %v7523, %v7522
        %v7526 = vpack.c.b16 %v7524, %v7524
        %v7528 = vsel %vm567, %v7525, 0
        %v7531 = vsel %vm567, %v7526, 0
        %v7534 = vsel %vm574, %v7518, 0
        %7536 = vmatprep.subr.bf16.mxu0 0
        %7537 = vmatpush1.bf16.msra.mxu0 %v7517
        %7538 = vmatprep.subr.bf16.mxu0 0
        %7539 = vmatpush1.bf16.msra.mxu0 %v7534
        %7540 = vmatprep.subr.bf16.mxu0 0
        %7541 = vmatpush1.bf16.msra.mxu0 0
        %7542 = vmatprep.subr.bf16.mxu0 0
        %7543 = vmatpush1.bf16.msra.mxu0 0
        %7544 = vmatprep.subr.bf16.mxu0 0
        %7545 = vmatpush1.bf16.msra.mxu0 0
        %7546 = vmatprep.subr.bf16.mxu0 0
        %7547 = vmatpush1.bf16.msra.mxu0 0
        %7548 = vmatprep.subr.bf16.mxu0 0
        %7549 = vmatpush1.bf16.msra.mxu0 0
        %7550 = vmatprep.subr.bf16.mxu0 0
        %7551 = vmatpush1.bf16.msra.mxu0 0
        %7552 = vmatprep.subr.bf16.mxu0 0
        %7553 = vmatpush1.bf16.msra.mxu0 0
        %7554 = vmatprep.subr.bf16.mxu0 0
        %7555 = vmatpush1.bf16.msra.mxu0 0
        %7556 = vmatprep.subr.bf16.mxu0 0
        %7557 = vmatpush1.bf16.msra.mxu0 0
        %7558 = vmatprep.subr.bf16.mxu0 0
        %7559 = vmatpush1.bf16.msra.mxu0 0
        %7560 = vmatprep.subr.bf16.mxu0 0
        %7561 = vmatpush1.bf16.msra.mxu0 0
        %7562 = vmatprep.subr.bf16.mxu0 0
        %7563 = vmatpush1.bf16.msra.mxu0 0
        %7564 = vmatprep.subr.bf16.mxu0 0
        %7565 = vmatpush1.bf16.msra.mxu0 0
        %7566 = vmatprep.subr.bf16.mxu0 0
        %7567 = vmatpush1.bf16.msra.mxu0 0
        %7568 = vmatprep.mubr.bf16.mxu0 0
        %7569 = vmatmul.mubr.bf16.gmra.mrb[0].mxu0 %v7528
        %v7570 = vpop.f32.mrb[0].mxu0
        %v7571 = vadd.f32 0.0, %v7570
        %v7572 = vpop.f32.mrb[0].mxu0
        %v7573 = vpop.f32.mrb[0].mxu0
        %v7574 = vadd.f32 0.0, %v7573
        %v7575 = vpop.f32.mrb[0].mxu0
        %7576 = vmatprep.mubr.bf16.mxu0 0
        %7577 = vmatmul.mubr.bf16.gmra.mrb[0].mxu0 %v7531
        %v7578 = vpop.f32.mrb[0].mxu0
        %v7579 = vadd.f32 0.0, %v7578
        %v7580 = vpop.f32.mrb[0].mxu0
        %v7581 = vpop.f32.mrb[0].mxu0
        %v7582 = vpop.f32.mrb[0].mxu0
        %7583 = vdwg.mxu0
        %v7584 = vadd.f32 %v7462, %v7571
        %v7585 = vadd.f32 %v7463, %v7574
        %v7586 = vadd.f32 %v7464, %v7579
        %s7587 = scalar_lea.vmem %s1, 528
        %v7588 = vld [vmem:[%s7587] sm:$0xf]
        %v7589 = vld [vmem:[%s7587 + $0x4] sm:$0xf]
        %v7590 = vld [vmem:[%s7587 + $0x8] sm:$0xf]
        %7591 = vmatprep.subr.bf16.mxu0 0
        %7592 = vmatpush1.bf16.msra.mxu0 %v3549
        %7593 = vmatprep.subr.bf16.mxu0 0
        %7594 = vmatpush1.bf16.msra.mxu0 %v3550
        %7595 = vmatprep.subr.bf16.mxu0 0
        %7596 = vmatpush1.bf16.msra.mxu0 %v3551
        %7597 = vmatprep.subr.bf16.mxu0 0
        %7598 = vmatpush1.bf16.msra.mxu0 %v3552
        %7599 = vmatprep.subr.bf16.mxu0 0
        %7600 = vmatpush1.bf16.msra.mxu0 0
        %7601 = vmatprep.subr.bf16.mxu0 0
        %7602 = vmatpush1.bf16.msra.mxu0 0
        %7603 = vmatprep.subr.bf16.mxu0 0
        %7604 = vmatpush1.bf16.msra.mxu0 0
        %7605 = vmatprep.subr.bf16.mxu0 0
        %7606 = vmatpush1.bf16.msra.mxu0 0
        %7607 = vmatprep.subr.bf16.mxu0 0
        %7608 = vmatpush1.bf16.msra.mxu0 0
        %7609 = vmatprep.subr.bf16.mxu0 0
        %7610 = vmatpush1.bf16.msra.mxu0 0
        %7611 = vmatprep.subr.bf16.mxu0 0
        %7612 = vmatpush1.bf16.msra.mxu0 0
        %7613 = vmatprep.subr.bf16.mxu0 0
        %7614 = vmatpush1.bf16.msra.mxu0 0
        %7615 = vmatprep.subr.bf16.mxu0 0
        %7616 = vmatpush1.bf16.msra.mxu0 0
        %7617 = vmatprep.subr.bf16.mxu0 0
        %7618 = vmatpush1.bf16.msra.mxu0 0
        %7619 = vmatprep.subr.bf16.mxu0 0
        %7620 = vmatpush1.bf16.msra.mxu0 0
        %7621 = vmatprep.subr.bf16.mxu0 0
        %7622 = vmatpush1.bf16.msra.mxu0 0
        %7623 = vmatprep.mubr.bf16.mxu0 0
        %7624 = vmatmul.mubr.bf16.gmra.mrb[0].mxu0 %v6616
        %v7625 = vpop.f32.mrb[0].mxu0
        %v7626 = vadd.f32 0.0, %v7625
        %v7627 = vpop.f32.mrb[0].mxu0
        %v7628 = vpop.f32.mrb[0].mxu0
        %v7629 = vadd.f32 0.0, %v7628
        %v7630 = vpop.f32.mrb[0].mxu0
        %7631 = vmatprep.mubr.bf16.mxu0 0
        %7632 = vmatmul.mubr.bf16.gmra.mrb[0].mxu0 %v6619
        %v7633 = vpop.f32.mrb[0].mxu0
        %v7634 = vadd.f32 0.0, %v7633
        %v7635 = vpop.f32.mrb[0].mxu0
        %v7636 = vpop.f32.mrb[0].mxu0
        %v7637 = vpop.f32.mrb[0].mxu0
        %7638 = vdwg.mxu0
        %v7639 = vpack.c.bf16 %v7629, %v7626
        %v7640 = vpack.c.bf16 %v7634, %v7634
        %v7644 = vunpack.c.l.b16 %v7588
        %v7645 = vunpack.c.l.b16 %v7589
        %v7646 = vunpack.c.l.b16 %v7590
        %v7647 = vpack.c.b16 %v7645, %v7644
        %v7648 = vpack.c.b16 %v7646, %v7646
        %v7650 = vsel %vm567, %v7647, 0
        %v7653 = vsel %vm567, %v7648, 0
        %v7656 = vsel %vm574, %v7640, 0
        %7658 = vmatprep.subr.bf16.mxu0 0
        %7659 = vmatpush1.bf16.msra.mxu0 %v7639
        %7660 = vmatprep.subr.bf16.mxu0 0
        %7661 = vmatpush1.bf16.msra.mxu0 %v7656
        %7662 = vmatprep.subr.bf16.mxu0 0
        %7663 = vmatpush1.bf16.msra.mxu0 0
        %7664 = vmatprep.subr.bf16.mxu0 0
        %7665 = vmatpush1.bf16.msra.mxu0 0
        %7666 = vmatprep.subr.bf16.mxu0 0
        %7667 = vmatpush1.bf16.msra.mxu0 0
        %7668 = vmatprep.subr.bf16.mxu0 0
        %7669 = vmatpush1.bf16.msra.mxu0 0
        %7670 = vmatprep.subr.bf16.mxu0 0
        %7671 = vmatpush1.bf16.msra.mxu0 0
        %7672 = vmatprep.subr.bf16.mxu0 0
        %7673 = vmatpush1.bf16.msra.mxu0 0
        %7674 = vmatprep.subr.bf16.mxu0 0
        %7675 = vmatpush1.bf16.msra.mxu0 0
        %7676 = vmatprep.subr.bf16.mxu0 0
        %7677 = vmatpush1.bf16.msra.mxu0 0
        %7678 = vmatprep.subr.bf16.mxu0 0
        %7679 = vmatpush1.bf16.msra.mxu0 0
        %7680 = vmatprep.subr.bf16.mxu0 0
        %7681 = vmatpush1.bf16.msra.mxu0 0
        %7682 = vmatprep.subr.bf16.mxu0 0
        %7683 = vmatpush1.bf16.msra.mxu0 0
        %7684 = vmatprep.subr.bf16.mxu0 0
        %7685 = vmatpush1.bf16.msra.mxu0 0
        %7686 = vmatprep.subr.bf16.mxu0 0
        %7687 = vmatpush1.bf16.msra.mxu0 0
        %7688 = vmatprep.subr.bf16.mxu0 0
        %7689 = vmatpush1.bf16.msra.mxu0 0
        %7690 = vmatprep.mubr.bf16.mxu0 0
        %7691 = vmatmul.mubr.bf16.gmra.mrb[0].mxu0 %v7650
        %v7692 = vpop.f32.mrb[0].mxu0
        %v7693 = vadd.f32 0.0, %v7692
        %v7694 = vpop.f32.mrb[0].mxu0
        %v7695 = vpop.f32.mrb[0].mxu0
        %v7696 = vadd.f32 0.0, %v7695
        %v7697 = vpop.f32.mrb[0].mxu0
        %7698 = vmatprep.mubr.bf16.mxu0 0
        %7699 = vmatmul.mubr.bf16.gmra.mrb[0].mxu0 %v7653
        %v7700 = vpop.f32.mrb[0].mxu0
        %v7701 = vadd.f32 0.0, %v7700
        %v7702 = vpop.f32.mrb[0].mxu0
        %v7703 = vpop.f32.mrb[0].mxu0
        %v7704 = vpop.f32.mrb[0].mxu0
        %7705 = vdwg.mxu0
        %v7706 = vadd.f32 %v7584, %v7693
        %v7707 = vadd.f32 %v7585, %v7696
        %v7708 = vadd.f32 %v7586, %v7701
        %s7709 = scalar_lea.vmem %s2, 96
        %v7710 = vld [vmem:[%s7709] sm:$0xff]
        %v7711 = vld [vmem:[%s7709 + $0x8] sm:$0xff]
        %v7712 = vld [vmem:[%s7709 + $0x10] sm:$0xff]
        %7714 = vset.pattern.permute.xlu0 0
        %7715 = vperm.xlu0 %7714, %v7710
        %v7716 = vpop.permute.xlu0 %7715
        %7719 = vset.pattern.permute.xlu0 0
        %7720 = vperm.xlu0 %7719, %v7711
        %v7721 = vpop.permute.xlu0 %7720
        %7724 = vset.pattern.permute.xlu0 0
        %7725 = vperm.xlu0 %7724, %v7712
        %v7726 = vpop.permute.xlu0 %7725
        %v7728 = vadd.f32 %v7706, %v7716
        %v7729 = vadd.f32 %v7707, %v7721
        %v7730 = vadd.f32 %v7708, %v7726
        %v7731 = vmul.f32 %v7728, 0.2
        %v7732 = vmul.f32 %v7729, 0.2
        %v7733 = vmul.f32 %v7730, 0.2
        %v7734 = vmax.f32 %v7728, %v7731
        %v7735 = vmax.f32 %v7729, %v7732
        %v7736 = vmax.f32 %v7730, %v7733
        %s7737 = scalar_lea.vmem [#allocation2], 24
        %v7738 = vld [vmem:[%s7737] sm:$0xf]
        %v7739 = vld [vmem:[%s7737 + $0x4] sm:$0xf]
        %v7740 = vld [vmem:[%s7737 + $0x8] sm:$0xf]
        %s7741 = scalar_lea.vmem [#allocation2], 36
        %v7742 = vld [vmem:[%s7741] sm:$0xf]
        %v7743 = vld [vmem:[%s7741 + $0x4] sm:$0xf]
        %v7744 = vld [vmem:[%s7741 + $0x8] sm:$0xf]
        %v7745 = vpack.c.bf16 %v7735, %v7734
        %v7746 = vpack.c.bf16 %v7736, %v7736
        %v7750 = vunpack.c.l.b16 %v7742
        %v7751 = vunpack.c.l.b16 %v7743
        %v7752 = vunpack.c.l.b16 %v7744
        %v7753 = vpack.c.b16 %v7751, %v7750
        %v7754 = vpack.c.b16 %v7752, %v7752
        %v7756 = vsel %vm567, %v7753, 0
        %v7759 = vsel %vm567, %v7754, 0
        %v7762 = vsel %vm574, %v7746, 0
        %7764 = vmatprep.subr.bf16.mxu0 0
        %7765 = vmatpush1.bf16.msra.mxu0 %v7745
        %7766 = vmatprep.subr.bf16.mxu0 0
        %7767 = vmatpush1.bf16.msra.mxu0 %v7762
        %7768 = vmatprep.subr.bf16.mxu0 0
        %7769 = vmatpush1.bf16.msra.mxu0 0
        %7770 = vmatprep.subr.bf16.mxu0 0
        %7771 = vmatpush1.bf16.msra.mxu0 0
        %7772 = vmatprep.subr.bf16.mxu0 0
        %7773 = vmatpush1.bf16.msra.mxu0 0
        %7774 = vmatprep.subr.bf16.mxu0 0
        %7775 = vmatpush1.bf16.msra.mxu0 0
        %7776 = vmatprep.subr.bf16.mxu0 0
        %7777 = vmatpush1.bf16.msra.mxu0 0
        %7778 = vmatprep.subr.bf16.mxu0 0
        %7779 = vmatpush1.bf16.msra.mxu0 0
        %7780 = vmatprep.subr.bf16.mxu0 0
        %7781 = vmatpush1.bf16.msra.mxu0 0
        %7782 = vmatprep.subr.bf16.mxu0 0
        %7783 = vmatpush1.bf16.msra.mxu0 0
        %7784 = vmatprep.subr.bf16.mxu0 0
        %7785 = vmatpush1.bf16.msra.mxu0 0
        %7786 = vmatprep.subr.bf16.mxu0 0
        %7787 = vmatpush1.bf16.msra.mxu0 0
        %7788 = vmatprep.subr.bf16.mxu0 0
        %7789 = vmatpush1.bf16.msra.mxu0 0
        %7790 = vmatprep.subr.bf16.mxu0 0
        %7791 = vmatpush1.bf16.msra.mxu0 0
        %7792 = vmatprep.subr.bf16.mxu0 0
        %7793 = vmatpush1.bf16.msra.mxu0 0
        %7794 = vmatprep.subr.bf16.mxu0 0
        %7795 = vmatpush1.bf16.msra.mxu0 0
        %7796 = vmatprep.mubr.bf16.mxu0 0
        %7797 = vmatmul.mubr.bf16.gmra.mrb[0].mxu0 %v7756
        %v7798 = vpop.f32.mrb[0].mxu0
        %v7799 = vadd.f32 0.0, %v7798
        %v7800 = vpop.f32.mrb[0].mxu0
        %v7801 = vpop.f32.mrb[0].mxu0
        %v7802 = vadd.f32 0.0, %v7801
        %v7803 = vpop.f32.mrb[0].mxu0
        %7804 = vmatprep.mubr.bf16.mxu0 0
        %7805 = vmatmul.mubr.bf16.gmra.mrb[0].mxu0 %v7759
        %v7806 = vpop.f32.mrb[0].mxu0
        %v7807 = vadd.f32 0.0, %v7806
        %v7808 = vpop.f32.mrb[0].mxu0
        %v7809 = vpop.f32.mrb[0].mxu0
        %v7810 = vpop.f32.mrb[0].mxu0
        %7811 = vdwg.mxu0
        %v7812 = vpack.c.bf16 %v7802, %v7799
        %v7813 = vpack.c.bf16 %v7807, %v7807
        %v7814 = vld [vmem:[#allocation7] sm:$0xff]
        %v7815 = vld [vmem:[#allocation7 + $0x8] sm:$0xff]
        %v7816 = vld [vmem:[#allocation7 + $0x10] sm:$0xff]
        %v7817 = vld [vmem:[#allocation7 + $0x18] sm:$0xff]
        %v7818 = vld [vmem:[#allocation7 + $0x20] sm:$0xff]
        %v7819 = vld [vmem:[#allocation7 + $0x28] sm:$0xff]
        %v7820 = vld [vmem:[#allocation7 + $0x30] sm:$0xff]
        %v7821 = vld [vmem:[#allocation7 + $0x38] sm:$0xff]
        %v7830 = vunpack.c.l.b16 %v7814
        %v7831 = vunpack.c.h.b16 %v7814
        %v7832 = vunpack.c.l.b16 %v7815
        %v7833 = vunpack.c.h.b16 %v7815
        %v7834 = vunpack.c.l.b16 %v7816
        %v7835 = vunpack.c.h.b16 %v7816
        %v7836 = vunpack.c.l.b16 %v7817
        %v7837 = vunpack.c.h.b16 %v7817
        %v7838 = vunpack.c.l.b16 %v7818
        %v7839 = vunpack.c.h.b16 %v7818
        %v7840 = vunpack.c.l.b16 %v7819
        %v7841 = vunpack.c.h.b16 %v7819
        %v7842 = vunpack.c.l.b16 %v7820
        %v7843 = vunpack.c.h.b16 %v7820
        %v7844 = vunpack.c.l.b16 %v7821
        %v7845 = vunpack.c.h.b16 %v7821
        %v7846 = vpack.c.b16 %v7832, %v7830
        %v7847 = vpack.c.b16 %v7833, %v7831
        %v7848 = vpack.c.b16 %v7836, %v7834
        %v7849 = vpack.c.b16 %v7837, %v7835
        %v7850 = vpack.c.b16 %v7840, %v7838
        %v7851 = vpack.c.b16 %v7841, %v7839
        %v7852 = vpack.c.b16 %v7844, %v7842
        %v7853 = vpack.c.b16 %v7845, %v7843
        %v7863 = vsel %vm2316, %v7812, 0
        %v7866 = vsel %vm2316, %v7813, 0
        %7868 = vmatprep.subr.bf16.mxu0 %v7847
        %7869 = vmatpush1.bf16.msra.mxu0 %v7846
        %7870 = vmatprep.subr.bf16.mxu0 %v7849
        %7871 = vmatpush1.bf16.msra.mxu0 %v7848
        %7872 = vmatprep.subr.bf16.mxu0 %v7851
        %7873 = vmatpush1.bf16.msra.mxu0 %v7850
        %7874 = vmatprep.subr.bf16.mxu0 %v7853
        %7875 = vmatpush1.bf16.msra.mxu0 %v7852
        %7876 = vmatprep.subr.bf16.mxu0 0
        %7877 = vmatpush1.bf16.msra.mxu0 0
        %7878 = vmatprep.subr.bf16.mxu0 0
        %7879 = vmatpush1.bf16.msra.mxu0 0
        %7880 = vmatprep.subr.bf16.mxu0 0
        %7881 = vmatpush1.bf16.msra.mxu0 0
        %7882 = vmatprep.subr.bf16.mxu0 0
        %7883 = vmatpush1.bf16.msra.mxu0 0
        %7884 = vmatprep.subr.bf16.mxu0 0
        %7885 = vmatpush1.bf16.msra.mxu0 0
        %7886 = vmatprep.subr.bf16.mxu0 0
        %7887 = vmatpush1.bf16.msra.mxu0 0
        %7888 = vmatprep.subr.bf16.mxu0 0
        %7889 = vmatpush1.bf16.msra.mxu0 0
        %7890 = vmatprep.subr.bf16.mxu0 0
        %7891 = vmatpush1.bf16.msra.mxu0 0
        %7892 = vmatprep.subr.bf16.mxu0 0
        %7893 = vmatpush1.bf16.msra.mxu0 0
        %7894 = vmatprep.subr.bf16.mxu0 0
        %7895 = vmatpush1.bf16.msra.mxu0 0
        %7896 = vmatprep.subr.bf16.mxu0 0
        %7897 = vmatpush1.bf16.msra.mxu0 0
        %7898 = vmatprep.subr.bf16.mxu0 0
        %7899 = vmatpush1.bf16.msra.mxu0 0
        %7900 = vmatprep.mubr.bf16.mxu0 0
        %7901 = vmatmul.mubr.bf16.gmra.mrb[0].mxu0 %v7863
        %v7902 = vpop.f32.mrb[0].mxu0
        %v7903 = vadd.f32 0.0, %v7902
        %v7904 = vpop.f32.mrb[0].mxu0
        %v7905 = vadd.f32 0.0, %v7904
        %v7906 = vpop.f32.mrb[0].mxu0
        %v7907 = vadd.f32 0.0, %v7906
        %v7908 = vpop.f32.mrb[0].mxu0
        %v7909 = vadd.f32 0.0, %v7908
        %7910 = vmatprep.mubr.bf16.mxu0 0
        %7911 = vmatmul.mubr.bf16.gmra.mrb[0].mxu0 %v7866
        %v7912 = vpop.f32.mrb[0].mxu0
        %v7913 = vadd.f32 0.0, %v7912
        %v7914 = vpop.f32.mrb[0].mxu0
        %v7915 = vadd.f32 0.0, %v7914
        %v7916 = vpop.f32.mrb[0].mxu0
        %v7917 = vpop.f32.mrb[0].mxu0
        %7918 = vdwg.mxu0
        %v7922 = vunpack.c.l.b16 %v7738
        %v7923 = vunpack.c.l.b16 %v7739
        %v7924 = vunpack.c.l.b16 %v7740
        %v7925 = vpack.c.b16 %v7923, %v7922
        %v7926 = vpack.c.b16 %v7924, %v7924
        %v7928 = vsel %vm567, %v7925, 0
        %v7931 = vsel %vm567, %v7926, 0
        %v7934 = vsel %vm574, %v1560, 0
        %v7937 = vsel %vm574, %v1561, 0
        %7939 = vmatprep.subr.bf16.mxu0 %v1559
        %7940 = vmatpush1.bf16.msra.mxu0 %v1558
        %7941 = vmatprep.subr.bf16.mxu0 %v7937
        %7942 = vmatpush1.bf16.msra.mxu0 %v7934
        %7943 = vmatprep.subr.bf16.mxu0 0
        %7944 = vmatpush1.bf16.msra.mxu0 0
        %7945 = vmatprep.subr.bf16.mxu0 0
        %7946 = vmatpush1.bf16.msra.mxu0 0
        %7947 = vmatprep.subr.bf16.mxu0 0
        %7948 = vmatpush1.bf16.msra.mxu0 0
        %7949 = vmatprep.subr.bf16.mxu0 0
        %7950 = vmatpush1.bf16.msra.mxu0 0
        %7951 = vmatprep.subr.bf16.mxu0 0
        %7952 = vmatpush1.bf16.msra.mxu0 0
        %7953 = vmatprep.subr.bf16.mxu0 0
        %7954 = vmatpush1.bf16.msra.mxu0 0
        %7955 = vmatprep.subr.bf16.mxu0 0
        %7956 = vmatpush1.bf16.msra.mxu0 0
        %7957 = vmatprep.subr.bf16.mxu0 0
        %7958 = vmatpush1.bf16.msra.mxu0 0
        %7959 = vmatprep.subr.bf16.mxu0 0
        %7960 = vmatpush1.bf16.msra.mxu0 0
        %7961 = vmatprep.subr.bf16.mxu0 0
        %7962 = vmatpush1.bf16.msra.mxu0 0
        %7963 = vmatprep.subr.bf16.mxu0 0
        %7964 = vmatpush1.bf16.msra.mxu0 0
        %7965 = vmatprep.subr.bf16.mxu0 0
        %7966 = vmatpush1.bf16.msra.mxu0 0
        %7967 = vmatprep.subr.bf16.mxu0 0
        %7968 = vmatpush1.bf16.msra.mxu0 0
        %7969 = vmatprep.subr.bf16.mxu0 0
        %7970 = vmatpush1.bf16.msra.mxu0 0
        %7971 = vmatprep.mubr.bf16.mxu0 0
        %7972 = vmatmul.mubr.bf16.gmra.mrb[0].mxu0 %v7928
        %v7973 = vpop.f32.mrb[0].mxu0
        %v7974 = vadd.f32 %v7903, %v7973
        %v7975 = vpop.f32.mrb[0].mxu0
        %v7976 = vadd.f32 %v7905, %v7975
        %v7977 = vpop.f32.mrb[0].mxu0
        %v7978 = vadd.f32 %v7907, %v7977
        %v7979 = vpop.f32.mrb[0].mxu0
        %v7980 = vadd.f32 %v7909, %v7979
        %7981 = vmatprep.mubr.bf16.mxu0 0
        %7982 = vmatmul.mubr.bf16.gmra.mrb[0].mxu0 %v7931
        %v7983 = vpop.f32.mrb[0].mxu0
        %v7984 = vadd.f32 %v7913, %v7983
        %v7985 = vpop.f32.mrb[0].mxu0
        %v7986 = vadd.f32 %v7915, %v7985
        %v7987 = vpop.f32.mrb[0].mxu0
        %v7988 = vpop.f32.mrb[0].mxu0
        %7989 = vdwg.mxu0
        %s7990 = scalar_lea.vmem %s4, 24
        %v7991 = vld [vmem:[%s7990] sm:$0xff]
        %v7992 = vld [vmem:[%s7990 + $0x8] sm:$0xff]
        %v7993 = vld [vmem:[%s7990 + $0x10] sm:$0xff]
        %7995 = vset.pattern.permute.xlu0 0
        %7996 = vperm.xlu0 %7995, %v7991
        %v7997 = vpop.permute.xlu0 %7996
        %8000 = vset.pattern.permute.xlu0 0
        %8001 = vperm.xlu0 %8000, %v7992
        %v8002 = vpop.permute.xlu0 %8001
        %8005 = vset.pattern.permute.xlu0 0
        %8006 = vperm.xlu0 %8005, %v7993
        %v8007 = vpop.permute.xlu0 %8006
        %v8009 = vadd.f32 %v7974, %v7997
        %v8010 = vadd.f32 %v7976, %v7997
        %v8011 = vadd.f32 %v7978, %v8002
        %v8012 = vadd.f32 %v7980, %v8002
        %v8013 = vadd.f32 %v7984, %v8007
        %v8014 = vadd.f32 %v7986, %v8007
        %v8015 = vmul.f32 %v8009, 0.2
        %v8016 = vmul.f32 %v8010, 0.2
        %v8017 = vmul.f32 %v8011, 0.2
        %v8018 = vmul.f32 %v8012, 0.2
        %v8019 = vmul.f32 %v8013, 0.2
        %v8020 = vmul.f32 %v8014, 0.2
        %v8021 = vmax.f32 %v8009, %v8015
        %v8022 = vmax.f32 %v8010, %v8016
        %v8023 = vmax.f32 %v8011, %v8017
        %v8024 = vmax.f32 %v8012, %v8018
        %v8025 = vmax.f32 %v8013, %v8019
        %v8026 = vmax.f32 %v8014, %v8020
        %v8027 = vpack.c.bf16 %v8023, %v8021
        %v8028 = vpack.c.bf16 %v8024, %v8022
        %v8029 = vpack.c.bf16 %v8025, %v8025
        %v8030 = vpack.c.bf16 %v8026, %v8026
        %s8031 = scalar_lea.vmem %s1, 540
        %v8032 = vld [vmem:[%s8031] sm:$0xf]
        %v8033 = vld [vmem:[%s8031 + $0x4] sm:$0xf]
        %v8034 = vld [vmem:[%s8031 + $0x8] sm:$0xf]
        %8035 = vrot.lane.b32.xlu0 %v8021, 17
        %v8036 = vpop.permute.xlu0 %8035
        %8037 = vrot.lane.b32.xlu0 %v8023, 17
        %v8038 = vpop.permute.xlu0 %8037
        %8039 = vrot.lane.b32.xlu0 %v8025, 17
        %v8040 = vpop.permute.xlu0 %8039
        %8041 = vrot.lane.b32.xlu0 %v8022, 17
        %v8042 = vpop.permute.xlu0 %8041
        %8043 = vrot.lane.b32.xlu0 %v8024, 17
        %v8044 = vpop.permute.xlu0 %8043
        %8045 = vrot.lane.b32.xlu0 %v8026, 17
        %v8046 = vpop.permute.xlu0 %8045
        %v8047 = vsel %vm484, %v8036, %v8042
        %v8048 = vsel %vm484, %v8038, %v8044
        %v8049 = vsel %vm484, %v8040, %v8046
        %v8050 = vsel %vm484, %v8042, %v8036
        %v8051 = vsel %vm484, %v8044, %v8038
        %v8052 = vsel %vm484, %v8046, %v8040
        %v8053 = vmul.f32 %v8050, %v496
        %v8054 = vmul.f32 %v8047, %v500
        %v8055 = vmul.f32 %v8051, %v496
        %v8056 = vmul.f32 %v8048, %v500
        %v8057 = vmul.f32 %v8052, %v496
        %v8058 = vmul.f32 %v8049, %v500
        %v8059 = vpack.c.bf16 %v8055, %v8053
        %v8060 = vpack.c.bf16 %v8056, %v8054
        %v8061 = vpack.c.bf16 %v8057, %v8057
        %v8062 = vpack.c.bf16 %v8058, %v8058
        %s8063 = scalar_lea.vmem %s1, 552
        %v8064 = vld [vmem:[%s8063] sm:$0xf]
        %v8065 = vld [vmem:[%s8063 + $0x4] sm:$0xf]
        %v8066 = vld [vmem:[%s8063 + $0x8] sm:$0xf]
        %8067 = vrot.lane.b32.xlu0 %v8021, 16
        %v8068 = vpop.permute.xlu0 %8067
        %8069 = vrot.lane.b32.xlu0 %v8023, 16
        %v8070 = vpop.permute.xlu0 %8069
        %8071 = vrot.lane.b32.xlu0 %v8025, 16
        %v8072 = vpop.permute.xlu0 %8071
        %8073 = vrot.lane.b32.xlu0 %v8022, 16
        %v8074 = vpop.permute.xlu0 %8073
        %8075 = vrot.lane.b32.xlu0 %v8024, 16
        %v8076 = vpop.permute.xlu0 %8075
        %8077 = vrot.lane.b32.xlu0 %v8026, 16
        %v8078 = vpop.permute.xlu0 %8077
        %v8079 = vsel %vm529, %v8068, %v8074
        %v8080 = vsel %vm529, %v8070, %v8076
        %v8081 = vsel %vm529, %v8072, %v8078
        %v8082 = vsel %vm529, %v8074, %v8068
        %v8083 = vsel %vm529, %v8076, %v8070
        %v8084 = vsel %vm529, %v8078, %v8072
        %v8085 = vmul.f32 %v8082, %v542
        %v8086 = vmul.f32 %v8079, %v546
        %v8087 = vmul.f32 %v8083, %v542
        %v8088 = vmul.f32 %v8080, %v546
        %v8089 = vmul.f32 %v8084, %v542
        %v8090 = vmul.f32 %v8081, %v546
        %v8091 = vpack.c.bf16 %v8087, %v8085
        %v8092 = vpack.c.bf16 %v8088, %v8086
        %v8093 = vpack.c.bf16 %v8089, %v8089
        %v8094 = vpack.c.bf16 %v8090, %v8090
        %v8098 = vunpack.c.l.b16 %v8064
        %v8099 = vunpack.c.l.b16 %v8065
        %v8100 = vunpack.c.l.b16 %v8066
        %v8101 = vpack.c.b16 %v8099, %v8098
        %v8102 = vpack.c.b16 %v8100, %v8100
        %v8104 = vsel %vm567, %v8101, 0
        %v8107 = vsel %vm567, %v8102, 0
        %v8110 = vsel %vm574, %v8093, 0
        %v8113 = vsel %vm574, %v8094, 0
        %8115 = vmatprep.subr.bf16.mxu0 %v8092
        %8116 = vmatpush1.bf16.msra.mxu0 %v8091
        %8117 = vmatprep.subr.bf16.mxu0 %v8113
        %8118 = vmatpush1.bf16.msra.mxu0 %v8110
        %8119 = vmatprep.subr.bf16.mxu0 0
        %8120 = vmatpush1.bf16.msra.mxu0 0
        %8121 = vmatprep.subr.bf16.mxu0 0
        %8122 = vmatpush1.bf16.msra.mxu0 0
        %8123 = vmatprep.subr.bf16.mxu0 0
        %8124 = vmatpush1.bf16.msra.mxu0 0
        %8125 = vmatprep.subr.bf16.mxu0 0
        %8126 = vmatpush1.bf16.msra.mxu0 0
        %8127 = vmatprep.subr.bf16.mxu0 0
        %8128 = vmatpush1.bf16.msra.mxu0 0
        %8129 = vmatprep.subr.bf16.mxu0 0
        %8130 = vmatpush1.bf16.msra.mxu0 0
        %8131 = vmatprep.subr.bf16.mxu0 0
        %8132 = vmatpush1.bf16.msra.mxu0 0
        %8133 = vmatprep.subr.bf16.mxu0 0
        %8134 = vmatpush1.bf16.msra.mxu0 0
        %8135 = vmatprep.subr.bf16.mxu0 0
        %8136 = vmatpush1.bf16.msra.mxu0 0
        %8137 = vmatprep.subr.bf16.mxu0 0
        %8138 = vmatpush1.bf16.msra.mxu0 0
        %8139 = vmatprep.subr.bf16.mxu0 0
        %8140 = vmatpush1.bf16.msra.mxu0 0
        %8141 = vmatprep.subr.bf16.mxu0 0
        %8142 = vmatpush1.bf16.msra.mxu0 0
        %8143 = vmatprep.subr.bf16.mxu0 0
        %8144 = vmatpush1.bf16.msra.mxu0 0
        %8145 = vmatprep.subr.bf16.mxu0 0
        %8146 = vmatpush1.bf16.msra.mxu0 0
        %8147 = vmatprep.mubr.bf16.mxu0 0
        %8148 = vmatmul.mubr.bf16.gmra.mrb[0].mxu0 %v8104
        %v8149 = vpop.f32.mrb[0].mxu0
        %v8150 = vadd.f32 0.0, %v8149
        %v8151 = vpop.f32.mrb[0].mxu0
        %v8152 = vadd.f32 0.0, %v8151
        %v8153 = vpop.f32.mrb[0].mxu0
        %v8154 = vadd.f32 0.0, %v8153
        %v8155 = vpop.f32.mrb[0].mxu0
        %v8156 = vadd.f32 0.0, %v8155
        %8157 = vmatprep.mubr.bf16.mxu0 0
        %8158 = vmatmul.mubr.bf16.gmra.mrb[0].mxu0 %v8107
        %v8159 = vpop.f32.mrb[0].mxu0
        %v8160 = vadd.f32 0.0, %v8159
        %v8161 = vpop.f32.mrb[0].mxu0
        %v8162 = vadd.f32 0.0, %v8161
        %v8163 = vpop.f32.mrb[0].mxu0
        %v8164 = vpop.f32.mrb[0].mxu0
        %8165 = vdwg.mxu0
        %v8169 = vunpack.c.l.b16 %v8032
        %v8170 = vunpack.c.l.b16 %v8033
        %v8171 = vunpack.c.l.b16 %v8034
        %v8172 = vpack.c.b16 %v8170, %v8169
        %v8173 = vpack.c.b16 %v8171, %v8171
        %v8175 = vsel %vm567, %v8172, 0
        %v8178 = vsel %vm567, %v8173, 0
        %v8181 = vsel %vm574, %v8061, 0
        %v8184 = vsel %vm574, %v8062, 0
        %8186 = vmatprep.subr.bf16.mxu0 %v8060
        %8187 = vmatpush1.bf16.msra.mxu0 %v8059
        %8188 = vmatprep.subr.bf16.mxu0 %v8184
        %8189 = vmatpush1.bf16.msra.mxu0 %v8181
        %8190 = vmatprep.subr.bf16.mxu0 0
        %8191 = vmatpush1.bf16.msra.mxu0 0
        %8192 = vmatprep.subr.bf16.mxu0 0
        %8193 = vmatpush1.bf16.msra.mxu0 0
        %8194 = vmatprep.subr.bf16.mxu0 0
        %8195 = vmatpush1.bf16.msra.mxu0 0
        %8196 = vmatprep.subr.bf16.mxu0 0
        %8197 = vmatpush1.bf16.msra.mxu0 0
        %8198 = vmatprep.subr.bf16.mxu0 0
        %8199 = vmatpush1.bf16.msra.mxu0 0
        %8200 = vmatprep.subr.bf16.mxu0 0
        %8201 = vmatpush1.bf16.msra.mxu0 0
        %8202 = vmatprep.subr.bf16.mxu0 0
        %8203 = vmatpush1.bf16.msra.mxu0 0
        %8204 = vmatprep.subr.bf16.mxu0 0
        %8205 = vmatpush1.bf16.msra.mxu0 0
        %8206 = vmatprep.subr.bf16.mxu0 0
        %8207 = vmatpush1.bf16.msra.mxu0 0
        %8208 = vmatprep.subr.bf16.mxu0 0
        %8209 = vmatpush1.bf16.msra.mxu0 0
        %8210 = vmatprep.subr.bf16.mxu0 0
        %8211 = vmatpush1.bf16.msra.mxu0 0
        %8212 = vmatprep.subr.bf16.mxu0 0
        %8213 = vmatpush1.bf16.msra.mxu0 0
        %8214 = vmatprep.subr.bf16.mxu0 0
        %8215 = vmatpush1.bf16.msra.mxu0 0
        %8216 = vmatprep.subr.bf16.mxu0 0
        %8217 = vmatpush1.bf16.msra.mxu0 0
        %8218 = vmatprep.mubr.bf16.mxu0 0
        %8219 = vmatmul.mubr.bf16.gmra.mrb[0].mxu0 %v8175
        %v8220 = vpop.f32.mrb[0].mxu0
        %v8221 = vadd.f32 %v8150, %v8220
        %v8222 = vpop.f32.mrb[0].mxu0
        %v8223 = vadd.f32 %v8152, %v8222
        %v8224 = vpop.f32.mrb[0].mxu0
        %v8225 = vadd.f32 %v8154, %v8224
        %v8226 = vpop.f32.mrb[0].mxu0
        %v8227 = vadd.f32 %v8156, %v8226
        %8228 = vmatprep.mubr.bf16.mxu0 0
        %8229 = vmatmul.mubr.bf16.gmra.mrb[0].mxu0 %v8178
        %v8230 = vpop.f32.mrb[0].mxu0
        %v8231 = vadd.f32 %v8160, %v8230
        %v8232 = vpop.f32.mrb[0].mxu0
        %v8233 = vadd.f32 %v8162, %v8232
        %v8234 = vpop.f32.mrb[0].mxu0
        %v8235 = vpop.f32.mrb[0].mxu0
        %8236 = vdwg.mxu0
        %s8237 = scalar_lea.vmem %s1, 564
        %v8238 = vld [vmem:[%s8237] sm:$0xf]
        %v8239 = vld [vmem:[%s8237 + $0x4] sm:$0xf]
        %v8240 = vld [vmem:[%s8237 + $0x8] sm:$0xf]
        %8241 = vrot.lane.b32.xlu0 %v8021, 15
        %v8242 = vpop.permute.xlu0 %8241
        %8243 = vrot.lane.b32.xlu0 %v8023, 15
        %v8244 = vpop.permute.xlu0 %8243
        %8245 = vrot.lane.b32.xlu0 %v8025, 15
        %v8246 = vpop.permute.xlu0 %8245
        %8247 = vrot.lane.b32.xlu0 %v8022, 15
        %v8248 = vpop.permute.xlu0 %8247
        %8249 = vrot.lane.b32.xlu0 %v8024, 15
        %v8250 = vpop.permute.xlu0 %8249
        %8251 = vrot.lane.b32.xlu0 %v8026, 15
        %v8252 = vpop.permute.xlu0 %8251
        %v8253 = vsel %vm719, %v8242, %v8248
        %v8254 = vsel %vm719, %v8244, %v8250
        %v8255 = vsel %vm719, %v8246, %v8252
        %v8256 = vsel %vm719, %v8248, %v8242
        %v8257 = vsel %vm719, %v8250, %v8244
        %v8258 = vsel %vm719, %v8252, %v8246
        %v8259 = vmul.f32 %v8256, %v732
        %v8260 = vmul.f32 %v8253, %v736
        %v8261 = vmul.f32 %v8257, %v732
        %v8262 = vmul.f32 %v8254, %v736
        %v8263 = vmul.f32 %v8258, %v732
        %v8264 = vmul.f32 %v8255, %v736
        %v8265 = vpack.c.bf16 %v8261, %v8259
        %v8266 = vpack.c.bf16 %v8262, %v8260
        %v8267 = vpack.c.bf16 %v8263, %v8263
        %v8268 = vpack.c.bf16 %v8264, %v8264
        %v8272 = vunpack.c.l.b16 %v8238
        %v8273 = vunpack.c.l.b16 %v8239
        %v8274 = vunpack.c.l.b16 %v8240
        %v8275 = vpack.c.b16 %v8273, %v8272
        %v8276 = vpack.c.b16 %v8274, %v8274
        %v8278 = vsel %vm567, %v8275, 0
        %v8281 = vsel %vm567, %v8276, 0
        %v8284 = vsel %vm574, %v8267, 0
        %v8287 = vsel %vm574, %v8268, 0
        %8289 = vmatprep.subr.bf16.mxu0 %v8266
        %8290 = vmatpush1.bf16.msra.mxu0 %v8265
        %8291 = vmatprep.subr.bf16.mxu0 %v8287
        %8292 = vmatpush1.bf16.msra.mxu0 %v8284
        %8293 = vmatprep.subr.bf16.mxu0 0
        %8294 = vmatpush1.bf16.msra.mxu0 0
        %8295 = vmatprep.subr.bf16.mxu0 0
        %8296 = vmatpush1.bf16.msra.mxu0 0
        %8297 = vmatprep.subr.bf16.mxu0 0
        %8298 = vmatpush1.bf16.msra.mxu0 0
        %8299 = vmatprep.subr.bf16.mxu0 0
        %8300 = vmatpush1.bf16.msra.mxu0 0
        %8301 = vmatprep.subr.bf16.mxu0 0
        %8302 = vmatpush1.bf16.msra.mxu0 0
        %8303 = vmatprep.subr.bf16.mxu0 0
        %8304 = vmatpush1.bf16.msra.mxu0 0
        %8305 = vmatprep.subr.bf16.mxu0 0
        %8306 = vmatpush1.bf16.msra.mxu0 0
        %8307 = vmatprep.subr.bf16.mxu0 0
        %8308 = vmatpush1.bf16.msra.mxu0 0
        %8309 = vmatprep.subr.bf16.mxu0 0
        %8310 = vmatpush1.bf16.msra.mxu0 0
        %8311 = vmatprep.subr.bf16.mxu0 0
        %8312 = vmatpush1.bf16.msra.mxu0 0
        %8313 = vmatprep.subr.bf16.mxu0 0
        %8314 = vmatpush1.bf16.msra.mxu0 0
        %8315 = vmatprep.subr.bf16.mxu0 0
        %8316 = vmatpush1.bf16.msra.mxu0 0
        %8317 = vmatprep.subr.bf16.mxu0 0
        %8318 = vmatpush1.bf16.msra.mxu0 0
        %8319 = vmatprep.subr.bf16.mxu0 0
        %8320 = vmatpush1.bf16.msra.mxu0 0
        %8321 = vmatprep.mubr.bf16.mxu0 0
        %8322 = vmatmul.mubr.bf16.gmra.mrb[0].mxu0 %v8278
        %v8323 = vpop.f32.mrb[0].mxu0
        %v8324 = vadd.f32 0.0, %v8323
        %v8325 = vpop.f32.mrb[0].mxu0
        %v8326 = vadd.f32 0.0, %v8325
        %v8327 = vpop.f32.mrb[0].mxu0
        %v8328 = vadd.f32 0.0, %v8327
        %v8329 = vpop.f32.mrb[0].mxu0
        %v8330 = vadd.f32 0.0, %v8329
        %8331 = vmatprep.mubr.bf16.mxu0 0
        %8332 = vmatmul.mubr.bf16.gmra.mrb[0].mxu0 %v8281
        %v8333 = vpop.f32.mrb[0].mxu0
        %v8334 = vadd.f32 0.0, %v8333
        %v8335 = vpop.f32.mrb[0].mxu0
        %v8336 = vadd.f32 0.0, %v8335
        %v8337 = vpop.f32.mrb[0].mxu0
        %v8338 = vpop.f32.mrb[0].mxu0
        %8339 = vdwg.mxu0
        %v8340 = vadd.f32 %v8221, %v8324
        %v8341 = vadd.f32 %v8223, %v8326
        %v8342 = vadd.f32 %v8225, %v8328
        %v8343 = vadd.f32 %v8227, %v8330
        %v8344 = vadd.f32 %v8231, %v8334
        %v8345 = vadd.f32 %v8233, %v8336
        %s8346 = scalar_lea.vmem %s1, 576
        %v8347 = vld [vmem:[%s8346] sm:$0xf]
        %v8348 = vld [vmem:[%s8346 + $0x4] sm:$0xf]
        %v8349 = vld [vmem:[%s8346 + $0x8] sm:$0xf]
        %8350 = vrot.lane.b32.xlu0 %v8021, 1
        %v8351 = vpop.permute.xlu0 %8350
        %8352 = vrot.lane.b32.xlu0 %v8023, 1
        %v8353 = vpop.permute.xlu0 %8352
        %8354 = vrot.lane.b32.xlu0 %v8025, 1
        %v8355 = vpop.permute.xlu0 %8354
        %8356 = vrot.lane.b32.xlu0 %v8022, 1
        %v8357 = vpop.permute.xlu0 %8356
        %8358 = vrot.lane.b32.xlu0 %v8024, 1
        %v8359 = vpop.permute.xlu0 %8358
        %8360 = vrot.lane.b32.xlu0 %v8026, 1
        %v8361 = vpop.permute.xlu0 %8360
        %v8362 = vsel %vm842, %v8351, %v8357
        %v8363 = vsel %vm842, %v8353, %v8359
        %v8364 = vsel %vm842, %v8355, %v8361
        %v8365 = vsel %vm842, %v8357, %v8351
        %v8366 = vsel %vm842, %v8359, %v8353
        %v8367 = vsel %vm842, %v8361, %v8355
        %v8368 = vmul.f32 %v8365, %v855
        %v8369 = vmul.f32 %v8362, %v859
        %v8370 = vmul.f32 %v8366, %v855
        %v8371 = vmul.f32 %v8363, %v859
        %v8372 = vmul.f32 %v8367, %v855
        %v8373 = vmul.f32 %v8364, %v859
        %v8374 = vpack.c.bf16 %v8370, %v8368
        %v8375 = vpack.c.bf16 %v8371, %v8369
        %v8376 = vpack.c.bf16 %v8372, %v8372
        %v8377 = vpack.c.bf16 %v8373, %v8373
        %v8381 = vunpack.c.l.b16 %v8347
        %v8382 = vunpack.c.l.b16 %v8348
        %v8383 = vunpack.c.l.b16 %v8349
        %v8384 = vpack.c.b16 %v8382, %v8381
        %v8385 = vpack.c.b16 %v8383, %v8383
        %v8387 = vsel %vm567, %v8384, 0
        %v8390 = vsel %vm567, %v8385, 0
        %v8393 = vsel %vm574, %v8376, 0
        %v8396 = vsel %vm574, %v8377, 0
        %8398 = vmatprep.subr.bf16.mxu0 %v8375
        %8399 = vmatpush1.bf16.msra.mxu0 %v8374
        %8400 = vmatprep.subr.bf16.mxu0 %v8396
        %8401 = vmatpush1.bf16.msra.mxu0 %v8393
        %8402 = vmatprep.subr.bf16.mxu0 0
        %8403 = vmatpush1.bf16.msra.mxu0 0
        %8404 = vmatprep.subr.bf16.mxu0 0
        %8405 = vmatpush1.bf16.msra.mxu0 0
        %8406 = vmatprep.subr.bf16.mxu0 0
        %8407 = vmatpush1.bf16.msra.mxu0 0
        %8408 = vmatprep.subr.bf16.mxu0 0
        %8409 = vmatpush1.bf16.msra.mxu0 0
        %8410 = vmatprep.subr.bf16.mxu0 0
        %8411 = vmatpush1.bf16.msra.mxu0 0
        %8412 = vmatprep.subr.bf16.mxu0 0
        %8413 = vmatpush1.bf16.msra.mxu0 0
        %8414 = vmatprep.subr.bf16.mxu0 0
        %8415 = vmatpush1.bf16.msra.mxu0 0
        %8416 = vmatprep.subr.bf16.mxu0 0
        %8417 = vmatpush1.bf16.msra.mxu0 0
        %8418 = vmatprep.subr.bf16.mxu0 0
        %8419 = vmatpush1.bf16.msra.mxu0 0
        %8420 = vmatprep.subr.bf16.mxu0 0
        %8421 = vmatpush1.bf16.msra.mxu0 0
        %8422 = vmatprep.subr.bf16.mxu0 0
        %8423 = vmatpush1.bf16.msra.mxu0 0
        %8424 = vmatprep.subr.bf16.mxu0 0
        %8425 = vmatpush1.bf16.msra.mxu0 0
        %8426 = vmatprep.subr.bf16.mxu0 0
        %8427 = vmatpush1.bf16.msra.mxu0 0
        %8428 = vmatprep.subr.bf16.mxu0 0
        %8429 = vmatpush1.bf16.msra.mxu0 0
        %8430 = vmatprep.mubr.bf16.mxu0 0
        %8431 = vmatmul.mubr.bf16.gmra.mrb[0].mxu0 %v8387
        %v8432 = vpop.f32.mrb[0].mxu0
        %v8433 = vadd.f32 0.0, %v8432
        %v8434 = vpop.f32.mrb[0].mxu0
        %v8435 = vadd.f32 0.0, %v8434
        %v8436 = vpop.f32.mrb[0].mxu0
        %v8437 = vadd.f32 0.0, %v8436
        %v8438 = vpop.f32.mrb[0].mxu0
        %v8439 = vadd.f32 0.0, %v8438
        %8440 = vmatprep.mubr.bf16.mxu0 0
        %8441 = vmatmul.mubr.bf16.gmra.mrb[0].mxu0 %v8390
        %v8442 = vpop.f32.mrb[0].mxu0
        %v8443 = vadd.f32 0.0, %v8442
        %v8444 = vpop.f32.mrb[0].mxu0
        %v8445 = vadd.f32 0.0, %v8444
        %v8446 = vpop.f32.mrb[0].mxu0
        %v8447 = vpop.f32.mrb[0].mxu0
        %8448 = vdwg.mxu0
        %v8449 = vadd.f32 %v8340, %v8433
        %v8450 = vadd.f32 %v8341, %v8435
        %v8451 = vadd.f32 %v8342, %v8437
        %v8452 = vadd.f32 %v8343, %v8439
        %v8453 = vadd.f32 %v8344, %v8443
        %v8454 = vadd.f32 %v8345, %v8445
        %s8455 = scalar_lea.vmem %s1, 588
        %v8456 = vld [vmem:[%s8455] sm:$0xf]
        %v8457 = vld [vmem:[%s8455 + $0x4] sm:$0xf]
        %v8458 = vld [vmem:[%s8455 + $0x8] sm:$0xf]
        %v8462 = vunpack.c.l.b16 %v8456
        %v8463 = vunpack.c.l.b16 %v8457
        %v8464 = vunpack.c.l.b16 %v8458
        %v8465 = vpack.c.b16 %v8463, %v8462
        %v8466 = vpack.c.b16 %v8464, %v8464
        %v8468 = vsel %vm567, %v8465, 0
        %v8471 = vsel %vm567, %v8466, 0
        %v8474 = vsel %vm574, %v8029, 0
        %v8477 = vsel %vm574, %v8030, 0
        %8479 = vmatprep.subr.bf16.mxu0 %v8028
        %8480 = vmatpush1.bf16.msra.mxu0 %v8027
        %8481 = vmatprep.subr.bf16.mxu0 %v8477
        %8482 = vmatpush1.bf16.msra.mxu0 %v8474
        %8483 = vmatprep.subr.bf16.mxu0 0
        %8484 = vmatpush1.bf16.msra.mxu0 0
        %8485 = vmatprep.subr.bf16.mxu0 0
        %8486 = vmatpush1.bf16.msra.mxu0 0
        %8487 = vmatprep.subr.bf16.mxu0 0
        %8488 = vmatpush1.bf16.msra.mxu0 0
        %8489 = vmatprep.subr.bf16.mxu0 0
        %8490 = vmatpush1.bf16.msra.mxu0 0
        %8491 = vmatprep.subr.bf16.mxu0 0
        %8492 = vmatpush1.bf16.msra.mxu0 0
        %8493 = vmatprep.subr.bf16.mxu0 0
        %8494 = vmatpush1.bf16.msra.mxu0 0
        %8495 = vmatprep.subr.bf16.mxu0 0
        %8496 = vmatpush1.bf16.msra.mxu0 0
        %8497 = vmatprep.subr.bf16.mxu0 0
        %8498 = vmatpush1.bf16.msra.mxu0 0
        %8499 = vmatprep.subr.bf16.mxu0 0
        %8500 = vmatpush1.bf16.msra.mxu0 0
        %8501 = vmatprep.subr.bf16.mxu0 0
        %8502 = vmatpush1.bf16.msra.mxu0 0
        %8503 = vmatprep.subr.bf16.mxu0 0
        %8504 = vmatpush1.bf16.msra.mxu0 0
        %8505 = vmatprep.subr.bf16.mxu0 0
        %8506 = vmatpush1.bf16.msra.mxu0 0
        %8507 = vmatprep.subr.bf16.mxu0 0
        %8508 = vmatpush1.bf16.msra.mxu0 0
        %8509 = vmatprep.subr.bf16.mxu0 0
        %8510 = vmatpush1.bf16.msra.mxu0 0
        %8511 = vmatprep.mubr.bf16.mxu0 0
        %8512 = vmatmul.mubr.bf16.gmra.mrb[0].mxu0 %v8468
        %v8513 = vpop.f32.mrb[0].mxu0
        %v8514 = vadd.f32 0.0, %v8513
        %v8515 = vpop.f32.mrb[0].mxu0
        %v8516 = vadd.f32 0.0, %v8515
        %v8517 = vpop.f32.mrb[0].mxu0
        %v8518 = vadd.f32 0.0, %v8517
        %v8519 = vpop.f32.mrb[0].mxu0
        %v8520 = vadd.f32 0.0, %v8519
        %8521 = vmatprep.mubr.bf16.mxu0 0
        %8522 = vmatmul.mubr.bf16.gmra.mrb[0].mxu0 %v8471
        %v8523 = vpop.f32.mrb[0].mxu0
        %v8524 = vadd.f32 0.0, %v8523
        %v8525 = vpop.f32.mrb[0].mxu0
        %v8526 = vadd.f32 0.0, %v8525
        %v8527 = vpop.f32.mrb[0].mxu0
        %v8528 = vpop.f32.mrb[0].mxu0
        %8529 = vdwg.mxu0
        %v8530 = vadd.f32 %v8449, %v8514
        %v8531 = vadd.f32 %v8450, %v8516
        %v8532 = vadd.f32 %v8451, %v8518
        %v8533 = vadd.f32 %v8452, %v8520
        %v8534 = vadd.f32 %v8453, %v8524
        %v8535 = vadd.f32 %v8454, %v8526
        %s8536 = scalar_lea.vmem %s1, 600
        %v8537 = vld [vmem:[%s8536] sm:$0xf]
        %v8538 = vld [vmem:[%s8536 + $0x4] sm:$0xf]
        %v8539 = vld [vmem:[%s8536 + $0x8] sm:$0xf]
        %8540 = vrot.lane.b32.xlu0 %v8021, 127
        %v8541 = vpop.permute.xlu0 %8540
        %8542 = vrot.lane.b32.xlu0 %v8023, 127
        %v8543 = vpop.permute.xlu0 %8542
        %8544 = vrot.lane.b32.xlu0 %v8025, 127
        %v8545 = vpop.permute.xlu0 %8544
        %8546 = vrot.lane.b32.xlu0 %v8022, 127
        %v8547 = vpop.permute.xlu0 %8546
        %8548 = vrot.lane.b32.xlu0 %v8024, 127
        %v8549 = vpop.permute.xlu0 %8548
        %8550 = vrot.lane.b32.xlu0 %v8026, 127
        %v8551 = vpop.permute.xlu0 %8550
        %v8552 = vsel %vm1046, %v8541, %v8547
        %v8553 = vsel %vm1046, %v8543, %v8549
        %v8554 = vsel %vm1046, %v8545, %v8551
        %v8555 = vsel %vm1046, %v8547, %v8541
        %v8556 = vsel %vm1046, %v8549, %v8543
        %v8557 = vsel %vm1046, %v8551, %v8545
        %v8558 = vmul.f32 %v8552, %v1059
        %v8559 = vmul.f32 %v8555, %v1063
        %v8560 = vmul.f32 %v8553, %v1059
        %v8561 = vmul.f32 %v8556, %v1063
        %v8562 = vmul.f32 %v8554, %v1059
        %v8563 = vmul.f32 %v8557, %v1063
        %v8564 = vpack.c.bf16 %v8560, %v8558
        %v8565 = vpack.c.bf16 %v8561, %v8559
        %v8566 = vpack.c.bf16 %v8562, %v8562
        %v8567 = vpack.c.bf16 %v8563, %v8563
        %v8571 = vunpack.c.l.b16 %v8537
        %v8572 = vunpack.c.l.b16 %v8538
        %v8573 = vunpack.c.l.b16 %v8539
        %v8574 = vpack.c.b16 %v8572, %v8571
        %v8575 = vpack.c.b16 %v8573, %v8573
        %v8577 = vsel %vm567, %v8574, 0
        %v8580 = vsel %vm567, %v8575, 0
        %v8583 = vsel %vm574, %v8566, 0
        %v8586 = vsel %vm574, %v8567, 0
        %8588 = vmatprep.subr.bf16.mxu0 %v8565
        %8589 = vmatpush1.bf16.msra.mxu0 %v8564
        %8590 = vmatprep.subr.bf16.mxu0 %v8586
        %8591 = vmatpush1.bf16.msra.mxu0 %v8583
        %8592 = vmatprep.subr.bf16.mxu0 0
        %8593 = vmatpush1.bf16.msra.mxu0 0
        %8594 = vmatprep.subr.bf16.mxu0 0
        %8595 = vmatpush1.bf16.msra.mxu0 0
        %8596 = vmatprep.subr.bf16.mxu0 0
        %8597 = vmatpush1.bf16.msra.mxu0 0
        %8598 = vmatprep.subr.bf16.mxu0 0
        %8599 = vmatpush1.bf16.msra.mxu0 0
        %8600 = vmatprep.subr.bf16.mxu0 0
        %8601 = vmatpush1.bf16.msra.mxu0 0
        %8602 = vmatprep.subr.bf16.mxu0 0
        %8603 = vmatpush1.bf16.msra.mxu0 0
        %8604 = vmatprep.subr.bf16.mxu0 0
        %8605 = vmatpush1.bf16.msra.mxu0 0
        %8606 = vmatprep.subr.bf16.mxu0 0
        %8607 = vmatpush1.bf16.msra.mxu0 0
        %8608 = vmatprep.subr.bf16.mxu0 0
        %8609 = vmatpush1.bf16.msra.mxu0 0
        %8610 = vmatprep.subr.bf16.mxu0 0
        %8611 = vmatpush1.bf16.msra.mxu0 0
        %8612 = vmatprep.subr.bf16.mxu0 0
        %8613 = vmatpush1.bf16.msra.mxu0 0
        %8614 = vmatprep.subr.bf16.mxu0 0
        %8615 = vmatpush1.bf16.msra.mxu0 0
        %8616 = vmatprep.subr.bf16.mxu0 0
        %8617 = vmatpush1.bf16.msra.mxu0 0
        %8618 = vmatprep.subr.bf16.mxu0 0
        %8619 = vmatpush1.bf16.msra.mxu0 0
        %8620 = vmatprep.mubr.bf16.mxu0 0
        %8621 = vmatmul.mubr.bf16.gmra.mrb[0].mxu0 %v8577
        %v8622 = vpop.f32.mrb[0].mxu0
        %v8623 = vadd.f32 0.0, %v8622
        %v8624 = vpop.f32.mrb[0].mxu0
        %v8625 = vadd.f32 0.0, %v8624
        %v8626 = vpop.f32.mrb[0].mxu0
        %v8627 = vadd.f32 0.0, %v8626
        %v8628 = vpop.f32.mrb[0].mxu0
        %v8629 = vadd.f32 0.0, %v8628
        %8630 = vmatprep.mubr.bf16.mxu0 0
        %8631 = vmatmul.mubr.bf16.gmra.mrb[0].mxu0 %v8580
        %v8632 = vpop.f32.mrb[0].mxu0
        %v8633 = vadd.f32 0.0, %v8632
        %v8634 = vpop.f32.mrb[0].mxu0
        %v8635 = vadd.f32 0.0, %v8634
        %v8636 = vpop.f32.mrb[0].mxu0
        %v8637 = vpop.f32.mrb[0].mxu0
        %8638 = vdwg.mxu0
        %v8639 = vadd.f32 %v8530, %v8623
        %v8640 = vadd.f32 %v8531, %v8625
        %v8641 = vadd.f32 %v8532, %v8627
        %v8642 = vadd.f32 %v8533, %v8629
        %v8643 = vadd.f32 %v8534, %v8633
        %v8644 = vadd.f32 %v8535, %v8635
        %s8645 = scalar_lea.vmem %s1, 612
        %v8646 = vld [vmem:[%s8645] sm:$0xf]
        %v8647 = vld [vmem:[%s8645 + $0x4] sm:$0xf]
        %v8648 = vld [vmem:[%s8645 + $0x8] sm:$0xf]
        %8649 = vrot.lane.b32.xlu0 %v8021, 113
        %v8650 = vpop.permute.xlu0 %8649
        %8651 = vrot.lane.b32.xlu0 %v8023, 113
        %v8652 = vpop.permute.xlu0 %8651
        %8653 = vrot.lane.b32.xlu0 %v8025, 113
        %v8654 = vpop.permute.xlu0 %8653
        %8655 = vrot.lane.b32.xlu0 %v8022, 113
        %v8656 = vpop.permute.xlu0 %8655
        %8657 = vrot.lane.b32.xlu0 %v8024, 113
        %v8658 = vpop.permute.xlu0 %8657
        %8659 = vrot.lane.b32.xlu0 %v8026, 113
        %v8660 = vpop.permute.xlu0 %8659
        %v8661 = vsel %vm1169, %v8650, %v8656
        %v8662 = vsel %vm1169, %v8652, %v8658
        %v8663 = vsel %vm1169, %v8654, %v8660
        %v8664 = vsel %vm1169, %v8656, %v8650
        %v8665 = vsel %vm1169, %v8658, %v8652
        %v8666 = vsel %vm1169, %v8660, %v8654
        %v8667 = vmul.f32 %v8661, %v1182
        %v8668 = vmul.f32 %v8664, %v1186
        %v8669 = vmul.f32 %v8662, %v1182
        %v8670 = vmul.f32 %v8665, %v1186
        %v8671 = vmul.f32 %v8663, %v1182
        %v8672 = vmul.f32 %v8666, %v1186
        %v8673 = vpack.c.bf16 %v8669, %v8667
        %v8674 = vpack.c.bf16 %v8670, %v8668
        %v8675 = vpack.c.bf16 %v8671, %v8671
        %v8676 = vpack.c.bf16 %v8672, %v8672
        %v8680 = vunpack.c.l.b16 %v8646
        %v8681 = vunpack.c.l.b16 %v8647
        %v8682 = vunpack.c.l.b16 %v8648
        %v8683 = vpack.c.b16 %v8681, %v8680
        %v8684 = vpack.c.b16 %v8682, %v8682
        %v8686 = vsel %vm567, %v8683, 0
        %v8689 = vsel %vm567, %v8684, 0
        %v8692 = vsel %vm574, %v8675, 0
        %v8695 = vsel %vm574, %v8676, 0
        %8697 = vmatprep.subr.bf16.mxu0 %v8674
        %8698 = vmatpush1.bf16.msra.mxu0 %v8673
        %8699 = vmatprep.subr.bf16.mxu0 %v8695
        %8700 = vmatpush1.bf16.msra.mxu0 %v8692
        %8701 = vmatprep.subr.bf16.mxu0 0
        %8702 = vmatpush1.bf16.msra.mxu0 0
        %8703 = vmatprep.subr.bf16.mxu0 0
        %8704 = vmatpush1.bf16.msra.mxu0 0
        %8705 = vmatprep.subr.bf16.mxu0 0
        %8706 = vmatpush1.bf16.msra.mxu0 0
        %8707 = vmatprep.subr.bf16.mxu0 0
        %8708 = vmatpush1.bf16.msra.mxu0 0
        %8709 = vmatprep.subr.bf16.mxu0 0
        %8710 = vmatpush1.bf16.msra.mxu0 0
        %8711 = vmatprep.subr.bf16.mxu0 0
        %8712 = vmatpush1.bf16.msra.mxu0 0
        %8713 = vmatprep.subr.bf16.mxu0 0
        %8714 = vmatpush1.bf16.msra.mxu0 0
        %8715 = vmatprep.subr.bf16.mxu0 0
        %8716 = vmatpush1.bf16.msra.mxu0 0
        %8717 = vmatprep.subr.bf16.mxu0 0
        %8718 = vmatpush1.bf16.msra.mxu0 0
        %8719 = vmatprep.subr.bf16.mxu0 0
        %8720 = vmatpush1.bf16.msra.mxu0 0
        %8721 = vmatprep.subr.bf16.mxu0 0
        %8722 = vmatpush1.bf16.msra.mxu0 0
        %8723 = vmatprep.subr.bf16.mxu0 0
        %8724 = vmatpush1.bf16.msra.mxu0 0
        %8725 = vmatprep.subr.bf16.mxu0 0
        %8726 = vmatpush1.bf16.msra.mxu0 0
        %8727 = vmatprep.subr.bf16.mxu0 0
        %8728 = vmatpush1.bf16.msra.mxu0 0
        %8729 = vmatprep.mubr.bf16.mxu0 0
        %8730 = vmatmul.mubr.bf16.gmra.mrb[0].mxu0 %v8686
        %v8731 = vpop.f32.mrb[0].mxu0
        %v8732 = vadd.f32 0.0, %v8731
        %v8733 = vpop.f32.mrb[0].mxu0
        %v8734 = vadd.f32 0.0, %v8733
        %v8735 = vpop.f32.mrb[0].mxu0
        %v8736 = vadd.f32 0.0, %v8735
        %v8737 = vpop.f32.mrb[0].mxu0
        %v8738 = vadd.f32 0.0, %v8737
        %8739 = vmatprep.mubr.bf16.mxu0 0
        %8740 = vmatmul.mubr.bf16.gmra.mrb[0].mxu0 %v8689
        %v8741 = vpop.f32.mrb[0].mxu0
        %v8742 = vadd.f32 0.0, %v8741
        %v8743 = vpop.f32.mrb[0].mxu0
        %v8744 = vadd.f32 0.0, %v8743
        %v8745 = vpop.f32.mrb[0].mxu0
        %v8746 = vpop.f32.mrb[0].mxu0
        %8747 = vdwg.mxu0
        %v8748 = vadd.f32 %v8639, %v8732
        %v8749 = vadd.f32 %v8640, %v8734
        %v8750 = vadd.f32 %v8641, %v8736
        %v8751 = vadd.f32 %v8642, %v8738
        %v8752 = vadd.f32 %v8643, %v8742
        %v8753 = vadd.f32 %v8644, %v8744
        %s8754 = scalar_lea.vmem %s1, 624
        %v8755 = vld [vmem:[%s8754] sm:$0xf]
        %v8756 = vld [vmem:[%s8754 + $0x4] sm:$0xf]
        %v8757 = vld [vmem:[%s8754 + $0x8] sm:$0xf]
        %8758 = vrot.lane.b32.xlu0 %v8021, 112
        %v8759 = vpop.permute.xlu0 %8758
        %8760 = vrot.lane.b32.xlu0 %v8023, 112
        %v8761 = vpop.permute.xlu0 %8760
        %8762 = vrot.lane.b32.xlu0 %v8025, 112
        %v8763 = vpop.permute.xlu0 %8762
        %8764 = vrot.lane.b32.xlu0 %v8022, 112
        %v8765 = vpop.permute.xlu0 %8764
        %8766 = vrot.lane.b32.xlu0 %v8024, 112
        %v8767 = vpop.permute.xlu0 %8766
        %8768 = vrot.lane.b32.xlu0 %v8026, 112
        %v8769 = vpop.permute.xlu0 %8768
        %v8770 = vsel %vm1292, %v8759, %v8765
        %v8771 = vsel %vm1292, %v8761, %v8767
        %v8772 = vsel %vm1292, %v8763, %v8769
        %v8773 = vsel %vm1292, %v8765, %v8759
        %v8774 = vsel %vm1292, %v8767, %v8761
        %v8775 = vsel %vm1292, %v8769, %v8763
        %v8776 = vmul.f32 %v8770, %v1305
        %v8777 = vmul.f32 %v8773, %v1309
        %v8778 = vmul.f32 %v8771, %v1305
        %v8779 = vmul.f32 %v8774, %v1309
        %v8780 = vmul.f32 %v8772, %v1305
        %v8781 = vmul.f32 %v8775, %v1309
        %v8782 = vpack.c.bf16 %v8778, %v8776
        %v8783 = vpack.c.bf16 %v8779, %v8777
        %v8784 = vpack.c.bf16 %v8780, %v8780
        %v8785 = vpack.c.bf16 %v8781, %v8781
        %v8789 = vunpack.c.l.b16 %v8755
        %v8790 = vunpack.c.l.b16 %v8756
        %v8791 = vunpack.c.l.b16 %v8757
        %v8792 = vpack.c.b16 %v8790, %v8789
        %v8793 = vpack.c.b16 %v8791, %v8791
        %v8795 = vsel %vm567, %v8792, 0
        %v8798 = vsel %vm567, %v8793, 0
        %v8801 = vsel %vm574, %v8784, 0
        %v8804 = vsel %vm574, %v8785, 0
        %8806 = vmatprep.subr.bf16.mxu0 %v8783
        %8807 = vmatpush1.bf16.msra.mxu0 %v8782
        %8808 = vmatprep.subr.bf16.mxu0 %v8804
        %8809 = vmatpush1.bf16.msra.mxu0 %v8801
        %8810 = vmatprep.subr.bf16.mxu0 0
        %8811 = vmatpush1.bf16.msra.mxu0 0
        %8812 = vmatprep.subr.bf16.mxu0 0
        %8813 = vmatpush1.bf16.msra.mxu0 0
        %8814 = vmatprep.subr.bf16.mxu0 0
        %8815 = vmatpush1.bf16.msra.mxu0 0
        %8816 = vmatprep.subr.bf16.mxu0 0
        %8817 = vmatpush1.bf16.msra.mxu0 0
        %8818 = vmatprep.subr.bf16.mxu0 0
        %8819 = vmatpush1.bf16.msra.mxu0 0
        %8820 = vmatprep.subr.bf16.mxu0 0
        %8821 = vmatpush1.bf16.msra.mxu0 0
        %8822 = vmatprep.subr.bf16.mxu0 0
        %8823 = vmatpush1.bf16.msra.mxu0 0
        %8824 = vmatprep.subr.bf16.mxu0 0
        %8825 = vmatpush1.bf16.msra.mxu0 0
        %8826 = vmatprep.subr.bf16.mxu0 0
        %8827 = vmatpush1.bf16.msra.mxu0 0
        %8828 = vmatprep.subr.bf16.mxu0 0
        %8829 = vmatpush1.bf16.msra.mxu0 0
        %8830 = vmatprep.subr.bf16.mxu0 0
        %8831 = vmatpush1.bf16.msra.mxu0 0
        %8832 = vmatprep.subr.bf16.mxu0 0
        %8833 = vmatpush1.bf16.msra.mxu0 0
        %8834 = vmatprep.subr.bf16.mxu0 0
        %8835 = vmatpush1.bf16.msra.mxu0 0
        %8836 = vmatprep.subr.bf16.mxu0 0
        %8837 = vmatpush1.bf16.msra.mxu0 0
        %8838 = vmatprep.mubr.bf16.mxu0 0
        %8839 = vmatmul.mubr.bf16.gmra.mrb[0].mxu0 %v8795
        %v8840 = vpop.f32.mrb[0].mxu0
        %v8841 = vadd.f32 0.0, %v8840
        %v8842 = vpop.f32.mrb[0].mxu0
        %v8843 = vadd.f32 0.0, %v8842
        %v8844 = vpop.f32.mrb[0].mxu0
        %v8845 = vadd.f32 0.0, %v8844
        %v8846 = vpop.f32.mrb[0].mxu0
        %v8847 = vadd.f32 0.0, %v8846
        %8848 = vmatprep.mubr.bf16.mxu0 0
        %8849 = vmatmul.mubr.bf16.gmra.mrb[0].mxu0 %v8798
        %v8850 = vpop.f32.mrb[0].mxu0
        %v8851 = vadd.f32 0.0, %v8850
        %v8852 = vpop.f32.mrb[0].mxu0
        %v8853 = vadd.f32 0.0, %v8852
        %v8854 = vpop.f32.mrb[0].mxu0
        %v8855 = vpop.f32.mrb[0].mxu0
        %8856 = vdwg.mxu0
        %v8857 = vadd.f32 %v8748, %v8841
        %v8858 = vadd.f32 %v8749, %v8843
        %v8859 = vadd.f32 %v8750, %v8845
        %v8860 = vadd.f32 %v8751, %v8847
        %v8861 = vadd.f32 %v8752, %v8851
        %v8862 = vadd.f32 %v8753, %v8853
        %s8863 = scalar_lea.vmem %s1, 636
        %v8864 = vld [vmem:[%s8863] sm:$0xf]
        %v8865 = vld [vmem:[%s8863 + $0x4] sm:$0xf]
        %v8866 = vld [vmem:[%s8863 + $0x8] sm:$0xf]
        %8867 = vrot.lane.b32.xlu0 %v8021, 111
        %v8868 = vpop.permute.xlu0 %8867
        %8869 = vrot.lane.b32.xlu0 %v8023, 111
        %v8870 = vpop.permute.xlu0 %8869
        %8871 = vrot.lane.b32.xlu0 %v8025, 111
        %v8872 = vpop.permute.xlu0 %8871
        %8873 = vrot.lane.b32.xlu0 %v8022, 111
        %v8874 = vpop.permute.xlu0 %8873
        %8875 = vrot.lane.b32.xlu0 %v8024, 111
        %v8876 = vpop.permute.xlu0 %8875
        %8877 = vrot.lane.b32.xlu0 %v8026, 111
        %v8878 = vpop.permute.xlu0 %8877
        %v8879 = vsel %vm1415, %v8868, %v8874
        %v8880 = vsel %vm1415, %v8870, %v8876
        %v8881 = vsel %vm1415, %v8872, %v8878
        %v8882 = vsel %vm1415, %v8874, %v8868
        %v8883 = vsel %vm1415, %v8876, %v8870
        %v8884 = vsel %vm1415, %v8878, %v8872
        %v8885 = vmul.f32 %v8879, %v1428
        %v8886 = vmul.f32 %v8882, %v1432
        %v8887 = vmul.f32 %v8880, %v1428
        %v8888 = vmul.f32 %v8883, %v1432
        %v8889 = vmul.f32 %v8881, %v1428
        %v8890 = vmul.f32 %v8884, %v1432
        %v8891 = vpack.c.bf16 %v8887, %v8885
        %v8892 = vpack.c.bf16 %v8888, %v8886
        %v8893 = vpack.c.bf16 %v8889, %v8889
        %v8894 = vpack.c.bf16 %v8890, %v8890
        %v8898 = vunpack.c.l.b16 %v8864
        %v8899 = vunpack.c.l.b16 %v8865
        %v8900 = vunpack.c.l.b16 %v8866
        %v8901 = vpack.c.b16 %v8899, %v8898
        %v8902 = vpack.c.b16 %v8900, %v8900
        %v8904 = vsel %vm567, %v8901, 0
        %v8907 = vsel %vm567, %v8902, 0
        %v8910 = vsel %vm574, %v8893, 0
        %v8913 = vsel %vm574, %v8894, 0
        %8915 = vmatprep.subr.bf16.mxu0 %v8892
        %8916 = vmatpush1.bf16.msra.mxu0 %v8891
        %8917 = vmatprep.subr.bf16.mxu0 %v8913
        %8918 = vmatpush1.bf16.msra.mxu0 %v8910
        %8919 = vmatprep.subr.bf16.mxu0 0
        %8920 = vmatpush1.bf16.msra.mxu0 0
        %8921 = vmatprep.subr.bf16.mxu0 0
        %8922 = vmatpush1.bf16.msra.mxu0 0
        %8923 = vmatprep.subr.bf16.mxu0 0
        %8924 = vmatpush1.bf16.msra.mxu0 0
        %8925 = vmatprep.subr.bf16.mxu0 0
        %8926 = vmatpush1.bf16.msra.mxu0 0
        %8927 = vmatprep.subr.bf16.mxu0 0
        %8928 = vmatpush1.bf16.msra.mxu0 0
        %8929 = vmatprep.subr.bf16.mxu0 0
        %8930 = vmatpush1.bf16.msra.mxu0 0
        %8931 = vmatprep.subr.bf16.mxu0 0
        %8932 = vmatpush1.bf16.msra.mxu0 0
        %8933 = vmatprep.subr.bf16.mxu0 0
        %8934 = vmatpush1.bf16.msra.mxu0 0
        %8935 = vmatprep.subr.bf16.mxu0 0
        %8936 = vmatpush1.bf16.msra.mxu0 0
        %8937 = vmatprep.subr.bf16.mxu0 0
        %8938 = vmatpush1.bf16.msra.mxu0 0
        %8939 = vmatprep.subr.bf16.mxu0 0
        %8940 = vmatpush1.bf16.msra.mxu0 0
        %8941 = vmatprep.subr.bf16.mxu0 0
        %8942 = vmatpush1.bf16.msra.mxu0 0
        %8943 = vmatprep.subr.bf16.mxu0 0
        %8944 = vmatpush1.bf16.msra.mxu0 0
        %8945 = vmatprep.subr.bf16.mxu0 0
        %8946 = vmatpush1.bf16.msra.mxu0 0
        %8947 = vmatprep.mubr.bf16.mxu0 0
        %8948 = vmatmul.mubr.bf16.gmra.mrb[0].mxu0 %v8904
        %v8949 = vpop.f32.mrb[0].mxu0
        %v8950 = vadd.f32 0.0, %v8949
        %v8951 = vpop.f32.mrb[0].mxu0
        %v8952 = vadd.f32 0.0, %v8951
        %v8953 = vpop.f32.mrb[0].mxu0
        %v8954 = vadd.f32 0.0, %v8953
        %v8955 = vpop.f32.mrb[0].mxu0
        %v8956 = vadd.f32 0.0, %v8955
        %8957 = vmatprep.mubr.bf16.mxu0 0
        %8958 = vmatmul.mubr.bf16.gmra.mrb[0].mxu0 %v8907
        %v8959 = vpop.f32.mrb[0].mxu0
        %v8960 = vadd.f32 0.0, %v8959
        %v8961 = vpop.f32.mrb[0].mxu0
        %v8962 = vadd.f32 0.0, %v8961
        %v8963 = vpop.f32.mrb[0].mxu0
        %v8964 = vpop.f32.mrb[0].mxu0
        %8965 = vdwg.mxu0
        %v8966 = vadd.f32 %v8857, %v8950
        %v8967 = vadd.f32 %v8858, %v8952
        %v8968 = vadd.f32 %v8859, %v8954
        %v8969 = vadd.f32 %v8860, %v8956
        %v8970 = vadd.f32 %v8861, %v8960
        %v8971 = vadd.f32 %v8862, %v8962
        %s8972 = scalar_lea.vmem %s2, 120
        %v8973 = vld [vmem:[%s8972] sm:$0xff]
        %v8974 = vld [vmem:[%s8972 + $0x8] sm:$0xff]
        %v8975 = vld [vmem:[%s8972 + $0x10] sm:$0xff]
        %8977 = vset.pattern.permute.xlu0 0
        %8978 = vperm.xlu0 %8977, %v8973
        %v8979 = vpop.permute.xlu0 %8978
        %8982 = vset.pattern.permute.xlu0 0
        %8983 = vperm.xlu0 %8982, %v8974
        %v8984 = vpop.permute.xlu0 %8983
        %8987 = vset.pattern.permute.xlu0 0
        %8988 = vperm.xlu0 %8987, %v8975
        %v8989 = vpop.permute.xlu0 %8988
        %v8991 = vadd.f32 %v8966, %v8979
        %v8992 = vadd.f32 %v8967, %v8979
        %v8993 = vadd.f32 %v8968, %v8984
        %v8994 = vadd.f32 %v8969, %v8984
        %v8995 = vadd.f32 %v8970, %v8989
        %v8996 = vadd.f32 %v8971, %v8989
        %v8997 = vmul.f32 %v8991, 0.2
        %v8998 = vmul.f32 %v8992, 0.2
        %v8999 = vmul.f32 %v8993, 0.2
        %v9000 = vmul.f32 %v8994, 0.2
        %v9001 = vmul.f32 %v8995, 0.2
        %v9002 = vmul.f32 %v8996, 0.2
        %v9003 = vmax.f32 %v8991, %v8997
        %v9004 = vmax.f32 %v8992, %v8998
        %v9005 = vmax.f32 %v8993, %v8999
        %v9006 = vmax.f32 %v8994, %v9000
        %v9007 = vmax.f32 %v8995, %v9001
        %v9008 = vmax.f32 %v8996, %v9002
        %v9009 = vadd.f32 %v9003, %v457
        %v9010 = vadd.f32 %v9004, %v458
        %v9011 = vadd.f32 %v9005, %v459
        %v9012 = vadd.f32 %v9006, %v460
        %v9013 = vadd.f32 %v9007, %v461
        %v9014 = vadd.f32 %v9008, %v462
        %9015 = vst [vmem:[%s450] sm:$0xff] %v9009
        %9016 = vst [vmem:[%s450 + $0x8] sm:$0xff] %v9010
        %9017 = vst [vmem:[%s450 + $0x10] sm:$0xff] %v9011
        %9018 = vst [vmem:[%s450 + $0x18] sm:$0xff] %v9012
        %9019 = vst [vmem:[%s450 + $0x20] sm:$0xff] %v9013
        %9020 = vst [vmem:[%s450 + $0x28] sm:$0xff] %v9014
        %s9021 = sand.u32 %s293, 1
        %s9022 = scalar_lea.sflag [#allocation4], %s9021
        %s9023 = sand.u32 %s293, 1
        %s9024 = smul.addr %s9023, 48
        %s9025 = scalar_lea.vmem [#allocation8], %s9024
        // Predicated region
        $region81: #{tpu_custom_call.1} parent=67 // pred_check
          %p9026 = pneg %p303
        $region82: #{tpu_custom_call.1} parent=67 // pred_check_branch
          %9028 = sbr.rel (%p9026) target = $region84
        $region83: #{tpu_custom_call.1} parent=67 // pred_region
          %s9030 = ssub.s32 768, 768
          %9031 = vsyncadd %s9022, %s9030
          %s9032 = smul.addr %s28, 6
          %s9033 = smul.addr %s9032, 128
          %s9034 = scalar_lea.hbm %s12, %s9033
          %s9035 = sshll.u32 %s9025, 4
          %s9036 = int_to_ptr.vmem [resolvable:$true] %s9035
          %9041 = dma.vmem_to_hbm [thread:$0]  %s9036, 768, %s9034, %s9022, 256, 256, 16
        $region84: #{tpu_custom_call.1} parent=67 // pred_fallthru
          _
      $region68: #{tpu_custom_call.1} parent=5 // pred_fallthru
        _
      %p9042 = scmp.le.s32.totalorder 2, %s23
      // Predicated region
      $region85: #{tpu_custom_call.1} parent=5 // pred_check
        %p9043 = pneg %p9042
      $region86: #{tpu_custom_call.1} parent=5 // pred_check_branch
        %9045 = sbr.rel (%p9043) target = $region88
      $region87: #{tpu_custom_call.1} parent=5 // pred_region
        %s9046 = ssub.s32 %s23, 2
        // Predicated region
        $region89: #{tpu_custom_call.1} parent=87 // pred_check
          %p9047 = pneg %p309
        $region90: #{tpu_custom_call.1} parent=87 // pred_check_branch
          %9049 = sbr.rel (%p9047) target = $region92
        $region91: #{tpu_custom_call.1} parent=87 // pred_region
          %s9050 = sand.u32 %s294, 1
          %s9051 = scalar_lea.sflag [#allocation4], %s9050
          %s9052 = sand.u32 %s294, 1
          %s9053 = smul.addr %s9052, 48
          %s9054 = scalar_lea.vmem [#allocation8], %s9053
          %9055 = dma.done %s9051, 768
        $region92: #{tpu_custom_call.1} parent=87 // pred_fallthru
          _
      $region88: #{tpu_custom_call.1} parent=5 // pred_fallthru
        _
    $region6: #{tpu_custom_call.1} parent=1 // loop_footer
      %s27 = sadd.s32 1, %s23
    $region7: #{tpu_custom_call.1} parent=1 // loop_footer_branch
      %22 = sbr.rel target = $region3
    $region8: #{tpu_custom_call.1} parent=1 // loop_exit
      _
    %9056 = vsyncpa [#allocation3], 1
    %s9057 = scalar_lea.sflag [#allocation3], 1
    %9058 = vsyncpa %s9057, 1
    %9059 = vsyncpa [#allocation6], 1
    %9060 = vsyncpa [#allocation4], 1
    %s9061 = scalar_lea.sflag [#allocation4], 1
    %9062 = vsyncpa %s9061, 1

</llo_original>
